<compile_context>
chip_gen: v5e
topology: v5e:2x2
jax: 0.10.0
libtpu: 0.0.40
codegen_flags: <defaults>
</compile_context>

<pallas_src>
import numpy as np
import jax
import jax.numpy as jnp
from jax.experimental import pallas as pl
from jax.experimental.pallas import tpu as pltpu

# Daubechies-5 (10-tap) filters, pywt convention: rec_lo = scaling filter,
# dec_lo = reversed(rec_lo).
DB5_REC_LO = (
    0.160102397974125,
    0.6038292697974729,
    0.7243085284385744,
    0.13842814590110342,
    -0.24229488706619015,
    -0.03224486958502952,
    0.07757149384006515,
    -0.006241490213011705,
    -0.012580751999015526,
    0.003335725285001549,
)
DB5_DEC_LO = tuple(reversed(DB5_REC_LO))
FLEN = 10          # db5 filter length
EXT = FLEN - 1     # symmetric extension width (9) on each side


def _round_up(x, m):
    return (x + m - 1) // m * m


def _choose_tiles(B, Lh):
    """Pick per-row output width W (lane dense), fold factor R, rows and TB."""
    r_target = max(1, -(-8 // B))                    # aim for >= 8 sublane rows
    W = _round_up(max(1, -(-Lh // r_target)), 128)
    W = max(128, min(W, 2048))                       # cap block width for VMEM
    R = -(-Lh // W)                                  # chunks per batch example
    rows = B * R
    TB = min(_round_up(rows, 8), 256)

    def est_bytes(tb):
        inp = 2 * tb * (W + 128)                     # stacked E/O block
        out = 2 * tb * W                             # stacked ye/yo block
        scr = tb * (W + 4)                           # cA scratch (single buffer)
        return 4 * (2 * (inp + out) + scr)           # in/out double-buffered

    budget = 22 * 1024 * 1024                        # leave headroom vs 32 MiB
    while TB > 8 and est_bytes(TB) > budget:
        TB = max(8, _round_up(TB // 2, 8))
    rows_pad = _round_up(rows, TB)
    return W, R, rows, TB, rows_pad


def _wavelet_kernel(eo_ref, out_ref, ca_ref):
    """db5 analysis low-pass + synthesis-from-cA for one block of rows.

    eo_ref : (2, TB, Wp)  stacked even/odd polyphase inputs (halo of 9, zero
                          padded to a 128-multiple lane width Wp = W + 128).
    out_ref: (2, TB, W)   stacked even/odd output phases (lane-dense W).
    ca_ref : (TB, W + 4)  VMEM scratch holding the approximation coeffs cA.
    """
    W = out_ref.shape[2]
    lc = W + 4                       # cA samples needed for W output pairs

    e = eo_ref.at[0]                 # zero-cost ref views
    o = eo_ref.at[1]

    # ---- DWT analysis low-pass (polyphase, first-tap init, ref-side taps) --
    # cA[k] = sum_j dec_lo[j] * x_sym[2k + 1 - j]
    acc = jnp.float32(DB5_DEC_LO[9]) * o[:, pl.ds(0, lc)]
    for t in range(1, 5):            # remaining taps hitting the odd phase
        acc = acc + jnp.float32(DB5_DEC_LO[9 - 2 * t]) * o[:, pl.ds(t, lc)]
    for t in range(1, 6):            # taps hitting the even phase
        acc = acc + jnp.float32(DB5_DEC_LO[10 - 2 * t]) * e[:, pl.ds(t, lc)]
    ca_ref[...] = acc

    # ---- IDWT from cA only (cD dropped / zero) -----------------------------
    # ya[2u + p] = sum_j rec_lo[2j + p] * cA[u + 4 - j]
    seg = ca_ref[:, pl.ds(4, W)]                       # j = 0
    ye = jnp.float32(DB5_REC_LO[0]) * seg
    yo = jnp.float32(DB5_REC_LO[1]) * seg
    for j in range(1, 5):
        seg = ca_ref[:, pl.ds(4 - j, W)]
        ye = ye + jnp.float32(DB5_REC_LO[2 * j]) * seg
        yo = yo + jnp.float32(DB5_REC_LO[2 * j + 1]) * seg

    out_ref[0, :, :] = ye
    out_ref[1, :, :] = yo


@jax.jit
def wavelet_trans_layer(x):
    """Forward pass of WaveletTransLayer.  x: (B, C, T) float -> (B, 1, C*T)."""
    B, C, T = x.shape
    N = C * T
    assert N % 2 == 0 and N >= 2 * FLEN, "need even flattened length >= 20"
    Lh = N // 2                                       # output pairs / len(ya)//2

    xf = x.reshape(B, N).astype(jnp.float32)          # flatten(1, 2)

    # pywt 'symmetric' (half-sample) extension by 9 on each side.
    xe = jnp.concatenate(
        [xf[:, :EXT][:, ::-1], xf, xf[:, N - EXT:][:, ::-1]], axis=1)
    E = xe[:, 0::2]                                   # (B, Lh + 9)
    O = xe[:, 1::2]                                   # (B, Lh + 9)

    W, R, rows, TB, rows_pad = _choose_tiles(B, Lh)
    Wp = W + 128                                      # lane-padded input width

    # Zero-pad the polyphase signals so every chunk (with its halo) exists.
    pad_sig = R * W - Lh                              # >= 0
    Ef = jnp.pad(E, ((0, 0), (0, pad_sig)))           # (B, R*W + 9)
    Of = jnp.pad(O, ((0, 0), (0, pad_sig)))

    # Fold the signal axis into sublane rows: chunks of W outputs, halo of 9.
    def fold(a):
        chunks = [a[:, r * W: r * W + W + EXT] for r in range(R)]
        return jnp.stack(chunks, axis=1).reshape(rows, W + EXT)

    EO = jnp.stack([fold(Ef), fold(Of)], axis=0)      # (2, rows, W + 9)
    EO = jnp.pad(EO, ((0, 0), (0, rows_pad - rows), (0, Wp - (W + EXT))))

    out = pl.pallas_call(
        _wavelet_kernel,
        grid=(rows_pad // TB,),
        in_specs=[pl.BlockSpec((2, TB, Wp), lambda i: (0, i, 0))],
        out_specs=pl.BlockSpec((2, TB, W), lambda i: (0, i, 0)),
        out_shape=jax.ShapeDtypeStruct((2, rows_pad, W), jnp.float32),
        scratch_shapes=[pltpu.VMEM((TB, W + 4), jnp.float32)],
        compiler_params=pltpu.CompilerParams(
            dimension_semantics=("parallel",),
            vmem_limit_bytes=32 * 1024 * 1024),
    )(EO)

    # Drop padded rows/lanes, undo the fold, interleave even/odd phases.
    ye = out[0, :rows].reshape(B, R * W)[:, :Lh]
    yo = out[1, :rows].reshape(B, R * W)[:, :Lh]
    ya = jnp.stack([ye, yo], axis=-1).reshape(B, N)
    return ya[:, None, :]                             # torch's unsqueeze(1)


def _ref_wavelet(x_np):
    """Direct (non-polyphase) float64 reference of pywt dwt+idwt('db5')."""
    dec_lo = np.asarray(DB5_DEC_LO, np.float64)
    rec_lo = np.asarray(DB5_REC_LO, np.float64)
    B = x_np.shape[0]
    xf = x_np.reshape(B, -1)
    N = xf.shape[1]
    Lc = (N + FLEN - 1) // 2
    cA = np.zeros((B, Lc), np.float64)
    for k in range(Lc):
        i = 2 * k + 1
        s = np.zeros(B, np.float64)
        for j in range(FLEN):
            idx = i - j
            if idx < 0:
                idx = -idx - 1            # half-sample symmetric (left)
            elif idx >= N:
                idx = 2 * N - 1 - idx     # half-sample symmetric (right)
            s += dec_lo[j] * xf[:, idx]
        cA[:, k] = s
    L = 2 * Lc - FLEN + 2
    ya = np.zeros((B, L), np.float64)
    for u in range(Lc - FLEN // 2 + 1):
        for j in range(FLEN // 2):
            ya[:, 2 * u] += rec_lo[2 * j] * cA[:, u + FLEN // 2 - 1 - j]
            ya[:, 2 * u + 1] += rec_lo[2 * j + 1] * cA[:, u + FLEN // 2 - 1 - j]
    return ya[:, None, :]


if __name__ == "__main__":
    key = jax.random.PRNGKey(0)
    # Two small cases: one that exercises the signal-fold path (R > 1, full
    # sublanes) and one tiny case that exercises the padding/edge path.
    shapes = [(2, 4, 512), (3, 1, 100)]
    for (B, C, T) in shapes:
        key, sub = jax.random.split(key)
        x = jax.random.normal(sub, (B, C, T), dtype=jnp.float32)

        ya = wavelet_trans_layer(x)
        jax.block_until_ready(ya)

        ref = _ref_wavelet(np.asarray(x, dtype=np.float64))
        assert ya.shape == ref.shape, (ya.shape, ref.shape)
        err = float(np.max(np.abs(np.asarray(ya, dtype=np.float64) - ref)))
        if err > 1e-4:
            raise AssertionError(
                f"kernel/reference mismatch for {(B, C, T)}: max abs err = {err}")

    print("KERNEL_OK")
</pallas_src>

<mosaic_0001>
module attributes {stable_mosaic.version = 11 : i64} {
  func.func @_wavelet_kernel(%arg0: i32, %arg1: memref<2x8x384xf32, #tpu.memory_space<vmem>>, %arg2: memref<2x8x256xf32, #tpu.memory_space<vmem>>, %arg3: memref<8x260xf32, #tpu.memory_space<vmem>>) attributes {dimension_semantics = [#tpu.dimension_semantics<parallel>], iteration_bounds = array<i64: 1>, scalar_prefetch = 0 : i64, scratch_operands = 1 : i64, tpu.core_type = #tpu.core_type<tc>, window_params = [{transform_indices = @transform_0, window_bounds = array<i64: 2, 8, 384>}, {transform_indices = @transform_1, window_bounds = array<i64: 2, 8, 256>}]} {
    %c1_i32 = arith.constant 1 : i32
    %c0_i32 = arith.constant 0 : i32
    %c0_i32_0 = arith.constant 0 : i32
    %0 = tpu.memref_slice %arg1[%c1_i32, %c0_i32, %c0_i32_0] : memref<2x8x384xf32, #tpu.memory_space<vmem>> -> memref<1x8x384xf32, #tpu.memory_space<vmem>>
    %1 = tpu.memref_squeeze %0 : memref<1x8x384xf32, #tpu.memory_space<vmem>> -> memref<8x384xf32, #tpu.memory_space<vmem>>
    %c0 = arith.constant 0 : index
    %c0_1 = arith.constant 0 : index
    %2 = vector.load %1[%c0, %c0_1] : memref<8x384xf32, #tpu.memory_space<vmem>>, vector<8x260xf32>
    %cst = arith.constant 0.160102397 : f32
    %3 = vector.broadcast %cst : f32 to vector<8x260xf32>
    %4 = arith.mulf %3, %2 : vector<8x260xf32>
    %c1_i32_2 = arith.constant 1 : i32
    %c0_i32_3 = arith.constant 0 : i32
    %c0_i32_4 = arith.constant 0 : i32
    %5 = tpu.memref_slice %arg1[%c1_i32_2, %c0_i32_3, %c0_i32_4] : memref<2x8x384xf32, #tpu.memory_space<vmem>> -> memref<1x8x384xf32, #tpu.memory_space<vmem>>
    %6 = tpu.memref_squeeze %5 : memref<1x8x384xf32, #tpu.memory_space<vmem>> -> memref<8x384xf32, #tpu.memory_space<vmem>>
    %c0_5 = arith.constant 0 : index
    %c1 = arith.constant 1 : index
    %7 = vector.load %6[%c0_5, %c1] : memref<8x384xf32, #tpu.memory_space<vmem>>, vector<8x260xf32>
    %cst_6 = arith.constant 0.72430855 : f32
    %8 = vector.broadcast %cst_6 : f32 to vector<8x260xf32>
    %9 = arith.mulf %8, %7 : vector<8x260xf32>
    %10 = arith.addf %4, %9 : vector<8x260xf32>
    %c1_i32_7 = arith.constant 1 : i32
    %c0_i32_8 = arith.constant 0 : i32
    %c0_i32_9 = arith.constant 0 : i32
    %11 = tpu.memref_slice %arg1[%c1_i32_7, %c0_i32_8, %c0_i32_9] : memref<2x8x384xf32, #tpu.memory_space<vmem>> -> memref<1x8x384xf32, #tpu.memory_space<vmem>>
    %12 = tpu.memref_squeeze %11 : memref<1x8x384xf32, #tpu.memory_space<vmem>> -> memref<8x384xf32, #tpu.memory_space<vmem>>
    %c0_10 = arith.constant 0 : index
    %c2 = arith.constant 2 : index
    %13 = vector.load %12[%c0_10, %c2] : memref<8x384xf32, #tpu.memory_space<vmem>>, vector<8x260xf32>
    %cst_11 = arith.constant -0.242294893 : f32
    %14 = vector.broadcast %cst_11 : f32 to vector<8x260xf32>
    %15 = arith.mulf %14, %13 : vector<8x260xf32>
    %16 = arith.addf %10, %15 : vector<8x260xf32>
    %c1_i32_12 = arith.constant 1 : i32
    %c0_i32_13 = arith.constant 0 : i32
    %c0_i32_14 = arith.constant 0 : i32
    %17 = tpu.memref_slice %arg1[%c1_i32_12, %c0_i32_13, %c0_i32_14] : memref<2x8x384xf32, #tpu.memory_space<vmem>> -> memref<1x8x384xf32, #tpu.memory_space<vmem>>
    %18 = tpu.memref_squeeze %17 : memref<1x8x384xf32, #tpu.memory_space<vmem>> -> memref<8x384xf32, #tpu.memory_space<vmem>>
    %c0_15 = arith.constant 0 : index
    %c3 = arith.constant 3 : index
    %19 = vector.load %18[%c0_15, %c3] : memref<8x384xf32, #tpu.memory_space<vmem>>, vector<8x260xf32>
    %cst_16 = arith.constant 7.757150e-02 : f32
    %20 = vector.broadcast %cst_16 : f32 to vector<8x260xf32>
    %21 = arith.mulf %20, %19 : vector<8x260xf32>
    %22 = arith.addf %16, %21 : vector<8x260xf32>
    %c1_i32_17 = arith.constant 1 : i32
    %c0_i32_18 = arith.constant 0 : i32
    %c0_i32_19 = arith.constant 0 : i32
    %23 = tpu.memref_slice %arg1[%c1_i32_17, %c0_i32_18, %c0_i32_19] : memref<2x8x384xf32, #tpu.memory_space<vmem>> -> memref<1x8x384xf32, #tpu.memory_space<vmem>>
    %24 = tpu.memref_squeeze %23 : memref<1x8x384xf32, #tpu.memory_space<vmem>> -> memref<8x384xf32, #tpu.memory_space<vmem>>
    %c0_20 = arith.constant 0 : index
    %c4 = arith.constant 4 : index
    %25 = vector.load %24[%c0_20, %c4] : memref<8x384xf32, #tpu.memory_space<vmem>>, vector<8x260xf32>
    %cst_21 = arith.constant -0.0125807524 : f32
    %26 = vector.broadcast %cst_21 : f32 to vector<8x260xf32>
    %27 = arith.mulf %26, %25 : vector<8x260xf32>
    %28 = arith.addf %22, %27 : vector<8x260xf32>
    %c0_i32_22 = arith.constant 0 : i32
    %c0_i32_23 = arith.constant 0 : i32
    %c0_i32_24 = arith.constant 0 : i32
    %29 = tpu.memref_slice %arg1[%c0_i32_22, %c0_i32_23, %c0_i32_24] : memref<2x8x384xf32, #tpu.memory_space<vmem>> -> memref<1x8x384xf32, #tpu.memory_space<vmem>>
    %30 = tpu.memref_squeeze %29 : memref<1x8x384xf32, #tpu.memory_space<vmem>> -> memref<8x384xf32, #tpu.memory_space<vmem>>
    %c0_25 = arith.constant 0 : index
    %c1_26 = arith.constant 1 : index
    %31 = vector.load %30[%c0_25, %c1_26] : memref<8x384xf32, #tpu.memory_space<vmem>>, vector<8x260xf32>
    %cst_27 = arith.constant 0.603829265 : f32
    %32 = vector.broadcast %cst_27 : f32 to vector<8x260xf32>
    %33 = arith.mulf %32, %31 : vector<8x260xf32>
    %34 = arith.addf %28, %33 : vector<8x260xf32>
    %c0_i32_28 = arith.constant 0 : i32
    %c0_i32_29 = arith.constant 0 : i32
    %c0_i32_30 = arith.constant 0 : i32
    %35 = tpu.memref_slice %arg1[%c0_i32_28, %c0_i32_29, %c0_i32_30] : memref<2x8x384xf32, #tpu.memory_space<vmem>> -> memref<1x8x384xf32, #tpu.memory_space<vmem>>
    %36 = tpu.memref_squeeze %35 : memref<1x8x384xf32, #tpu.memory_space<vmem>> -> memref<8x384xf32, #tpu.memory_space<vmem>>
    %c0_31 = arith.constant 0 : index
    %c2_32 = arith.constant 2 : index
    %37 = vector.load %36[%c0_31, %c2_32] : memref<8x384xf32, #tpu.memory_space<vmem>>, vector<8x260xf32>
    %cst_33 = arith.constant 0.138428152 : f32
    %38 = vector.broadcast %cst_33 : f32 to vector<8x260xf32>
    %39 = arith.mulf %38, %37 : vector<8x260xf32>
    %40 = arith.addf %34, %39 : vector<8x260xf32>
    %c0_i32_34 = arith.constant 0 : i32
    %c0_i32_35 = arith.constant 0 : i32
    %c0_i32_36 = arith.constant 0 : i32
    %41 = tpu.memref_slice %arg1[%c0_i32_34, %c0_i32_35, %c0_i32_36] : memref<2x8x384xf32, #tpu.memory_space<vmem>> -> memref<1x8x384xf32, #tpu.memory_space<vmem>>
    %42 = tpu.memref_squeeze %41 : memref<1x8x384xf32, #tpu.memory_space<vmem>> -> memref<8x384xf32, #tpu.memory_space<vmem>>
    %c0_37 = arith.constant 0 : index
    %c3_38 = arith.constant 3 : index
    %43 = vector.load %42[%c0_37, %c3_38] : memref<8x384xf32, #tpu.memory_space<vmem>>, vector<8x260xf32>
    %cst_39 = arith.constant -0.0322448686 : f32
    %44 = vector.broadcast %cst_39 : f32 to vector<8x260xf32>
    %45 = arith.mulf %44, %43 : vector<8x260xf32>
    %46 = arith.addf %40, %45 : vector<8x260xf32>
    %c0_i32_40 = arith.constant 0 : i32
    %c0_i32_41 = arith.constant 0 : i32
    %c0_i32_42 = arith.constant 0 : i32
    %47 = tpu.memref_slice %arg1[%c0_i32_40, %c0_i32_41, %c0_i32_42] : memref<2x8x384xf32, #tpu.memory_space<vmem>> -> memref<1x8x384xf32, #tpu.memory_space<vmem>>
    %48 = tpu.memref_squeeze %47 : memref<1x8x384xf32, #tpu.memory_space<vmem>> -> memref<8x384xf32, #tpu.memory_space<vmem>>
    %c0_43 = arith.constant 0 : index
    %c4_44 = arith.constant 4 : index
    %49 = vector.load %48[%c0_43, %c4_44] : memref<8x384xf32, #tpu.memory_space<vmem>>, vector<8x260xf32>
    %cst_45 = arith.constant -6.241490e-03 : f32
    %50 = vector.broadcast %cst_45 : f32 to vector<8x260xf32>
    %51 = arith.mulf %50, %49 : vector<8x260xf32>
    %52 = arith.addf %46, %51 : vector<8x260xf32>
    %c0_i32_46 = arith.constant 0 : i32
    %c0_i32_47 = arith.constant 0 : i32
    %c0_i32_48 = arith.constant 0 : i32
    %53 = tpu.memref_slice %arg1[%c0_i32_46, %c0_i32_47, %c0_i32_48] : memref<2x8x384xf32, #tpu.memory_space<vmem>> -> memref<1x8x384xf32, #tpu.memory_space<vmem>>
    %54 = tpu.memref_squeeze %53 : memref<1x8x384xf32, #tpu.memory_space<vmem>> -> memref<8x384xf32, #tpu.memory_space<vmem>>
    %c0_49 = arith.constant 0 : index
    %c5 = arith.constant 5 : index
    %55 = vector.load %54[%c0_49, %c5] : memref<8x384xf32, #tpu.memory_space<vmem>>, vector<8x260xf32>
    %cst_50 = arith.constant 0.00333572528 : f32
    %56 = vector.broadcast %cst_50 : f32 to vector<8x260xf32>
    %57 = arith.mulf %56, %55 : vector<8x260xf32>
    %58 = arith.addf %52, %57 : vector<8x260xf32>
    %c0_51 = arith.constant 0 : index
    %c0_52 = arith.constant 0 : index
    %59 = vector.load %arg3[%c0_51, %c0_52] : memref<8x260xf32, #tpu.memory_space<vmem>>, vector<8x260xf32>
    tpu.vector_store %arg3[%c0_51, %c0_52], %58 {strides = array<i32>} : memref<8x260xf32, #tpu.memory_space<vmem>>, vector<8x260xf32>,
    %c0_53 = arith.constant 0 : index
    %c4_54 = arith.constant 4 : index
    %60 = vector.load %arg3[%c0_53, %c4_54] : memref<8x260xf32, #tpu.memory_space<vmem>>, vector<8x256xf32>
    %cst_55 = arith.constant 0.160102397 : f32
    %61 = vector.broadcast %cst_55 : f32 to vector<8x256xf32>
    %62 = arith.mulf %61, %60 : vector<8x256xf32>
    %cst_56 = arith.constant 0.603829265 : f32
    %63 = vector.broadcast %cst_56 : f32 to vector<8x256xf32>
    %64 = arith.mulf %63, %60 : vector<8x256xf32>
    %c0_57 = arith.constant 0 : index
    %c3_58 = arith.constant 3 : index
    %65 = vector.load %arg3[%c0_57, %c3_58] : memref<8x260xf32, #tpu.memory_space<vmem>>, vector<8x256xf32>
    %cst_59 = arith.constant 0.72430855 : f32
    %66 = vector.broadcast %cst_59 : f32 to vector<8x256xf32>
    %67 = arith.mulf %66, %65 : vector<8x256xf32>
    %68 = arith.addf %62, %67 : vector<8x256xf32>
    %cst_60 = arith.constant 0.138428152 : f32
    %69 = vector.broadcast %cst_60 : f32 to vector<8x256xf32>
    %70 = arith.mulf %69, %65 : vector<8x256xf32>
    %71 = arith.addf %64, %70 : vector<8x256xf32>
    %c0_61 = arith.constant 0 : index
    %c2_62 = arith.constant 2 : index
    %72 = vector.load %arg3[%c0_61, %c2_62] : memref<8x260xf32, #tpu.memory_space<vmem>>, vector<8x256xf32>
    %cst_63 = arith.constant -0.242294893 : f32
    %73 = vector.broadcast %cst_63 : f32 to vector<8x256xf32>
    %74 = arith.mulf %73, %72 : vector<8x256xf32>
    %75 = arith.addf %68, %74 : vector<8x256xf32>
    %cst_64 = arith.constant -0.0322448686 : f32
    %76 = vector.broadcast %cst_64 : f32 to vector<8x256xf32>
    %77 = arith.mulf %76, %72 : vector<8x256xf32>
    %78 = arith.addf %71, %77 : vector<8x256xf32>
    %c0_65 = arith.constant 0 : index
    %c1_66 = arith.constant 1 : index
    %79 = vector.load %arg3[%c0_65, %c1_66] : memref<8x260xf32, #tpu.memory_space<vmem>>, vector<8x256xf32>
    %cst_67 = arith.constant 7.757150e-02 : f32
    %80 = vector.broadcast %cst_67 : f32 to vector<8x256xf32>
    %81 = arith.mulf %80, %79 : vector<8x256xf32>
    %82 = arith.addf %75, %81 : vector<8x256xf32>
    %cst_68 = arith.constant -6.241490e-03 : f32
    %83 = vector.broadcast %cst_68 : f32 to vector<8x256xf32>
    %84 = arith.mulf %83, %79 : vector<8x256xf32>
    %85 = arith.addf %78, %84 : vector<8x256xf32>
    %c0_69 = arith.constant 0 : index
    %c0_70 = arith.constant 0 : index
    %86 = vector.load %arg3[%c0_69, %c0_70] : memref<8x260xf32, #tpu.memory_space<vmem>>, vector<8x256xf32>
    %cst_71 = arith.constant -0.0125807524 : f32
    %87 = vector.broadcast %cst_71 : f32 to vector<8x256xf32>
    %88 = arith.mulf %87, %86 : vector<8x256xf32>
    %89 = arith.addf %82, %88 : vector<8x256xf32>
    %cst_72 = arith.constant 0.00333572528 : f32
    %90 = vector.broadcast %cst_72 : f32 to vector<8x256xf32>
    %91 = arith.mulf %90, %86 : vector<8x256xf32>
    %92 = arith.addf %85, %91 : vector<8x256xf32>
    %c0_73 = arith.constant 0 : index
    %c0_74 = arith.constant 0 : index
    %c0_75 = arith.constant 0 : index
    %93 = vector.load %arg2[%c0_73, %c0_74, %c0_75] : memref<2x8x256xf32, #tpu.memory_space<vmem>>, vector<1x8x256xf32>
    %94 = vector.shape_cast %93 : vector<1x8x256xf32> to vector<8x256xf32>
    %95 = vector.shape_cast %89 : vector<8x256xf32> to vector<1x8x256xf32>
    tpu.vector_store %arg2[%c0_73, %c0_74, %c0_75], %95 {strides = array<i32>} : memref<2x8x256xf32, #tpu.memory_space<vmem>>, vector<1x8x256xf32>,
    %c1_76 = arith.constant 1 : index
    %c0_77 = arith.constant 0 : index
    %c0_78 = arith.constant 0 : index
    %96 = vector.load %arg2[%c1_76, %c0_77, %c0_78] : memref<2x8x256xf32, #tpu.memory_space<vmem>>, vector<1x8x256xf32>
    %97 = vector.shape_cast %96 : vector<1x8x256xf32> to vector<8x256xf32>
    %98 = vector.shape_cast %92 : vector<8x256xf32> to vector<1x8x256xf32>
    tpu.vector_store %arg2[%c1_76, %c0_77, %c0_78], %98 {strides = array<i32>} : memref<2x8x256xf32, #tpu.memory_space<vmem>>, vector<1x8x256xf32>,
    return
  }
  func.func @transform_0(%arg0: i32) -> (i32, i32, i32) {
    %c0_i32 = arith.constant 0 : i32
    %c0_i32_0 = arith.constant 0 : i32
    %c0_i32_1 = arith.constant 0 : i32
    return %c0_i32, %arg0, %c0_i32_0 : i32, i32, i32
  }
  func.func @transform_1(%arg0: i32) -> (i32, i32, i32) {
    %c0_i32 = arith.constant 0 : i32
    %c0_i32_0 = arith.constant 0 : i32
    %c0_i32_1 = arith.constant 0 : i32
    return %c0_i32, %arg0, %c0_i32_0 : i32, i32, i32
  }
}

</mosaic_0001>

<llo_original>
// kernel: squeeze.0
$region0: #{squeeze.0}
  %s0 = inlined_call_operand.vmem [shape: f32[1,8,256], index: 0, kind: input, shape index: {}]
  %s1 = inlined_call_operand.vmem [shape: f32[2,1024,1], index: 1, kind: output, shape index: {}]
  %v2 = vld [vmem:[%s0] sm:$0xff]
  %vm3 = vcmask 7168
  %4 = vst.msk [vmem:[%s1] sm:$0x1] %vm3, %v2
  %s5 = scalar_lea.vmem %s1, 255
  %6 = vst.msk [vmem:[%s5] sm:$0x2] %vm3, %v2
  %s7 = scalar_lea.vmem %s1, 510
  %8 = vst.msk [vmem:[%s7] sm:$0x4] %vm3, %v2
  %s9 = scalar_lea.vmem %s1, 765
  %10 = vst.msk [vmem:[%s9] sm:$0x8] %vm3, %v2
  %s11 = scalar_lea.vmem %s1, 1020
  %12 = vst.msk [vmem:[%s11] sm:$0x10] %vm3, %v2
  %s13 = scalar_lea.vmem %s1, 1275
  %14 = vst.msk [vmem:[%s13] sm:$0x20] %vm3, %v2
  %s15 = scalar_lea.vmem %s1, 1530
  %16 = vst.msk [vmem:[%s15] sm:$0x40] %vm3, %v2
  %s17 = scalar_lea.vmem %s1, 1785
  %18 = vst.msk [vmem:[%s17] sm:$0x80] %vm3, %v2
  %s19 = scalar_lea.vmem %s0, 8
  %v20 = vld [vmem:[%s19] sm:$0xff]
  %vm21 = vcmask 7168
  %s22 = scalar_lea.vmem %s1, 128
  %23 = vst.msk [vmem:[%s22] sm:$0x1] %vm21, %v20
  %s24 = scalar_lea.vmem %s1, 383
  %25 = vst.msk [vmem:[%s24] sm:$0x2] %vm21, %v20
  %s26 = scalar_lea.vmem %s1, 638
  %27 = vst.msk [vmem:[%s26] sm:$0x4] %vm21, %v20
  %s28 = scalar_lea.vmem %s1, 893
  %29 = vst.msk [vmem:[%s28] sm:$0x8] %vm21, %v20
  %s30 = scalar_lea.vmem %s1, 1148
  %31 = vst.msk [vmem:[%s30] sm:$0x10] %vm21, %v20
  %s32 = scalar_lea.vmem %s1, 1403
  %33 = vst.msk [vmem:[%s32] sm:$0x20] %vm21, %v20
  %s34 = scalar_lea.vmem %s1, 1658
  %35 = vst.msk [vmem:[%s34] sm:$0x40] %vm21, %v20
  %s36 = scalar_lea.vmem %s1, 1913
  %37 = vst.msk [vmem:[%s36] sm:$0x80] %vm21, %v20
  %v38 = vld [vmem:[%s0] sm:$0xff]
  %39 = vrot.lane.b32.xlu0 %v38, 127
  %v40 = vpop.permute.xlu0 %39
  %vm41 = vcmask 7168
  %s42 = scalar_lea.vmem %s1, 1
  %43 = vst.msk [vmem:[%s42] sm:$0x1] %vm41, %v40
  %s44 = scalar_lea.vmem %s1, 256
  %45 = vst.msk [vmem:[%s44] sm:$0x2] %vm41, %v40
  %s46 = scalar_lea.vmem %s1, 511
  %47 = vst.msk [vmem:[%s46] sm:$0x4] %vm41, %v40
  %s48 = scalar_lea.vmem %s1, 766
  %49 = vst.msk [vmem:[%s48] sm:$0x8] %vm41, %v40
  %s50 = scalar_lea.vmem %s1, 1021
  %51 = vst.msk [vmem:[%s50] sm:$0x10] %vm41, %v40
  %s52 = scalar_lea.vmem %s1, 1276
  %53 = vst.msk [vmem:[%s52] sm:$0x20] %vm41, %v40
  %s54 = scalar_lea.vmem %s1, 1531
  %55 = vst.msk [vmem:[%s54] sm:$0x40] %vm41, %v40
  %s56 = scalar_lea.vmem %s1, 1786
  %57 = vst.msk [vmem:[%s56] sm:$0x80] %vm41, %v40
  %s58 = scalar_lea.vmem %s0, 8
  %v59 = vld [vmem:[%s58] sm:$0xff]
  %60 = vrot.lane.b32.xlu0 %v59, 127
  %v61 = vpop.permute.xlu0 %60
  %vm62 = vcmask 7168
  %s63 = scalar_lea.vmem %s1, 129
  %64 = vst.msk [vmem:[%s63] sm:$0x1] %vm62, %v61
  %s65 = scalar_lea.vmem %s1, 384
  %66 = vst.msk [vmem:[%s65] sm:$0x2] %vm62, %v61
  %s67 = scalar_lea.vmem %s1, 639
  %68 = vst.msk [vmem:[%s67] sm:$0x4] %vm62, %v61
  %s69 = scalar_lea.vmem %s1, 894
  %70 = vst.msk [vmem:[%s69] sm:$0x8] %vm62, %v61
  %s71 = scalar_lea.vmem %s1, 1149
  %72 = vst.msk [vmem:[%s71] sm:$0x10] %vm62, %v61
  %s73 = scalar_lea.vmem %s1, 1404
  %74 = vst.msk [vmem:[%s73] sm:$0x20] %vm62, %v61
  %s75 = scalar_lea.vmem %s1, 1659
  %76 = vst.msk [vmem:[%s75] sm:$0x40] %vm62, %v61
  %s77 = scalar_lea.vmem %s1, 1914
  %78 = vst.msk [vmem:[%s77] sm:$0x80] %vm62, %v61
  %v79 = vld [vmem:[%s0] sm:$0xff]
  %80 = vrot.lane.b32.xlu0 %v79, 126
  %v81 = vpop.permute.xlu0 %80
  %vm82 = vcmask 7168
  %s83 = scalar_lea.vmem %s1, 2
  %84 = vst.msk [vmem:[%s83] sm:$0x1] %vm82, %v81
  %s85 = scalar_lea.vmem %s1, 257
  %86 = vst.msk [vmem:[%s85] sm:$0x2] %vm82, %v81
  %s87 = scalar_lea.vmem %s1, 512
  %88 = vst.msk [vmem:[%s87] sm:$0x4] %vm82, %v81
  %s89 = scalar_lea.vmem %s1, 767
  %90 = vst.msk [vmem:[%s89] sm:$0x8] %vm82, %v81
  %s91 = scalar_lea.vmem %s1, 1022
  %92 = vst.msk [vmem:[%s91] sm:$0x10] %vm82, %v81
  %s93 = scalar_lea.vmem %s1, 1277
  %94 = vst.msk [vmem:[%s93] sm:$0x20] %vm82, %v81
  %s95 = scalar_lea.vmem %s1, 1532
  %96 = vst.msk [vmem:[%s95] sm:$0x40] %vm82, %v81
  %s97 = scalar_lea.vmem %s1, 1787
  %98 = vst.msk [vmem:[%s97] sm:$0x80] %vm82, %v81
  %s99 = scalar_lea.vmem %s0, 8
  %v100 = vld [vmem:[%s99] sm:$0xff]
  %101 = vrot.lane.b32.xlu0 %v100, 126
  %v102 = vpop.permute.xlu0 %101
  %vm103 = vcmask 7168
  %s104 = scalar_lea.vmem %s1, 130
  %105 = vst.msk [vmem:[%s104] sm:$0x1] %vm103, %v102
  %s106 = scalar_lea.vmem %s1, 385
  %107 = vst.msk [vmem:[%s106] sm:$0x2] %vm103, %v102
  %s108 = scalar_lea.vmem %s1, 640
  %109 = vst.msk [vmem:[%s108] sm:$0x4] %vm103, %v102
  %s110 = scalar_lea.vmem %s1, 895
  %111 = vst.msk [vmem:[%s110] sm:$0x8] %vm103, %v102
  %s112 = scalar_lea.vmem %s1, 1150
  %113 = vst.msk [vmem:[%s112] sm:$0x10] %vm103, %v102
  %s114 = scalar_lea.vmem %s1, 1405
  %115 = vst.msk [vmem:[%s114] sm:$0x20] %vm103, %v102
  %s116 = scalar_lea.vmem %s1, 1660
  %117 = vst.msk [vmem:[%s116] sm:$0x40] %vm103, %v102
  %s118 = scalar_lea.vmem %s1, 1915
  %119 = vst.msk [vmem:[%s118] sm:$0x80] %vm103, %v102
  %v120 = vld [vmem:[%s0] sm:$0xff]
  %121 = vrot.lane.b32.xlu0 %v120, 125
  %v122 = vpop.permute.xlu0 %121
  %vm123 = vcmask 7168
  %s124 = scalar_lea.vmem %s1, 3
  %125 = vst.msk [vmem:[%s124] sm:$0x1] %vm123, %v122
  %s126 = scalar_lea.vmem %s1, 258
  %127 = vst.msk [vmem:[%s126] sm:$0x2] %vm123, %v122
  %s128 = scalar_lea.vmem %s1, 513
  %129 = vst.msk [vmem:[%s128] sm:$0x4] %vm123, %v122
  %s130 = scalar_lea.vmem %s1, 768
  %131 = vst.msk [vmem:[%s130] sm:$0x8] %vm123, %v122
  %s132 = scalar_lea.vmem %s1, 1023
  %133 = vst.msk [vmem:[%s132] sm:$0x10] %vm123, %v122
  %s134 = scalar_lea.vmem %s1, 1278
  %135 = vst.msk [vmem:[%s134] sm:$0x20] %vm123, %v122
  %s136 = scalar_lea.vmem %s1, 1533
  %137 = vst.msk [vmem:[%s136] sm:$0x40] %vm123, %v122
  %s138 = scalar_lea.vmem %s1, 1788
  %139 = vst.msk [vmem:[%s138] sm:$0x80] %vm123, %v122
  %s140 = scalar_lea.vmem %s0, 8
  %v141 = vld [vmem:[%s140] sm:$0xff]
  %142 = vrot.lane.b32.xlu0 %v141, 125
  %v143 = vpop.permute.xlu0 %142
  %vm144 = vcmask 7168
  %s145 = scalar_lea.vmem %s1, 131
  %146 = vst.msk [vmem:[%s145] sm:$0x1] %vm144, %v143
  %s147 = scalar_lea.vmem %s1, 386
  %148 = vst.msk [vmem:[%s147] sm:$0x2] %vm144, %v143
  %s149 = scalar_lea.vmem %s1, 641
  %150 = vst.msk [vmem:[%s149] sm:$0x4] %vm144, %v143
  %s151 = scalar_lea.vmem %s1, 896
  %152 = vst.msk [vmem:[%s151] sm:$0x8] %vm144, %v143
  %s153 = scalar_lea.vmem %s1, 1151
  %154 = vst.msk [vmem:[%s153] sm:$0x10] %vm144, %v143
  %s155 = scalar_lea.vmem %s1, 1406
  %156 = vst.msk [vmem:[%s155] sm:$0x20] %vm144, %v143
  %s157 = scalar_lea.vmem %s1, 1661
  %158 = vst.msk [vmem:[%s157] sm:$0x40] %vm144, %v143
  %s159 = scalar_lea.vmem %s1, 1916
  %160 = vst.msk [vmem:[%s159] sm:$0x80] %vm144, %v143
  %v161 = vld [vmem:[%s0] sm:$0xff]
  %162 = vrot.lane.b32.xlu0 %v161, 124
  %v163 = vpop.permute.xlu0 %162
  %vm164 = vcmask 7168
  %s165 = scalar_lea.vmem %s1, 4
  %166 = vst.msk [vmem:[%s165] sm:$0x1] %vm164, %v163
  %s167 = scalar_lea.vmem %s1, 259
  %168 = vst.msk [vmem:[%s167] sm:$0x2] %vm164, %v163
  %s169 = scalar_lea.vmem %s1, 514
  %170 = vst.msk [vmem:[%s169] sm:$0x4] %vm164, %v163
  %s171 = scalar_lea.vmem %s1, 769
  %172 = vst.msk [vmem:[%s171] sm:$0x8] %vm164, %v163
  %s173 = scalar_lea.vmem %s1, 1024
  %174 = vst.msk [vmem:[%s173] sm:$0x10] %vm164, %v163
  %s175 = scalar_lea.vmem %s1, 1279
  %176 = vst.msk [vmem:[%s175] sm:$0x20] %vm164, %v163
  %s177 = scalar_lea.vmem %s1, 1534
  %178 = vst.msk [vmem:[%s177] sm:$0x40] %vm164, %v163
  %s179 = scalar_lea.vmem %s1, 1789
  %180 = vst.msk [vmem:[%s179] sm:$0x80] %vm164, %v163
  %s181 = scalar_lea.vmem %s0, 8
  %v182 = vld [vmem:[%s181] sm:$0xff]
  %183 = vrot.lane.b32.xlu0 %v182, 124
  %v184 = vpop.permute.xlu0 %183
  %vm185 = vcmask 7168
  %s186 = scalar_lea.vmem %s1, 132
  %187 = vst.msk [vmem:[%s186] sm:$0x1] %vm185, %v184
  %s188 = scalar_lea.vmem %s1, 387
  %189 = vst.msk [vmem:[%s188] sm:$0x2] %vm185, %v184
  %s190 = scalar_lea.vmem %s1, 642
  %191 = vst.msk [vmem:[%s190] sm:$0x4] %vm185, %v184
  %s192 = scalar_lea.vmem %s1, 897
  %193 = vst.msk [vmem:[%s192] sm:$0x8] %vm185, %v184
  %s194 = scalar_lea.vmem %s1, 1152
  %195 = vst.msk [vmem:[%s194] sm:$0x10] %vm185, %v184
  %s196 = scalar_lea.vmem %s1, 1407
  %197 = vst.msk [vmem:[%s196] sm:$0x20] %vm185, %v184
  %s198 = scalar_lea.vmem %s1, 1662
  %199 = vst.msk [vmem:[%s198] sm:$0x40] %vm185, %v184
  %s200 = scalar_lea.vmem %s1, 1917
  %201 = vst.msk [vmem:[%s200] sm:$0x80] %vm185, %v184
  %v202 = vld [vmem:[%s0] sm:$0xff]
  %203 = vrot.lane.b32.xlu0 %v202, 123
  %v204 = vpop.permute.xlu0 %203
  %vm205 = vcmask 7168
  %s206 = scalar_lea.vmem %s1, 5
  %207 = vst.msk [vmem:[%s206] sm:$0x1] %vm205, %v204
  %s208 = scalar_lea.vmem %s1, 260
  %209 = vst.msk [vmem:[%s208] sm:$0x2] %vm205, %v204
  %s210 = scalar_lea.vmem %s1, 515
  %211 = vst.msk [vmem:[%s210] sm:$0x4] %vm205, %v204
  %s212 = scalar_lea.vmem %s1, 770
  %213 = vst.msk [vmem:[%s212] sm:$0x8] %vm205, %v204
  %s214 = scalar_lea.vmem %s1, 1025
  %215 = vst.msk [vmem:[%s214] sm:$0x10] %vm205, %v204
  %s216 = scalar_lea.vmem %s1, 1280
  %217 = vst.msk [vmem:[%s216] sm:$0x20] %vm205, %v204
  %s218 = scalar_lea.vmem %s1, 1535
  %219 = vst.msk [vmem:[%s218] sm:$0x40] %vm205, %v204
  %s220 = scalar_lea.vmem %s1, 1790
  %221 = vst.msk [vmem:[%s220] sm:$0x80] %vm205, %v204
  %s222 = scalar_lea.vmem %s0, 8
  %v223 = vld [vmem:[%s222] sm:$0xff]
  %224 = vrot.lane.b32.xlu0 %v223, 123
  %v225 = vpop.permute.xlu0 %224
  %vm226 = vcmask 7168
  %s227 = scalar_lea.vmem %s1, 133
  %228 = vst.msk [vmem:[%s227] sm:$0x1] %vm226, %v225
  %s229 = scalar_lea.vmem %s1, 388
  %230 = vst.msk [vmem:[%s229] sm:$0x2] %vm226, %v225
  %s231 = scalar_lea.vmem %s1, 643
  %232 = vst.msk [vmem:[%s231] sm:$0x4] %vm226, %v225
  %s233 = scalar_lea.vmem %s1, 898
  %234 = vst.msk [vmem:[%s233] sm:$0x8] %vm226, %v225
  %s235 = scalar_lea.vmem %s1, 1153
  %236 = vst.msk [vmem:[%s235] sm:$0x10] %vm226, %v225
  %s237 = scalar_lea.vmem %s1, 1408
  %238 = vst.msk [vmem:[%s237] sm:$0x20] %vm226, %v225
  %s239 = scalar_lea.vmem %s1, 1663
  %240 = vst.msk [vmem:[%s239] sm:$0x40] %vm226, %v225
  %s241 = scalar_lea.vmem %s1, 1918
  %242 = vst.msk [vmem:[%s241] sm:$0x80] %vm226, %v225
  %v243 = vld [vmem:[%s0] sm:$0xff]
  %244 = vrot.lane.b32.xlu0 %v243, 122
  %v245 = vpop.permute.xlu0 %244
  %vm246 = vcmask 7168
  %s247 = scalar_lea.vmem %s1, 6
  %248 = vst.msk [vmem:[%s247] sm:$0x1] %vm246, %v245
  %s249 = scalar_lea.vmem %s1, 261
  %250 = vst.msk [vmem:[%s249] sm:$0x2] %vm246, %v245
  %s251 = scalar_lea.vmem %s1, 516
  %252 = vst.msk [vmem:[%s251] sm:$0x4] %vm246, %v245
  %s253 = scalar_lea.vmem %s1, 771
  %254 = vst.msk [vmem:[%s253] sm:$0x8] %vm246, %v245
  %s255 = scalar_lea.vmem %s1, 1026
  %256 = vst.msk [vmem:[%s255] sm:$0x10] %vm246, %v245
  %s257 = scalar_lea.vmem %s1, 1281
  %258 = vst.msk [vmem:[%s257] sm:$0x20] %vm246, %v245
  %s259 = scalar_lea.vmem %s1, 1536
  %260 = vst.msk [vmem:[%s259] sm:$0x40] %vm246, %v245
  %s261 = scalar_lea.vmem %s1, 1791
  %262 = vst.msk [vmem:[%s261] sm:$0x80] %vm246, %v245
  %s263 = scalar_lea.vmem %s0, 8
  %v264 = vld [vmem:[%s263] sm:$0xff]
  %265 = vrot.lane.b32.xlu0 %v264, 122
  %v266 = vpop.permute.xlu0 %265
  %vm267 = vcmask 7168
  %s268 = scalar_lea.vmem %s1, 134
  %269 = vst.msk [vmem:[%s268] sm:$0x1] %vm267, %v266
  %s270 = scalar_lea.vmem %s1, 389
  %271 = vst.msk [vmem:[%s270] sm:$0x2] %vm267, %v266
  %s272 = scalar_lea.vmem %s1, 644
  %273 = vst.msk [vmem:[%s272] sm:$0x4] %vm267, %v266
  %s274 = scalar_lea.vmem %s1, 899
  %275 = vst.msk [vmem:[%s274] sm:$0x8] %vm267, %v266
  %s276 = scalar_lea.vmem %s1, 1154
  %277 = vst.msk [vmem:[%s276] sm:$0x10] %vm267, %v266
  %s278 = scalar_lea.vmem %s1, 1409
  %279 = vst.msk [vmem:[%s278] sm:$0x20] %vm267, %v266
  %s280 = scalar_lea.vmem %s1, 1664
  %281 = vst.msk [vmem:[%s280] sm:$0x40] %vm267, %v266
  %s282 = scalar_lea.vmem %s1, 1919
  %283 = vst.msk [vmem:[%s282] sm:$0x80] %vm267, %v266
  %v284 = vld [vmem:[%s0] sm:$0xff]
  %285 = vrot.lane.b32.xlu0 %v284, 121
  %v286 = vpop.permute.xlu0 %285
  %vm287 = vcmask 7168
  %s288 = scalar_lea.vmem %s1, 7
  %289 = vst.msk [vmem:[%s288] sm:$0x1] %vm287, %v286
  %s290 = scalar_lea.vmem %s1, 262
  %291 = vst.msk [vmem:[%s290] sm:$0x2] %vm287, %v286
  %s292 = scalar_lea.vmem %s1, 517
  %293 = vst.msk [vmem:[%s292] sm:$0x4] %vm287, %v286
  %s294 = scalar_lea.vmem %s1, 772
  %295 = vst.msk [vmem:[%s294] sm:$0x8] %vm287, %v286
  %s296 = scalar_lea.vmem %s1, 1027
  %297 = vst.msk [vmem:[%s296] sm:$0x10] %vm287, %v286
  %s298 = scalar_lea.vmem %s1, 1282
  %299 = vst.msk [vmem:[%s298] sm:$0x20] %vm287, %v286
  %s300 = scalar_lea.vmem %s1, 1537
  %301 = vst.msk [vmem:[%s300] sm:$0x40] %vm287, %v286
  %s302 = scalar_lea.vmem %s1, 1792
  %303 = vst.msk [vmem:[%s302] sm:$0x80] %vm287, %v286
  %s304 = scalar_lea.vmem %s0, 8
  %v305 = vld [vmem:[%s304] sm:$0xff]
  %306 = vrot.lane.b32.xlu0 %v305, 121
  %v307 = vpop.permute.xlu0 %306
  %vm308 = vcmask 7168
  %s309 = scalar_lea.vmem %s1, 135
  %310 = vst.msk [vmem:[%s309] sm:$0x1] %vm308, %v307
  %s311 = scalar_lea.vmem %s1, 390
  %312 = vst.msk [vmem:[%s311] sm:$0x2] %vm308, %v307
  %s313 = scalar_lea.vmem %s1, 645
  %314 = vst.msk [vmem:[%s313] sm:$0x4] %vm308, %v307
  %s315 = scalar_lea.vmem %s1, 900
  %316 = vst.msk [vmem:[%s315] sm:$0x8] %vm308, %v307
  %s317 = scalar_lea.vmem %s1, 1155
  %318 = vst.msk [vmem:[%s317] sm:$0x10] %vm308, %v307
  %s319 = scalar_lea.vmem %s1, 1410
  %320 = vst.msk [vmem:[%s319] sm:$0x20] %vm308, %v307
  %s321 = scalar_lea.vmem %s1, 1665
  %322 = vst.msk [vmem:[%s321] sm:$0x40] %vm308, %v307
  %s323 = scalar_lea.vmem %s1, 1920
  %324 = vst.msk [vmem:[%s323] sm:$0x80] %vm308, %v307
  %v325 = vld [vmem:[%s0] sm:$0xff]
  %326 = vrot.lane.b32.xlu0 %v325, 120
  %v327 = vpop.permute.xlu0 %326
  %vm328 = vcmask 7168
  %s329 = scalar_lea.vmem %s1, 8
  %330 = vst.msk [vmem:[%s329] sm:$0x1] %vm328, %v327
  %s331 = scalar_lea.vmem %s1, 263
  %332 = vst.msk [vmem:[%s331] sm:$0x2] %vm328, %v327
  %s333 = scalar_lea.vmem %s1, 518
  %334 = vst.msk [vmem:[%s333] sm:$0x4] %vm328, %v327
  %s335 = scalar_lea.vmem %s1, 773
  %336 = vst.msk [vmem:[%s335] sm:$0x8] %vm328, %v327
  %s337 = scalar_lea.vmem %s1, 1028
  %338 = vst.msk [vmem:[%s337] sm:$0x10] %vm328, %v327
  %s339 = scalar_lea.vmem %s1, 1283
  %340 = vst.msk [vmem:[%s339] sm:$0x20] %vm328, %v327
  %s341 = scalar_lea.vmem %s1, 1538
  %342 = vst.msk [vmem:[%s341] sm:$0x40] %vm328, %v327
  %s343 = scalar_lea.vmem %s1, 1793
  %344 = vst.msk [vmem:[%s343] sm:$0x80] %vm328, %v327
  %s345 = scalar_lea.vmem %s0, 8
  %v346 = vld [vmem:[%s345] sm:$0xff]
  %347 = vrot.lane.b32.xlu0 %v346, 120
  %v348 = vpop.permute.xlu0 %347
  %vm349 = vcmask 7168
  %s350 = scalar_lea.vmem %s1, 136
  %351 = vst.msk [vmem:[%s350] sm:$0x1] %vm349, %v348
  %s352 = scalar_lea.vmem %s1, 391
  %353 = vst.msk [vmem:[%s352] sm:$0x2] %vm349, %v348
  %s354 = scalar_lea.vmem %s1, 646
  %355 = vst.msk [vmem:[%s354] sm:$0x4] %vm349, %v348
  %s356 = scalar_lea.vmem %s1, 901
  %357 = vst.msk [vmem:[%s356] sm:$0x8] %vm349, %v348
  %s358 = scalar_lea.vmem %s1, 1156
  %359 = vst.msk [vmem:[%s358] sm:$0x10] %vm349, %v348
  %s360 = scalar_lea.vmem %s1, 1411
  %361 = vst.msk [vmem:[%s360] sm:$0x20] %vm349, %v348
  %s362 = scalar_lea.vmem %s1, 1666
  %363 = vst.msk [vmem:[%s362] sm:$0x40] %vm349, %v348
  %s364 = scalar_lea.vmem %s1, 1921
  %365 = vst.msk [vmem:[%s364] sm:$0x80] %vm349, %v348
  %v366 = vld [vmem:[%s0] sm:$0xff]
  %367 = vrot.lane.b32.xlu0 %v366, 119
  %v368 = vpop.permute.xlu0 %367
  %vm369 = vcmask 7168
  %s370 = scalar_lea.vmem %s1, 9
  %371 = vst.msk [vmem:[%s370] sm:$0x1] %vm369, %v368
  %s372 = scalar_lea.vmem %s1, 264
  %373 = vst.msk [vmem:[%s372] sm:$0x2] %vm369, %v368
  %s374 = scalar_lea.vmem %s1, 519
  %375 = vst.msk [vmem:[%s374] sm:$0x4] %vm369, %v368
  %s376 = scalar_lea.vmem %s1, 774
  %377 = vst.msk [vmem:[%s376] sm:$0x8] %vm369, %v368
  %s378 = scalar_lea.vmem %s1, 1029
  %379 = vst.msk [vmem:[%s378] sm:$0x10] %vm369, %v368
  %s380 = scalar_lea.vmem %s1, 1284
  %381 = vst.msk [vmem:[%s380] sm:$0x20] %vm369, %v368
  %s382 = scalar_lea.vmem %s1, 1539
  %383 = vst.msk [vmem:[%s382] sm:$0x40] %vm369, %v368
  %s384 = scalar_lea.vmem %s1, 1794
  %385 = vst.msk [vmem:[%s384] sm:$0x80] %vm369, %v368
  %s386 = scalar_lea.vmem %s0, 8
  %v387 = vld [vmem:[%s386] sm:$0xff]
  %388 = vrot.lane.b32.xlu0 %v387, 119
  %v389 = vpop.permute.xlu0 %388
  %vm390 = vcmask 7168
  %s391 = scalar_lea.vmem %s1, 137
  %392 = vst.msk [vmem:[%s391] sm:$0x1] %vm390, %v389
  %s393 = scalar_lea.vmem %s1, 392
  %394 = vst.msk [vmem:[%s393] sm:$0x2] %vm390, %v389
  %s395 = scalar_lea.vmem %s1, 647
  %396 = vst.msk [vmem:[%s395] sm:$0x4] %vm390, %v389
  %s397 = scalar_lea.vmem %s1, 902
  %398 = vst.msk [vmem:[%s397] sm:$0x8] %vm390, %v389
  %s399 = scalar_lea.vmem %s1, 1157
  %400 = vst.msk [vmem:[%s399] sm:$0x10] %vm390, %v389
  %s401 = scalar_lea.vmem %s1, 1412
  %402 = vst.msk [vmem:[%s401] sm:$0x20] %vm390, %v389
  %s403 = scalar_lea.vmem %s1, 1667
  %404 = vst.msk [vmem:[%s403] sm:$0x40] %vm390, %v389
  %s405 = scalar_lea.vmem %s1, 1922
  %406 = vst.msk [vmem:[%s405] sm:$0x80] %vm390, %v389
  %v407 = vld [vmem:[%s0] sm:$0xff]
  %408 = vrot.lane.b32.xlu0 %v407, 118
  %v409 = vpop.permute.xlu0 %408
  %vm410 = vcmask 7168
  %s411 = scalar_lea.vmem %s1, 10
  %412 = vst.msk [vmem:[%s411] sm:$0x1] %vm410, %v409
  %s413 = scalar_lea.vmem %s1, 265
  %414 = vst.msk [vmem:[%s413] sm:$0x2] %vm410, %v409
  %s415 = scalar_lea.vmem %s1, 520
  %416 = vst.msk [vmem:[%s415] sm:$0x4] %vm410, %v409
  %s417 = scalar_lea.vmem %s1, 775
  %418 = vst.msk [vmem:[%s417] sm:$0x8] %vm410, %v409
  %s419 = scalar_lea.vmem %s1, 1030
  %420 = vst.msk [vmem:[%s419] sm:$0x10] %vm410, %v409
  %s421 = scalar_lea.vmem %s1, 1285
  %422 = vst.msk [vmem:[%s421] sm:$0x20] %vm410, %v409
  %s423 = scalar_lea.vmem %s1, 1540
  %424 = vst.msk [vmem:[%s423] sm:$0x40] %vm410, %v409
  %s425 = scalar_lea.vmem %s1, 1795
  %426 = vst.msk [vmem:[%s425] sm:$0x80] %vm410, %v409
  %s427 = scalar_lea.vmem %s0, 8
  %v428 = vld [vmem:[%s427] sm:$0xff]
  %429 = vrot.lane.b32.xlu0 %v428, 118
  %v430 = vpop.permute.xlu0 %429
  %vm431 = vcmask 7168
  %s432 = scalar_lea.vmem %s1, 138
  %433 = vst.msk [vmem:[%s432] sm:$0x1] %vm431, %v430
  %s434 = scalar_lea.vmem %s1, 393
  %435 = vst.msk [vmem:[%s434] sm:$0x2] %vm431, %v430
  %s436 = scalar_lea.vmem %s1, 648
  %437 = vst.msk [vmem:[%s436] sm:$0x4] %vm431, %v430
  %s438 = scalar_lea.vmem %s1, 903
  %439 = vst.msk [vmem:[%s438] sm:$0x8] %vm431, %v430
  %s440 = scalar_lea.vmem %s1, 1158
  %441 = vst.msk [vmem:[%s440] sm:$0x10] %vm431, %v430
  %s442 = scalar_lea.vmem %s1, 1413
  %443 = vst.msk [vmem:[%s442] sm:$0x20] %vm431, %v430
  %s444 = scalar_lea.vmem %s1, 1668
  %445 = vst.msk [vmem:[%s444] sm:$0x40] %vm431, %v430
  %s446 = scalar_lea.vmem %s1, 1923
  %447 = vst.msk [vmem:[%s446] sm:$0x80] %vm431, %v430
  %v448 = vld [vmem:[%s0] sm:$0xff]
  %449 = vrot.lane.b32.xlu0 %v448, 117
  %v450 = vpop.permute.xlu0 %449
  %vm451 = vcmask 7168
  %s452 = scalar_lea.vmem %s1, 11
  %453 = vst.msk [vmem:[%s452] sm:$0x1] %vm451, %v450
  %s454 = scalar_lea.vmem %s1, 266
  %455 = vst.msk [vmem:[%s454] sm:$0x2] %vm451, %v450
  %s456 = scalar_lea.vmem %s1, 521
  %457 = vst.msk [vmem:[%s456] sm:$0x4] %vm451, %v450
  %s458 = scalar_lea.vmem %s1, 776
  %459 = vst.msk [vmem:[%s458] sm:$0x8] %vm451, %v450
  %s460 = scalar_lea.vmem %s1, 1031
  %461 = vst.msk [vmem:[%s460] sm:$0x10] %vm451, %v450
  %s462 = scalar_lea.vmem %s1, 1286
  %463 = vst.msk [vmem:[%s462] sm:$0x20] %vm451, %v450
  %s464 = scalar_lea.vmem %s1, 1541
  %465 = vst.msk [vmem:[%s464] sm:$0x40] %vm451, %v450
  %s466 = scalar_lea.vmem %s1, 1796
  %467 = vst.msk [vmem:[%s466] sm:$0x80] %vm451, %v450
  %s468 = scalar_lea.vmem %s0, 8
  %v469 = vld [vmem:[%s468] sm:$0xff]
  %470 = vrot.lane.b32.xlu0 %v469, 117
  %v471 = vpop.permute.xlu0 %470
  %vm472 = vcmask 7168
  %s473 = scalar_lea.vmem %s1, 139
  %474 = vst.msk [vmem:[%s473] sm:$0x1] %vm472, %v471
  %s475 = scalar_lea.vmem %s1, 394
  %476 = vst.msk [vmem:[%s475] sm:$0x2] %vm472, %v471
  %s477 = scalar_lea.vmem %s1, 649
  %478 = vst.msk [vmem:[%s477] sm:$0x4] %vm472, %v471
  %s479 = scalar_lea.vmem %s1, 904
  %480 = vst.msk [vmem:[%s479] sm:$0x8] %vm472, %v471
  %s481 = scalar_lea.vmem %s1, 1159
  %482 = vst.msk [vmem:[%s481] sm:$0x10] %vm472, %v471
  %s483 = scalar_lea.vmem %s1, 1414
  %484 = vst.msk [vmem:[%s483] sm:$0x20] %vm472, %v471
  %s485 = scalar_lea.vmem %s1, 1669
  %486 = vst.msk [vmem:[%s485] sm:$0x40] %vm472, %v471
  %s487 = scalar_lea.vmem %s1, 1924
  %488 = vst.msk [vmem:[%s487] sm:$0x80] %vm472, %v471
  %v489 = vld [vmem:[%s0] sm:$0xff]
  %490 = vrot.lane.b32.xlu0 %v489, 116
  %v491 = vpop.permute.xlu0 %490
  %vm492 = vcmask 7168
  %s493 = scalar_lea.vmem %s1, 12
  %494 = vst.msk [vmem:[%s493] sm:$0x1] %vm492, %v491
  %s495 = scalar_lea.vmem %s1, 267
  %496 = vst.msk [vmem:[%s495] sm:$0x2] %vm492, %v491
  %s497 = scalar_lea.vmem %s1, 522
  %498 = vst.msk [vmem:[%s497] sm:$0x4] %vm492, %v491
  %s499 = scalar_lea.vmem %s1, 777
  %500 = vst.msk [vmem:[%s499] sm:$0x8] %vm492, %v491
  %s501 = scalar_lea.vmem %s1, 1032
  %502 = vst.msk [vmem:[%s501] sm:$0x10] %vm492, %v491
  %s503 = scalar_lea.vmem %s1, 1287
  %504 = vst.msk [vmem:[%s503] sm:$0x20] %vm492, %v491
  %s505 = scalar_lea.vmem %s1, 1542
  %506 = vst.msk [vmem:[%s505] sm:$0x40] %vm492, %v491
  %s507 = scalar_lea.vmem %s1, 1797
  %508 = vst.msk [vmem:[%s507] sm:$0x80] %vm492, %v491
  %s509 = scalar_lea.vmem %s0, 8
  %v510 = vld [vmem:[%s509] sm:$0xff]
  %511 = vrot.lane.b32.xlu0 %v510, 116
  %v512 = vpop.permute.xlu0 %511
  %vm513 = vcmask 7168
  %s514 = scalar_lea.vmem %s1, 140
  %515 = vst.msk [vmem:[%s514] sm:$0x1] %vm513, %v512
  %s516 = scalar_lea.vmem %s1, 395
  %517 = vst.msk [vmem:[%s516] sm:$0x2] %vm513, %v512
  %s518 = scalar_lea.vmem %s1, 650
  %519 = vst.msk [vmem:[%s518] sm:$0x4] %vm513, %v512
  %s520 = scalar_lea.vmem %s1, 905
  %521 = vst.msk [vmem:[%s520] sm:$0x8] %vm513, %v512
  %s522 = scalar_lea.vmem %s1, 1160
  %523 = vst.msk [vmem:[%s522] sm:$0x10] %vm513, %v512
  %s524 = scalar_lea.vmem %s1, 1415
  %525 = vst.msk [vmem:[%s524] sm:$0x20] %vm513, %v512
  %s526 = scalar_lea.vmem %s1, 1670
  %527 = vst.msk [vmem:[%s526] sm:$0x40] %vm513, %v512
  %s528 = scalar_lea.vmem %s1, 1925
  %529 = vst.msk [vmem:[%s528] sm:$0x80] %vm513, %v512
  %v530 = vld [vmem:[%s0] sm:$0xff]
  %531 = vrot.lane.b32.xlu0 %v530, 115
  %v532 = vpop.permute.xlu0 %531
  %vm533 = vcmask 7168
  %s534 = scalar_lea.vmem %s1, 13
  %535 = vst.msk [vmem:[%s534] sm:$0x1] %vm533, %v532
  %s536 = scalar_lea.vmem %s1, 268
  %537 = vst.msk [vmem:[%s536] sm:$0x2] %vm533, %v532
  %s538 = scalar_lea.vmem %s1, 523
  %539 = vst.msk [vmem:[%s538] sm:$0x4] %vm533, %v532
  %s540 = scalar_lea.vmem %s1, 778
  %541 = vst.msk [vmem:[%s540] sm:$0x8] %vm533, %v532
  %s542 = scalar_lea.vmem %s1, 1033
  %543 = vst.msk [vmem:[%s542] sm:$0x10] %vm533, %v532
  %s544 = scalar_lea.vmem %s1, 1288
  %545 = vst.msk [vmem:[%s544] sm:$0x20] %vm533, %v532
  %s546 = scalar_lea.vmem %s1, 1543
  %547 = vst.msk [vmem:[%s546] sm:$0x40] %vm533, %v532
  %s548 = scalar_lea.vmem %s1, 1798
  %549 = vst.msk [vmem:[%s548] sm:$0x80] %vm533, %v532
  %s550 = scalar_lea.vmem %s0, 8
  %v551 = vld [vmem:[%s550] sm:$0xff]
  %552 = vrot.lane.b32.xlu0 %v551, 115
  %v553 = vpop.permute.xlu0 %552
  %vm554 = vcmask 7168
  %s555 = scalar_lea.vmem %s1, 141
  %556 = vst.msk [vmem:[%s555] sm:$0x1] %vm554, %v553
  %s557 = scalar_lea.vmem %s1, 396
  %558 = vst.msk [vmem:[%s557] sm:$0x2] %vm554, %v553
  %s559 = scalar_lea.vmem %s1, 651
  %560 = vst.msk [vmem:[%s559] sm:$0x4] %vm554, %v553
  %s561 = scalar_lea.vmem %s1, 906
  %562 = vst.msk [vmem:[%s561] sm:$0x8] %vm554, %v553
  %s563 = scalar_lea.vmem %s1, 1161
  %564 = vst.msk [vmem:[%s563] sm:$0x10] %vm554, %v553
  %s565 = scalar_lea.vmem %s1, 1416
  %566 = vst.msk [vmem:[%s565] sm:$0x20] %vm554, %v553
  %s567 = scalar_lea.vmem %s1, 1671
  %568 = vst.msk [vmem:[%s567] sm:$0x40] %vm554, %v553
  %s569 = scalar_lea.vmem %s1, 1926
  %570 = vst.msk [vmem:[%s569] sm:$0x80] %vm554, %v553
  %v571 = vld [vmem:[%s0] sm:$0xff]
  %572 = vrot.lane.b32.xlu0 %v571, 114
  %v573 = vpop.permute.xlu0 %572
  %vm574 = vcmask 7168
  %s575 = scalar_lea.vmem %s1, 14
  %576 = vst.msk [vmem:[%s575] sm:$0x1] %vm574, %v573
  %s577 = scalar_lea.vmem %s1, 269
  %578 = vst.msk [vmem:[%s577] sm:$0x2] %vm574, %v573
  %s579 = scalar_lea.vmem %s1, 524
  %580 = vst.msk [vmem:[%s579] sm:$0x4] %vm574, %v573
  %s581 = scalar_lea.vmem %s1, 779
  %582 = vst.msk [vmem:[%s581] sm:$0x8] %vm574, %v573
  %s583 = scalar_lea.vmem %s1, 1034
  %584 = vst.msk [vmem:[%s583] sm:$0x10] %vm574, %v573
  %s585 = scalar_lea.vmem %s1, 1289
  %586 = vst.msk [vmem:[%s585] sm:$0x20] %vm574, %v573
  %s587 = scalar_lea.vmem %s1, 1544
  %588 = vst.msk [vmem:[%s587] sm:$0x40] %vm574, %v573
  %s589 = scalar_lea.vmem %s1, 1799
  %590 = vst.msk [vmem:[%s589] sm:$0x80] %vm574, %v573
  %s591 = scalar_lea.vmem %s0, 8
  %v592 = vld [vmem:[%s591] sm:$0xff]
  %593 = vrot.lane.b32.xlu0 %v592, 114
  %v594 = vpop.permute.xlu0 %593
  %vm595 = vcmask 7168
  %s596 = scalar_lea.vmem %s1, 142
  %597 = vst.msk [vmem:[%s596] sm:$0x1] %vm595, %v594
  %s598 = scalar_lea.vmem %s1, 397
  %599 = vst.msk [vmem:[%s598] sm:$0x2] %vm595, %v594
  %s600 = scalar_lea.vmem %s1, 652
  %601 = vst.msk [vmem:[%s600] sm:$0x4] %vm595, %v594
  %s602 = scalar_lea.vmem %s1, 907
  %603 = vst.msk [vmem:[%s602] sm:$0x8] %vm595, %v594
  %s604 = scalar_lea.vmem %s1, 1162
  %605 = vst.msk [vmem:[%s604] sm:$0x10] %vm595, %v594
  %s606 = scalar_lea.vmem %s1, 1417
  %607 = vst.msk [vmem:[%s606] sm:$0x20] %vm595, %v594
  %s608 = scalar_lea.vmem %s1, 1672
  %609 = vst.msk [vmem:[%s608] sm:$0x40] %vm595, %v594
  %s610 = scalar_lea.vmem %s1, 1927
  %611 = vst.msk [vmem:[%s610] sm:$0x80] %vm595, %v594
  %v612 = vld [vmem:[%s0] sm:$0xff]
  %613 = vrot.lane.b32.xlu0 %v612, 113
  %v614 = vpop.permute.xlu0 %613
  %vm615 = vcmask 7168
  %s616 = scalar_lea.vmem %s1, 15
  %617 = vst.msk [vmem:[%s616] sm:$0x1] %vm615, %v614
  %s618 = scalar_lea.vmem %s1, 270
  %619 = vst.msk [vmem:[%s618] sm:$0x2] %vm615, %v614
  %s620 = scalar_lea.vmem %s1, 525
  %621 = vst.msk [vmem:[%s620] sm:$0x4] %vm615, %v614
  %s622 = scalar_lea.vmem %s1, 780
  %623 = vst.msk [vmem:[%s622] sm:$0x8] %vm615, %v614
  %s624 = scalar_lea.vmem %s1, 1035
  %625 = vst.msk [vmem:[%s624] sm:$0x10] %vm615, %v614
  %s626 = scalar_lea.vmem %s1, 1290
  %627 = vst.msk [vmem:[%s626] sm:$0x20] %vm615, %v614
  %s628 = scalar_lea.vmem %s1, 1545
  %629 = vst.msk [vmem:[%s628] sm:$0x40] %vm615, %v614
  %s630 = scalar_lea.vmem %s1, 1800
  %631 = vst.msk [vmem:[%s630] sm:$0x80] %vm615, %v614
  %s632 = scalar_lea.vmem %s0, 8
  %v633 = vld [vmem:[%s632] sm:$0xff]
  %634 = vrot.lane.b32.xlu0 %v633, 113
  %v635 = vpop.permute.xlu0 %634
  %vm636 = vcmask 7168
  %s637 = scalar_lea.vmem %s1, 143
  %638 = vst.msk [vmem:[%s637] sm:$0x1] %vm636, %v635
  %s639 = scalar_lea.vmem %s1, 398
  %640 = vst.msk [vmem:[%s639] sm:$0x2] %vm636, %v635
  %s641 = scalar_lea.vmem %s1, 653
  %642 = vst.msk [vmem:[%s641] sm:$0x4] %vm636, %v635
  %s643 = scalar_lea.vmem %s1, 908
  %644 = vst.msk [vmem:[%s643] sm:$0x8] %vm636, %v635
  %s645 = scalar_lea.vmem %s1, 1163
  %646 = vst.msk [vmem:[%s645] sm:$0x10] %vm636, %v635
  %s647 = scalar_lea.vmem %s1, 1418
  %648 = vst.msk [vmem:[%s647] sm:$0x20] %vm636, %v635
  %s649 = scalar_lea.vmem %s1, 1673
  %650 = vst.msk [vmem:[%s649] sm:$0x40] %vm636, %v635
  %s651 = scalar_lea.vmem %s1, 1928
  %652 = vst.msk [vmem:[%s651] sm:$0x80] %vm636, %v635
  %v653 = vld [vmem:[%s0] sm:$0xff]
  %654 = vrot.lane.b32.xlu0 %v653, 112
  %v655 = vpop.permute.xlu0 %654
  %vm656 = vcmask 7168
  %s657 = scalar_lea.vmem %s1, 16
  %658 = vst.msk [vmem:[%s657] sm:$0x1] %vm656, %v655
  %s659 = scalar_lea.vmem %s1, 271
  %660 = vst.msk [vmem:[%s659] sm:$0x2] %vm656, %v655
  %s661 = scalar_lea.vmem %s1, 526
  %662 = vst.msk [vmem:[%s661] sm:$0x4] %vm656, %v655
  %s663 = scalar_lea.vmem %s1, 781
  %664 = vst.msk [vmem:[%s663] sm:$0x8] %vm656, %v655
  %s665 = scalar_lea.vmem %s1, 1036
  %666 = vst.msk [vmem:[%s665] sm:$0x10] %vm656, %v655
  %s667 = scalar_lea.vmem %s1, 1291
  %668 = vst.msk [vmem:[%s667] sm:$0x20] %vm656, %v655
  %s669 = scalar_lea.vmem %s1, 1546
  %670 = vst.msk [vmem:[%s669] sm:$0x40] %vm656, %v655
  %s671 = scalar_lea.vmem %s1, 1801
  %672 = vst.msk [vmem:[%s671] sm:$0x80] %vm656, %v655
  %s673 = scalar_lea.vmem %s0, 8
  %v674 = vld [vmem:[%s673] sm:$0xff]
  %675 = vrot.lane.b32.xlu0 %v674, 112
  %v676 = vpop.permute.xlu0 %675
  %vm677 = vcmask 7168
  %s678 = scalar_lea.vmem %s1, 144
  %679 = vst.msk [vmem:[%s678] sm:$0x1] %vm677, %v676
  %s680 = scalar_lea.vmem %s1, 399
  %681 = vst.msk [vmem:[%s680] sm:$0x2] %vm677, %v676
  %s682 = scalar_lea.vmem %s1, 654
  %683 = vst.msk [vmem:[%s682] sm:$0x4] %vm677, %v676
  %s684 = scalar_lea.vmem %s1, 909
  %685 = vst.msk [vmem:[%s684] sm:$0x8] %vm677, %v676
  %s686 = scalar_lea.vmem %s1, 1164
  %687 = vst.msk [vmem:[%s686] sm:$0x10] %vm677, %v676
  %s688 = scalar_lea.vmem %s1, 1419
  %689 = vst.msk [vmem:[%s688] sm:$0x20] %vm677, %v676
  %s690 = scalar_lea.vmem %s1, 1674
  %691 = vst.msk [vmem:[%s690] sm:$0x40] %vm677, %v676
  %s692 = scalar_lea.vmem %s1, 1929
  %693 = vst.msk [vmem:[%s692] sm:$0x80] %vm677, %v676
  %v694 = vld [vmem:[%s0] sm:$0xff]
  %695 = vrot.lane.b32.xlu0 %v694, 111
  %v696 = vpop.permute.xlu0 %695
  %vm697 = vcmask 7168
  %s698 = scalar_lea.vmem %s1, 17
  %699 = vst.msk [vmem:[%s698] sm:$0x1] %vm697, %v696
  %s700 = scalar_lea.vmem %s1, 272
  %701 = vst.msk [vmem:[%s700] sm:$0x2] %vm697, %v696
  %s702 = scalar_lea.vmem %s1, 527
  %703 = vst.msk [vmem:[%s702] sm:$0x4] %vm697, %v696
  %s704 = scalar_lea.vmem %s1, 782
  %705 = vst.msk [vmem:[%s704] sm:$0x8] %vm697, %v696
  %s706 = scalar_lea.vmem %s1, 1037
  %707 = vst.msk [vmem:[%s706] sm:$0x10] %vm697, %v696
  %s708 = scalar_lea.vmem %s1, 1292
  %709 = vst.msk [vmem:[%s708] sm:$0x20] %vm697, %v696
  %s710 = scalar_lea.vmem %s1, 1547
  %711 = vst.msk [vmem:[%s710] sm:$0x40] %vm697, %v696
  %s712 = scalar_lea.vmem %s1, 1802
  %713 = vst.msk [vmem:[%s712] sm:$0x80] %vm697, %v696
  %s714 = scalar_lea.vmem %s0, 8
  %v715 = vld [vmem:[%s714] sm:$0xff]
  %716 = vrot.lane.b32.xlu0 %v715, 111
  %v717 = vpop.permute.xlu0 %716
  %vm718 = vcmask 7168
  %s719 = scalar_lea.vmem %s1, 145
  %720 = vst.msk [vmem:[%s719] sm:$0x1] %vm718, %v717
  %s721 = scalar_lea.vmem %s1, 400
  %722 = vst.msk [vmem:[%s721] sm:$0x2] %vm718, %v717
  %s723 = scalar_lea.vmem %s1, 655
  %724 = vst.msk [vmem:[%s723] sm:$0x4] %vm718, %v717
  %s725 = scalar_lea.vmem %s1, 910
  %726 = vst.msk [vmem:[%s725] sm:$0x8] %vm718, %v717
  %s727 = scalar_lea.vmem %s1, 1165
  %728 = vst.msk [vmem:[%s727] sm:$0x10] %vm718, %v717
  %s729 = scalar_lea.vmem %s1, 1420
  %730 = vst.msk [vmem:[%s729] sm:$0x20] %vm718, %v717
  %s731 = scalar_lea.vmem %s1, 1675
  %732 = vst.msk [vmem:[%s731] sm:$0x40] %vm718, %v717
  %s733 = scalar_lea.vmem %s1, 1930
  %734 = vst.msk [vmem:[%s733] sm:$0x80] %vm718, %v717
  %v735 = vld [vmem:[%s0] sm:$0xff]
  %736 = vrot.lane.b32.xlu0 %v735, 110
  %v737 = vpop.permute.xlu0 %736
  %vm738 = vcmask 7168
  %s739 = scalar_lea.vmem %s1, 18
  %740 = vst.msk [vmem:[%s739] sm:$0x1] %vm738, %v737
  %s741 = scalar_lea.vmem %s1, 273
  %742 = vst.msk [vmem:[%s741] sm:$0x2] %vm738, %v737
  %s743 = scalar_lea.vmem %s1, 528
  %744 = vst.msk [vmem:[%s743] sm:$0x4] %vm738, %v737
  %s745 = scalar_lea.vmem %s1, 783
  %746 = vst.msk [vmem:[%s745] sm:$0x8] %vm738, %v737
  %s747 = scalar_lea.vmem %s1, 1038
  %748 = vst.msk [vmem:[%s747] sm:$0x10] %vm738, %v737
  %s749 = scalar_lea.vmem %s1, 1293
  %750 = vst.msk [vmem:[%s749] sm:$0x20] %vm738, %v737
  %s751 = scalar_lea.vmem %s1, 1548
  %752 = vst.msk [vmem:[%s751] sm:$0x40] %vm738, %v737
  %s753 = scalar_lea.vmem %s1, 1803
  %754 = vst.msk [vmem:[%s753] sm:$0x80] %vm738, %v737
  %s755 = scalar_lea.vmem %s0, 8
  %v756 = vld [vmem:[%s755] sm:$0xff]
  %757 = vrot.lane.b32.xlu0 %v756, 110
  %v758 = vpop.permute.xlu0 %757
  %vm759 = vcmask 7168
  %s760 = scalar_lea.vmem %s1, 146
  %761 = vst.msk [vmem:[%s760] sm:$0x1] %vm759, %v758
  %s762 = scalar_lea.vmem %s1, 401
  %763 = vst.msk [vmem:[%s762] sm:$0x2] %vm759, %v758
  %s764 = scalar_lea.vmem %s1, 656
  %765 = vst.msk [vmem:[%s764] sm:$0x4] %vm759, %v758
  %s766 = scalar_lea.vmem %s1, 911
  %767 = vst.msk [vmem:[%s766] sm:$0x8] %vm759, %v758
  %s768 = scalar_lea.vmem %s1, 1166
  %769 = vst.msk [vmem:[%s768] sm:$0x10] %vm759, %v758
  %s770 = scalar_lea.vmem %s1, 1421
  %771 = vst.msk [vmem:[%s770] sm:$0x20] %vm759, %v758
  %s772 = scalar_lea.vmem %s1, 1676
  %773 = vst.msk [vmem:[%s772] sm:$0x40] %vm759, %v758
  %s774 = scalar_lea.vmem %s1, 1931
  %775 = vst.msk [vmem:[%s774] sm:$0x80] %vm759, %v758
  %v776 = vld [vmem:[%s0] sm:$0xff]
  %777 = vrot.lane.b32.xlu0 %v776, 109
  %v778 = vpop.permute.xlu0 %777
  %vm779 = vcmask 7168
  %s780 = scalar_lea.vmem %s1, 19
  %781 = vst.msk [vmem:[%s780] sm:$0x1] %vm779, %v778
  %s782 = scalar_lea.vmem %s1, 274
  %783 = vst.msk [vmem:[%s782] sm:$0x2] %vm779, %v778
  %s784 = scalar_lea.vmem %s1, 529
  %785 = vst.msk [vmem:[%s784] sm:$0x4] %vm779, %v778
  %s786 = scalar_lea.vmem %s1, 784
  %787 = vst.msk [vmem:[%s786] sm:$0x8] %vm779, %v778
  %s788 = scalar_lea.vmem %s1, 1039
  %789 = vst.msk [vmem:[%s788] sm:$0x10] %vm779, %v778
  %s790 = scalar_lea.vmem %s1, 1294
  %791 = vst.msk [vmem:[%s790] sm:$0x20] %vm779, %v778
  %s792 = scalar_lea.vmem %s1, 1549
  %793 = vst.msk [vmem:[%s792] sm:$0x40] %vm779, %v778
  %s794 = scalar_lea.vmem %s1, 1804
  %795 = vst.msk [vmem:[%s794] sm:$0x80] %vm779, %v778
  %s796 = scalar_lea.vmem %s0, 8
  %v797 = vld [vmem:[%s796] sm:$0xff]
  %798 = vrot.lane.b32.xlu0 %v797, 109
  %v799 = vpop.permute.xlu0 %798
  %vm800 = vcmask 7168
  %s801 = scalar_lea.vmem %s1, 147
  %802 = vst.msk [vmem:[%s801] sm:$0x1] %vm800, %v799
  %s803 = scalar_lea.vmem %s1, 402
  %804 = vst.msk [vmem:[%s803] sm:$0x2] %vm800, %v799
  %s805 = scalar_lea.vmem %s1, 657
  %806 = vst.msk [vmem:[%s805] sm:$0x4] %vm800, %v799
  %s807 = scalar_lea.vmem %s1, 912
  %808 = vst.msk [vmem:[%s807] sm:$0x8] %vm800, %v799
  %s809 = scalar_lea.vmem %s1, 1167
  %810 = vst.msk [vmem:[%s809] sm:$0x10] %vm800, %v799
  %s811 = scalar_lea.vmem %s1, 1422
  %812 = vst.msk [vmem:[%s811] sm:$0x20] %vm800, %v799
  %s813 = scalar_lea.vmem %s1, 1677
  %814 = vst.msk [vmem:[%s813] sm:$0x40] %vm800, %v799
  %s815 = scalar_lea.vmem %s1, 1932
  %816 = vst.msk [vmem:[%s815] sm:$0x80] %vm800, %v799
  %v817 = vld [vmem:[%s0] sm:$0xff]
  %818 = vrot.lane.b32.xlu0 %v817, 108
  %v819 = vpop.permute.xlu0 %818
  %vm820 = vcmask 7168
  %s821 = scalar_lea.vmem %s1, 20
  %822 = vst.msk [vmem:[%s821] sm:$0x1] %vm820, %v819
  %s823 = scalar_lea.vmem %s1, 275
  %824 = vst.msk [vmem:[%s823] sm:$0x2] %vm820, %v819
  %s825 = scalar_lea.vmem %s1, 530
  %826 = vst.msk [vmem:[%s825] sm:$0x4] %vm820, %v819
  %s827 = scalar_lea.vmem %s1, 785
  %828 = vst.msk [vmem:[%s827] sm:$0x8] %vm820, %v819
  %s829 = scalar_lea.vmem %s1, 1040
  %830 = vst.msk [vmem:[%s829] sm:$0x10] %vm820, %v819
  %s831 = scalar_lea.vmem %s1, 1295
  %832 = vst.msk [vmem:[%s831] sm:$0x20] %vm820, %v819
  %s833 = scalar_lea.vmem %s1, 1550
  %834 = vst.msk [vmem:[%s833] sm:$0x40] %vm820, %v819
  %s835 = scalar_lea.vmem %s1, 1805
  %836 = vst.msk [vmem:[%s835] sm:$0x80] %vm820, %v819
  %s837 = scalar_lea.vmem %s0, 8
  %v838 = vld [vmem:[%s837] sm:$0xff]
  %839 = vrot.lane.b32.xlu0 %v838, 108
  %v840 = vpop.permute.xlu0 %839
  %vm841 = vcmask 7168
  %s842 = scalar_lea.vmem %s1, 148
  %843 = vst.msk [vmem:[%s842] sm:$0x1] %vm841, %v840
  %s844 = scalar_lea.vmem %s1, 403
  %845 = vst.msk [vmem:[%s844] sm:$0x2] %vm841, %v840
  %s846 = scalar_lea.vmem %s1, 658
  %847 = vst.msk [vmem:[%s846] sm:$0x4] %vm841, %v840
  %s848 = scalar_lea.vmem %s1, 913
  %849 = vst.msk [vmem:[%s848] sm:$0x8] %vm841, %v840
  %s850 = scalar_lea.vmem %s1, 1168
  %851 = vst.msk [vmem:[%s850] sm:$0x10] %vm841, %v840
  %s852 = scalar_lea.vmem %s1, 1423
  %853 = vst.msk [vmem:[%s852] sm:$0x20] %vm841, %v840
  %s854 = scalar_lea.vmem %s1, 1678
  %855 = vst.msk [vmem:[%s854] sm:$0x40] %vm841, %v840
  %s856 = scalar_lea.vmem %s1, 1933
  %857 = vst.msk [vmem:[%s856] sm:$0x80] %vm841, %v840
  %v858 = vld [vmem:[%s0] sm:$0xff]
  %859 = vrot.lane.b32.xlu0 %v858, 107
  %v860 = vpop.permute.xlu0 %859
  %vm861 = vcmask 7168
  %s862 = scalar_lea.vmem %s1, 21
  %863 = vst.msk [vmem:[%s862] sm:$0x1] %vm861, %v860
  %s864 = scalar_lea.vmem %s1, 276
  %865 = vst.msk [vmem:[%s864] sm:$0x2] %vm861, %v860
  %s866 = scalar_lea.vmem %s1, 531
  %867 = vst.msk [vmem:[%s866] sm:$0x4] %vm861, %v860
  %s868 = scalar_lea.vmem %s1, 786
  %869 = vst.msk [vmem:[%s868] sm:$0x8] %vm861, %v860
  %s870 = scalar_lea.vmem %s1, 1041
  %871 = vst.msk [vmem:[%s870] sm:$0x10] %vm861, %v860
  %s872 = scalar_lea.vmem %s1, 1296
  %873 = vst.msk [vmem:[%s872] sm:$0x20] %vm861, %v860
  %s874 = scalar_lea.vmem %s1, 1551
  %875 = vst.msk [vmem:[%s874] sm:$0x40] %vm861, %v860
  %s876 = scalar_lea.vmem %s1, 1806
  %877 = vst.msk [vmem:[%s876] sm:$0x80] %vm861, %v860
  %s878 = scalar_lea.vmem %s0, 8
  %v879 = vld [vmem:[%s878] sm:$0xff]
  %880 = vrot.lane.b32.xlu0 %v879, 107
  %v881 = vpop.permute.xlu0 %880
  %vm882 = vcmask 7168
  %s883 = scalar_lea.vmem %s1, 149
  %884 = vst.msk [vmem:[%s883] sm:$0x1] %vm882, %v881
  %s885 = scalar_lea.vmem %s1, 404
  %886 = vst.msk [vmem:[%s885] sm:$0x2] %vm882, %v881
  %s887 = scalar_lea.vmem %s1, 659
  %888 = vst.msk [vmem:[%s887] sm:$0x4] %vm882, %v881
  %s889 = scalar_lea.vmem %s1, 914
  %890 = vst.msk [vmem:[%s889] sm:$0x8] %vm882, %v881
  %s891 = scalar_lea.vmem %s1, 1169
  %892 = vst.msk [vmem:[%s891] sm:$0x10] %vm882, %v881
  %s893 = scalar_lea.vmem %s1, 1424
  %894 = vst.msk [vmem:[%s893] sm:$0x20] %vm882, %v881
  %s895 = scalar_lea.vmem %s1, 1679
  %896 = vst.msk [vmem:[%s895] sm:$0x40] %vm882, %v881
  %s897 = scalar_lea.vmem %s1, 1934
  %898 = vst.msk [vmem:[%s897] sm:$0x80] %vm882, %v881
  %v899 = vld [vmem:[%s0] sm:$0xff]
  %900 = vrot.lane.b32.xlu0 %v899, 106
  %v901 = vpop.permute.xlu0 %900
  %vm902 = vcmask 7168
  %s903 = scalar_lea.vmem %s1, 22
  %904 = vst.msk [vmem:[%s903] sm:$0x1] %vm902, %v901
  %s905 = scalar_lea.vmem %s1, 277
  %906 = vst.msk [vmem:[%s905] sm:$0x2] %vm902, %v901
  %s907 = scalar_lea.vmem %s1, 532
  %908 = vst.msk [vmem:[%s907] sm:$0x4] %vm902, %v901
  %s909 = scalar_lea.vmem %s1, 787
  %910 = vst.msk [vmem:[%s909] sm:$0x8] %vm902, %v901
  %s911 = scalar_lea.vmem %s1, 1042
  %912 = vst.msk [vmem:[%s911] sm:$0x10] %vm902, %v901
  %s913 = scalar_lea.vmem %s1, 1297
  %914 = vst.msk [vmem:[%s913] sm:$0x20] %vm902, %v901
  %s915 = scalar_lea.vmem %s1, 1552
  %916 = vst.msk [vmem:[%s915] sm:$0x40] %vm902, %v901
  %s917 = scalar_lea.vmem %s1, 1807
  %918 = vst.msk [vmem:[%s917] sm:$0x80] %vm902, %v901
  %s919 = scalar_lea.vmem %s0, 8
  %v920 = vld [vmem:[%s919] sm:$0xff]
  %921 = vrot.lane.b32.xlu0 %v920, 106
  %v922 = vpop.permute.xlu0 %921
  %vm923 = vcmask 7168
  %s924 = scalar_lea.vmem %s1, 150
  %925 = vst.msk [vmem:[%s924] sm:$0x1] %vm923, %v922
  %s926 = scalar_lea.vmem %s1, 405
  %927 = vst.msk [vmem:[%s926] sm:$0x2] %vm923, %v922
  %s928 = scalar_lea.vmem %s1, 660
  %929 = vst.msk [vmem:[%s928] sm:$0x4] %vm923, %v922
  %s930 = scalar_lea.vmem %s1, 915
  %931 = vst.msk [vmem:[%s930] sm:$0x8] %vm923, %v922
  %s932 = scalar_lea.vmem %s1, 1170
  %933 = vst.msk [vmem:[%s932] sm:$0x10] %vm923, %v922
  %s934 = scalar_lea.vmem %s1, 1425
  %935 = vst.msk [vmem:[%s934] sm:$0x20] %vm923, %v922
  %s936 = scalar_lea.vmem %s1, 1680
  %937 = vst.msk [vmem:[%s936] sm:$0x40] %vm923, %v922
  %s938 = scalar_lea.vmem %s1, 1935
  %939 = vst.msk [vmem:[%s938] sm:$0x80] %vm923, %v922
  %v940 = vld [vmem:[%s0] sm:$0xff]
  %941 = vrot.lane.b32.xlu0 %v940, 105
  %v942 = vpop.permute.xlu0 %941
  %vm943 = vcmask 7168
  %s944 = scalar_lea.vmem %s1, 23
  %945 = vst.msk [vmem:[%s944] sm:$0x1] %vm943, %v942
  %s946 = scalar_lea.vmem %s1, 278
  %947 = vst.msk [vmem:[%s946] sm:$0x2] %vm943, %v942
  %s948 = scalar_lea.vmem %s1, 533
  %949 = vst.msk [vmem:[%s948] sm:$0x4] %vm943, %v942
  %s950 = scalar_lea.vmem %s1, 788
  %951 = vst.msk [vmem:[%s950] sm:$0x8] %vm943, %v942
  %s952 = scalar_lea.vmem %s1, 1043
  %953 = vst.msk [vmem:[%s952] sm:$0x10] %vm943, %v942
  %s954 = scalar_lea.vmem %s1, 1298
  %955 = vst.msk [vmem:[%s954] sm:$0x20] %vm943, %v942
  %s956 = scalar_lea.vmem %s1, 1553
  %957 = vst.msk [vmem:[%s956] sm:$0x40] %vm943, %v942
  %s958 = scalar_lea.vmem %s1, 1808
  %959 = vst.msk [vmem:[%s958] sm:$0x80] %vm943, %v942
  %s960 = scalar_lea.vmem %s0, 8
  %v961 = vld [vmem:[%s960] sm:$0xff]
  %962 = vrot.lane.b32.xlu0 %v961, 105
  %v963 = vpop.permute.xlu0 %962
  %vm964 = vcmask 7168
  %s965 = scalar_lea.vmem %s1, 151
  %966 = vst.msk [vmem:[%s965] sm:$0x1] %vm964, %v963
  %s967 = scalar_lea.vmem %s1, 406
  %968 = vst.msk [vmem:[%s967] sm:$0x2] %vm964, %v963
  %s969 = scalar_lea.vmem %s1, 661
  %970 = vst.msk [vmem:[%s969] sm:$0x4] %vm964, %v963
  %s971 = scalar_lea.vmem %s1, 916
  %972 = vst.msk [vmem:[%s971] sm:$0x8] %vm964, %v963
  %s973 = scalar_lea.vmem %s1, 1171
  %974 = vst.msk [vmem:[%s973] sm:$0x10] %vm964, %v963
  %s975 = scalar_lea.vmem %s1, 1426
  %976 = vst.msk [vmem:[%s975] sm:$0x20] %vm964, %v963
  %s977 = scalar_lea.vmem %s1, 1681
  %978 = vst.msk [vmem:[%s977] sm:$0x40] %vm964, %v963
  %s979 = scalar_lea.vmem %s1, 1936
  %980 = vst.msk [vmem:[%s979] sm:$0x80] %vm964, %v963
  %v981 = vld [vmem:[%s0] sm:$0xff]
  %982 = vrot.lane.b32.xlu0 %v981, 104
  %v983 = vpop.permute.xlu0 %982
  %vm984 = vcmask 7168
  %s985 = scalar_lea.vmem %s1, 24
  %986 = vst.msk [vmem:[%s985] sm:$0x1] %vm984, %v983
  %s987 = scalar_lea.vmem %s1, 279
  %988 = vst.msk [vmem:[%s987] sm:$0x2] %vm984, %v983
  %s989 = scalar_lea.vmem %s1, 534
  %990 = vst.msk [vmem:[%s989] sm:$0x4] %vm984, %v983
  %s991 = scalar_lea.vmem %s1, 789
  %992 = vst.msk [vmem:[%s991] sm:$0x8] %vm984, %v983
  %s993 = scalar_lea.vmem %s1, 1044
  %994 = vst.msk [vmem:[%s993] sm:$0x10] %vm984, %v983
  %s995 = scalar_lea.vmem %s1, 1299
  %996 = vst.msk [vmem:[%s995] sm:$0x20] %vm984, %v983
  %s997 = scalar_lea.vmem %s1, 1554
  %998 = vst.msk [vmem:[%s997] sm:$0x40] %vm984, %v983
  %s999 = scalar_lea.vmem %s1, 1809
  %1000 = vst.msk [vmem:[%s999] sm:$0x80] %vm984, %v983
  %s1001 = scalar_lea.vmem %s0, 8
  %v1002 = vld [vmem:[%s1001] sm:$0xff]
  %1003 = vrot.lane.b32.xlu0 %v1002, 104
  %v1004 = vpop.permute.xlu0 %1003
  %vm1005 = vcmask 7168
  %s1006 = scalar_lea.vmem %s1, 152
  %1007 = vst.msk [vmem:[%s1006] sm:$0x1] %vm1005, %v1004
  %s1008 = scalar_lea.vmem %s1, 407
  %1009 = vst.msk [vmem:[%s1008] sm:$0x2] %vm1005, %v1004
  %s1010 = scalar_lea.vmem %s1, 662
  %1011 = vst.msk [vmem:[%s1010] sm:$0x4] %vm1005, %v1004
  %s1012 = scalar_lea.vmem %s1, 917
  %1013 = vst.msk [vmem:[%s1012] sm:$0x8] %vm1005, %v1004
  %s1014 = scalar_lea.vmem %s1, 1172
  %1015 = vst.msk [vmem:[%s1014] sm:$0x10] %vm1005, %v1004
  %s1016 = scalar_lea.vmem %s1, 1427
  %1017 = vst.msk [vmem:[%s1016] sm:$0x20] %vm1005, %v1004
  %s1018 = scalar_lea.vmem %s1, 1682
  %1019 = vst.msk [vmem:[%s1018] sm:$0x40] %vm1005, %v1004
  %s1020 = scalar_lea.vmem %s1, 1937
  %1021 = vst.msk [vmem:[%s1020] sm:$0x80] %vm1005, %v1004
  %v1022 = vld [vmem:[%s0] sm:$0xff]
  %1023 = vrot.lane.b32.xlu0 %v1022, 103
  %v1024 = vpop.permute.xlu0 %1023
  %vm1025 = vcmask 7168
  %s1026 = scalar_lea.vmem %s1, 25
  %1027 = vst.msk [vmem:[%s1026] sm:$0x1] %vm1025, %v1024
  %s1028 = scalar_lea.vmem %s1, 280
  %1029 = vst.msk [vmem:[%s1028] sm:$0x2] %vm1025, %v1024
  %s1030 = scalar_lea.vmem %s1, 535
  %1031 = vst.msk [vmem:[%s1030] sm:$0x4] %vm1025, %v1024
  %s1032 = scalar_lea.vmem %s1, 790
  %1033 = vst.msk [vmem:[%s1032] sm:$0x8] %vm1025, %v1024
  %s1034 = scalar_lea.vmem %s1, 1045
  %1035 = vst.msk [vmem:[%s1034] sm:$0x10] %vm1025, %v1024
  %s1036 = scalar_lea.vmem %s1, 1300
  %1037 = vst.msk [vmem:[%s1036] sm:$0x20] %vm1025, %v1024
  %s1038 = scalar_lea.vmem %s1, 1555
  %1039 = vst.msk [vmem:[%s1038] sm:$0x40] %vm1025, %v1024
  %s1040 = scalar_lea.vmem %s1, 1810
  %1041 = vst.msk [vmem:[%s1040] sm:$0x80] %vm1025, %v1024
  %s1042 = scalar_lea.vmem %s0, 8
  %v1043 = vld [vmem:[%s1042] sm:$0xff]
  %1044 = vrot.lane.b32.xlu0 %v1043, 103
  %v1045 = vpop.permute.xlu0 %1044
  %vm1046 = vcmask 7168
  %s1047 = scalar_lea.vmem %s1, 153
  %1048 = vst.msk [vmem:[%s1047] sm:$0x1] %vm1046, %v1045
  %s1049 = scalar_lea.vmem %s1, 408
  %1050 = vst.msk [vmem:[%s1049] sm:$0x2] %vm1046, %v1045
  %s1051 = scalar_lea.vmem %s1, 663
  %1052 = vst.msk [vmem:[%s1051] sm:$0x4] %vm1046, %v1045
  %s1053 = scalar_lea.vmem %s1, 918
  %1054 = vst.msk [vmem:[%s1053] sm:$0x8] %vm1046, %v1045
  %s1055 = scalar_lea.vmem %s1, 1173
  %1056 = vst.msk [vmem:[%s1055] sm:$0x10] %vm1046, %v1045
  %s1057 = scalar_lea.vmem %s1, 1428
  %1058 = vst.msk [vmem:[%s1057] sm:$0x20] %vm1046, %v1045
  %s1059 = scalar_lea.vmem %s1, 1683
  %1060 = vst.msk [vmem:[%s1059] sm:$0x40] %vm1046, %v1045
  %s1061 = scalar_lea.vmem %s1, 1938
  %1062 = vst.msk [vmem:[%s1061] sm:$0x80] %vm1046, %v1045
  %v1063 = vld [vmem:[%s0] sm:$0xff]
  %1064 = vrot.lane.b32.xlu0 %v1063, 102
  %v1065 = vpop.permute.xlu0 %1064
  %vm1066 = vcmask 7168
  %s1067 = scalar_lea.vmem %s1, 26
  %1068 = vst.msk [vmem:[%s1067] sm:$0x1] %vm1066, %v1065
  %s1069 = scalar_lea.vmem %s1, 281
  %1070 = vst.msk [vmem:[%s1069] sm:$0x2] %vm1066, %v1065
  %s1071 = scalar_lea.vmem %s1, 536
  %1072 = vst.msk [vmem:[%s1071] sm:$0x4] %vm1066, %v1065
  %s1073 = scalar_lea.vmem %s1, 791
  %1074 = vst.msk [vmem:[%s1073] sm:$0x8] %vm1066, %v1065
  %s1075 = scalar_lea.vmem %s1, 1046
  %1076 = vst.msk [vmem:[%s1075] sm:$0x10] %vm1066, %v1065
  %s1077 = scalar_lea.vmem %s1, 1301
  %1078 = vst.msk [vmem:[%s1077] sm:$0x20] %vm1066, %v1065
  %s1079 = scalar_lea.vmem %s1, 1556
  %1080 = vst.msk [vmem:[%s1079] sm:$0x40] %vm1066, %v1065
  %s1081 = scalar_lea.vmem %s1, 1811
  %1082 = vst.msk [vmem:[%s1081] sm:$0x80] %vm1066, %v1065
  %s1083 = scalar_lea.vmem %s0, 8
  %v1084 = vld [vmem:[%s1083] sm:$0xff]
  %1085 = vrot.lane.b32.xlu0 %v1084, 102
  %v1086 = vpop.permute.xlu0 %1085
  %vm1087 = vcmask 7168
  %s1088 = scalar_lea.vmem %s1, 154
  %1089 = vst.msk [vmem:[%s1088] sm:$0x1] %vm1087, %v1086
  %s1090 = scalar_lea.vmem %s1, 409
  %1091 = vst.msk [vmem:[%s1090] sm:$0x2] %vm1087, %v1086
  %s1092 = scalar_lea.vmem %s1, 664
  %1093 = vst.msk [vmem:[%s1092] sm:$0x4] %vm1087, %v1086
  %s1094 = scalar_lea.vmem %s1, 919
  %1095 = vst.msk [vmem:[%s1094] sm:$0x8] %vm1087, %v1086
  %s1096 = scalar_lea.vmem %s1, 1174
  %1097 = vst.msk [vmem:[%s1096] sm:$0x10] %vm1087, %v1086
  %s1098 = scalar_lea.vmem %s1, 1429
  %1099 = vst.msk [vmem:[%s1098] sm:$0x20] %vm1087, %v1086
  %s1100 = scalar_lea.vmem %s1, 1684
  %1101 = vst.msk [vmem:[%s1100] sm:$0x40] %vm1087, %v1086
  %s1102 = scalar_lea.vmem %s1, 1939
  %1103 = vst.msk [vmem:[%s1102] sm:$0x80] %vm1087, %v1086
  %v1104 = vld [vmem:[%s0] sm:$0xff]
  %1105 = vrot.lane.b32.xlu0 %v1104, 101
  %v1106 = vpop.permute.xlu0 %1105
  %vm1107 = vcmask 7168
  %s1108 = scalar_lea.vmem %s1, 27
  %1109 = vst.msk [vmem:[%s1108] sm:$0x1] %vm1107, %v1106
  %s1110 = scalar_lea.vmem %s1, 282
  %1111 = vst.msk [vmem:[%s1110] sm:$0x2] %vm1107, %v1106
  %s1112 = scalar_lea.vmem %s1, 537
  %1113 = vst.msk [vmem:[%s1112] sm:$0x4] %vm1107, %v1106
  %s1114 = scalar_lea.vmem %s1, 792
  %1115 = vst.msk [vmem:[%s1114] sm:$0x8] %vm1107, %v1106
  %s1116 = scalar_lea.vmem %s1, 1047
  %1117 = vst.msk [vmem:[%s1116] sm:$0x10] %vm1107, %v1106
  %s1118 = scalar_lea.vmem %s1, 1302
  %1119 = vst.msk [vmem:[%s1118] sm:$0x20] %vm1107, %v1106
  %s1120 = scalar_lea.vmem %s1, 1557
  %1121 = vst.msk [vmem:[%s1120] sm:$0x40] %vm1107, %v1106
  %s1122 = scalar_lea.vmem %s1, 1812
  %1123 = vst.msk [vmem:[%s1122] sm:$0x80] %vm1107, %v1106
  %s1124 = scalar_lea.vmem %s0, 8
  %v1125 = vld [vmem:[%s1124] sm:$0xff]
  %1126 = vrot.lane.b32.xlu0 %v1125, 101
  %v1127 = vpop.permute.xlu0 %1126
  %vm1128 = vcmask 7168
  %s1129 = scalar_lea.vmem %s1, 155
  %1130 = vst.msk [vmem:[%s1129] sm:$0x1] %vm1128, %v1127
  %s1131 = scalar_lea.vmem %s1, 410
  %1132 = vst.msk [vmem:[%s1131] sm:$0x2] %vm1128, %v1127
  %s1133 = scalar_lea.vmem %s1, 665
  %1134 = vst.msk [vmem:[%s1133] sm:$0x4] %vm1128, %v1127
  %s1135 = scalar_lea.vmem %s1, 920
  %1136 = vst.msk [vmem:[%s1135] sm:$0x8] %vm1128, %v1127
  %s1137 = scalar_lea.vmem %s1, 1175
  %1138 = vst.msk [vmem:[%s1137] sm:$0x10] %vm1128, %v1127
  %s1139 = scalar_lea.vmem %s1, 1430
  %1140 = vst.msk [vmem:[%s1139] sm:$0x20] %vm1128, %v1127
  %s1141 = scalar_lea.vmem %s1, 1685
  %1142 = vst.msk [vmem:[%s1141] sm:$0x40] %vm1128, %v1127
  %s1143 = scalar_lea.vmem %s1, 1940
  %1144 = vst.msk [vmem:[%s1143] sm:$0x80] %vm1128, %v1127
  %v1145 = vld [vmem:[%s0] sm:$0xff]
  %1146 = vrot.lane.b32.xlu0 %v1145, 100
  %v1147 = vpop.permute.xlu0 %1146
  %vm1148 = vcmask 7168
  %s1149 = scalar_lea.vmem %s1, 28
  %1150 = vst.msk [vmem:[%s1149] sm:$0x1] %vm1148, %v1147
  %s1151 = scalar_lea.vmem %s1, 283
  %1152 = vst.msk [vmem:[%s1151] sm:$0x2] %vm1148, %v1147
  %s1153 = scalar_lea.vmem %s1, 538
  %1154 = vst.msk [vmem:[%s1153] sm:$0x4] %vm1148, %v1147
  %s1155 = scalar_lea.vmem %s1, 793
  %1156 = vst.msk [vmem:[%s1155] sm:$0x8] %vm1148, %v1147
  %s1157 = scalar_lea.vmem %s1, 1048
  %1158 = vst.msk [vmem:[%s1157] sm:$0x10] %vm1148, %v1147
  %s1159 = scalar_lea.vmem %s1, 1303
  %1160 = vst.msk [vmem:[%s1159] sm:$0x20] %vm1148, %v1147
  %s1161 = scalar_lea.vmem %s1, 1558
  %1162 = vst.msk [vmem:[%s1161] sm:$0x40] %vm1148, %v1147
  %s1163 = scalar_lea.vmem %s1, 1813
  %1164 = vst.msk [vmem:[%s1163] sm:$0x80] %vm1148, %v1147
  %s1165 = scalar_lea.vmem %s0, 8
  %v1166 = vld [vmem:[%s1165] sm:$0xff]
  %1167 = vrot.lane.b32.xlu0 %v1166, 100
  %v1168 = vpop.permute.xlu0 %1167
  %vm1169 = vcmask 7168
  %s1170 = scalar_lea.vmem %s1, 156
  %1171 = vst.msk [vmem:[%s1170] sm:$0x1] %vm1169, %v1168
  %s1172 = scalar_lea.vmem %s1, 411
  %1173 = vst.msk [vmem:[%s1172] sm:$0x2] %vm1169, %v1168
  %s1174 = scalar_lea.vmem %s1, 666
  %1175 = vst.msk [vmem:[%s1174] sm:$0x4] %vm1169, %v1168
  %s1176 = scalar_lea.vmem %s1, 921
  %1177 = vst.msk [vmem:[%s1176] sm:$0x8] %vm1169, %v1168
  %s1178 = scalar_lea.vmem %s1, 1176
  %1179 = vst.msk [vmem:[%s1178] sm:$0x10] %vm1169, %v1168
  %s1180 = scalar_lea.vmem %s1, 1431
  %1181 = vst.msk [vmem:[%s1180] sm:$0x20] %vm1169, %v1168
  %s1182 = scalar_lea.vmem %s1, 1686
  %1183 = vst.msk [vmem:[%s1182] sm:$0x40] %vm1169, %v1168
  %s1184 = scalar_lea.vmem %s1, 1941
  %1185 = vst.msk [vmem:[%s1184] sm:$0x80] %vm1169, %v1168
  %v1186 = vld [vmem:[%s0] sm:$0xff]
  %1187 = vrot.lane.b32.xlu0 %v1186, 99
  %v1188 = vpop.permute.xlu0 %1187
  %vm1189 = vcmask 7168
  %s1190 = scalar_lea.vmem %s1, 29
  %1191 = vst.msk [vmem:[%s1190] sm:$0x1] %vm1189, %v1188
  %s1192 = scalar_lea.vmem %s1, 284
  %1193 = vst.msk [vmem:[%s1192] sm:$0x2] %vm1189, %v1188
  %s1194 = scalar_lea.vmem %s1, 539
  %1195 = vst.msk [vmem:[%s1194] sm:$0x4] %vm1189, %v1188
  %s1196 = scalar_lea.vmem %s1, 794
  %1197 = vst.msk [vmem:[%s1196] sm:$0x8] %vm1189, %v1188
  %s1198 = scalar_lea.vmem %s1, 1049
  %1199 = vst.msk [vmem:[%s1198] sm:$0x10] %vm1189, %v1188
  %s1200 = scalar_lea.vmem %s1, 1304
  %1201 = vst.msk [vmem:[%s1200] sm:$0x20] %vm1189, %v1188
  %s1202 = scalar_lea.vmem %s1, 1559
  %1203 = vst.msk [vmem:[%s1202] sm:$0x40] %vm1189, %v1188
  %s1204 = scalar_lea.vmem %s1, 1814
  %1205 = vst.msk [vmem:[%s1204] sm:$0x80] %vm1189, %v1188
  %s1206 = scalar_lea.vmem %s0, 8
  %v1207 = vld [vmem:[%s1206] sm:$0xff]
  %1208 = vrot.lane.b32.xlu0 %v1207, 99
  %v1209 = vpop.permute.xlu0 %1208
  %vm1210 = vcmask 7168
  %s1211 = scalar_lea.vmem %s1, 157
  %1212 = vst.msk [vmem:[%s1211] sm:$0x1] %vm1210, %v1209
  %s1213 = scalar_lea.vmem %s1, 412
  %1214 = vst.msk [vmem:[%s1213] sm:$0x2] %vm1210, %v1209
  %s1215 = scalar_lea.vmem %s1, 667
  %1216 = vst.msk [vmem:[%s1215] sm:$0x4] %vm1210, %v1209
  %s1217 = scalar_lea.vmem %s1, 922
  %1218 = vst.msk [vmem:[%s1217] sm:$0x8] %vm1210, %v1209
  %s1219 = scalar_lea.vmem %s1, 1177
  %1220 = vst.msk [vmem:[%s1219] sm:$0x10] %vm1210, %v1209
  %s1221 = scalar_lea.vmem %s1, 1432
  %1222 = vst.msk [vmem:[%s1221] sm:$0x20] %vm1210, %v1209
  %s1223 = scalar_lea.vmem %s1, 1687
  %1224 = vst.msk [vmem:[%s1223] sm:$0x40] %vm1210, %v1209
  %s1225 = scalar_lea.vmem %s1, 1942
  %1226 = vst.msk [vmem:[%s1225] sm:$0x80] %vm1210, %v1209
  %v1227 = vld [vmem:[%s0] sm:$0xff]
  %1228 = vrot.lane.b32.xlu0 %v1227, 98
  %v1229 = vpop.permute.xlu0 %1228
  %vm1230 = vcmask 7168
  %s1231 = scalar_lea.vmem %s1, 30
  %1232 = vst.msk [vmem:[%s1231] sm:$0x1] %vm1230, %v1229
  %s1233 = scalar_lea.vmem %s1, 285
  %1234 = vst.msk [vmem:[%s1233] sm:$0x2] %vm1230, %v1229
  %s1235 = scalar_lea.vmem %s1, 540
  %1236 = vst.msk [vmem:[%s1235] sm:$0x4] %vm1230, %v1229
  %s1237 = scalar_lea.vmem %s1, 795
  %1238 = vst.msk [vmem:[%s1237] sm:$0x8] %vm1230, %v1229
  %s1239 = scalar_lea.vmem %s1, 1050
  %1240 = vst.msk [vmem:[%s1239] sm:$0x10] %vm1230, %v1229
  %s1241 = scalar_lea.vmem %s1, 1305
  %1242 = vst.msk [vmem:[%s1241] sm:$0x20] %vm1230, %v1229
  %s1243 = scalar_lea.vmem %s1, 1560
  %1244 = vst.msk [vmem:[%s1243] sm:$0x40] %vm1230, %v1229
  %s1245 = scalar_lea.vmem %s1, 1815
  %1246 = vst.msk [vmem:[%s1245] sm:$0x80] %vm1230, %v1229
  %s1247 = scalar_lea.vmem %s0, 8
  %v1248 = vld [vmem:[%s1247] sm:$0xff]
  %1249 = vrot.lane.b32.xlu0 %v1248, 98
  %v1250 = vpop.permute.xlu0 %1249
  %vm1251 = vcmask 7168
  %s1252 = scalar_lea.vmem %s1, 158
  %1253 = vst.msk [vmem:[%s1252] sm:$0x1] %vm1251, %v1250
  %s1254 = scalar_lea.vmem %s1, 413
  %1255 = vst.msk [vmem:[%s1254] sm:$0x2] %vm1251, %v1250
  %s1256 = scalar_lea.vmem %s1, 668
  %1257 = vst.msk [vmem:[%s1256] sm:$0x4] %vm1251, %v1250
  %s1258 = scalar_lea.vmem %s1, 923
  %1259 = vst.msk [vmem:[%s1258] sm:$0x8] %vm1251, %v1250
  %s1260 = scalar_lea.vmem %s1, 1178
  %1261 = vst.msk [vmem:[%s1260] sm:$0x10] %vm1251, %v1250
  %s1262 = scalar_lea.vmem %s1, 1433
  %1263 = vst.msk [vmem:[%s1262] sm:$0x20] %vm1251, %v1250
  %s1264 = scalar_lea.vmem %s1, 1688
  %1265 = vst.msk [vmem:[%s1264] sm:$0x40] %vm1251, %v1250
  %s1266 = scalar_lea.vmem %s1, 1943
  %1267 = vst.msk [vmem:[%s1266] sm:$0x80] %vm1251, %v1250
  %v1268 = vld [vmem:[%s0] sm:$0xff]
  %1269 = vrot.lane.b32.xlu0 %v1268, 97
  %v1270 = vpop.permute.xlu0 %1269
  %vm1271 = vcmask 7168
  %s1272 = scalar_lea.vmem %s1, 31
  %1273 = vst.msk [vmem:[%s1272] sm:$0x1] %vm1271, %v1270
  %s1274 = scalar_lea.vmem %s1, 286
  %1275 = vst.msk [vmem:[%s1274] sm:$0x2] %vm1271, %v1270
  %s1276 = scalar_lea.vmem %s1, 541
  %1277 = vst.msk [vmem:[%s1276] sm:$0x4] %vm1271, %v1270
  %s1278 = scalar_lea.vmem %s1, 796
  %1279 = vst.msk [vmem:[%s1278] sm:$0x8] %vm1271, %v1270
  %s1280 = scalar_lea.vmem %s1, 1051
  %1281 = vst.msk [vmem:[%s1280] sm:$0x10] %vm1271, %v1270
  %s1282 = scalar_lea.vmem %s1, 1306
  %1283 = vst.msk [vmem:[%s1282] sm:$0x20] %vm1271, %v1270
  %s1284 = scalar_lea.vmem %s1, 1561
  %1285 = vst.msk [vmem:[%s1284] sm:$0x40] %vm1271, %v1270
  %s1286 = scalar_lea.vmem %s1, 1816
  %1287 = vst.msk [vmem:[%s1286] sm:$0x80] %vm1271, %v1270
  %s1288 = scalar_lea.vmem %s0, 8
  %v1289 = vld [vmem:[%s1288] sm:$0xff]
  %1290 = vrot.lane.b32.xlu0 %v1289, 97
  %v1291 = vpop.permute.xlu0 %1290
  %vm1292 = vcmask 7168
  %s1293 = scalar_lea.vmem %s1, 159
  %1294 = vst.msk [vmem:[%s1293] sm:$0x1] %vm1292, %v1291
  %s1295 = scalar_lea.vmem %s1, 414
  %1296 = vst.msk [vmem:[%s1295] sm:$0x2] %vm1292, %v1291
  %s1297 = scalar_lea.vmem %s1, 669
  %1298 = vst.msk [vmem:[%s1297] sm:$0x4] %vm1292, %v1291
  %s1299 = scalar_lea.vmem %s1, 924
  %1300 = vst.msk [vmem:[%s1299] sm:$0x8] %vm1292, %v1291
  %s1301 = scalar_lea.vmem %s1, 1179
  %1302 = vst.msk [vmem:[%s1301] sm:$0x10] %vm1292, %v1291
  %s1303 = scalar_lea.vmem %s1, 1434
  %1304 = vst.msk [vmem:[%s1303] sm:$0x20] %vm1292, %v1291
  %s1305 = scalar_lea.vmem %s1, 1689
  %1306 = vst.msk [vmem:[%s1305] sm:$0x40] %vm1292, %v1291
  %s1307 = scalar_lea.vmem %s1, 1944
  %1308 = vst.msk [vmem:[%s1307] sm:$0x80] %vm1292, %v1291
  %v1309 = vld [vmem:[%s0] sm:$0xff]
  %1310 = vrot.lane.b32.xlu0 %v1309, 96
  %v1311 = vpop.permute.xlu0 %1310
  %vm1312 = vcmask 7168
  %s1313 = scalar_lea.vmem %s1, 32
  %1314 = vst.msk [vmem:[%s1313] sm:$0x1] %vm1312, %v1311
  %s1315 = scalar_lea.vmem %s1, 287
  %1316 = vst.msk [vmem:[%s1315] sm:$0x2] %vm1312, %v1311
  %s1317 = scalar_lea.vmem %s1, 542
  %1318 = vst.msk [vmem:[%s1317] sm:$0x4] %vm1312, %v1311
  %s1319 = scalar_lea.vmem %s1, 797
  %1320 = vst.msk [vmem:[%s1319] sm:$0x8] %vm1312, %v1311
  %s1321 = scalar_lea.vmem %s1, 1052
  %1322 = vst.msk [vmem:[%s1321] sm:$0x10] %vm1312, %v1311
  %s1323 = scalar_lea.vmem %s1, 1307
  %1324 = vst.msk [vmem:[%s1323] sm:$0x20] %vm1312, %v1311
  %s1325 = scalar_lea.vmem %s1, 1562
  %1326 = vst.msk [vmem:[%s1325] sm:$0x40] %vm1312, %v1311
  %s1327 = scalar_lea.vmem %s1, 1817
  %1328 = vst.msk [vmem:[%s1327] sm:$0x80] %vm1312, %v1311
  %s1329 = scalar_lea.vmem %s0, 8
  %v1330 = vld [vmem:[%s1329] sm:$0xff]
  %1331 = vrot.lane.b32.xlu0 %v1330, 96
  %v1332 = vpop.permute.xlu0 %1331
  %vm1333 = vcmask 7168
  %s1334 = scalar_lea.vmem %s1, 160
  %1335 = vst.msk [vmem:[%s1334] sm:$0x1] %vm1333, %v1332
  %s1336 = scalar_lea.vmem %s1, 415
  %1337 = vst.msk [vmem:[%s1336] sm:$0x2] %vm1333, %v1332
  %s1338 = scalar_lea.vmem %s1, 670
  %1339 = vst.msk [vmem:[%s1338] sm:$0x4] %vm1333, %v1332
  %s1340 = scalar_lea.vmem %s1, 925
  %1341 = vst.msk [vmem:[%s1340] sm:$0x8] %vm1333, %v1332
  %s1342 = scalar_lea.vmem %s1, 1180
  %1343 = vst.msk [vmem:[%s1342] sm:$0x10] %vm1333, %v1332
  %s1344 = scalar_lea.vmem %s1, 1435
  %1345 = vst.msk [vmem:[%s1344] sm:$0x20] %vm1333, %v1332
  %s1346 = scalar_lea.vmem %s1, 1690
  %1347 = vst.msk [vmem:[%s1346] sm:$0x40] %vm1333, %v1332
  %s1348 = scalar_lea.vmem %s1, 1945
  %1349 = vst.msk [vmem:[%s1348] sm:$0x80] %vm1333, %v1332
  %v1350 = vld [vmem:[%s0] sm:$0xff]
  %1351 = vrot.lane.b32.xlu0 %v1350, 95
  %v1352 = vpop.permute.xlu0 %1351
  %vm1353 = vcmask 7168
  %s1354 = scalar_lea.vmem %s1, 33
  %1355 = vst.msk [vmem:[%s1354] sm:$0x1] %vm1353, %v1352
  %s1356 = scalar_lea.vmem %s1, 288
  %1357 = vst.msk [vmem:[%s1356] sm:$0x2] %vm1353, %v1352
  %s1358 = scalar_lea.vmem %s1, 543
  %1359 = vst.msk [vmem:[%s1358] sm:$0x4] %vm1353, %v1352
  %s1360 = scalar_lea.vmem %s1, 798
  %1361 = vst.msk [vmem:[%s1360] sm:$0x8] %vm1353, %v1352
  %s1362 = scalar_lea.vmem %s1, 1053
  %1363 = vst.msk [vmem:[%s1362] sm:$0x10] %vm1353, %v1352
  %s1364 = scalar_lea.vmem %s1, 1308
  %1365 = vst.msk [vmem:[%s1364] sm:$0x20] %vm1353, %v1352
  %s1366 = scalar_lea.vmem %s1, 1563
  %1367 = vst.msk [vmem:[%s1366] sm:$0x40] %vm1353, %v1352
  %s1368 = scalar_lea.vmem %s1, 1818
  %1369 = vst.msk [vmem:[%s1368] sm:$0x80] %vm1353, %v1352
  %s1370 = scalar_lea.vmem %s0, 8
  %v1371 = vld [vmem:[%s1370] sm:$0xff]
  %1372 = vrot.lane.b32.xlu0 %v1371, 95
  %v1373 = vpop.permute.xlu0 %1372
  %vm1374 = vcmask 7168
  %s1375 = scalar_lea.vmem %s1, 161
  %1376 = vst.msk [vmem:[%s1375] sm:$0x1] %vm1374, %v1373
  %s1377 = scalar_lea.vmem %s1, 416
  %1378 = vst.msk [vmem:[%s1377] sm:$0x2] %vm1374, %v1373
  %s1379 = scalar_lea.vmem %s1, 671
  %1380 = vst.msk [vmem:[%s1379] sm:$0x4] %vm1374, %v1373
  %s1381 = scalar_lea.vmem %s1, 926
  %1382 = vst.msk [vmem:[%s1381] sm:$0x8] %vm1374, %v1373
  %s1383 = scalar_lea.vmem %s1, 1181
  %1384 = vst.msk [vmem:[%s1383] sm:$0x10] %vm1374, %v1373
  %s1385 = scalar_lea.vmem %s1, 1436
  %1386 = vst.msk [vmem:[%s1385] sm:$0x20] %vm1374, %v1373
  %s1387 = scalar_lea.vmem %s1, 1691
  %1388 = vst.msk [vmem:[%s1387] sm:$0x40] %vm1374, %v1373
  %s1389 = scalar_lea.vmem %s1, 1946
  %1390 = vst.msk [vmem:[%s1389] sm:$0x80] %vm1374, %v1373
  %v1391 = vld [vmem:[%s0] sm:$0xff]
  %1392 = vrot.lane.b32.xlu0 %v1391, 94
  %v1393 = vpop.permute.xlu0 %1392
  %vm1394 = vcmask 7168
  %s1395 = scalar_lea.vmem %s1, 34
  %1396 = vst.msk [vmem:[%s1395] sm:$0x1] %vm1394, %v1393
  %s1397 = scalar_lea.vmem %s1, 289
  %1398 = vst.msk [vmem:[%s1397] sm:$0x2] %vm1394, %v1393
  %s1399 = scalar_lea.vmem %s1, 544
  %1400 = vst.msk [vmem:[%s1399] sm:$0x4] %vm1394, %v1393
  %s1401 = scalar_lea.vmem %s1, 799
  %1402 = vst.msk [vmem:[%s1401] sm:$0x8] %vm1394, %v1393
  %s1403 = scalar_lea.vmem %s1, 1054
  %1404 = vst.msk [vmem:[%s1403] sm:$0x10] %vm1394, %v1393
  %s1405 = scalar_lea.vmem %s1, 1309
  %1406 = vst.msk [vmem:[%s1405] sm:$0x20] %vm1394, %v1393
  %s1407 = scalar_lea.vmem %s1, 1564
  %1408 = vst.msk [vmem:[%s1407] sm:$0x40] %vm1394, %v1393
  %s1409 = scalar_lea.vmem %s1, 1819
  %1410 = vst.msk [vmem:[%s1409] sm:$0x80] %vm1394, %v1393
  %s1411 = scalar_lea.vmem %s0, 8
  %v1412 = vld [vmem:[%s1411] sm:$0xff]
  %1413 = vrot.lane.b32.xlu0 %v1412, 94
  %v1414 = vpop.permute.xlu0 %1413
  %vm1415 = vcmask 7168
  %s1416 = scalar_lea.vmem %s1, 162
  %1417 = vst.msk [vmem:[%s1416] sm:$0x1] %vm1415, %v1414
  %s1418 = scalar_lea.vmem %s1, 417
  %1419 = vst.msk [vmem:[%s1418] sm:$0x2] %vm1415, %v1414
  %s1420 = scalar_lea.vmem %s1, 672
  %1421 = vst.msk [vmem:[%s1420] sm:$0x4] %vm1415, %v1414
  %s1422 = scalar_lea.vmem %s1, 927
  %1423 = vst.msk [vmem:[%s1422] sm:$0x8] %vm1415, %v1414
  %s1424 = scalar_lea.vmem %s1, 1182
  %1425 = vst.msk [vmem:[%s1424] sm:$0x10] %vm1415, %v1414
  %s1426 = scalar_lea.vmem %s1, 1437
  %1427 = vst.msk [vmem:[%s1426] sm:$0x20] %vm1415, %v1414
  %s1428 = scalar_lea.vmem %s1, 1692
  %1429 = vst.msk [vmem:[%s1428] sm:$0x40] %vm1415, %v1414
  %s1430 = scalar_lea.vmem %s1, 1947
  %1431 = vst.msk [vmem:[%s1430] sm:$0x80] %vm1415, %v1414
  %v1432 = vld [vmem:[%s0] sm:$0xff]
  %1433 = vrot.lane.b32.xlu0 %v1432, 93
  %v1434 = vpop.permute.xlu0 %1433
  %vm1435 = vcmask 7168
  %s1436 = scalar_lea.vmem %s1, 35
  %1437 = vst.msk [vmem:[%s1436] sm:$0x1] %vm1435, %v1434
  %s1438 = scalar_lea.vmem %s1, 290
  %1439 = vst.msk [vmem:[%s1438] sm:$0x2] %vm1435, %v1434
  %s1440 = scalar_lea.vmem %s1, 545
  %1441 = vst.msk [vmem:[%s1440] sm:$0x4] %vm1435, %v1434
  %s1442 = scalar_lea.vmem %s1, 800
  %1443 = vst.msk [vmem:[%s1442] sm:$0x8] %vm1435, %v1434
  %s1444 = scalar_lea.vmem %s1, 1055
  %1445 = vst.msk [vmem:[%s1444] sm:$0x10] %vm1435, %v1434
  %s1446 = scalar_lea.vmem %s1, 1310
  %1447 = vst.msk [vmem:[%s1446] sm:$0x20] %vm1435, %v1434
  %s1448 = scalar_lea.vmem %s1, 1565
  %1449 = vst.msk [vmem:[%s1448] sm:$0x40] %vm1435, %v1434
  %s1450 = scalar_lea.vmem %s1, 1820
  %1451 = vst.msk [vmem:[%s1450] sm:$0x80] %vm1435, %v1434
  %s1452 = scalar_lea.vmem %s0, 8
  %v1453 = vld [vmem:[%s1452] sm:$0xff]
  %1454 = vrot.lane.b32.xlu0 %v1453, 93
  %v1455 = vpop.permute.xlu0 %1454
  %vm1456 = vcmask 7168
  %s1457 = scalar_lea.vmem %s1, 163
  %1458 = vst.msk [vmem:[%s1457] sm:$0x1] %vm1456, %v1455
  %s1459 = scalar_lea.vmem %s1, 418
  %1460 = vst.msk [vmem:[%s1459] sm:$0x2] %vm1456, %v1455
  %s1461 = scalar_lea.vmem %s1, 673
  %1462 = vst.msk [vmem:[%s1461] sm:$0x4] %vm1456, %v1455
  %s1463 = scalar_lea.vmem %s1, 928
  %1464 = vst.msk [vmem:[%s1463] sm:$0x8] %vm1456, %v1455
  %s1465 = scalar_lea.vmem %s1, 1183
  %1466 = vst.msk [vmem:[%s1465] sm:$0x10] %vm1456, %v1455
  %s1467 = scalar_lea.vmem %s1, 1438
  %1468 = vst.msk [vmem:[%s1467] sm:$0x20] %vm1456, %v1455
  %s1469 = scalar_lea.vmem %s1, 1693
  %1470 = vst.msk [vmem:[%s1469] sm:$0x40] %vm1456, %v1455
  %s1471 = scalar_lea.vmem %s1, 1948
  %1472 = vst.msk [vmem:[%s1471] sm:$0x80] %vm1456, %v1455
  %v1473 = vld [vmem:[%s0] sm:$0xff]
  %1474 = vrot.lane.b32.xlu0 %v1473, 92
  %v1475 = vpop.permute.xlu0 %1474
  %vm1476 = vcmask 7168
  %s1477 = scalar_lea.vmem %s1, 36
  %1478 = vst.msk [vmem:[%s1477] sm:$0x1] %vm1476, %v1475
  %s1479 = scalar_lea.vmem %s1, 291
  %1480 = vst.msk [vmem:[%s1479] sm:$0x2] %vm1476, %v1475
  %s1481 = scalar_lea.vmem %s1, 546
  %1482 = vst.msk [vmem:[%s1481] sm:$0x4] %vm1476, %v1475
  %s1483 = scalar_lea.vmem %s1, 801
  %1484 = vst.msk [vmem:[%s1483] sm:$0x8] %vm1476, %v1475
  %s1485 = scalar_lea.vmem %s1, 1056
  %1486 = vst.msk [vmem:[%s1485] sm:$0x10] %vm1476, %v1475
  %s1487 = scalar_lea.vmem %s1, 1311
  %1488 = vst.msk [vmem:[%s1487] sm:$0x20] %vm1476, %v1475
  %s1489 = scalar_lea.vmem %s1, 1566
  %1490 = vst.msk [vmem:[%s1489] sm:$0x40] %vm1476, %v1475
  %s1491 = scalar_lea.vmem %s1, 1821
  %1492 = vst.msk [vmem:[%s1491] sm:$0x80] %vm1476, %v1475
  %s1493 = scalar_lea.vmem %s0, 8
  %v1494 = vld [vmem:[%s1493] sm:$0xff]
  %1495 = vrot.lane.b32.xlu0 %v1494, 92
  %v1496 = vpop.permute.xlu0 %1495
  %vm1497 = vcmask 7168
  %s1498 = scalar_lea.vmem %s1, 164
  %1499 = vst.msk [vmem:[%s1498] sm:$0x1] %vm1497, %v1496
  %s1500 = scalar_lea.vmem %s1, 419
  %1501 = vst.msk [vmem:[%s1500] sm:$0x2] %vm1497, %v1496
  %s1502 = scalar_lea.vmem %s1, 674
  %1503 = vst.msk [vmem:[%s1502] sm:$0x4] %vm1497, %v1496
  %s1504 = scalar_lea.vmem %s1, 929
  %1505 = vst.msk [vmem:[%s1504] sm:$0x8] %vm1497, %v1496
  %s1506 = scalar_lea.vmem %s1, 1184
  %1507 = vst.msk [vmem:[%s1506] sm:$0x10] %vm1497, %v1496
  %s1508 = scalar_lea.vmem %s1, 1439
  %1509 = vst.msk [vmem:[%s1508] sm:$0x20] %vm1497, %v1496
  %s1510 = scalar_lea.vmem %s1, 1694
  %1511 = vst.msk [vmem:[%s1510] sm:$0x40] %vm1497, %v1496
  %s1512 = scalar_lea.vmem %s1, 1949
  %1513 = vst.msk [vmem:[%s1512] sm:$0x80] %vm1497, %v1496
  %v1514 = vld [vmem:[%s0] sm:$0xff]
  %1515 = vrot.lane.b32.xlu0 %v1514, 91
  %v1516 = vpop.permute.xlu0 %1515
  %vm1517 = vcmask 7168
  %s1518 = scalar_lea.vmem %s1, 37
  %1519 = vst.msk [vmem:[%s1518] sm:$0x1] %vm1517, %v1516
  %s1520 = scalar_lea.vmem %s1, 292
  %1521 = vst.msk [vmem:[%s1520] sm:$0x2] %vm1517, %v1516
  %s1522 = scalar_lea.vmem %s1, 547
  %1523 = vst.msk [vmem:[%s1522] sm:$0x4] %vm1517, %v1516
  %s1524 = scalar_lea.vmem %s1, 802
  %1525 = vst.msk [vmem:[%s1524] sm:$0x8] %vm1517, %v1516
  %s1526 = scalar_lea.vmem %s1, 1057
  %1527 = vst.msk [vmem:[%s1526] sm:$0x10] %vm1517, %v1516
  %s1528 = scalar_lea.vmem %s1, 1312
  %1529 = vst.msk [vmem:[%s1528] sm:$0x20] %vm1517, %v1516
  %s1530 = scalar_lea.vmem %s1, 1567
  %1531 = vst.msk [vmem:[%s1530] sm:$0x40] %vm1517, %v1516
  %s1532 = scalar_lea.vmem %s1, 1822
  %1533 = vst.msk [vmem:[%s1532] sm:$0x80] %vm1517, %v1516
  %s1534 = scalar_lea.vmem %s0, 8
  %v1535 = vld [vmem:[%s1534] sm:$0xff]
  %1536 = vrot.lane.b32.xlu0 %v1535, 91
  %v1537 = vpop.permute.xlu0 %1536
  %vm1538 = vcmask 7168
  %s1539 = scalar_lea.vmem %s1, 165
  %1540 = vst.msk [vmem:[%s1539] sm:$0x1] %vm1538, %v1537
  %s1541 = scalar_lea.vmem %s1, 420
  %1542 = vst.msk [vmem:[%s1541] sm:$0x2] %vm1538, %v1537
  %s1543 = scalar_lea.vmem %s1, 675
  %1544 = vst.msk [vmem:[%s1543] sm:$0x4] %vm1538, %v1537
  %s1545 = scalar_lea.vmem %s1, 930
  %1546 = vst.msk [vmem:[%s1545] sm:$0x8] %vm1538, %v1537
  %s1547 = scalar_lea.vmem %s1, 1185
  %1548 = vst.msk [vmem:[%s1547] sm:$0x10] %vm1538, %v1537
  %s1549 = scalar_lea.vmem %s1, 1440
  %1550 = vst.msk [vmem:[%s1549] sm:$0x20] %vm1538, %v1537
  %s1551 = scalar_lea.vmem %s1, 1695
  %1552 = vst.msk [vmem:[%s1551] sm:$0x40] %vm1538, %v1537
  %s1553 = scalar_lea.vmem %s1, 1950
  %1554 = vst.msk [vmem:[%s1553] sm:$0x80] %vm1538, %v1537
  %v1555 = vld [vmem:[%s0] sm:$0xff]
  %1556 = vrot.lane.b32.xlu0 %v1555, 90
  %v1557 = vpop.permute.xlu0 %1556
  %vm1558 = vcmask 7168
  %s1559 = scalar_lea.vmem %s1, 38
  %1560 = vst.msk [vmem:[%s1559] sm:$0x1] %vm1558, %v1557
  %s1561 = scalar_lea.vmem %s1, 293
  %1562 = vst.msk [vmem:[%s1561] sm:$0x2] %vm1558, %v1557
  %s1563 = scalar_lea.vmem %s1, 548
  %1564 = vst.msk [vmem:[%s1563] sm:$0x4] %vm1558, %v1557
  %s1565 = scalar_lea.vmem %s1, 803
  %1566 = vst.msk [vmem:[%s1565] sm:$0x8] %vm1558, %v1557
  %s1567 = scalar_lea.vmem %s1, 1058
  %1568 = vst.msk [vmem:[%s1567] sm:$0x10] %vm1558, %v1557
  %s1569 = scalar_lea.vmem %s1, 1313
  %1570 = vst.msk [vmem:[%s1569] sm:$0x20] %vm1558, %v1557
  %s1571 = scalar_lea.vmem %s1, 1568
  %1572 = vst.msk [vmem:[%s1571] sm:$0x40] %vm1558, %v1557
  %s1573 = scalar_lea.vmem %s1, 1823
  %1574 = vst.msk [vmem:[%s1573] sm:$0x80] %vm1558, %v1557
  %s1575 = scalar_lea.vmem %s0, 8
  %v1576 = vld [vmem:[%s1575] sm:$0xff]
  %1577 = vrot.lane.b32.xlu0 %v1576, 90
  %v1578 = vpop.permute.xlu0 %1577
  %vm1579 = vcmask 7168
  %s1580 = scalar_lea.vmem %s1, 166
  %1581 = vst.msk [vmem:[%s1580] sm:$0x1] %vm1579, %v1578
  %s1582 = scalar_lea.vmem %s1, 421
  %1583 = vst.msk [vmem:[%s1582] sm:$0x2] %vm1579, %v1578
  %s1584 = scalar_lea.vmem %s1, 676
  %1585 = vst.msk [vmem:[%s1584] sm:$0x4] %vm1579, %v1578
  %s1586 = scalar_lea.vmem %s1, 931
  %1587 = vst.msk [vmem:[%s1586] sm:$0x8] %vm1579, %v1578
  %s1588 = scalar_lea.vmem %s1, 1186
  %1589 = vst.msk [vmem:[%s1588] sm:$0x10] %vm1579, %v1578
  %s1590 = scalar_lea.vmem %s1, 1441
  %1591 = vst.msk [vmem:[%s1590] sm:$0x20] %vm1579, %v1578
  %s1592 = scalar_lea.vmem %s1, 1696
  %1593 = vst.msk [vmem:[%s1592] sm:$0x40] %vm1579, %v1578
  %s1594 = scalar_lea.vmem %s1, 1951
  %1595 = vst.msk [vmem:[%s1594] sm:$0x80] %vm1579, %v1578
  %v1596 = vld [vmem:[%s0] sm:$0xff]
  %1597 = vrot.lane.b32.xlu0 %v1596, 89
  %v1598 = vpop.permute.xlu0 %1597
  %vm1599 = vcmask 7168
  %s1600 = scalar_lea.vmem %s1, 39
  %1601 = vst.msk [vmem:[%s1600] sm:$0x1] %vm1599, %v1598
  %s1602 = scalar_lea.vmem %s1, 294
  %1603 = vst.msk [vmem:[%s1602] sm:$0x2] %vm1599, %v1598
  %s1604 = scalar_lea.vmem %s1, 549
  %1605 = vst.msk [vmem:[%s1604] sm:$0x4] %vm1599, %v1598
  %s1606 = scalar_lea.vmem %s1, 804
  %1607 = vst.msk [vmem:[%s1606] sm:$0x8] %vm1599, %v1598
  %s1608 = scalar_lea.vmem %s1, 1059
  %1609 = vst.msk [vmem:[%s1608] sm:$0x10] %vm1599, %v1598
  %s1610 = scalar_lea.vmem %s1, 1314
  %1611 = vst.msk [vmem:[%s1610] sm:$0x20] %vm1599, %v1598
  %s1612 = scalar_lea.vmem %s1, 1569
  %1613 = vst.msk [vmem:[%s1612] sm:$0x40] %vm1599, %v1598
  %s1614 = scalar_lea.vmem %s1, 1824
  %1615 = vst.msk [vmem:[%s1614] sm:$0x80] %vm1599, %v1598
  %s1616 = scalar_lea.vmem %s0, 8
  %v1617 = vld [vmem:[%s1616] sm:$0xff]
  %1618 = vrot.lane.b32.xlu0 %v1617, 89
  %v1619 = vpop.permute.xlu0 %1618
  %vm1620 = vcmask 7168
  %s1621 = scalar_lea.vmem %s1, 167
  %1622 = vst.msk [vmem:[%s1621] sm:$0x1] %vm1620, %v1619
  %s1623 = scalar_lea.vmem %s1, 422
  %1624 = vst.msk [vmem:[%s1623] sm:$0x2] %vm1620, %v1619
  %s1625 = scalar_lea.vmem %s1, 677
  %1626 = vst.msk [vmem:[%s1625] sm:$0x4] %vm1620, %v1619
  %s1627 = scalar_lea.vmem %s1, 932
  %1628 = vst.msk [vmem:[%s1627] sm:$0x8] %vm1620, %v1619
  %s1629 = scalar_lea.vmem %s1, 1187
  %1630 = vst.msk [vmem:[%s1629] sm:$0x10] %vm1620, %v1619
  %s1631 = scalar_lea.vmem %s1, 1442
  %1632 = vst.msk [vmem:[%s1631] sm:$0x20] %vm1620, %v1619
  %s1633 = scalar_lea.vmem %s1, 1697
  %1634 = vst.msk [vmem:[%s1633] sm:$0x40] %vm1620, %v1619
  %s1635 = scalar_lea.vmem %s1, 1952
  %1636 = vst.msk [vmem:[%s1635] sm:$0x80] %vm1620, %v1619
  %v1637 = vld [vmem:[%s0] sm:$0xff]
  %1638 = vrot.lane.b32.xlu0 %v1637, 88
  %v1639 = vpop.permute.xlu0 %1638
  %vm1640 = vcmask 7168
  %s1641 = scalar_lea.vmem %s1, 40
  %1642 = vst.msk [vmem:[%s1641] sm:$0x1] %vm1640, %v1639
  %s1643 = scalar_lea.vmem %s1, 295
  %1644 = vst.msk [vmem:[%s1643] sm:$0x2] %vm1640, %v1639
  %s1645 = scalar_lea.vmem %s1, 550
  %1646 = vst.msk [vmem:[%s1645] sm:$0x4] %vm1640, %v1639
  %s1647 = scalar_lea.vmem %s1, 805
  %1648 = vst.msk [vmem:[%s1647] sm:$0x8] %vm1640, %v1639
  %s1649 = scalar_lea.vmem %s1, 1060
  %1650 = vst.msk [vmem:[%s1649] sm:$0x10] %vm1640, %v1639
  %s1651 = scalar_lea.vmem %s1, 1315
  %1652 = vst.msk [vmem:[%s1651] sm:$0x20] %vm1640, %v1639
  %s1653 = scalar_lea.vmem %s1, 1570
  %1654 = vst.msk [vmem:[%s1653] sm:$0x40] %vm1640, %v1639
  %s1655 = scalar_lea.vmem %s1, 1825
  %1656 = vst.msk [vmem:[%s1655] sm:$0x80] %vm1640, %v1639
  %s1657 = scalar_lea.vmem %s0, 8
  %v1658 = vld [vmem:[%s1657] sm:$0xff]
  %1659 = vrot.lane.b32.xlu0 %v1658, 88
  %v1660 = vpop.permute.xlu0 %1659
  %vm1661 = vcmask 7168
  %s1662 = scalar_lea.vmem %s1, 168
  %1663 = vst.msk [vmem:[%s1662] sm:$0x1] %vm1661, %v1660
  %s1664 = scalar_lea.vmem %s1, 423
  %1665 = vst.msk [vmem:[%s1664] sm:$0x2] %vm1661, %v1660
  %s1666 = scalar_lea.vmem %s1, 678
  %1667 = vst.msk [vmem:[%s1666] sm:$0x4] %vm1661, %v1660
  %s1668 = scalar_lea.vmem %s1, 933
  %1669 = vst.msk [vmem:[%s1668] sm:$0x8] %vm1661, %v1660
  %s1670 = scalar_lea.vmem %s1, 1188
  %1671 = vst.msk [vmem:[%s1670] sm:$0x10] %vm1661, %v1660
  %s1672 = scalar_lea.vmem %s1, 1443
  %1673 = vst.msk [vmem:[%s1672] sm:$0x20] %vm1661, %v1660
  %s1674 = scalar_lea.vmem %s1, 1698
  %1675 = vst.msk [vmem:[%s1674] sm:$0x40] %vm1661, %v1660
  %s1676 = scalar_lea.vmem %s1, 1953
  %1677 = vst.msk [vmem:[%s1676] sm:$0x80] %vm1661, %v1660
  %v1678 = vld [vmem:[%s0] sm:$0xff]
  %1679 = vrot.lane.b32.xlu0 %v1678, 87
  %v1680 = vpop.permute.xlu0 %1679
  %vm1681 = vcmask 7168
  %s1682 = scalar_lea.vmem %s1, 41
  %1683 = vst.msk [vmem:[%s1682] sm:$0x1] %vm1681, %v1680
  %s1684 = scalar_lea.vmem %s1, 296
  %1685 = vst.msk [vmem:[%s1684] sm:$0x2] %vm1681, %v1680
  %s1686 = scalar_lea.vmem %s1, 551
  %1687 = vst.msk [vmem:[%s1686] sm:$0x4] %vm1681, %v1680
  %s1688 = scalar_lea.vmem %s1, 806
  %1689 = vst.msk [vmem:[%s1688] sm:$0x8] %vm1681, %v1680
  %s1690 = scalar_lea.vmem %s1, 1061
  %1691 = vst.msk [vmem:[%s1690] sm:$0x10] %vm1681, %v1680
  %s1692 = scalar_lea.vmem %s1, 1316
  %1693 = vst.msk [vmem:[%s1692] sm:$0x20] %vm1681, %v1680
  %s1694 = scalar_lea.vmem %s1, 1571
  %1695 = vst.msk [vmem:[%s1694] sm:$0x40] %vm1681, %v1680
  %s1696 = scalar_lea.vmem %s1, 1826
  %1697 = vst.msk [vmem:[%s1696] sm:$0x80] %vm1681, %v1680
  %s1698 = scalar_lea.vmem %s0, 8
  %v1699 = vld [vmem:[%s1698] sm:$0xff]
  %1700 = vrot.lane.b32.xlu0 %v1699, 87
  %v1701 = vpop.permute.xlu0 %1700
  %vm1702 = vcmask 7168
  %s1703 = scalar_lea.vmem %s1, 169
  %1704 = vst.msk [vmem:[%s1703] sm:$0x1] %vm1702, %v1701
  %s1705 = scalar_lea.vmem %s1, 424
  %1706 = vst.msk [vmem:[%s1705] sm:$0x2] %vm1702, %v1701
  %s1707 = scalar_lea.vmem %s1, 679
  %1708 = vst.msk [vmem:[%s1707] sm:$0x4] %vm1702, %v1701
  %s1709 = scalar_lea.vmem %s1, 934
  %1710 = vst.msk [vmem:[%s1709] sm:$0x8] %vm1702, %v1701
  %s1711 = scalar_lea.vmem %s1, 1189
  %1712 = vst.msk [vmem:[%s1711] sm:$0x10] %vm1702, %v1701
  %s1713 = scalar_lea.vmem %s1, 1444
  %1714 = vst.msk [vmem:[%s1713] sm:$0x20] %vm1702, %v1701
  %s1715 = scalar_lea.vmem %s1, 1699
  %1716 = vst.msk [vmem:[%s1715] sm:$0x40] %vm1702, %v1701
  %s1717 = scalar_lea.vmem %s1, 1954
  %1718 = vst.msk [vmem:[%s1717] sm:$0x80] %vm1702, %v1701
  %v1719 = vld [vmem:[%s0] sm:$0xff]
  %1720 = vrot.lane.b32.xlu0 %v1719, 86
  %v1721 = vpop.permute.xlu0 %1720
  %vm1722 = vcmask 7168
  %s1723 = scalar_lea.vmem %s1, 42
  %1724 = vst.msk [vmem:[%s1723] sm:$0x1] %vm1722, %v1721
  %s1725 = scalar_lea.vmem %s1, 297
  %1726 = vst.msk [vmem:[%s1725] sm:$0x2] %vm1722, %v1721
  %s1727 = scalar_lea.vmem %s1, 552
  %1728 = vst.msk [vmem:[%s1727] sm:$0x4] %vm1722, %v1721
  %s1729 = scalar_lea.vmem %s1, 807
  %1730 = vst.msk [vmem:[%s1729] sm:$0x8] %vm1722, %v1721
  %s1731 = scalar_lea.vmem %s1, 1062
  %1732 = vst.msk [vmem:[%s1731] sm:$0x10] %vm1722, %v1721
  %s1733 = scalar_lea.vmem %s1, 1317
  %1734 = vst.msk [vmem:[%s1733] sm:$0x20] %vm1722, %v1721
  %s1735 = scalar_lea.vmem %s1, 1572
  %1736 = vst.msk [vmem:[%s1735] sm:$0x40] %vm1722, %v1721
  %s1737 = scalar_lea.vmem %s1, 1827
  %1738 = vst.msk [vmem:[%s1737] sm:$0x80] %vm1722, %v1721
  %s1739 = scalar_lea.vmem %s0, 8
  %v1740 = vld [vmem:[%s1739] sm:$0xff]
  %1741 = vrot.lane.b32.xlu0 %v1740, 86
  %v1742 = vpop.permute.xlu0 %1741
  %vm1743 = vcmask 7168
  %s1744 = scalar_lea.vmem %s1, 170
  %1745 = vst.msk [vmem:[%s1744] sm:$0x1] %vm1743, %v1742
  %s1746 = scalar_lea.vmem %s1, 425
  %1747 = vst.msk [vmem:[%s1746] sm:$0x2] %vm1743, %v1742
  %s1748 = scalar_lea.vmem %s1, 680
  %1749 = vst.msk [vmem:[%s1748] sm:$0x4] %vm1743, %v1742
  %s1750 = scalar_lea.vmem %s1, 935
  %1751 = vst.msk [vmem:[%s1750] sm:$0x8] %vm1743, %v1742
  %s1752 = scalar_lea.vmem %s1, 1190
  %1753 = vst.msk [vmem:[%s1752] sm:$0x10] %vm1743, %v1742
  %s1754 = scalar_lea.vmem %s1, 1445
  %1755 = vst.msk [vmem:[%s1754] sm:$0x20] %vm1743, %v1742
  %s1756 = scalar_lea.vmem %s1, 1700
  %1757 = vst.msk [vmem:[%s1756] sm:$0x40] %vm1743, %v1742
  %s1758 = scalar_lea.vmem %s1, 1955
  %1759 = vst.msk [vmem:[%s1758] sm:$0x80] %vm1743, %v1742
  %v1760 = vld [vmem:[%s0] sm:$0xff]
  %1761 = vrot.lane.b32.xlu0 %v1760, 85
  %v1762 = vpop.permute.xlu0 %1761
  %vm1763 = vcmask 7168
  %s1764 = scalar_lea.vmem %s1, 43
  %1765 = vst.msk [vmem:[%s1764] sm:$0x1] %vm1763, %v1762
  %s1766 = scalar_lea.vmem %s1, 298
  %1767 = vst.msk [vmem:[%s1766] sm:$0x2] %vm1763, %v1762
  %s1768 = scalar_lea.vmem %s1, 553
  %1769 = vst.msk [vmem:[%s1768] sm:$0x4] %vm1763, %v1762
  %s1770 = scalar_lea.vmem %s1, 808
  %1771 = vst.msk [vmem:[%s1770] sm:$0x8] %vm1763, %v1762
  %s1772 = scalar_lea.vmem %s1, 1063
  %1773 = vst.msk [vmem:[%s1772] sm:$0x10] %vm1763, %v1762
  %s1774 = scalar_lea.vmem %s1, 1318
  %1775 = vst.msk [vmem:[%s1774] sm:$0x20] %vm1763, %v1762
  %s1776 = scalar_lea.vmem %s1, 1573
  %1777 = vst.msk [vmem:[%s1776] sm:$0x40] %vm1763, %v1762
  %s1778 = scalar_lea.vmem %s1, 1828
  %1779 = vst.msk [vmem:[%s1778] sm:$0x80] %vm1763, %v1762
  %s1780 = scalar_lea.vmem %s0, 8
  %v1781 = vld [vmem:[%s1780] sm:$0xff]
  %1782 = vrot.lane.b32.xlu0 %v1781, 85
  %v1783 = vpop.permute.xlu0 %1782
  %vm1784 = vcmask 7168
  %s1785 = scalar_lea.vmem %s1, 171
  %1786 = vst.msk [vmem:[%s1785] sm:$0x1] %vm1784, %v1783
  %s1787 = scalar_lea.vmem %s1, 426
  %1788 = vst.msk [vmem:[%s1787] sm:$0x2] %vm1784, %v1783
  %s1789 = scalar_lea.vmem %s1, 681
  %1790 = vst.msk [vmem:[%s1789] sm:$0x4] %vm1784, %v1783
  %s1791 = scalar_lea.vmem %s1, 936
  %1792 = vst.msk [vmem:[%s1791] sm:$0x8] %vm1784, %v1783
  %s1793 = scalar_lea.vmem %s1, 1191
  %1794 = vst.msk [vmem:[%s1793] sm:$0x10] %vm1784, %v1783
  %s1795 = scalar_lea.vmem %s1, 1446
  %1796 = vst.msk [vmem:[%s1795] sm:$0x20] %vm1784, %v1783
  %s1797 = scalar_lea.vmem %s1, 1701
  %1798 = vst.msk [vmem:[%s1797] sm:$0x40] %vm1784, %v1783
  %s1799 = scalar_lea.vmem %s1, 1956
  %1800 = vst.msk [vmem:[%s1799] sm:$0x80] %vm1784, %v1783
  %v1801 = vld [vmem:[%s0] sm:$0xff]
  %1802 = vrot.lane.b32.xlu0 %v1801, 84
  %v1803 = vpop.permute.xlu0 %1802
  %vm1804 = vcmask 7168
  %s1805 = scalar_lea.vmem %s1, 44
  %1806 = vst.msk [vmem:[%s1805] sm:$0x1] %vm1804, %v1803
  %s1807 = scalar_lea.vmem %s1, 299
  %1808 = vst.msk [vmem:[%s1807] sm:$0x2] %vm1804, %v1803
  %s1809 = scalar_lea.vmem %s1, 554
  %1810 = vst.msk [vmem:[%s1809] sm:$0x4] %vm1804, %v1803
  %s1811 = scalar_lea.vmem %s1, 809
  %1812 = vst.msk [vmem:[%s1811] sm:$0x8] %vm1804, %v1803
  %s1813 = scalar_lea.vmem %s1, 1064
  %1814 = vst.msk [vmem:[%s1813] sm:$0x10] %vm1804, %v1803
  %s1815 = scalar_lea.vmem %s1, 1319
  %1816 = vst.msk [vmem:[%s1815] sm:$0x20] %vm1804, %v1803
  %s1817 = scalar_lea.vmem %s1, 1574
  %1818 = vst.msk [vmem:[%s1817] sm:$0x40] %vm1804, %v1803
  %s1819 = scalar_lea.vmem %s1, 1829
  %1820 = vst.msk [vmem:[%s1819] sm:$0x80] %vm1804, %v1803
  %s1821 = scalar_lea.vmem %s0, 8
  %v1822 = vld [vmem:[%s1821] sm:$0xff]
  %1823 = vrot.lane.b32.xlu0 %v1822, 84
  %v1824 = vpop.permute.xlu0 %1823
  %vm1825 = vcmask 7168
  %s1826 = scalar_lea.vmem %s1, 172
  %1827 = vst.msk [vmem:[%s1826] sm:$0x1] %vm1825, %v1824
  %s1828 = scalar_lea.vmem %s1, 427
  %1829 = vst.msk [vmem:[%s1828] sm:$0x2] %vm1825, %v1824
  %s1830 = scalar_lea.vmem %s1, 682
  %1831 = vst.msk [vmem:[%s1830] sm:$0x4] %vm1825, %v1824
  %s1832 = scalar_lea.vmem %s1, 937
  %1833 = vst.msk [vmem:[%s1832] sm:$0x8] %vm1825, %v1824
  %s1834 = scalar_lea.vmem %s1, 1192
  %1835 = vst.msk [vmem:[%s1834] sm:$0x10] %vm1825, %v1824
  %s1836 = scalar_lea.vmem %s1, 1447
  %1837 = vst.msk [vmem:[%s1836] sm:$0x20] %vm1825, %v1824
  %s1838 = scalar_lea.vmem %s1, 1702
  %1839 = vst.msk [vmem:[%s1838] sm:$0x40] %vm1825, %v1824
  %s1840 = scalar_lea.vmem %s1, 1957
  %1841 = vst.msk [vmem:[%s1840] sm:$0x80] %vm1825, %v1824
  %v1842 = vld [vmem:[%s0] sm:$0xff]
  %1843 = vrot.lane.b32.xlu0 %v1842, 83
  %v1844 = vpop.permute.xlu0 %1843
  %vm1845 = vcmask 7168
  %s1846 = scalar_lea.vmem %s1, 45
  %1847 = vst.msk [vmem:[%s1846] sm:$0x1] %vm1845, %v1844
  %s1848 = scalar_lea.vmem %s1, 300
  %1849 = vst.msk [vmem:[%s1848] sm:$0x2] %vm1845, %v1844
  %s1850 = scalar_lea.vmem %s1, 555
  %1851 = vst.msk [vmem:[%s1850] sm:$0x4] %vm1845, %v1844
  %s1852 = scalar_lea.vmem %s1, 810
  %1853 = vst.msk [vmem:[%s1852] sm:$0x8] %vm1845, %v1844
  %s1854 = scalar_lea.vmem %s1, 1065
  %1855 = vst.msk [vmem:[%s1854] sm:$0x10] %vm1845, %v1844
  %s1856 = scalar_lea.vmem %s1, 1320
  %1857 = vst.msk [vmem:[%s1856] sm:$0x20] %vm1845, %v1844
  %s1858 = scalar_lea.vmem %s1, 1575
  %1859 = vst.msk [vmem:[%s1858] sm:$0x40] %vm1845, %v1844
  %s1860 = scalar_lea.vmem %s1, 1830
  %1861 = vst.msk [vmem:[%s1860] sm:$0x80] %vm1845, %v1844
  %s1862 = scalar_lea.vmem %s0, 8
  %v1863 = vld [vmem:[%s1862] sm:$0xff]
  %1864 = vrot.lane.b32.xlu0 %v1863, 83
  %v1865 = vpop.permute.xlu0 %1864
  %vm1866 = vcmask 7168
  %s1867 = scalar_lea.vmem %s1, 173
  %1868 = vst.msk [vmem:[%s1867] sm:$0x1] %vm1866, %v1865
  %s1869 = scalar_lea.vmem %s1, 428
  %1870 = vst.msk [vmem:[%s1869] sm:$0x2] %vm1866, %v1865
  %s1871 = scalar_lea.vmem %s1, 683
  %1872 = vst.msk [vmem:[%s1871] sm:$0x4] %vm1866, %v1865
  %s1873 = scalar_lea.vmem %s1, 938
  %1874 = vst.msk [vmem:[%s1873] sm:$0x8] %vm1866, %v1865
  %s1875 = scalar_lea.vmem %s1, 1193
  %1876 = vst.msk [vmem:[%s1875] sm:$0x10] %vm1866, %v1865
  %s1877 = scalar_lea.vmem %s1, 1448
  %1878 = vst.msk [vmem:[%s1877] sm:$0x20] %vm1866, %v1865
  %s1879 = scalar_lea.vmem %s1, 1703
  %1880 = vst.msk [vmem:[%s1879] sm:$0x40] %vm1866, %v1865
  %s1881 = scalar_lea.vmem %s1, 1958
  %1882 = vst.msk [vmem:[%s1881] sm:$0x80] %vm1866, %v1865
  %v1883 = vld [vmem:[%s0] sm:$0xff]
  %1884 = vrot.lane.b32.xlu0 %v1883, 82
  %v1885 = vpop.permute.xlu0 %1884
  %vm1886 = vcmask 7168
  %s1887 = scalar_lea.vmem %s1, 46
  %1888 = vst.msk [vmem:[%s1887] sm:$0x1] %vm1886, %v1885
  %s1889 = scalar_lea.vmem %s1, 301
  %1890 = vst.msk [vmem:[%s1889] sm:$0x2] %vm1886, %v1885
  %s1891 = scalar_lea.vmem %s1, 556
  %1892 = vst.msk [vmem:[%s1891] sm:$0x4] %vm1886, %v1885
  %s1893 = scalar_lea.vmem %s1, 811
  %1894 = vst.msk [vmem:[%s1893] sm:$0x8] %vm1886, %v1885
  %s1895 = scalar_lea.vmem %s1, 1066
  %1896 = vst.msk [vmem:[%s1895] sm:$0x10] %vm1886, %v1885
  %s1897 = scalar_lea.vmem %s1, 1321
  %1898 = vst.msk [vmem:[%s1897] sm:$0x20] %vm1886, %v1885
  %s1899 = scalar_lea.vmem %s1, 1576
  %1900 = vst.msk [vmem:[%s1899] sm:$0x40] %vm1886, %v1885
  %s1901 = scalar_lea.vmem %s1, 1831
  %1902 = vst.msk [vmem:[%s1901] sm:$0x80] %vm1886, %v1885
  %s1903 = scalar_lea.vmem %s0, 8
  %v1904 = vld [vmem:[%s1903] sm:$0xff]
  %1905 = vrot.lane.b32.xlu0 %v1904, 82
  %v1906 = vpop.permute.xlu0 %1905
  %vm1907 = vcmask 7168
  %s1908 = scalar_lea.vmem %s1, 174
  %1909 = vst.msk [vmem:[%s1908] sm:$0x1] %vm1907, %v1906
  %s1910 = scalar_lea.vmem %s1, 429
  %1911 = vst.msk [vmem:[%s1910] sm:$0x2] %vm1907, %v1906
  %s1912 = scalar_lea.vmem %s1, 684
  %1913 = vst.msk [vmem:[%s1912] sm:$0x4] %vm1907, %v1906
  %s1914 = scalar_lea.vmem %s1, 939
  %1915 = vst.msk [vmem:[%s1914] sm:$0x8] %vm1907, %v1906
  %s1916 = scalar_lea.vmem %s1, 1194
  %1917 = vst.msk [vmem:[%s1916] sm:$0x10] %vm1907, %v1906
  %s1918 = scalar_lea.vmem %s1, 1449
  %1919 = vst.msk [vmem:[%s1918] sm:$0x20] %vm1907, %v1906
  %s1920 = scalar_lea.vmem %s1, 1704
  %1921 = vst.msk [vmem:[%s1920] sm:$0x40] %vm1907, %v1906
  %s1922 = scalar_lea.vmem %s1, 1959
  %1923 = vst.msk [vmem:[%s1922] sm:$0x80] %vm1907, %v1906
  %v1924 = vld [vmem:[%s0] sm:$0xff]
  %1925 = vrot.lane.b32.xlu0 %v1924, 81
  %v1926 = vpop.permute.xlu0 %1925
  %vm1927 = vcmask 7168
  %s1928 = scalar_lea.vmem %s1, 47
  %1929 = vst.msk [vmem:[%s1928] sm:$0x1] %vm1927, %v1926
  %s1930 = scalar_lea.vmem %s1, 302
  %1931 = vst.msk [vmem:[%s1930] sm:$0x2] %vm1927, %v1926
  %s1932 = scalar_lea.vmem %s1, 557
  %1933 = vst.msk [vmem:[%s1932] sm:$0x4] %vm1927, %v1926
  %s1934 = scalar_lea.vmem %s1, 812
  %1935 = vst.msk [vmem:[%s1934] sm:$0x8] %vm1927, %v1926
  %s1936 = scalar_lea.vmem %s1, 1067
  %1937 = vst.msk [vmem:[%s1936] sm:$0x10] %vm1927, %v1926
  %s1938 = scalar_lea.vmem %s1, 1322
  %1939 = vst.msk [vmem:[%s1938] sm:$0x20] %vm1927, %v1926
  %s1940 = scalar_lea.vmem %s1, 1577
  %1941 = vst.msk [vmem:[%s1940] sm:$0x40] %vm1927, %v1926
  %s1942 = scalar_lea.vmem %s1, 1832
  %1943 = vst.msk [vmem:[%s1942] sm:$0x80] %vm1927, %v1926
  %s1944 = scalar_lea.vmem %s0, 8
  %v1945 = vld [vmem:[%s1944] sm:$0xff]
  %1946 = vrot.lane.b32.xlu0 %v1945, 81
  %v1947 = vpop.permute.xlu0 %1946
  %vm1948 = vcmask 7168
  %s1949 = scalar_lea.vmem %s1, 175
  %1950 = vst.msk [vmem:[%s1949] sm:$0x1] %vm1948, %v1947
  %s1951 = scalar_lea.vmem %s1, 430
  %1952 = vst.msk [vmem:[%s1951] sm:$0x2] %vm1948, %v1947
  %s1953 = scalar_lea.vmem %s1, 685
  %1954 = vst.msk [vmem:[%s1953] sm:$0x4] %vm1948, %v1947
  %s1955 = scalar_lea.vmem %s1, 940
  %1956 = vst.msk [vmem:[%s1955] sm:$0x8] %vm1948, %v1947
  %s1957 = scalar_lea.vmem %s1, 1195
  %1958 = vst.msk [vmem:[%s1957] sm:$0x10] %vm1948, %v1947
  %s1959 = scalar_lea.vmem %s1, 1450
  %1960 = vst.msk [vmem:[%s1959] sm:$0x20] %vm1948, %v1947
  %s1961 = scalar_lea.vmem %s1, 1705
  %1962 = vst.msk [vmem:[%s1961] sm:$0x40] %vm1948, %v1947
  %s1963 = scalar_lea.vmem %s1, 1960
  %1964 = vst.msk [vmem:[%s1963] sm:$0x80] %vm1948, %v1947
  %v1965 = vld [vmem:[%s0] sm:$0xff]
  %1966 = vrot.lane.b32.xlu0 %v1965, 80
  %v1967 = vpop.permute.xlu0 %1966
  %vm1968 = vcmask 7168
  %s1969 = scalar_lea.vmem %s1, 48
  %1970 = vst.msk [vmem:[%s1969] sm:$0x1] %vm1968, %v1967
  %s1971 = scalar_lea.vmem %s1, 303
  %1972 = vst.msk [vmem:[%s1971] sm:$0x2] %vm1968, %v1967
  %s1973 = scalar_lea.vmem %s1, 558
  %1974 = vst.msk [vmem:[%s1973] sm:$0x4] %vm1968, %v1967
  %s1975 = scalar_lea.vmem %s1, 813
  %1976 = vst.msk [vmem:[%s1975] sm:$0x8] %vm1968, %v1967
  %s1977 = scalar_lea.vmem %s1, 1068
  %1978 = vst.msk [vmem:[%s1977] sm:$0x10] %vm1968, %v1967
  %s1979 = scalar_lea.vmem %s1, 1323
  %1980 = vst.msk [vmem:[%s1979] sm:$0x20] %vm1968, %v1967
  %s1981 = scalar_lea.vmem %s1, 1578
  %1982 = vst.msk [vmem:[%s1981] sm:$0x40] %vm1968, %v1967
  %s1983 = scalar_lea.vmem %s1, 1833
  %1984 = vst.msk [vmem:[%s1983] sm:$0x80] %vm1968, %v1967
  %s1985 = scalar_lea.vmem %s0, 8
  %v1986 = vld [vmem:[%s1985] sm:$0xff]
  %1987 = vrot.lane.b32.xlu0 %v1986, 80
  %v1988 = vpop.permute.xlu0 %1987
  %vm1989 = vcmask 7168
  %s1990 = scalar_lea.vmem %s1, 176
  %1991 = vst.msk [vmem:[%s1990] sm:$0x1] %vm1989, %v1988
  %s1992 = scalar_lea.vmem %s1, 431
  %1993 = vst.msk [vmem:[%s1992] sm:$0x2] %vm1989, %v1988
  %s1994 = scalar_lea.vmem %s1, 686
  %1995 = vst.msk [vmem:[%s1994] sm:$0x4] %vm1989, %v1988
  %s1996 = scalar_lea.vmem %s1, 941
  %1997 = vst.msk [vmem:[%s1996] sm:$0x8] %vm1989, %v1988
  %s1998 = scalar_lea.vmem %s1, 1196
  %1999 = vst.msk [vmem:[%s1998] sm:$0x10] %vm1989, %v1988
  %s2000 = scalar_lea.vmem %s1, 1451
  %2001 = vst.msk [vmem:[%s2000] sm:$0x20] %vm1989, %v1988
  %s2002 = scalar_lea.vmem %s1, 1706
  %2003 = vst.msk [vmem:[%s2002] sm:$0x40] %vm1989, %v1988
  %s2004 = scalar_lea.vmem %s1, 1961
  %2005 = vst.msk [vmem:[%s2004] sm:$0x80] %vm1989, %v1988
  %v2006 = vld [vmem:[%s0] sm:$0xff]
  %2007 = vrot.lane.b32.xlu0 %v2006, 79
  %v2008 = vpop.permute.xlu0 %2007
  %vm2009 = vcmask 7168
  %s2010 = scalar_lea.vmem %s1, 49
  %2011 = vst.msk [vmem:[%s2010] sm:$0x1] %vm2009, %v2008
  %s2012 = scalar_lea.vmem %s1, 304
  %2013 = vst.msk [vmem:[%s2012] sm:$0x2] %vm2009, %v2008
  %s2014 = scalar_lea.vmem %s1, 559
  %2015 = vst.msk [vmem:[%s2014] sm:$0x4] %vm2009, %v2008
  %s2016 = scalar_lea.vmem %s1, 814
  %2017 = vst.msk [vmem:[%s2016] sm:$0x8] %vm2009, %v2008
  %s2018 = scalar_lea.vmem %s1, 1069
  %2019 = vst.msk [vmem:[%s2018] sm:$0x10] %vm2009, %v2008
  %s2020 = scalar_lea.vmem %s1, 1324
  %2021 = vst.msk [vmem:[%s2020] sm:$0x20] %vm2009, %v2008
  %s2022 = scalar_lea.vmem %s1, 1579
  %2023 = vst.msk [vmem:[%s2022] sm:$0x40] %vm2009, %v2008
  %s2024 = scalar_lea.vmem %s1, 1834
  %2025 = vst.msk [vmem:[%s2024] sm:$0x80] %vm2009, %v2008
  %s2026 = scalar_lea.vmem %s0, 8
  %v2027 = vld [vmem:[%s2026] sm:$0xff]
  %2028 = vrot.lane.b32.xlu0 %v2027, 79
  %v2029 = vpop.permute.xlu0 %2028
  %vm2030 = vcmask 7168
  %s2031 = scalar_lea.vmem %s1, 177
  %2032 = vst.msk [vmem:[%s2031] sm:$0x1] %vm2030, %v2029
  %s2033 = scalar_lea.vmem %s1, 432
  %2034 = vst.msk [vmem:[%s2033] sm:$0x2] %vm2030, %v2029
  %s2035 = scalar_lea.vmem %s1, 687
  %2036 = vst.msk [vmem:[%s2035] sm:$0x4] %vm2030, %v2029
  %s2037 = scalar_lea.vmem %s1, 942
  %2038 = vst.msk [vmem:[%s2037] sm:$0x8] %vm2030, %v2029
  %s2039 = scalar_lea.vmem %s1, 1197
  %2040 = vst.msk [vmem:[%s2039] sm:$0x10] %vm2030, %v2029
  %s2041 = scalar_lea.vmem %s1, 1452
  %2042 = vst.msk [vmem:[%s2041] sm:$0x20] %vm2030, %v2029
  %s2043 = scalar_lea.vmem %s1, 1707
  %2044 = vst.msk [vmem:[%s2043] sm:$0x40] %vm2030, %v2029
  %s2045 = scalar_lea.vmem %s1, 1962
  %2046 = vst.msk [vmem:[%s2045] sm:$0x80] %vm2030, %v2029
  %v2047 = vld [vmem:[%s0] sm:$0xff]
  %2048 = vrot.lane.b32.xlu0 %v2047, 78
  %v2049 = vpop.permute.xlu0 %2048
  %vm2050 = vcmask 7168
  %s2051 = scalar_lea.vmem %s1, 50
  %2052 = vst.msk [vmem:[%s2051] sm:$0x1] %vm2050, %v2049
  %s2053 = scalar_lea.vmem %s1, 305
  %2054 = vst.msk [vmem:[%s2053] sm:$0x2] %vm2050, %v2049
  %s2055 = scalar_lea.vmem %s1, 560
  %2056 = vst.msk [vmem:[%s2055] sm:$0x4] %vm2050, %v2049
  %s2057 = scalar_lea.vmem %s1, 815
  %2058 = vst.msk [vmem:[%s2057] sm:$0x8] %vm2050, %v2049
  %s2059 = scalar_lea.vmem %s1, 1070
  %2060 = vst.msk [vmem:[%s2059] sm:$0x10] %vm2050, %v2049
  %s2061 = scalar_lea.vmem %s1, 1325
  %2062 = vst.msk [vmem:[%s2061] sm:$0x20] %vm2050, %v2049
  %s2063 = scalar_lea.vmem %s1, 1580
  %2064 = vst.msk [vmem:[%s2063] sm:$0x40] %vm2050, %v2049
  %s2065 = scalar_lea.vmem %s1, 1835
  %2066 = vst.msk [vmem:[%s2065] sm:$0x80] %vm2050, %v2049
  %s2067 = scalar_lea.vmem %s0, 8
  %v2068 = vld [vmem:[%s2067] sm:$0xff]
  %2069 = vrot.lane.b32.xlu0 %v2068, 78
  %v2070 = vpop.permute.xlu0 %2069
  %vm2071 = vcmask 7168
  %s2072 = scalar_lea.vmem %s1, 178
  %2073 = vst.msk [vmem:[%s2072] sm:$0x1] %vm2071, %v2070
  %s2074 = scalar_lea.vmem %s1, 433
  %2075 = vst.msk [vmem:[%s2074] sm:$0x2] %vm2071, %v2070
  %s2076 = scalar_lea.vmem %s1, 688
  %2077 = vst.msk [vmem:[%s2076] sm:$0x4] %vm2071, %v2070
  %s2078 = scalar_lea.vmem %s1, 943
  %2079 = vst.msk [vmem:[%s2078] sm:$0x8] %vm2071, %v2070
  %s2080 = scalar_lea.vmem %s1, 1198
  %2081 = vst.msk [vmem:[%s2080] sm:$0x10] %vm2071, %v2070
  %s2082 = scalar_lea.vmem %s1, 1453
  %2083 = vst.msk [vmem:[%s2082] sm:$0x20] %vm2071, %v2070
  %s2084 = scalar_lea.vmem %s1, 1708
  %2085 = vst.msk [vmem:[%s2084] sm:$0x40] %vm2071, %v2070
  %s2086 = scalar_lea.vmem %s1, 1963
  %2087 = vst.msk [vmem:[%s2086] sm:$0x80] %vm2071, %v2070
  %v2088 = vld [vmem:[%s0] sm:$0xff]
  %2089 = vrot.lane.b32.xlu0 %v2088, 77
  %v2090 = vpop.permute.xlu0 %2089
  %vm2091 = vcmask 7168
  %s2092 = scalar_lea.vmem %s1, 51
  %2093 = vst.msk [vmem:[%s2092] sm:$0x1] %vm2091, %v2090
  %s2094 = scalar_lea.vmem %s1, 306
  %2095 = vst.msk [vmem:[%s2094] sm:$0x2] %vm2091, %v2090
  %s2096 = scalar_lea.vmem %s1, 561
  %2097 = vst.msk [vmem:[%s2096] sm:$0x4] %vm2091, %v2090
  %s2098 = scalar_lea.vmem %s1, 816
  %2099 = vst.msk [vmem:[%s2098] sm:$0x8] %vm2091, %v2090
  %s2100 = scalar_lea.vmem %s1, 1071
  %2101 = vst.msk [vmem:[%s2100] sm:$0x10] %vm2091, %v2090
  %s2102 = scalar_lea.vmem %s1, 1326
  %2103 = vst.msk [vmem:[%s2102] sm:$0x20] %vm2091, %v2090
  %s2104 = scalar_lea.vmem %s1, 1581
  %2105 = vst.msk [vmem:[%s2104] sm:$0x40] %vm2091, %v2090
  %s2106 = scalar_lea.vmem %s1, 1836
  %2107 = vst.msk [vmem:[%s2106] sm:$0x80] %vm2091, %v2090
  %s2108 = scalar_lea.vmem %s0, 8
  %v2109 = vld [vmem:[%s2108] sm:$0xff]
  %2110 = vrot.lane.b32.xlu0 %v2109, 77
  %v2111 = vpop.permute.xlu0 %2110
  %vm2112 = vcmask 7168
  %s2113 = scalar_lea.vmem %s1, 179
  %2114 = vst.msk [vmem:[%s2113] sm:$0x1] %vm2112, %v2111
  %s2115 = scalar_lea.vmem %s1, 434
  %2116 = vst.msk [vmem:[%s2115] sm:$0x2] %vm2112, %v2111
  %s2117 = scalar_lea.vmem %s1, 689
  %2118 = vst.msk [vmem:[%s2117] sm:$0x4] %vm2112, %v2111
  %s2119 = scalar_lea.vmem %s1, 944
  %2120 = vst.msk [vmem:[%s2119] sm:$0x8] %vm2112, %v2111
  %s2121 = scalar_lea.vmem %s1, 1199
  %2122 = vst.msk [vmem:[%s2121] sm:$0x10] %vm2112, %v2111
  %s2123 = scalar_lea.vmem %s1, 1454
  %2124 = vst.msk [vmem:[%s2123] sm:$0x20] %vm2112, %v2111
  %s2125 = scalar_lea.vmem %s1, 1709
  %2126 = vst.msk [vmem:[%s2125] sm:$0x40] %vm2112, %v2111
  %s2127 = scalar_lea.vmem %s1, 1964
  %2128 = vst.msk [vmem:[%s2127] sm:$0x80] %vm2112, %v2111
  %v2129 = vld [vmem:[%s0] sm:$0xff]
  %2130 = vrot.lane.b32.xlu0 %v2129, 76
  %v2131 = vpop.permute.xlu0 %2130
  %vm2132 = vcmask 7168
  %s2133 = scalar_lea.vmem %s1, 52
  %2134 = vst.msk [vmem:[%s2133] sm:$0x1] %vm2132, %v2131
  %s2135 = scalar_lea.vmem %s1, 307
  %2136 = vst.msk [vmem:[%s2135] sm:$0x2] %vm2132, %v2131
  %s2137 = scalar_lea.vmem %s1, 562
  %2138 = vst.msk [vmem:[%s2137] sm:$0x4] %vm2132, %v2131
  %s2139 = scalar_lea.vmem %s1, 817
  %2140 = vst.msk [vmem:[%s2139] sm:$0x8] %vm2132, %v2131
  %s2141 = scalar_lea.vmem %s1, 1072
  %2142 = vst.msk [vmem:[%s2141] sm:$0x10] %vm2132, %v2131
  %s2143 = scalar_lea.vmem %s1, 1327
  %2144 = vst.msk [vmem:[%s2143] sm:$0x20] %vm2132, %v2131
  %s2145 = scalar_lea.vmem %s1, 1582
  %2146 = vst.msk [vmem:[%s2145] sm:$0x40] %vm2132, %v2131
  %s2147 = scalar_lea.vmem %s1, 1837
  %2148 = vst.msk [vmem:[%s2147] sm:$0x80] %vm2132, %v2131
  %s2149 = scalar_lea.vmem %s0, 8
  %v2150 = vld [vmem:[%s2149] sm:$0xff]
  %2151 = vrot.lane.b32.xlu0 %v2150, 76
  %v2152 = vpop.permute.xlu0 %2151
  %vm2153 = vcmask 7168
  %s2154 = scalar_lea.vmem %s1, 180
  %2155 = vst.msk [vmem:[%s2154] sm:$0x1] %vm2153, %v2152
  %s2156 = scalar_lea.vmem %s1, 435
  %2157 = vst.msk [vmem:[%s2156] sm:$0x2] %vm2153, %v2152
  %s2158 = scalar_lea.vmem %s1, 690
  %2159 = vst.msk [vmem:[%s2158] sm:$0x4] %vm2153, %v2152
  %s2160 = scalar_lea.vmem %s1, 945
  %2161 = vst.msk [vmem:[%s2160] sm:$0x8] %vm2153, %v2152
  %s2162 = scalar_lea.vmem %s1, 1200
  %2163 = vst.msk [vmem:[%s2162] sm:$0x10] %vm2153, %v2152
  %s2164 = scalar_lea.vmem %s1, 1455
  %2165 = vst.msk [vmem:[%s2164] sm:$0x20] %vm2153, %v2152
  %s2166 = scalar_lea.vmem %s1, 1710
  %2167 = vst.msk [vmem:[%s2166] sm:$0x40] %vm2153, %v2152
  %s2168 = scalar_lea.vmem %s1, 1965
  %2169 = vst.msk [vmem:[%s2168] sm:$0x80] %vm2153, %v2152
  %v2170 = vld [vmem:[%s0] sm:$0xff]
  %2171 = vrot.lane.b32.xlu0 %v2170, 75
  %v2172 = vpop.permute.xlu0 %2171
  %vm2173 = vcmask 7168
  %s2174 = scalar_lea.vmem %s1, 53
  %2175 = vst.msk [vmem:[%s2174] sm:$0x1] %vm2173, %v2172
  %s2176 = scalar_lea.vmem %s1, 308
  %2177 = vst.msk [vmem:[%s2176] sm:$0x2] %vm2173, %v2172
  %s2178 = scalar_lea.vmem %s1, 563
  %2179 = vst.msk [vmem:[%s2178] sm:$0x4] %vm2173, %v2172
  %s2180 = scalar_lea.vmem %s1, 818
  %2181 = vst.msk [vmem:[%s2180] sm:$0x8] %vm2173, %v2172
  %s2182 = scalar_lea.vmem %s1, 1073
  %2183 = vst.msk [vmem:[%s2182] sm:$0x10] %vm2173, %v2172
  %s2184 = scalar_lea.vmem %s1, 1328
  %2185 = vst.msk [vmem:[%s2184] sm:$0x20] %vm2173, %v2172
  %s2186 = scalar_lea.vmem %s1, 1583
  %2187 = vst.msk [vmem:[%s2186] sm:$0x40] %vm2173, %v2172
  %s2188 = scalar_lea.vmem %s1, 1838
  %2189 = vst.msk [vmem:[%s2188] sm:$0x80] %vm2173, %v2172
  %s2190 = scalar_lea.vmem %s0, 8
  %v2191 = vld [vmem:[%s2190] sm:$0xff]
  %2192 = vrot.lane.b32.xlu0 %v2191, 75
  %v2193 = vpop.permute.xlu0 %2192
  %vm2194 = vcmask 7168
  %s2195 = scalar_lea.vmem %s1, 181
  %2196 = vst.msk [vmem:[%s2195] sm:$0x1] %vm2194, %v2193
  %s2197 = scalar_lea.vmem %s1, 436
  %2198 = vst.msk [vmem:[%s2197] sm:$0x2] %vm2194, %v2193
  %s2199 = scalar_lea.vmem %s1, 691
  %2200 = vst.msk [vmem:[%s2199] sm:$0x4] %vm2194, %v2193
  %s2201 = scalar_lea.vmem %s1, 946
  %2202 = vst.msk [vmem:[%s2201] sm:$0x8] %vm2194, %v2193
  %s2203 = scalar_lea.vmem %s1, 1201
  %2204 = vst.msk [vmem:[%s2203] sm:$0x10] %vm2194, %v2193
  %s2205 = scalar_lea.vmem %s1, 1456
  %2206 = vst.msk [vmem:[%s2205] sm:$0x20] %vm2194, %v2193
  %s2207 = scalar_lea.vmem %s1, 1711
  %2208 = vst.msk [vmem:[%s2207] sm:$0x40] %vm2194, %v2193
  %s2209 = scalar_lea.vmem %s1, 1966
  %2210 = vst.msk [vmem:[%s2209] sm:$0x80] %vm2194, %v2193
  %v2211 = vld [vmem:[%s0] sm:$0xff]
  %2212 = vrot.lane.b32.xlu0 %v2211, 74
  %v2213 = vpop.permute.xlu0 %2212
  %vm2214 = vcmask 7168
  %s2215 = scalar_lea.vmem %s1, 54
  %2216 = vst.msk [vmem:[%s2215] sm:$0x1] %vm2214, %v2213
  %s2217 = scalar_lea.vmem %s1, 309
  %2218 = vst.msk [vmem:[%s2217] sm:$0x2] %vm2214, %v2213
  %s2219 = scalar_lea.vmem %s1, 564
  %2220 = vst.msk [vmem:[%s2219] sm:$0x4] %vm2214, %v2213
  %s2221 = scalar_lea.vmem %s1, 819
  %2222 = vst.msk [vmem:[%s2221] sm:$0x8] %vm2214, %v2213
  %s2223 = scalar_lea.vmem %s1, 1074
  %2224 = vst.msk [vmem:[%s2223] sm:$0x10] %vm2214, %v2213
  %s2225 = scalar_lea.vmem %s1, 1329
  %2226 = vst.msk [vmem:[%s2225] sm:$0x20] %vm2214, %v2213
  %s2227 = scalar_lea.vmem %s1, 1584
  %2228 = vst.msk [vmem:[%s2227] sm:$0x40] %vm2214, %v2213
  %s2229 = scalar_lea.vmem %s1, 1839
  %2230 = vst.msk [vmem:[%s2229] sm:$0x80] %vm2214, %v2213
  %s2231 = scalar_lea.vmem %s0, 8
  %v2232 = vld [vmem:[%s2231] sm:$0xff]
  %2233 = vrot.lane.b32.xlu0 %v2232, 74
  %v2234 = vpop.permute.xlu0 %2233
  %vm2235 = vcmask 7168
  %s2236 = scalar_lea.vmem %s1, 182
  %2237 = vst.msk [vmem:[%s2236] sm:$0x1] %vm2235, %v2234
  %s2238 = scalar_lea.vmem %s1, 437
  %2239 = vst.msk [vmem:[%s2238] sm:$0x2] %vm2235, %v2234
  %s2240 = scalar_lea.vmem %s1, 692
  %2241 = vst.msk [vmem:[%s2240] sm:$0x4] %vm2235, %v2234
  %s2242 = scalar_lea.vmem %s1, 947
  %2243 = vst.msk [vmem:[%s2242] sm:$0x8] %vm2235, %v2234
  %s2244 = scalar_lea.vmem %s1, 1202
  %2245 = vst.msk [vmem:[%s2244] sm:$0x10] %vm2235, %v2234
  %s2246 = scalar_lea.vmem %s1, 1457
  %2247 = vst.msk [vmem:[%s2246] sm:$0x20] %vm2235, %v2234
  %s2248 = scalar_lea.vmem %s1, 1712
  %2249 = vst.msk [vmem:[%s2248] sm:$0x40] %vm2235, %v2234
  %s2250 = scalar_lea.vmem %s1, 1967
  %2251 = vst.msk [vmem:[%s2250] sm:$0x80] %vm2235, %v2234
  %v2252 = vld [vmem:[%s0] sm:$0xff]
  %2253 = vrot.lane.b32.xlu0 %v2252, 73
  %v2254 = vpop.permute.xlu0 %2253
  %vm2255 = vcmask 7168
  %s2256 = scalar_lea.vmem %s1, 55
  %2257 = vst.msk [vmem:[%s2256] sm:$0x1] %vm2255, %v2254
  %s2258 = scalar_lea.vmem %s1, 310
  %2259 = vst.msk [vmem:[%s2258] sm:$0x2] %vm2255, %v2254
  %s2260 = scalar_lea.vmem %s1, 565
  %2261 = vst.msk [vmem:[%s2260] sm:$0x4] %vm2255, %v2254
  %s2262 = scalar_lea.vmem %s1, 820
  %2263 = vst.msk [vmem:[%s2262] sm:$0x8] %vm2255, %v2254
  %s2264 = scalar_lea.vmem %s1, 1075
  %2265 = vst.msk [vmem:[%s2264] sm:$0x10] %vm2255, %v2254
  %s2266 = scalar_lea.vmem %s1, 1330
  %2267 = vst.msk [vmem:[%s2266] sm:$0x20] %vm2255, %v2254
  %s2268 = scalar_lea.vmem %s1, 1585
  %2269 = vst.msk [vmem:[%s2268] sm:$0x40] %vm2255, %v2254
  %s2270 = scalar_lea.vmem %s1, 1840
  %2271 = vst.msk [vmem:[%s2270] sm:$0x80] %vm2255, %v2254
  %s2272 = scalar_lea.vmem %s0, 8
  %v2273 = vld [vmem:[%s2272] sm:$0xff]
  %2274 = vrot.lane.b32.xlu0 %v2273, 73
  %v2275 = vpop.permute.xlu0 %2274
  %vm2276 = vcmask 7168
  %s2277 = scalar_lea.vmem %s1, 183
  %2278 = vst.msk [vmem:[%s2277] sm:$0x1] %vm2276, %v2275
  %s2279 = scalar_lea.vmem %s1, 438
  %2280 = vst.msk [vmem:[%s2279] sm:$0x2] %vm2276, %v2275
  %s2281 = scalar_lea.vmem %s1, 693
  %2282 = vst.msk [vmem:[%s2281] sm:$0x4] %vm2276, %v2275
  %s2283 = scalar_lea.vmem %s1, 948
  %2284 = vst.msk [vmem:[%s2283] sm:$0x8] %vm2276, %v2275
  %s2285 = scalar_lea.vmem %s1, 1203
  %2286 = vst.msk [vmem:[%s2285] sm:$0x10] %vm2276, %v2275
  %s2287 = scalar_lea.vmem %s1, 1458
  %2288 = vst.msk [vmem:[%s2287] sm:$0x20] %vm2276, %v2275
  %s2289 = scalar_lea.vmem %s1, 1713
  %2290 = vst.msk [vmem:[%s2289] sm:$0x40] %vm2276, %v2275
  %s2291 = scalar_lea.vmem %s1, 1968
  %2292 = vst.msk [vmem:[%s2291] sm:$0x80] %vm2276, %v2275
  %v2293 = vld [vmem:[%s0] sm:$0xff]
  %2294 = vrot.lane.b32.xlu0 %v2293, 72
  %v2295 = vpop.permute.xlu0 %2294
  %vm2296 = vcmask 7168
  %s2297 = scalar_lea.vmem %s1, 56
  %2298 = vst.msk [vmem:[%s2297] sm:$0x1] %vm2296, %v2295
  %s2299 = scalar_lea.vmem %s1, 311
  %2300 = vst.msk [vmem:[%s2299] sm:$0x2] %vm2296, %v2295
  %s2301 = scalar_lea.vmem %s1, 566
  %2302 = vst.msk [vmem:[%s2301] sm:$0x4] %vm2296, %v2295
  %s2303 = scalar_lea.vmem %s1, 821
  %2304 = vst.msk [vmem:[%s2303] sm:$0x8] %vm2296, %v2295
  %s2305 = scalar_lea.vmem %s1, 1076
  %2306 = vst.msk [vmem:[%s2305] sm:$0x10] %vm2296, %v2295
  %s2307 = scalar_lea.vmem %s1, 1331
  %2308 = vst.msk [vmem:[%s2307] sm:$0x20] %vm2296, %v2295
  %s2309 = scalar_lea.vmem %s1, 1586
  %2310 = vst.msk [vmem:[%s2309] sm:$0x40] %vm2296, %v2295
  %s2311 = scalar_lea.vmem %s1, 1841
  %2312 = vst.msk [vmem:[%s2311] sm:$0x80] %vm2296, %v2295
  %s2313 = scalar_lea.vmem %s0, 8
  %v2314 = vld [vmem:[%s2313] sm:$0xff]
  %2315 = vrot.lane.b32.xlu0 %v2314, 72
  %v2316 = vpop.permute.xlu0 %2315
  %vm2317 = vcmask 7168
  %s2318 = scalar_lea.vmem %s1, 184
  %2319 = vst.msk [vmem:[%s2318] sm:$0x1] %vm2317, %v2316
  %s2320 = scalar_lea.vmem %s1, 439
  %2321 = vst.msk [vmem:[%s2320] sm:$0x2] %vm2317, %v2316
  %s2322 = scalar_lea.vmem %s1, 694
  %2323 = vst.msk [vmem:[%s2322] sm:$0x4] %vm2317, %v2316
  %s2324 = scalar_lea.vmem %s1, 949
  %2325 = vst.msk [vmem:[%s2324] sm:$0x8] %vm2317, %v2316
  %s2326 = scalar_lea.vmem %s1, 1204
  %2327 = vst.msk [vmem:[%s2326] sm:$0x10] %vm2317, %v2316
  %s2328 = scalar_lea.vmem %s1, 1459
  %2329 = vst.msk [vmem:[%s2328] sm:$0x20] %vm2317, %v2316
  %s2330 = scalar_lea.vmem %s1, 1714
  %2331 = vst.msk [vmem:[%s2330] sm:$0x40] %vm2317, %v2316
  %s2332 = scalar_lea.vmem %s1, 1969
  %2333 = vst.msk [vmem:[%s2332] sm:$0x80] %vm2317, %v2316
  %v2334 = vld [vmem:[%s0] sm:$0xff]
  %2335 = vrot.lane.b32.xlu0 %v2334, 71
  %v2336 = vpop.permute.xlu0 %2335
  %vm2337 = vcmask 7168
  %s2338 = scalar_lea.vmem %s1, 57
  %2339 = vst.msk [vmem:[%s2338] sm:$0x1] %vm2337, %v2336
  %s2340 = scalar_lea.vmem %s1, 312
  %2341 = vst.msk [vmem:[%s2340] sm:$0x2] %vm2337, %v2336
  %s2342 = scalar_lea.vmem %s1, 567
  %2343 = vst.msk [vmem:[%s2342] sm:$0x4] %vm2337, %v2336
  %s2344 = scalar_lea.vmem %s1, 822
  %2345 = vst.msk [vmem:[%s2344] sm:$0x8] %vm2337, %v2336
  %s2346 = scalar_lea.vmem %s1, 1077
  %2347 = vst.msk [vmem:[%s2346] sm:$0x10] %vm2337, %v2336
  %s2348 = scalar_lea.vmem %s1, 1332
  %2349 = vst.msk [vmem:[%s2348] sm:$0x20] %vm2337, %v2336
  %s2350 = scalar_lea.vmem %s1, 1587
  %2351 = vst.msk [vmem:[%s2350] sm:$0x40] %vm2337, %v2336
  %s2352 = scalar_lea.vmem %s1, 1842
  %2353 = vst.msk [vmem:[%s2352] sm:$0x80] %vm2337, %v2336
  %s2354 = scalar_lea.vmem %s0, 8
  %v2355 = vld [vmem:[%s2354] sm:$0xff]
  %2356 = vrot.lane.b32.xlu0 %v2355, 71
  %v2357 = vpop.permute.xlu0 %2356
  %vm2358 = vcmask 7168
  %s2359 = scalar_lea.vmem %s1, 185
  %2360 = vst.msk [vmem:[%s2359] sm:$0x1] %vm2358, %v2357
  %s2361 = scalar_lea.vmem %s1, 440
  %2362 = vst.msk [vmem:[%s2361] sm:$0x2] %vm2358, %v2357
  %s2363 = scalar_lea.vmem %s1, 695
  %2364 = vst.msk [vmem:[%s2363] sm:$0x4] %vm2358, %v2357
  %s2365 = scalar_lea.vmem %s1, 950
  %2366 = vst.msk [vmem:[%s2365] sm:$0x8] %vm2358, %v2357
  %s2367 = scalar_lea.vmem %s1, 1205
  %2368 = vst.msk [vmem:[%s2367] sm:$0x10] %vm2358, %v2357
  %s2369 = scalar_lea.vmem %s1, 1460
  %2370 = vst.msk [vmem:[%s2369] sm:$0x20] %vm2358, %v2357
  %s2371 = scalar_lea.vmem %s1, 1715
  %2372 = vst.msk [vmem:[%s2371] sm:$0x40] %vm2358, %v2357
  %s2373 = scalar_lea.vmem %s1, 1970
  %2374 = vst.msk [vmem:[%s2373] sm:$0x80] %vm2358, %v2357
  %v2375 = vld [vmem:[%s0] sm:$0xff]
  %2376 = vrot.lane.b32.xlu0 %v2375, 70
  %v2377 = vpop.permute.xlu0 %2376
  %vm2378 = vcmask 7168
  %s2379 = scalar_lea.vmem %s1, 58
  %2380 = vst.msk [vmem:[%s2379] sm:$0x1] %vm2378, %v2377
  %s2381 = scalar_lea.vmem %s1, 313
  %2382 = vst.msk [vmem:[%s2381] sm:$0x2] %vm2378, %v2377
  %s2383 = scalar_lea.vmem %s1, 568
  %2384 = vst.msk [vmem:[%s2383] sm:$0x4] %vm2378, %v2377
  %s2385 = scalar_lea.vmem %s1, 823
  %2386 = vst.msk [vmem:[%s2385] sm:$0x8] %vm2378, %v2377
  %s2387 = scalar_lea.vmem %s1, 1078
  %2388 = vst.msk [vmem:[%s2387] sm:$0x10] %vm2378, %v2377
  %s2389 = scalar_lea.vmem %s1, 1333
  %2390 = vst.msk [vmem:[%s2389] sm:$0x20] %vm2378, %v2377
  %s2391 = scalar_lea.vmem %s1, 1588
  %2392 = vst.msk [vmem:[%s2391] sm:$0x40] %vm2378, %v2377
  %s2393 = scalar_lea.vmem %s1, 1843
  %2394 = vst.msk [vmem:[%s2393] sm:$0x80] %vm2378, %v2377
  %s2395 = scalar_lea.vmem %s0, 8
  %v2396 = vld [vmem:[%s2395] sm:$0xff]
  %2397 = vrot.lane.b32.xlu0 %v2396, 70
  %v2398 = vpop.permute.xlu0 %2397
  %vm2399 = vcmask 7168
  %s2400 = scalar_lea.vmem %s1, 186
  %2401 = vst.msk [vmem:[%s2400] sm:$0x1] %vm2399, %v2398
  %s2402 = scalar_lea.vmem %s1, 441
  %2403 = vst.msk [vmem:[%s2402] sm:$0x2] %vm2399, %v2398
  %s2404 = scalar_lea.vmem %s1, 696
  %2405 = vst.msk [vmem:[%s2404] sm:$0x4] %vm2399, %v2398
  %s2406 = scalar_lea.vmem %s1, 951
  %2407 = vst.msk [vmem:[%s2406] sm:$0x8] %vm2399, %v2398
  %s2408 = scalar_lea.vmem %s1, 1206
  %2409 = vst.msk [vmem:[%s2408] sm:$0x10] %vm2399, %v2398
  %s2410 = scalar_lea.vmem %s1, 1461
  %2411 = vst.msk [vmem:[%s2410] sm:$0x20] %vm2399, %v2398
  %s2412 = scalar_lea.vmem %s1, 1716
  %2413 = vst.msk [vmem:[%s2412] sm:$0x40] %vm2399, %v2398
  %s2414 = scalar_lea.vmem %s1, 1971
  %2415 = vst.msk [vmem:[%s2414] sm:$0x80] %vm2399, %v2398
  %v2416 = vld [vmem:[%s0] sm:$0xff]
  %2417 = vrot.lane.b32.xlu0 %v2416, 69
  %v2418 = vpop.permute.xlu0 %2417
  %vm2419 = vcmask 7168
  %s2420 = scalar_lea.vmem %s1, 59
  %2421 = vst.msk [vmem:[%s2420] sm:$0x1] %vm2419, %v2418
  %s2422 = scalar_lea.vmem %s1, 314
  %2423 = vst.msk [vmem:[%s2422] sm:$0x2] %vm2419, %v2418
  %s2424 = scalar_lea.vmem %s1, 569
  %2425 = vst.msk [vmem:[%s2424] sm:$0x4] %vm2419, %v2418
  %s2426 = scalar_lea.vmem %s1, 824
  %2427 = vst.msk [vmem:[%s2426] sm:$0x8] %vm2419, %v2418
  %s2428 = scalar_lea.vmem %s1, 1079
  %2429 = vst.msk [vmem:[%s2428] sm:$0x10] %vm2419, %v2418
  %s2430 = scalar_lea.vmem %s1, 1334
  %2431 = vst.msk [vmem:[%s2430] sm:$0x20] %vm2419, %v2418
  %s2432 = scalar_lea.vmem %s1, 1589
  %2433 = vst.msk [vmem:[%s2432] sm:$0x40] %vm2419, %v2418
  %s2434 = scalar_lea.vmem %s1, 1844
  %2435 = vst.msk [vmem:[%s2434] sm:$0x80] %vm2419, %v2418
  %s2436 = scalar_lea.vmem %s0, 8
  %v2437 = vld [vmem:[%s2436] sm:$0xff]
  %2438 = vrot.lane.b32.xlu0 %v2437, 69
  %v2439 = vpop.permute.xlu0 %2438
  %vm2440 = vcmask 7168
  %s2441 = scalar_lea.vmem %s1, 187
  %2442 = vst.msk [vmem:[%s2441] sm:$0x1] %vm2440, %v2439
  %s2443 = scalar_lea.vmem %s1, 442
  %2444 = vst.msk [vmem:[%s2443] sm:$0x2] %vm2440, %v2439
  %s2445 = scalar_lea.vmem %s1, 697
  %2446 = vst.msk [vmem:[%s2445] sm:$0x4] %vm2440, %v2439
  %s2447 = scalar_lea.vmem %s1, 952
  %2448 = vst.msk [vmem:[%s2447] sm:$0x8] %vm2440, %v2439
  %s2449 = scalar_lea.vmem %s1, 1207
  %2450 = vst.msk [vmem:[%s2449] sm:$0x10] %vm2440, %v2439
  %s2451 = scalar_lea.vmem %s1, 1462
  %2452 = vst.msk [vmem:[%s2451] sm:$0x20] %vm2440, %v2439
  %s2453 = scalar_lea.vmem %s1, 1717
  %2454 = vst.msk [vmem:[%s2453] sm:$0x40] %vm2440, %v2439
  %s2455 = scalar_lea.vmem %s1, 1972
  %2456 = vst.msk [vmem:[%s2455] sm:$0x80] %vm2440, %v2439
  %v2457 = vld [vmem:[%s0] sm:$0xff]
  %2458 = vrot.lane.b32.xlu0 %v2457, 68
  %v2459 = vpop.permute.xlu0 %2458
  %vm2460 = vcmask 7168
  %s2461 = scalar_lea.vmem %s1, 60
  %2462 = vst.msk [vmem:[%s2461] sm:$0x1] %vm2460, %v2459
  %s2463 = scalar_lea.vmem %s1, 315
  %2464 = vst.msk [vmem:[%s2463] sm:$0x2] %vm2460, %v2459
  %s2465 = scalar_lea.vmem %s1, 570
  %2466 = vst.msk [vmem:[%s2465] sm:$0x4] %vm2460, %v2459
  %s2467 = scalar_lea.vmem %s1, 825
  %2468 = vst.msk [vmem:[%s2467] sm:$0x8] %vm2460, %v2459
  %s2469 = scalar_lea.vmem %s1, 1080
  %2470 = vst.msk [vmem:[%s2469] sm:$0x10] %vm2460, %v2459
  %s2471 = scalar_lea.vmem %s1, 1335
  %2472 = vst.msk [vmem:[%s2471] sm:$0x20] %vm2460, %v2459
  %s2473 = scalar_lea.vmem %s1, 1590
  %2474 = vst.msk [vmem:[%s2473] sm:$0x40] %vm2460, %v2459
  %s2475 = scalar_lea.vmem %s1, 1845
  %2476 = vst.msk [vmem:[%s2475] sm:$0x80] %vm2460, %v2459
  %s2477 = scalar_lea.vmem %s0, 8
  %v2478 = vld [vmem:[%s2477] sm:$0xff]
  %2479 = vrot.lane.b32.xlu0 %v2478, 68
  %v2480 = vpop.permute.xlu0 %2479
  %vm2481 = vcmask 7168
  %s2482 = scalar_lea.vmem %s1, 188
  %2483 = vst.msk [vmem:[%s2482] sm:$0x1] %vm2481, %v2480
  %s2484 = scalar_lea.vmem %s1, 443
  %2485 = vst.msk [vmem:[%s2484] sm:$0x2] %vm2481, %v2480
  %s2486 = scalar_lea.vmem %s1, 698
  %2487 = vst.msk [vmem:[%s2486] sm:$0x4] %vm2481, %v2480
  %s2488 = scalar_lea.vmem %s1, 953
  %2489 = vst.msk [vmem:[%s2488] sm:$0x8] %vm2481, %v2480
  %s2490 = scalar_lea.vmem %s1, 1208
  %2491 = vst.msk [vmem:[%s2490] sm:$0x10] %vm2481, %v2480
  %s2492 = scalar_lea.vmem %s1, 1463
  %2493 = vst.msk [vmem:[%s2492] sm:$0x20] %vm2481, %v2480
  %s2494 = scalar_lea.vmem %s1, 1718
  %2495 = vst.msk [vmem:[%s2494] sm:$0x40] %vm2481, %v2480
  %s2496 = scalar_lea.vmem %s1, 1973
  %2497 = vst.msk [vmem:[%s2496] sm:$0x80] %vm2481, %v2480
  %v2498 = vld [vmem:[%s0] sm:$0xff]
  %2499 = vrot.lane.b32.xlu0 %v2498, 67
  %v2500 = vpop.permute.xlu0 %2499
  %vm2501 = vcmask 7168
  %s2502 = scalar_lea.vmem %s1, 61
  %2503 = vst.msk [vmem:[%s2502] sm:$0x1] %vm2501, %v2500
  %s2504 = scalar_lea.vmem %s1, 316
  %2505 = vst.msk [vmem:[%s2504] sm:$0x2] %vm2501, %v2500
  %s2506 = scalar_lea.vmem %s1, 571
  %2507 = vst.msk [vmem:[%s2506] sm:$0x4] %vm2501, %v2500
  %s2508 = scalar_lea.vmem %s1, 826
  %2509 = vst.msk [vmem:[%s2508] sm:$0x8] %vm2501, %v2500
  %s2510 = scalar_lea.vmem %s1, 1081
  %2511 = vst.msk [vmem:[%s2510] sm:$0x10] %vm2501, %v2500
  %s2512 = scalar_lea.vmem %s1, 1336
  %2513 = vst.msk [vmem:[%s2512] sm:$0x20] %vm2501, %v2500
  %s2514 = scalar_lea.vmem %s1, 1591
  %2515 = vst.msk [vmem:[%s2514] sm:$0x40] %vm2501, %v2500
  %s2516 = scalar_lea.vmem %s1, 1846
  %2517 = vst.msk [vmem:[%s2516] sm:$0x80] %vm2501, %v2500
  %s2518 = scalar_lea.vmem %s0, 8
  %v2519 = vld [vmem:[%s2518] sm:$0xff]
  %2520 = vrot.lane.b32.xlu0 %v2519, 67
  %v2521 = vpop.permute.xlu0 %2520
  %vm2522 = vcmask 7168
  %s2523 = scalar_lea.vmem %s1, 189
  %2524 = vst.msk [vmem:[%s2523] sm:$0x1] %vm2522, %v2521
  %s2525 = scalar_lea.vmem %s1, 444
  %2526 = vst.msk [vmem:[%s2525] sm:$0x2] %vm2522, %v2521
  %s2527 = scalar_lea.vmem %s1, 699
  %2528 = vst.msk [vmem:[%s2527] sm:$0x4] %vm2522, %v2521
  %s2529 = scalar_lea.vmem %s1, 954
  %2530 = vst.msk [vmem:[%s2529] sm:$0x8] %vm2522, %v2521
  %s2531 = scalar_lea.vmem %s1, 1209
  %2532 = vst.msk [vmem:[%s2531] sm:$0x10] %vm2522, %v2521
  %s2533 = scalar_lea.vmem %s1, 1464
  %2534 = vst.msk [vmem:[%s2533] sm:$0x20] %vm2522, %v2521
  %s2535 = scalar_lea.vmem %s1, 1719
  %2536 = vst.msk [vmem:[%s2535] sm:$0x40] %vm2522, %v2521
  %s2537 = scalar_lea.vmem %s1, 1974
  %2538 = vst.msk [vmem:[%s2537] sm:$0x80] %vm2522, %v2521
  %v2539 = vld [vmem:[%s0] sm:$0xff]
  %2540 = vrot.lane.b32.xlu0 %v2539, 66
  %v2541 = vpop.permute.xlu0 %2540
  %vm2542 = vcmask 7168
  %s2543 = scalar_lea.vmem %s1, 62
  %2544 = vst.msk [vmem:[%s2543] sm:$0x1] %vm2542, %v2541
  %s2545 = scalar_lea.vmem %s1, 317
  %2546 = vst.msk [vmem:[%s2545] sm:$0x2] %vm2542, %v2541
  %s2547 = scalar_lea.vmem %s1, 572
  %2548 = vst.msk [vmem:[%s2547] sm:$0x4] %vm2542, %v2541
  %s2549 = scalar_lea.vmem %s1, 827
  %2550 = vst.msk [vmem:[%s2549] sm:$0x8] %vm2542, %v2541
  %s2551 = scalar_lea.vmem %s1, 1082
  %2552 = vst.msk [vmem:[%s2551] sm:$0x10] %vm2542, %v2541
  %s2553 = scalar_lea.vmem %s1, 1337
  %2554 = vst.msk [vmem:[%s2553] sm:$0x20] %vm2542, %v2541
  %s2555 = scalar_lea.vmem %s1, 1592
  %2556 = vst.msk [vmem:[%s2555] sm:$0x40] %vm2542, %v2541
  %s2557 = scalar_lea.vmem %s1, 1847
  %2558 = vst.msk [vmem:[%s2557] sm:$0x80] %vm2542, %v2541
  %s2559 = scalar_lea.vmem %s0, 8
  %v2560 = vld [vmem:[%s2559] sm:$0xff]
  %2561 = vrot.lane.b32.xlu0 %v2560, 66
  %v2562 = vpop.permute.xlu0 %2561
  %vm2563 = vcmask 7168
  %s2564 = scalar_lea.vmem %s1, 190
  %2565 = vst.msk [vmem:[%s2564] sm:$0x1] %vm2563, %v2562
  %s2566 = scalar_lea.vmem %s1, 445
  %2567 = vst.msk [vmem:[%s2566] sm:$0x2] %vm2563, %v2562
  %s2568 = scalar_lea.vmem %s1, 700
  %2569 = vst.msk [vmem:[%s2568] sm:$0x4] %vm2563, %v2562
  %s2570 = scalar_lea.vmem %s1, 955
  %2571 = vst.msk [vmem:[%s2570] sm:$0x8] %vm2563, %v2562
  %s2572 = scalar_lea.vmem %s1, 1210
  %2573 = vst.msk [vmem:[%s2572] sm:$0x10] %vm2563, %v2562
  %s2574 = scalar_lea.vmem %s1, 1465
  %2575 = vst.msk [vmem:[%s2574] sm:$0x20] %vm2563, %v2562
  %s2576 = scalar_lea.vmem %s1, 1720
  %2577 = vst.msk [vmem:[%s2576] sm:$0x40] %vm2563, %v2562
  %s2578 = scalar_lea.vmem %s1, 1975
  %2579 = vst.msk [vmem:[%s2578] sm:$0x80] %vm2563, %v2562
  %v2580 = vld [vmem:[%s0] sm:$0xff]
  %2581 = vrot.lane.b32.xlu0 %v2580, 65
  %v2582 = vpop.permute.xlu0 %2581
  %vm2583 = vcmask 7168
  %s2584 = scalar_lea.vmem %s1, 63
  %2585 = vst.msk [vmem:[%s2584] sm:$0x1] %vm2583, %v2582
  %s2586 = scalar_lea.vmem %s1, 318
  %2587 = vst.msk [vmem:[%s2586] sm:$0x2] %vm2583, %v2582
  %s2588 = scalar_lea.vmem %s1, 573
  %2589 = vst.msk [vmem:[%s2588] sm:$0x4] %vm2583, %v2582
  %s2590 = scalar_lea.vmem %s1, 828
  %2591 = vst.msk [vmem:[%s2590] sm:$0x8] %vm2583, %v2582
  %s2592 = scalar_lea.vmem %s1, 1083
  %2593 = vst.msk [vmem:[%s2592] sm:$0x10] %vm2583, %v2582
  %s2594 = scalar_lea.vmem %s1, 1338
  %2595 = vst.msk [vmem:[%s2594] sm:$0x20] %vm2583, %v2582
  %s2596 = scalar_lea.vmem %s1, 1593
  %2597 = vst.msk [vmem:[%s2596] sm:$0x40] %vm2583, %v2582
  %s2598 = scalar_lea.vmem %s1, 1848
  %2599 = vst.msk [vmem:[%s2598] sm:$0x80] %vm2583, %v2582
  %s2600 = scalar_lea.vmem %s0, 8
  %v2601 = vld [vmem:[%s2600] sm:$0xff]
  %2602 = vrot.lane.b32.xlu0 %v2601, 65
  %v2603 = vpop.permute.xlu0 %2602
  %vm2604 = vcmask 7168
  %s2605 = scalar_lea.vmem %s1, 191
  %2606 = vst.msk [vmem:[%s2605] sm:$0x1] %vm2604, %v2603
  %s2607 = scalar_lea.vmem %s1, 446
  %2608 = vst.msk [vmem:[%s2607] sm:$0x2] %vm2604, %v2603
  %s2609 = scalar_lea.vmem %s1, 701
  %2610 = vst.msk [vmem:[%s2609] sm:$0x4] %vm2604, %v2603
  %s2611 = scalar_lea.vmem %s1, 956
  %2612 = vst.msk [vmem:[%s2611] sm:$0x8] %vm2604, %v2603
  %s2613 = scalar_lea.vmem %s1, 1211
  %2614 = vst.msk [vmem:[%s2613] sm:$0x10] %vm2604, %v2603
  %s2615 = scalar_lea.vmem %s1, 1466
  %2616 = vst.msk [vmem:[%s2615] sm:$0x20] %vm2604, %v2603
  %s2617 = scalar_lea.vmem %s1, 1721
  %2618 = vst.msk [vmem:[%s2617] sm:$0x40] %vm2604, %v2603
  %s2619 = scalar_lea.vmem %s1, 1976
  %2620 = vst.msk [vmem:[%s2619] sm:$0x80] %vm2604, %v2603
  %v2621 = vld [vmem:[%s0] sm:$0xff]
  %2622 = vrot.lane.b32.xlu0 %v2621, 64
  %v2623 = vpop.permute.xlu0 %2622
  %vm2624 = vcmask 7168
  %s2625 = scalar_lea.vmem %s1, 64
  %2626 = vst.msk [vmem:[%s2625] sm:$0x1] %vm2624, %v2623
  %s2627 = scalar_lea.vmem %s1, 319
  %2628 = vst.msk [vmem:[%s2627] sm:$0x2] %vm2624, %v2623
  %s2629 = scalar_lea.vmem %s1, 574
  %2630 = vst.msk [vmem:[%s2629] sm:$0x4] %vm2624, %v2623
  %s2631 = scalar_lea.vmem %s1, 829
  %2632 = vst.msk [vmem:[%s2631] sm:$0x8] %vm2624, %v2623
  %s2633 = scalar_lea.vmem %s1, 1084
  %2634 = vst.msk [vmem:[%s2633] sm:$0x10] %vm2624, %v2623
  %s2635 = scalar_lea.vmem %s1, 1339
  %2636 = vst.msk [vmem:[%s2635] sm:$0x20] %vm2624, %v2623
  %s2637 = scalar_lea.vmem %s1, 1594
  %2638 = vst.msk [vmem:[%s2637] sm:$0x40] %vm2624, %v2623
  %s2639 = scalar_lea.vmem %s1, 1849
  %2640 = vst.msk [vmem:[%s2639] sm:$0x80] %vm2624, %v2623
  %s2641 = scalar_lea.vmem %s0, 8
  %v2642 = vld [vmem:[%s2641] sm:$0xff]
  %2643 = vrot.lane.b32.xlu0 %v2642, 64
  %v2644 = vpop.permute.xlu0 %2643
  %vm2645 = vcmask 7168
  %s2646 = scalar_lea.vmem %s1, 192
  %2647 = vst.msk [vmem:[%s2646] sm:$0x1] %vm2645, %v2644
  %s2648 = scalar_lea.vmem %s1, 447
  %2649 = vst.msk [vmem:[%s2648] sm:$0x2] %vm2645, %v2644
  %s2650 = scalar_lea.vmem %s1, 702
  %2651 = vst.msk [vmem:[%s2650] sm:$0x4] %vm2645, %v2644
  %s2652 = scalar_lea.vmem %s1, 957
  %2653 = vst.msk [vmem:[%s2652] sm:$0x8] %vm2645, %v2644
  %s2654 = scalar_lea.vmem %s1, 1212
  %2655 = vst.msk [vmem:[%s2654] sm:$0x10] %vm2645, %v2644
  %s2656 = scalar_lea.vmem %s1, 1467
  %2657 = vst.msk [vmem:[%s2656] sm:$0x20] %vm2645, %v2644
  %s2658 = scalar_lea.vmem %s1, 1722
  %2659 = vst.msk [vmem:[%s2658] sm:$0x40] %vm2645, %v2644
  %s2660 = scalar_lea.vmem %s1, 1977
  %2661 = vst.msk [vmem:[%s2660] sm:$0x80] %vm2645, %v2644
  %v2662 = vld [vmem:[%s0] sm:$0xff]
  %2663 = vrot.lane.b32.xlu0 %v2662, 63
  %v2664 = vpop.permute.xlu0 %2663
  %vm2665 = vcmask 7168
  %s2666 = scalar_lea.vmem %s1, 65
  %2667 = vst.msk [vmem:[%s2666] sm:$0x1] %vm2665, %v2664
  %s2668 = scalar_lea.vmem %s1, 320
  %2669 = vst.msk [vmem:[%s2668] sm:$0x2] %vm2665, %v2664
  %s2670 = scalar_lea.vmem %s1, 575
  %2671 = vst.msk [vmem:[%s2670] sm:$0x4] %vm2665, %v2664
  %s2672 = scalar_lea.vmem %s1, 830
  %2673 = vst.msk [vmem:[%s2672] sm:$0x8] %vm2665, %v2664
  %s2674 = scalar_lea.vmem %s1, 1085
  %2675 = vst.msk [vmem:[%s2674] sm:$0x10] %vm2665, %v2664
  %s2676 = scalar_lea.vmem %s1, 1340
  %2677 = vst.msk [vmem:[%s2676] sm:$0x20] %vm2665, %v2664
  %s2678 = scalar_lea.vmem %s1, 1595
  %2679 = vst.msk [vmem:[%s2678] sm:$0x40] %vm2665, %v2664
  %s2680 = scalar_lea.vmem %s1, 1850
  %2681 = vst.msk [vmem:[%s2680] sm:$0x80] %vm2665, %v2664
  %s2682 = scalar_lea.vmem %s0, 8
  %v2683 = vld [vmem:[%s2682] sm:$0xff]
  %2684 = vrot.lane.b32.xlu0 %v2683, 63
  %v2685 = vpop.permute.xlu0 %2684
  %vm2686 = vcmask 7168
  %s2687 = scalar_lea.vmem %s1, 193
  %2688 = vst.msk [vmem:[%s2687] sm:$0x1] %vm2686, %v2685
  %s2689 = scalar_lea.vmem %s1, 448
  %2690 = vst.msk [vmem:[%s2689] sm:$0x2] %vm2686, %v2685
  %s2691 = scalar_lea.vmem %s1, 703
  %2692 = vst.msk [vmem:[%s2691] sm:$0x4] %vm2686, %v2685
  %s2693 = scalar_lea.vmem %s1, 958
  %2694 = vst.msk [vmem:[%s2693] sm:$0x8] %vm2686, %v2685
  %s2695 = scalar_lea.vmem %s1, 1213
  %2696 = vst.msk [vmem:[%s2695] sm:$0x10] %vm2686, %v2685
  %s2697 = scalar_lea.vmem %s1, 1468
  %2698 = vst.msk [vmem:[%s2697] sm:$0x20] %vm2686, %v2685
  %s2699 = scalar_lea.vmem %s1, 1723
  %2700 = vst.msk [vmem:[%s2699] sm:$0x40] %vm2686, %v2685
  %s2701 = scalar_lea.vmem %s1, 1978
  %2702 = vst.msk [vmem:[%s2701] sm:$0x80] %vm2686, %v2685
  %v2703 = vld [vmem:[%s0] sm:$0xff]
  %2704 = vrot.lane.b32.xlu0 %v2703, 62
  %v2705 = vpop.permute.xlu0 %2704
  %vm2706 = vcmask 7168
  %s2707 = scalar_lea.vmem %s1, 66
  %2708 = vst.msk [vmem:[%s2707] sm:$0x1] %vm2706, %v2705
  %s2709 = scalar_lea.vmem %s1, 321
  %2710 = vst.msk [vmem:[%s2709] sm:$0x2] %vm2706, %v2705
  %s2711 = scalar_lea.vmem %s1, 576
  %2712 = vst.msk [vmem:[%s2711] sm:$0x4] %vm2706, %v2705
  %s2713 = scalar_lea.vmem %s1, 831
  %2714 = vst.msk [vmem:[%s2713] sm:$0x8] %vm2706, %v2705
  %s2715 = scalar_lea.vmem %s1, 1086
  %2716 = vst.msk [vmem:[%s2715] sm:$0x10] %vm2706, %v2705
  %s2717 = scalar_lea.vmem %s1, 1341
  %2718 = vst.msk [vmem:[%s2717] sm:$0x20] %vm2706, %v2705
  %s2719 = scalar_lea.vmem %s1, 1596
  %2720 = vst.msk [vmem:[%s2719] sm:$0x40] %vm2706, %v2705
  %s2721 = scalar_lea.vmem %s1, 1851
  %2722 = vst.msk [vmem:[%s2721] sm:$0x80] %vm2706, %v2705
  %s2723 = scalar_lea.vmem %s0, 8
  %v2724 = vld [vmem:[%s2723] sm:$0xff]
  %2725 = vrot.lane.b32.xlu0 %v2724, 62
  %v2726 = vpop.permute.xlu0 %2725
  %vm2727 = vcmask 7168
  %s2728 = scalar_lea.vmem %s1, 194
  %2729 = vst.msk [vmem:[%s2728] sm:$0x1] %vm2727, %v2726
  %s2730 = scalar_lea.vmem %s1, 449
  %2731 = vst.msk [vmem:[%s2730] sm:$0x2] %vm2727, %v2726
  %s2732 = scalar_lea.vmem %s1, 704
  %2733 = vst.msk [vmem:[%s2732] sm:$0x4] %vm2727, %v2726
  %s2734 = scalar_lea.vmem %s1, 959
  %2735 = vst.msk [vmem:[%s2734] sm:$0x8] %vm2727, %v2726
  %s2736 = scalar_lea.vmem %s1, 1214
  %2737 = vst.msk [vmem:[%s2736] sm:$0x10] %vm2727, %v2726
  %s2738 = scalar_lea.vmem %s1, 1469
  %2739 = vst.msk [vmem:[%s2738] sm:$0x20] %vm2727, %v2726
  %s2740 = scalar_lea.vmem %s1, 1724
  %2741 = vst.msk [vmem:[%s2740] sm:$0x40] %vm2727, %v2726
  %s2742 = scalar_lea.vmem %s1, 1979
  %2743 = vst.msk [vmem:[%s2742] sm:$0x80] %vm2727, %v2726
  %v2744 = vld [vmem:[%s0] sm:$0xff]
  %2745 = vrot.lane.b32.xlu0 %v2744, 61
  %v2746 = vpop.permute.xlu0 %2745
  %vm2747 = vcmask 7168
  %s2748 = scalar_lea.vmem %s1, 67
  %2749 = vst.msk [vmem:[%s2748] sm:$0x1] %vm2747, %v2746
  %s2750 = scalar_lea.vmem %s1, 322
  %2751 = vst.msk [vmem:[%s2750] sm:$0x2] %vm2747, %v2746
  %s2752 = scalar_lea.vmem %s1, 577
  %2753 = vst.msk [vmem:[%s2752] sm:$0x4] %vm2747, %v2746
  %s2754 = scalar_lea.vmem %s1, 832
  %2755 = vst.msk [vmem:[%s2754] sm:$0x8] %vm2747, %v2746
  %s2756 = scalar_lea.vmem %s1, 1087
  %2757 = vst.msk [vmem:[%s2756] sm:$0x10] %vm2747, %v2746
  %s2758 = scalar_lea.vmem %s1, 1342
  %2759 = vst.msk [vmem:[%s2758] sm:$0x20] %vm2747, %v2746
  %s2760 = scalar_lea.vmem %s1, 1597
  %2761 = vst.msk [vmem:[%s2760] sm:$0x40] %vm2747, %v2746
  %s2762 = scalar_lea.vmem %s1, 1852
  %2763 = vst.msk [vmem:[%s2762] sm:$0x80] %vm2747, %v2746
  %s2764 = scalar_lea.vmem %s0, 8
  %v2765 = vld [vmem:[%s2764] sm:$0xff]
  %2766 = vrot.lane.b32.xlu0 %v2765, 61
  %v2767 = vpop.permute.xlu0 %2766
  %vm2768 = vcmask 7168
  %s2769 = scalar_lea.vmem %s1, 195
  %2770 = vst.msk [vmem:[%s2769] sm:$0x1] %vm2768, %v2767
  %s2771 = scalar_lea.vmem %s1, 450
  %2772 = vst.msk [vmem:[%s2771] sm:$0x2] %vm2768, %v2767
  %s2773 = scalar_lea.vmem %s1, 705
  %2774 = vst.msk [vmem:[%s2773] sm:$0x4] %vm2768, %v2767
  %s2775 = scalar_lea.vmem %s1, 960
  %2776 = vst.msk [vmem:[%s2775] sm:$0x8] %vm2768, %v2767
  %s2777 = scalar_lea.vmem %s1, 1215
  %2778 = vst.msk [vmem:[%s2777] sm:$0x10] %vm2768, %v2767
  %s2779 = scalar_lea.vmem %s1, 1470
  %2780 = vst.msk [vmem:[%s2779] sm:$0x20] %vm2768, %v2767
  %s2781 = scalar_lea.vmem %s1, 1725
  %2782 = vst.msk [vmem:[%s2781] sm:$0x40] %vm2768, %v2767
  %s2783 = scalar_lea.vmem %s1, 1980
  %2784 = vst.msk [vmem:[%s2783] sm:$0x80] %vm2768, %v2767
  %v2785 = vld [vmem:[%s0] sm:$0xff]
  %2786 = vrot.lane.b32.xlu0 %v2785, 60
  %v2787 = vpop.permute.xlu0 %2786
  %vm2788 = vcmask 7168
  %s2789 = scalar_lea.vmem %s1, 68
  %2790 = vst.msk [vmem:[%s2789] sm:$0x1] %vm2788, %v2787
  %s2791 = scalar_lea.vmem %s1, 323
  %2792 = vst.msk [vmem:[%s2791] sm:$0x2] %vm2788, %v2787
  %s2793 = scalar_lea.vmem %s1, 578
  %2794 = vst.msk [vmem:[%s2793] sm:$0x4] %vm2788, %v2787
  %s2795 = scalar_lea.vmem %s1, 833
  %2796 = vst.msk [vmem:[%s2795] sm:$0x8] %vm2788, %v2787
  %s2797 = scalar_lea.vmem %s1, 1088
  %2798 = vst.msk [vmem:[%s2797] sm:$0x10] %vm2788, %v2787
  %s2799 = scalar_lea.vmem %s1, 1343
  %2800 = vst.msk [vmem:[%s2799] sm:$0x20] %vm2788, %v2787
  %s2801 = scalar_lea.vmem %s1, 1598
  %2802 = vst.msk [vmem:[%s2801] sm:$0x40] %vm2788, %v2787
  %s2803 = scalar_lea.vmem %s1, 1853
  %2804 = vst.msk [vmem:[%s2803] sm:$0x80] %vm2788, %v2787
  %s2805 = scalar_lea.vmem %s0, 8
  %v2806 = vld [vmem:[%s2805] sm:$0xff]
  %2807 = vrot.lane.b32.xlu0 %v2806, 60
  %v2808 = vpop.permute.xlu0 %2807
  %vm2809 = vcmask 7168
  %s2810 = scalar_lea.vmem %s1, 196
  %2811 = vst.msk [vmem:[%s2810] sm:$0x1] %vm2809, %v2808
  %s2812 = scalar_lea.vmem %s1, 451
  %2813 = vst.msk [vmem:[%s2812] sm:$0x2] %vm2809, %v2808
  %s2814 = scalar_lea.vmem %s1, 706
  %2815 = vst.msk [vmem:[%s2814] sm:$0x4] %vm2809, %v2808
  %s2816 = scalar_lea.vmem %s1, 961
  %2817 = vst.msk [vmem:[%s2816] sm:$0x8] %vm2809, %v2808
  %s2818 = scalar_lea.vmem %s1, 1216
  %2819 = vst.msk [vmem:[%s2818] sm:$0x10] %vm2809, %v2808
  %s2820 = scalar_lea.vmem %s1, 1471
  %2821 = vst.msk [vmem:[%s2820] sm:$0x20] %vm2809, %v2808
  %s2822 = scalar_lea.vmem %s1, 1726
  %2823 = vst.msk [vmem:[%s2822] sm:$0x40] %vm2809, %v2808
  %s2824 = scalar_lea.vmem %s1, 1981
  %2825 = vst.msk [vmem:[%s2824] sm:$0x80] %vm2809, %v2808
  %v2826 = vld [vmem:[%s0] sm:$0xff]
  %2827 = vrot.lane.b32.xlu0 %v2826, 59
  %v2828 = vpop.permute.xlu0 %2827
  %vm2829 = vcmask 7168
  %s2830 = scalar_lea.vmem %s1, 69
  %2831 = vst.msk [vmem:[%s2830] sm:$0x1] %vm2829, %v2828
  %s2832 = scalar_lea.vmem %s1, 324
  %2833 = vst.msk [vmem:[%s2832] sm:$0x2] %vm2829, %v2828
  %s2834 = scalar_lea.vmem %s1, 579
  %2835 = vst.msk [vmem:[%s2834] sm:$0x4] %vm2829, %v2828
  %s2836 = scalar_lea.vmem %s1, 834
  %2837 = vst.msk [vmem:[%s2836] sm:$0x8] %vm2829, %v2828
  %s2838 = scalar_lea.vmem %s1, 1089
  %2839 = vst.msk [vmem:[%s2838] sm:$0x10] %vm2829, %v2828
  %s2840 = scalar_lea.vmem %s1, 1344
  %2841 = vst.msk [vmem:[%s2840] sm:$0x20] %vm2829, %v2828
  %s2842 = scalar_lea.vmem %s1, 1599
  %2843 = vst.msk [vmem:[%s2842] sm:$0x40] %vm2829, %v2828
  %s2844 = scalar_lea.vmem %s1, 1854
  %2845 = vst.msk [vmem:[%s2844] sm:$0x80] %vm2829, %v2828
  %s2846 = scalar_lea.vmem %s0, 8
  %v2847 = vld [vmem:[%s2846] sm:$0xff]
  %2848 = vrot.lane.b32.xlu0 %v2847, 59
  %v2849 = vpop.permute.xlu0 %2848
  %vm2850 = vcmask 7168
  %s2851 = scalar_lea.vmem %s1, 197
  %2852 = vst.msk [vmem:[%s2851] sm:$0x1] %vm2850, %v2849
  %s2853 = scalar_lea.vmem %s1, 452
  %2854 = vst.msk [vmem:[%s2853] sm:$0x2] %vm2850, %v2849
  %s2855 = scalar_lea.vmem %s1, 707
  %2856 = vst.msk [vmem:[%s2855] sm:$0x4] %vm2850, %v2849
  %s2857 = scalar_lea.vmem %s1, 962
  %2858 = vst.msk [vmem:[%s2857] sm:$0x8] %vm2850, %v2849
  %s2859 = scalar_lea.vmem %s1, 1217
  %2860 = vst.msk [vmem:[%s2859] sm:$0x10] %vm2850, %v2849
  %s2861 = scalar_lea.vmem %s1, 1472
  %2862 = vst.msk [vmem:[%s2861] sm:$0x20] %vm2850, %v2849
  %s2863 = scalar_lea.vmem %s1, 1727
  %2864 = vst.msk [vmem:[%s2863] sm:$0x40] %vm2850, %v2849
  %s2865 = scalar_lea.vmem %s1, 1982
  %2866 = vst.msk [vmem:[%s2865] sm:$0x80] %vm2850, %v2849
  %v2867 = vld [vmem:[%s0] sm:$0xff]
  %2868 = vrot.lane.b32.xlu0 %v2867, 58
  %v2869 = vpop.permute.xlu0 %2868
  %vm2870 = vcmask 7168
  %s2871 = scalar_lea.vmem %s1, 70
  %2872 = vst.msk [vmem:[%s2871] sm:$0x1] %vm2870, %v2869
  %s2873 = scalar_lea.vmem %s1, 325
  %2874 = vst.msk [vmem:[%s2873] sm:$0x2] %vm2870, %v2869
  %s2875 = scalar_lea.vmem %s1, 580
  %2876 = vst.msk [vmem:[%s2875] sm:$0x4] %vm2870, %v2869
  %s2877 = scalar_lea.vmem %s1, 835
  %2878 = vst.msk [vmem:[%s2877] sm:$0x8] %vm2870, %v2869
  %s2879 = scalar_lea.vmem %s1, 1090
  %2880 = vst.msk [vmem:[%s2879] sm:$0x10] %vm2870, %v2869
  %s2881 = scalar_lea.vmem %s1, 1345
  %2882 = vst.msk [vmem:[%s2881] sm:$0x20] %vm2870, %v2869
  %s2883 = scalar_lea.vmem %s1, 1600
  %2884 = vst.msk [vmem:[%s2883] sm:$0x40] %vm2870, %v2869
  %s2885 = scalar_lea.vmem %s1, 1855
  %2886 = vst.msk [vmem:[%s2885] sm:$0x80] %vm2870, %v2869
  %s2887 = scalar_lea.vmem %s0, 8
  %v2888 = vld [vmem:[%s2887] sm:$0xff]
  %2889 = vrot.lane.b32.xlu0 %v2888, 58
  %v2890 = vpop.permute.xlu0 %2889
  %vm2891 = vcmask 7168
  %s2892 = scalar_lea.vmem %s1, 198
  %2893 = vst.msk [vmem:[%s2892] sm:$0x1] %vm2891, %v2890
  %s2894 = scalar_lea.vmem %s1, 453
  %2895 = vst.msk [vmem:[%s2894] sm:$0x2] %vm2891, %v2890
  %s2896 = scalar_lea.vmem %s1, 708
  %2897 = vst.msk [vmem:[%s2896] sm:$0x4] %vm2891, %v2890
  %s2898 = scalar_lea.vmem %s1, 963
  %2899 = vst.msk [vmem:[%s2898] sm:$0x8] %vm2891, %v2890
  %s2900 = scalar_lea.vmem %s1, 1218
  %2901 = vst.msk [vmem:[%s2900] sm:$0x10] %vm2891, %v2890
  %s2902 = scalar_lea.vmem %s1, 1473
  %2903 = vst.msk [vmem:[%s2902] sm:$0x20] %vm2891, %v2890
  %s2904 = scalar_lea.vmem %s1, 1728
  %2905 = vst.msk [vmem:[%s2904] sm:$0x40] %vm2891, %v2890
  %s2906 = scalar_lea.vmem %s1, 1983
  %2907 = vst.msk [vmem:[%s2906] sm:$0x80] %vm2891, %v2890
  %v2908 = vld [vmem:[%s0] sm:$0xff]
  %2909 = vrot.lane.b32.xlu0 %v2908, 57
  %v2910 = vpop.permute.xlu0 %2909
  %vm2911 = vcmask 7168
  %s2912 = scalar_lea.vmem %s1, 71
  %2913 = vst.msk [vmem:[%s2912] sm:$0x1] %vm2911, %v2910
  %s2914 = scalar_lea.vmem %s1, 326
  %2915 = vst.msk [vmem:[%s2914] sm:$0x2] %vm2911, %v2910
  %s2916 = scalar_lea.vmem %s1, 581
  %2917 = vst.msk [vmem:[%s2916] sm:$0x4] %vm2911, %v2910
  %s2918 = scalar_lea.vmem %s1, 836
  %2919 = vst.msk [vmem:[%s2918] sm:$0x8] %vm2911, %v2910
  %s2920 = scalar_lea.vmem %s1, 1091
  %2921 = vst.msk [vmem:[%s2920] sm:$0x10] %vm2911, %v2910
  %s2922 = scalar_lea.vmem %s1, 1346
  %2923 = vst.msk [vmem:[%s2922] sm:$0x20] %vm2911, %v2910
  %s2924 = scalar_lea.vmem %s1, 1601
  %2925 = vst.msk [vmem:[%s2924] sm:$0x40] %vm2911, %v2910
  %s2926 = scalar_lea.vmem %s1, 1856
  %2927 = vst.msk [vmem:[%s2926] sm:$0x80] %vm2911, %v2910
  %s2928 = scalar_lea.vmem %s0, 8
  %v2929 = vld [vmem:[%s2928] sm:$0xff]
  %2930 = vrot.lane.b32.xlu0 %v2929, 57
  %v2931 = vpop.permute.xlu0 %2930
  %vm2932 = vcmask 7168
  %s2933 = scalar_lea.vmem %s1, 199
  %2934 = vst.msk [vmem:[%s2933] sm:$0x1] %vm2932, %v2931
  %s2935 = scalar_lea.vmem %s1, 454
  %2936 = vst.msk [vmem:[%s2935] sm:$0x2] %vm2932, %v2931
  %s2937 = scalar_lea.vmem %s1, 709
  %2938 = vst.msk [vmem:[%s2937] sm:$0x4] %vm2932, %v2931
  %s2939 = scalar_lea.vmem %s1, 964
  %2940 = vst.msk [vmem:[%s2939] sm:$0x8] %vm2932, %v2931
  %s2941 = scalar_lea.vmem %s1, 1219
  %2942 = vst.msk [vmem:[%s2941] sm:$0x10] %vm2932, %v2931
  %s2943 = scalar_lea.vmem %s1, 1474
  %2944 = vst.msk [vmem:[%s2943] sm:$0x20] %vm2932, %v2931
  %s2945 = scalar_lea.vmem %s1, 1729
  %2946 = vst.msk [vmem:[%s2945] sm:$0x40] %vm2932, %v2931
  %s2947 = scalar_lea.vmem %s1, 1984
  %2948 = vst.msk [vmem:[%s2947] sm:$0x80] %vm2932, %v2931
  %v2949 = vld [vmem:[%s0] sm:$0xff]
  %2950 = vrot.lane.b32.xlu0 %v2949, 56
  %v2951 = vpop.permute.xlu0 %2950
  %vm2952 = vcmask 7168
  %s2953 = scalar_lea.vmem %s1, 72
  %2954 = vst.msk [vmem:[%s2953] sm:$0x1] %vm2952, %v2951
  %s2955 = scalar_lea.vmem %s1, 327
  %2956 = vst.msk [vmem:[%s2955] sm:$0x2] %vm2952, %v2951
  %s2957 = scalar_lea.vmem %s1, 582
  %2958 = vst.msk [vmem:[%s2957] sm:$0x4] %vm2952, %v2951
  %s2959 = scalar_lea.vmem %s1, 837
  %2960 = vst.msk [vmem:[%s2959] sm:$0x8] %vm2952, %v2951
  %s2961 = scalar_lea.vmem %s1, 1092
  %2962 = vst.msk [vmem:[%s2961] sm:$0x10] %vm2952, %v2951
  %s2963 = scalar_lea.vmem %s1, 1347
  %2964 = vst.msk [vmem:[%s2963] sm:$0x20] %vm2952, %v2951
  %s2965 = scalar_lea.vmem %s1, 1602
  %2966 = vst.msk [vmem:[%s2965] sm:$0x40] %vm2952, %v2951
  %s2967 = scalar_lea.vmem %s1, 1857
  %2968 = vst.msk [vmem:[%s2967] sm:$0x80] %vm2952, %v2951
  %s2969 = scalar_lea.vmem %s0, 8
  %v2970 = vld [vmem:[%s2969] sm:$0xff]
  %2971 = vrot.lane.b32.xlu0 %v2970, 56
  %v2972 = vpop.permute.xlu0 %2971
  %vm2973 = vcmask 7168
  %s2974 = scalar_lea.vmem %s1, 200
  %2975 = vst.msk [vmem:[%s2974] sm:$0x1] %vm2973, %v2972
  %s2976 = scalar_lea.vmem %s1, 455
  %2977 = vst.msk [vmem:[%s2976] sm:$0x2] %vm2973, %v2972
  %s2978 = scalar_lea.vmem %s1, 710
  %2979 = vst.msk [vmem:[%s2978] sm:$0x4] %vm2973, %v2972
  %s2980 = scalar_lea.vmem %s1, 965
  %2981 = vst.msk [vmem:[%s2980] sm:$0x8] %vm2973, %v2972
  %s2982 = scalar_lea.vmem %s1, 1220
  %2983 = vst.msk [vmem:[%s2982] sm:$0x10] %vm2973, %v2972
  %s2984 = scalar_lea.vmem %s1, 1475
  %2985 = vst.msk [vmem:[%s2984] sm:$0x20] %vm2973, %v2972
  %s2986 = scalar_lea.vmem %s1, 1730
  %2987 = vst.msk [vmem:[%s2986] sm:$0x40] %vm2973, %v2972
  %s2988 = scalar_lea.vmem %s1, 1985
  %2989 = vst.msk [vmem:[%s2988] sm:$0x80] %vm2973, %v2972
  %v2990 = vld [vmem:[%s0] sm:$0xff]
  %2991 = vrot.lane.b32.xlu0 %v2990, 55
  %v2992 = vpop.permute.xlu0 %2991
  %vm2993 = vcmask 7168
  %s2994 = scalar_lea.vmem %s1, 73
  %2995 = vst.msk [vmem:[%s2994] sm:$0x1] %vm2993, %v2992
  %s2996 = scalar_lea.vmem %s1, 328
  %2997 = vst.msk [vmem:[%s2996] sm:$0x2] %vm2993, %v2992
  %s2998 = scalar_lea.vmem %s1, 583
  %2999 = vst.msk [vmem:[%s2998] sm:$0x4] %vm2993, %v2992
  %s3000 = scalar_lea.vmem %s1, 838
  %3001 = vst.msk [vmem:[%s3000] sm:$0x8] %vm2993, %v2992
  %s3002 = scalar_lea.vmem %s1, 1093
  %3003 = vst.msk [vmem:[%s3002] sm:$0x10] %vm2993, %v2992
  %s3004 = scalar_lea.vmem %s1, 1348
  %3005 = vst.msk [vmem:[%s3004] sm:$0x20] %vm2993, %v2992
  %s3006 = scalar_lea.vmem %s1, 1603
  %3007 = vst.msk [vmem:[%s3006] sm:$0x40] %vm2993, %v2992
  %s3008 = scalar_lea.vmem %s1, 1858
  %3009 = vst.msk [vmem:[%s3008] sm:$0x80] %vm2993, %v2992
  %s3010 = scalar_lea.vmem %s0, 8
  %v3011 = vld [vmem:[%s3010] sm:$0xff]
  %3012 = vrot.lane.b32.xlu0 %v3011, 55
  %v3013 = vpop.permute.xlu0 %3012
  %vm3014 = vcmask 7168
  %s3015 = scalar_lea.vmem %s1, 201
  %3016 = vst.msk [vmem:[%s3015] sm:$0x1] %vm3014, %v3013
  %s3017 = scalar_lea.vmem %s1, 456
  %3018 = vst.msk [vmem:[%s3017] sm:$0x2] %vm3014, %v3013
  %s3019 = scalar_lea.vmem %s1, 711
  %3020 = vst.msk [vmem:[%s3019] sm:$0x4] %vm3014, %v3013
  %s3021 = scalar_lea.vmem %s1, 966
  %3022 = vst.msk [vmem:[%s3021] sm:$0x8] %vm3014, %v3013
  %s3023 = scalar_lea.vmem %s1, 1221
  %3024 = vst.msk [vmem:[%s3023] sm:$0x10] %vm3014, %v3013
  %s3025 = scalar_lea.vmem %s1, 1476
  %3026 = vst.msk [vmem:[%s3025] sm:$0x20] %vm3014, %v3013
  %s3027 = scalar_lea.vmem %s1, 1731
  %3028 = vst.msk [vmem:[%s3027] sm:$0x40] %vm3014, %v3013
  %s3029 = scalar_lea.vmem %s1, 1986
  %3030 = vst.msk [vmem:[%s3029] sm:$0x80] %vm3014, %v3013
  %v3031 = vld [vmem:[%s0] sm:$0xff]
  %3032 = vrot.lane.b32.xlu0 %v3031, 54
  %v3033 = vpop.permute.xlu0 %3032
  %vm3034 = vcmask 7168
  %s3035 = scalar_lea.vmem %s1, 74
  %3036 = vst.msk [vmem:[%s3035] sm:$0x1] %vm3034, %v3033
  %s3037 = scalar_lea.vmem %s1, 329
  %3038 = vst.msk [vmem:[%s3037] sm:$0x2] %vm3034, %v3033
  %s3039 = scalar_lea.vmem %s1, 584
  %3040 = vst.msk [vmem:[%s3039] sm:$0x4] %vm3034, %v3033
  %s3041 = scalar_lea.vmem %s1, 839
  %3042 = vst.msk [vmem:[%s3041] sm:$0x8] %vm3034, %v3033
  %s3043 = scalar_lea.vmem %s1, 1094
  %3044 = vst.msk [vmem:[%s3043] sm:$0x10] %vm3034, %v3033
  %s3045 = scalar_lea.vmem %s1, 1349
  %3046 = vst.msk [vmem:[%s3045] sm:$0x20] %vm3034, %v3033
  %s3047 = scalar_lea.vmem %s1, 1604
  %3048 = vst.msk [vmem:[%s3047] sm:$0x40] %vm3034, %v3033
  %s3049 = scalar_lea.vmem %s1, 1859
  %3050 = vst.msk [vmem:[%s3049] sm:$0x80] %vm3034, %v3033
  %s3051 = scalar_lea.vmem %s0, 8
  %v3052 = vld [vmem:[%s3051] sm:$0xff]
  %3053 = vrot.lane.b32.xlu0 %v3052, 54
  %v3054 = vpop.permute.xlu0 %3053
  %vm3055 = vcmask 7168
  %s3056 = scalar_lea.vmem %s1, 202
  %3057 = vst.msk [vmem:[%s3056] sm:$0x1] %vm3055, %v3054
  %s3058 = scalar_lea.vmem %s1, 457
  %3059 = vst.msk [vmem:[%s3058] sm:$0x2] %vm3055, %v3054
  %s3060 = scalar_lea.vmem %s1, 712
  %3061 = vst.msk [vmem:[%s3060] sm:$0x4] %vm3055, %v3054
  %s3062 = scalar_lea.vmem %s1, 967
  %3063 = vst.msk [vmem:[%s3062] sm:$0x8] %vm3055, %v3054
  %s3064 = scalar_lea.vmem %s1, 1222
  %3065 = vst.msk [vmem:[%s3064] sm:$0x10] %vm3055, %v3054
  %s3066 = scalar_lea.vmem %s1, 1477
  %3067 = vst.msk [vmem:[%s3066] sm:$0x20] %vm3055, %v3054
  %s3068 = scalar_lea.vmem %s1, 1732
  %3069 = vst.msk [vmem:[%s3068] sm:$0x40] %vm3055, %v3054
  %s3070 = scalar_lea.vmem %s1, 1987
  %3071 = vst.msk [vmem:[%s3070] sm:$0x80] %vm3055, %v3054
  %v3072 = vld [vmem:[%s0] sm:$0xff]
  %3073 = vrot.lane.b32.xlu0 %v3072, 53
  %v3074 = vpop.permute.xlu0 %3073
  %vm3075 = vcmask 7168
  %s3076 = scalar_lea.vmem %s1, 75
  %3077 = vst.msk [vmem:[%s3076] sm:$0x1] %vm3075, %v3074
  %s3078 = scalar_lea.vmem %s1, 330
  %3079 = vst.msk [vmem:[%s3078] sm:$0x2] %vm3075, %v3074
  %s3080 = scalar_lea.vmem %s1, 585
  %3081 = vst.msk [vmem:[%s3080] sm:$0x4] %vm3075, %v3074
  %s3082 = scalar_lea.vmem %s1, 840
  %3083 = vst.msk [vmem:[%s3082] sm:$0x8] %vm3075, %v3074
  %s3084 = scalar_lea.vmem %s1, 1095
  %3085 = vst.msk [vmem:[%s3084] sm:$0x10] %vm3075, %v3074
  %s3086 = scalar_lea.vmem %s1, 1350
  %3087 = vst.msk [vmem:[%s3086] sm:$0x20] %vm3075, %v3074
  %s3088 = scalar_lea.vmem %s1, 1605
  %3089 = vst.msk [vmem:[%s3088] sm:$0x40] %vm3075, %v3074
  %s3090 = scalar_lea.vmem %s1, 1860
  %3091 = vst.msk [vmem:[%s3090] sm:$0x80] %vm3075, %v3074
  %s3092 = scalar_lea.vmem %s0, 8
  %v3093 = vld [vmem:[%s3092] sm:$0xff]
  %3094 = vrot.lane.b32.xlu0 %v3093, 53
  %v3095 = vpop.permute.xlu0 %3094
  %vm3096 = vcmask 7168
  %s3097 = scalar_lea.vmem %s1, 203
  %3098 = vst.msk [vmem:[%s3097] sm:$0x1] %vm3096, %v3095
  %s3099 = scalar_lea.vmem %s1, 458
  %3100 = vst.msk [vmem:[%s3099] sm:$0x2] %vm3096, %v3095
  %s3101 = scalar_lea.vmem %s1, 713
  %3102 = vst.msk [vmem:[%s3101] sm:$0x4] %vm3096, %v3095
  %s3103 = scalar_lea.vmem %s1, 968
  %3104 = vst.msk [vmem:[%s3103] sm:$0x8] %vm3096, %v3095
  %s3105 = scalar_lea.vmem %s1, 1223
  %3106 = vst.msk [vmem:[%s3105] sm:$0x10] %vm3096, %v3095
  %s3107 = scalar_lea.vmem %s1, 1478
  %3108 = vst.msk [vmem:[%s3107] sm:$0x20] %vm3096, %v3095
  %s3109 = scalar_lea.vmem %s1, 1733
  %3110 = vst.msk [vmem:[%s3109] sm:$0x40] %vm3096, %v3095
  %s3111 = scalar_lea.vmem %s1, 1988
  %3112 = vst.msk [vmem:[%s3111] sm:$0x80] %vm3096, %v3095
  %v3113 = vld [vmem:[%s0] sm:$0xff]
  %3114 = vrot.lane.b32.xlu0 %v3113, 52
  %v3115 = vpop.permute.xlu0 %3114
  %vm3116 = vcmask 7168
  %s3117 = scalar_lea.vmem %s1, 76
  %3118 = vst.msk [vmem:[%s3117] sm:$0x1] %vm3116, %v3115
  %s3119 = scalar_lea.vmem %s1, 331
  %3120 = vst.msk [vmem:[%s3119] sm:$0x2] %vm3116, %v3115
  %s3121 = scalar_lea.vmem %s1, 586
  %3122 = vst.msk [vmem:[%s3121] sm:$0x4] %vm3116, %v3115
  %s3123 = scalar_lea.vmem %s1, 841
  %3124 = vst.msk [vmem:[%s3123] sm:$0x8] %vm3116, %v3115
  %s3125 = scalar_lea.vmem %s1, 1096
  %3126 = vst.msk [vmem:[%s3125] sm:$0x10] %vm3116, %v3115
  %s3127 = scalar_lea.vmem %s1, 1351
  %3128 = vst.msk [vmem:[%s3127] sm:$0x20] %vm3116, %v3115
  %s3129 = scalar_lea.vmem %s1, 1606
  %3130 = vst.msk [vmem:[%s3129] sm:$0x40] %vm3116, %v3115
  %s3131 = scalar_lea.vmem %s1, 1861
  %3132 = vst.msk [vmem:[%s3131] sm:$0x80] %vm3116, %v3115
  %s3133 = scalar_lea.vmem %s0, 8
  %v3134 = vld [vmem:[%s3133] sm:$0xff]
  %3135 = vrot.lane.b32.xlu0 %v3134, 52
  %v3136 = vpop.permute.xlu0 %3135
  %vm3137 = vcmask 7168
  %s3138 = scalar_lea.vmem %s1, 204
  %3139 = vst.msk [vmem:[%s3138] sm:$0x1] %vm3137, %v3136
  %s3140 = scalar_lea.vmem %s1, 459
  %3141 = vst.msk [vmem:[%s3140] sm:$0x2] %vm3137, %v3136
  %s3142 = scalar_lea.vmem %s1, 714
  %3143 = vst.msk [vmem:[%s3142] sm:$0x4] %vm3137, %v3136
  %s3144 = scalar_lea.vmem %s1, 969
  %3145 = vst.msk [vmem:[%s3144] sm:$0x8] %vm3137, %v3136
  %s3146 = scalar_lea.vmem %s1, 1224
  %3147 = vst.msk [vmem:[%s3146] sm:$0x10] %vm3137, %v3136
  %s3148 = scalar_lea.vmem %s1, 1479
  %3149 = vst.msk [vmem:[%s3148] sm:$0x20] %vm3137, %v3136
  %s3150 = scalar_lea.vmem %s1, 1734
  %3151 = vst.msk [vmem:[%s3150] sm:$0x40] %vm3137, %v3136
  %s3152 = scalar_lea.vmem %s1, 1989
  %3153 = vst.msk [vmem:[%s3152] sm:$0x80] %vm3137, %v3136
  %v3154 = vld [vmem:[%s0] sm:$0xff]
  %3155 = vrot.lane.b32.xlu0 %v3154, 51
  %v3156 = vpop.permute.xlu0 %3155
  %vm3157 = vcmask 7168
  %s3158 = scalar_lea.vmem %s1, 77
  %3159 = vst.msk [vmem:[%s3158] sm:$0x1] %vm3157, %v3156
  %s3160 = scalar_lea.vmem %s1, 332
  %3161 = vst.msk [vmem:[%s3160] sm:$0x2] %vm3157, %v3156
  %s3162 = scalar_lea.vmem %s1, 587
  %3163 = vst.msk [vmem:[%s3162] sm:$0x4] %vm3157, %v3156
  %s3164 = scalar_lea.vmem %s1, 842
  %3165 = vst.msk [vmem:[%s3164] sm:$0x8] %vm3157, %v3156
  %s3166 = scalar_lea.vmem %s1, 1097
  %3167 = vst.msk [vmem:[%s3166] sm:$0x10] %vm3157, %v3156
  %s3168 = scalar_lea.vmem %s1, 1352
  %3169 = vst.msk [vmem:[%s3168] sm:$0x20] %vm3157, %v3156
  %s3170 = scalar_lea.vmem %s1, 1607
  %3171 = vst.msk [vmem:[%s3170] sm:$0x40] %vm3157, %v3156
  %s3172 = scalar_lea.vmem %s1, 1862
  %3173 = vst.msk [vmem:[%s3172] sm:$0x80] %vm3157, %v3156
  %s3174 = scalar_lea.vmem %s0, 8
  %v3175 = vld [vmem:[%s3174] sm:$0xff]
  %3176 = vrot.lane.b32.xlu0 %v3175, 51
  %v3177 = vpop.permute.xlu0 %3176
  %vm3178 = vcmask 7168
  %s3179 = scalar_lea.vmem %s1, 205
  %3180 = vst.msk [vmem:[%s3179] sm:$0x1] %vm3178, %v3177
  %s3181 = scalar_lea.vmem %s1, 460
  %3182 = vst.msk [vmem:[%s3181] sm:$0x2] %vm3178, %v3177
  %s3183 = scalar_lea.vmem %s1, 715
  %3184 = vst.msk [vmem:[%s3183] sm:$0x4] %vm3178, %v3177
  %s3185 = scalar_lea.vmem %s1, 970
  %3186 = vst.msk [vmem:[%s3185] sm:$0x8] %vm3178, %v3177
  %s3187 = scalar_lea.vmem %s1, 1225
  %3188 = vst.msk [vmem:[%s3187] sm:$0x10] %vm3178, %v3177
  %s3189 = scalar_lea.vmem %s1, 1480
  %3190 = vst.msk [vmem:[%s3189] sm:$0x20] %vm3178, %v3177
  %s3191 = scalar_lea.vmem %s1, 1735
  %3192 = vst.msk [vmem:[%s3191] sm:$0x40] %vm3178, %v3177
  %s3193 = scalar_lea.vmem %s1, 1990
  %3194 = vst.msk [vmem:[%s3193] sm:$0x80] %vm3178, %v3177
  %v3195 = vld [vmem:[%s0] sm:$0xff]
  %3196 = vrot.lane.b32.xlu0 %v3195, 50
  %v3197 = vpop.permute.xlu0 %3196
  %vm3198 = vcmask 7168
  %s3199 = scalar_lea.vmem %s1, 78
  %3200 = vst.msk [vmem:[%s3199] sm:$0x1] %vm3198, %v3197
  %s3201 = scalar_lea.vmem %s1, 333
  %3202 = vst.msk [vmem:[%s3201] sm:$0x2] %vm3198, %v3197
  %s3203 = scalar_lea.vmem %s1, 588
  %3204 = vst.msk [vmem:[%s3203] sm:$0x4] %vm3198, %v3197
  %s3205 = scalar_lea.vmem %s1, 843
  %3206 = vst.msk [vmem:[%s3205] sm:$0x8] %vm3198, %v3197
  %s3207 = scalar_lea.vmem %s1, 1098
  %3208 = vst.msk [vmem:[%s3207] sm:$0x10] %vm3198, %v3197
  %s3209 = scalar_lea.vmem %s1, 1353
  %3210 = vst.msk [vmem:[%s3209] sm:$0x20] %vm3198, %v3197
  %s3211 = scalar_lea.vmem %s1, 1608
  %3212 = vst.msk [vmem:[%s3211] sm:$0x40] %vm3198, %v3197
  %s3213 = scalar_lea.vmem %s1, 1863
  %3214 = vst.msk [vmem:[%s3213] sm:$0x80] %vm3198, %v3197
  %s3215 = scalar_lea.vmem %s0, 8
  %v3216 = vld [vmem:[%s3215] sm:$0xff]
  %3217 = vrot.lane.b32.xlu0 %v3216, 50
  %v3218 = vpop.permute.xlu0 %3217
  %vm3219 = vcmask 7168
  %s3220 = scalar_lea.vmem %s1, 206
  %3221 = vst.msk [vmem:[%s3220] sm:$0x1] %vm3219, %v3218
  %s3222 = scalar_lea.vmem %s1, 461
  %3223 = vst.msk [vmem:[%s3222] sm:$0x2] %vm3219, %v3218
  %s3224 = scalar_lea.vmem %s1, 716
  %3225 = vst.msk [vmem:[%s3224] sm:$0x4] %vm3219, %v3218
  %s3226 = scalar_lea.vmem %s1, 971
  %3227 = vst.msk [vmem:[%s3226] sm:$0x8] %vm3219, %v3218
  %s3228 = scalar_lea.vmem %s1, 1226
  %3229 = vst.msk [vmem:[%s3228] sm:$0x10] %vm3219, %v3218
  %s3230 = scalar_lea.vmem %s1, 1481
  %3231 = vst.msk [vmem:[%s3230] sm:$0x20] %vm3219, %v3218
  %s3232 = scalar_lea.vmem %s1, 1736
  %3233 = vst.msk [vmem:[%s3232] sm:$0x40] %vm3219, %v3218
  %s3234 = scalar_lea.vmem %s1, 1991
  %3235 = vst.msk [vmem:[%s3234] sm:$0x80] %vm3219, %v3218
  %v3236 = vld [vmem:[%s0] sm:$0xff]
  %3237 = vrot.lane.b32.xlu0 %v3236, 49
  %v3238 = vpop.permute.xlu0 %3237
  %vm3239 = vcmask 7168
  %s3240 = scalar_lea.vmem %s1, 79
  %3241 = vst.msk [vmem:[%s3240] sm:$0x1] %vm3239, %v3238
  %s3242 = scalar_lea.vmem %s1, 334
  %3243 = vst.msk [vmem:[%s3242] sm:$0x2] %vm3239, %v3238
  %s3244 = scalar_lea.vmem %s1, 589
  %3245 = vst.msk [vmem:[%s3244] sm:$0x4] %vm3239, %v3238
  %s3246 = scalar_lea.vmem %s1, 844
  %3247 = vst.msk [vmem:[%s3246] sm:$0x8] %vm3239, %v3238
  %s3248 = scalar_lea.vmem %s1, 1099
  %3249 = vst.msk [vmem:[%s3248] sm:$0x10] %vm3239, %v3238
  %s3250 = scalar_lea.vmem %s1, 1354
  %3251 = vst.msk [vmem:[%s3250] sm:$0x20] %vm3239, %v3238
  %s3252 = scalar_lea.vmem %s1, 1609
  %3253 = vst.msk [vmem:[%s3252] sm:$0x40] %vm3239, %v3238
  %s3254 = scalar_lea.vmem %s1, 1864
  %3255 = vst.msk [vmem:[%s3254] sm:$0x80] %vm3239, %v3238
  %s3256 = scalar_lea.vmem %s0, 8
  %v3257 = vld [vmem:[%s3256] sm:$0xff]
  %3258 = vrot.lane.b32.xlu0 %v3257, 49
  %v3259 = vpop.permute.xlu0 %3258
  %vm3260 = vcmask 7168
  %s3261 = scalar_lea.vmem %s1, 207
  %3262 = vst.msk [vmem:[%s3261] sm:$0x1] %vm3260, %v3259
  %s3263 = scalar_lea.vmem %s1, 462
  %3264 = vst.msk [vmem:[%s3263] sm:$0x2] %vm3260, %v3259
  %s3265 = scalar_lea.vmem %s1, 717
  %3266 = vst.msk [vmem:[%s3265] sm:$0x4] %vm3260, %v3259
  %s3267 = scalar_lea.vmem %s1, 972
  %3268 = vst.msk [vmem:[%s3267] sm:$0x8] %vm3260, %v3259
  %s3269 = scalar_lea.vmem %s1, 1227
  %3270 = vst.msk [vmem:[%s3269] sm:$0x10] %vm3260, %v3259
  %s3271 = scalar_lea.vmem %s1, 1482
  %3272 = vst.msk [vmem:[%s3271] sm:$0x20] %vm3260, %v3259
  %s3273 = scalar_lea.vmem %s1, 1737
  %3274 = vst.msk [vmem:[%s3273] sm:$0x40] %vm3260, %v3259
  %s3275 = scalar_lea.vmem %s1, 1992
  %3276 = vst.msk [vmem:[%s3275] sm:$0x80] %vm3260, %v3259
  %v3277 = vld [vmem:[%s0] sm:$0xff]
  %3278 = vrot.lane.b32.xlu0 %v3277, 48
  %v3279 = vpop.permute.xlu0 %3278
  %vm3280 = vcmask 7168
  %s3281 = scalar_lea.vmem %s1, 80
  %3282 = vst.msk [vmem:[%s3281] sm:$0x1] %vm3280, %v3279
  %s3283 = scalar_lea.vmem %s1, 335
  %3284 = vst.msk [vmem:[%s3283] sm:$0x2] %vm3280, %v3279
  %s3285 = scalar_lea.vmem %s1, 590
  %3286 = vst.msk [vmem:[%s3285] sm:$0x4] %vm3280, %v3279
  %s3287 = scalar_lea.vmem %s1, 845
  %3288 = vst.msk [vmem:[%s3287] sm:$0x8] %vm3280, %v3279
  %s3289 = scalar_lea.vmem %s1, 1100
  %3290 = vst.msk [vmem:[%s3289] sm:$0x10] %vm3280, %v3279
  %s3291 = scalar_lea.vmem %s1, 1355
  %3292 = vst.msk [vmem:[%s3291] sm:$0x20] %vm3280, %v3279
  %s3293 = scalar_lea.vmem %s1, 1610
  %3294 = vst.msk [vmem:[%s3293] sm:$0x40] %vm3280, %v3279
  %s3295 = scalar_lea.vmem %s1, 1865
  %3296 = vst.msk [vmem:[%s3295] sm:$0x80] %vm3280, %v3279
  %s3297 = scalar_lea.vmem %s0, 8
  %v3298 = vld [vmem:[%s3297] sm:$0xff]
  %3299 = vrot.lane.b32.xlu0 %v3298, 48
  %v3300 = vpop.permute.xlu0 %3299
  %vm3301 = vcmask 7168
  %s3302 = scalar_lea.vmem %s1, 208
  %3303 = vst.msk [vmem:[%s3302] sm:$0x1] %vm3301, %v3300
  %s3304 = scalar_lea.vmem %s1, 463
  %3305 = vst.msk [vmem:[%s3304] sm:$0x2] %vm3301, %v3300
  %s3306 = scalar_lea.vmem %s1, 718
  %3307 = vst.msk [vmem:[%s3306] sm:$0x4] %vm3301, %v3300
  %s3308 = scalar_lea.vmem %s1, 973
  %3309 = vst.msk [vmem:[%s3308] sm:$0x8] %vm3301, %v3300
  %s3310 = scalar_lea.vmem %s1, 1228
  %3311 = vst.msk [vmem:[%s3310] sm:$0x10] %vm3301, %v3300
  %s3312 = scalar_lea.vmem %s1, 1483
  %3313 = vst.msk [vmem:[%s3312] sm:$0x20] %vm3301, %v3300
  %s3314 = scalar_lea.vmem %s1, 1738
  %3315 = vst.msk [vmem:[%s3314] sm:$0x40] %vm3301, %v3300
  %s3316 = scalar_lea.vmem %s1, 1993
  %3317 = vst.msk [vmem:[%s3316] sm:$0x80] %vm3301, %v3300
  %v3318 = vld [vmem:[%s0] sm:$0xff]
  %3319 = vrot.lane.b32.xlu0 %v3318, 47
  %v3320 = vpop.permute.xlu0 %3319
  %vm3321 = vcmask 7168
  %s3322 = scalar_lea.vmem %s1, 81
  %3323 = vst.msk [vmem:[%s3322] sm:$0x1] %vm3321, %v3320
  %s3324 = scalar_lea.vmem %s1, 336
  %3325 = vst.msk [vmem:[%s3324] sm:$0x2] %vm3321, %v3320
  %s3326 = scalar_lea.vmem %s1, 591
  %3327 = vst.msk [vmem:[%s3326] sm:$0x4] %vm3321, %v3320
  %s3328 = scalar_lea.vmem %s1, 846
  %3329 = vst.msk [vmem:[%s3328] sm:$0x8] %vm3321, %v3320
  %s3330 = scalar_lea.vmem %s1, 1101
  %3331 = vst.msk [vmem:[%s3330] sm:$0x10] %vm3321, %v3320
  %s3332 = scalar_lea.vmem %s1, 1356
  %3333 = vst.msk [vmem:[%s3332] sm:$0x20] %vm3321, %v3320
  %s3334 = scalar_lea.vmem %s1, 1611
  %3335 = vst.msk [vmem:[%s3334] sm:$0x40] %vm3321, %v3320
  %s3336 = scalar_lea.vmem %s1, 1866
  %3337 = vst.msk [vmem:[%s3336] sm:$0x80] %vm3321, %v3320
  %s3338 = scalar_lea.vmem %s0, 8
  %v3339 = vld [vmem:[%s3338] sm:$0xff]
  %3340 = vrot.lane.b32.xlu0 %v3339, 47
  %v3341 = vpop.permute.xlu0 %3340
  %vm3342 = vcmask 7168
  %s3343 = scalar_lea.vmem %s1, 209
  %3344 = vst.msk [vmem:[%s3343] sm:$0x1] %vm3342, %v3341
  %s3345 = scalar_lea.vmem %s1, 464
  %3346 = vst.msk [vmem:[%s3345] sm:$0x2] %vm3342, %v3341
  %s3347 = scalar_lea.vmem %s1, 719
  %3348 = vst.msk [vmem:[%s3347] sm:$0x4] %vm3342, %v3341
  %s3349 = scalar_lea.vmem %s1, 974
  %3350 = vst.msk [vmem:[%s3349] sm:$0x8] %vm3342, %v3341
  %s3351 = scalar_lea.vmem %s1, 1229
  %3352 = vst.msk [vmem:[%s3351] sm:$0x10] %vm3342, %v3341
  %s3353 = scalar_lea.vmem %s1, 1484
  %3354 = vst.msk [vmem:[%s3353] sm:$0x20] %vm3342, %v3341
  %s3355 = scalar_lea.vmem %s1, 1739
  %3356 = vst.msk [vmem:[%s3355] sm:$0x40] %vm3342, %v3341
  %s3357 = scalar_lea.vmem %s1, 1994
  %3358 = vst.msk [vmem:[%s3357] sm:$0x80] %vm3342, %v3341
  %v3359 = vld [vmem:[%s0] sm:$0xff]
  %3360 = vrot.lane.b32.xlu0 %v3359, 46
  %v3361 = vpop.permute.xlu0 %3360
  %vm3362 = vcmask 7168
  %s3363 = scalar_lea.vmem %s1, 82
  %3364 = vst.msk [vmem:[%s3363] sm:$0x1] %vm3362, %v3361
  %s3365 = scalar_lea.vmem %s1, 337
  %3366 = vst.msk [vmem:[%s3365] sm:$0x2] %vm3362, %v3361
  %s3367 = scalar_lea.vmem %s1, 592
  %3368 = vst.msk [vmem:[%s3367] sm:$0x4] %vm3362, %v3361
  %s3369 = scalar_lea.vmem %s1, 847
  %3370 = vst.msk [vmem:[%s3369] sm:$0x8] %vm3362, %v3361
  %s3371 = scalar_lea.vmem %s1, 1102
  %3372 = vst.msk [vmem:[%s3371] sm:$0x10] %vm3362, %v3361
  %s3373 = scalar_lea.vmem %s1, 1357
  %3374 = vst.msk [vmem:[%s3373] sm:$0x20] %vm3362, %v3361
  %s3375 = scalar_lea.vmem %s1, 1612
  %3376 = vst.msk [vmem:[%s3375] sm:$0x40] %vm3362, %v3361
  %s3377 = scalar_lea.vmem %s1, 1867
  %3378 = vst.msk [vmem:[%s3377] sm:$0x80] %vm3362, %v3361
  %s3379 = scalar_lea.vmem %s0, 8
  %v3380 = vld [vmem:[%s3379] sm:$0xff]
  %3381 = vrot.lane.b32.xlu0 %v3380, 46
  %v3382 = vpop.permute.xlu0 %3381
  %vm3383 = vcmask 7168
  %s3384 = scalar_lea.vmem %s1, 210
  %3385 = vst.msk [vmem:[%s3384] sm:$0x1] %vm3383, %v3382
  %s3386 = scalar_lea.vmem %s1, 465
  %3387 = vst.msk [vmem:[%s3386] sm:$0x2] %vm3383, %v3382
  %s3388 = scalar_lea.vmem %s1, 720
  %3389 = vst.msk [vmem:[%s3388] sm:$0x4] %vm3383, %v3382
  %s3390 = scalar_lea.vmem %s1, 975
  %3391 = vst.msk [vmem:[%s3390] sm:$0x8] %vm3383, %v3382
  %s3392 = scalar_lea.vmem %s1, 1230
  %3393 = vst.msk [vmem:[%s3392] sm:$0x10] %vm3383, %v3382
  %s3394 = scalar_lea.vmem %s1, 1485
  %3395 = vst.msk [vmem:[%s3394] sm:$0x20] %vm3383, %v3382
  %s3396 = scalar_lea.vmem %s1, 1740
  %3397 = vst.msk [vmem:[%s3396] sm:$0x40] %vm3383, %v3382
  %s3398 = scalar_lea.vmem %s1, 1995
  %3399 = vst.msk [vmem:[%s3398] sm:$0x80] %vm3383, %v3382
  %v3400 = vld [vmem:[%s0] sm:$0xff]
  %3401 = vrot.lane.b32.xlu0 %v3400, 45
  %v3402 = vpop.permute.xlu0 %3401
  %vm3403 = vcmask 7168
  %s3404 = scalar_lea.vmem %s1, 83
  %3405 = vst.msk [vmem:[%s3404] sm:$0x1] %vm3403, %v3402
  %s3406 = scalar_lea.vmem %s1, 338
  %3407 = vst.msk [vmem:[%s3406] sm:$0x2] %vm3403, %v3402
  %s3408 = scalar_lea.vmem %s1, 593
  %3409 = vst.msk [vmem:[%s3408] sm:$0x4] %vm3403, %v3402
  %s3410 = scalar_lea.vmem %s1, 848
  %3411 = vst.msk [vmem:[%s3410] sm:$0x8] %vm3403, %v3402
  %s3412 = scalar_lea.vmem %s1, 1103
  %3413 = vst.msk [vmem:[%s3412] sm:$0x10] %vm3403, %v3402
  %s3414 = scalar_lea.vmem %s1, 1358
  %3415 = vst.msk [vmem:[%s3414] sm:$0x20] %vm3403, %v3402
  %s3416 = scalar_lea.vmem %s1, 1613
  %3417 = vst.msk [vmem:[%s3416] sm:$0x40] %vm3403, %v3402
  %s3418 = scalar_lea.vmem %s1, 1868
  %3419 = vst.msk [vmem:[%s3418] sm:$0x80] %vm3403, %v3402
  %s3420 = scalar_lea.vmem %s0, 8
  %v3421 = vld [vmem:[%s3420] sm:$0xff]
  %3422 = vrot.lane.b32.xlu0 %v3421, 45
  %v3423 = vpop.permute.xlu0 %3422
  %vm3424 = vcmask 7168
  %s3425 = scalar_lea.vmem %s1, 211
  %3426 = vst.msk [vmem:[%s3425] sm:$0x1] %vm3424, %v3423
  %s3427 = scalar_lea.vmem %s1, 466
  %3428 = vst.msk [vmem:[%s3427] sm:$0x2] %vm3424, %v3423
  %s3429 = scalar_lea.vmem %s1, 721
  %3430 = vst.msk [vmem:[%s3429] sm:$0x4] %vm3424, %v3423
  %s3431 = scalar_lea.vmem %s1, 976
  %3432 = vst.msk [vmem:[%s3431] sm:$0x8] %vm3424, %v3423
  %s3433 = scalar_lea.vmem %s1, 1231
  %3434 = vst.msk [vmem:[%s3433] sm:$0x10] %vm3424, %v3423
  %s3435 = scalar_lea.vmem %s1, 1486
  %3436 = vst.msk [vmem:[%s3435] sm:$0x20] %vm3424, %v3423
  %s3437 = scalar_lea.vmem %s1, 1741
  %3438 = vst.msk [vmem:[%s3437] sm:$0x40] %vm3424, %v3423
  %s3439 = scalar_lea.vmem %s1, 1996
  %3440 = vst.msk [vmem:[%s3439] sm:$0x80] %vm3424, %v3423
  %v3441 = vld [vmem:[%s0] sm:$0xff]
  %3442 = vrot.lane.b32.xlu0 %v3441, 44
  %v3443 = vpop.permute.xlu0 %3442
  %vm3444 = vcmask 7168
  %s3445 = scalar_lea.vmem %s1, 84
  %3446 = vst.msk [vmem:[%s3445] sm:$0x1] %vm3444, %v3443
  %s3447 = scalar_lea.vmem %s1, 339
  %3448 = vst.msk [vmem:[%s3447] sm:$0x2] %vm3444, %v3443
  %s3449 = scalar_lea.vmem %s1, 594
  %3450 = vst.msk [vmem:[%s3449] sm:$0x4] %vm3444, %v3443
  %s3451 = scalar_lea.vmem %s1, 849
  %3452 = vst.msk [vmem:[%s3451] sm:$0x8] %vm3444, %v3443
  %s3453 = scalar_lea.vmem %s1, 1104
  %3454 = vst.msk [vmem:[%s3453] sm:$0x10] %vm3444, %v3443
  %s3455 = scalar_lea.vmem %s1, 1359
  %3456 = vst.msk [vmem:[%s3455] sm:$0x20] %vm3444, %v3443
  %s3457 = scalar_lea.vmem %s1, 1614
  %3458 = vst.msk [vmem:[%s3457] sm:$0x40] %vm3444, %v3443
  %s3459 = scalar_lea.vmem %s1, 1869
  %3460 = vst.msk [vmem:[%s3459] sm:$0x80] %vm3444, %v3443
  %s3461 = scalar_lea.vmem %s0, 8
  %v3462 = vld [vmem:[%s3461] sm:$0xff]
  %3463 = vrot.lane.b32.xlu0 %v3462, 44
  %v3464 = vpop.permute.xlu0 %3463
  %vm3465 = vcmask 7168
  %s3466 = scalar_lea.vmem %s1, 212
  %3467 = vst.msk [vmem:[%s3466] sm:$0x1] %vm3465, %v3464
  %s3468 = scalar_lea.vmem %s1, 467
  %3469 = vst.msk [vmem:[%s3468] sm:$0x2] %vm3465, %v3464
  %s3470 = scalar_lea.vmem %s1, 722
  %3471 = vst.msk [vmem:[%s3470] sm:$0x4] %vm3465, %v3464
  %s3472 = scalar_lea.vmem %s1, 977
  %3473 = vst.msk [vmem:[%s3472] sm:$0x8] %vm3465, %v3464
  %s3474 = scalar_lea.vmem %s1, 1232
  %3475 = vst.msk [vmem:[%s3474] sm:$0x10] %vm3465, %v3464
  %s3476 = scalar_lea.vmem %s1, 1487
  %3477 = vst.msk [vmem:[%s3476] sm:$0x20] %vm3465, %v3464
  %s3478 = scalar_lea.vmem %s1, 1742
  %3479 = vst.msk [vmem:[%s3478] sm:$0x40] %vm3465, %v3464
  %s3480 = scalar_lea.vmem %s1, 1997
  %3481 = vst.msk [vmem:[%s3480] sm:$0x80] %vm3465, %v3464
  %v3482 = vld [vmem:[%s0] sm:$0xff]
  %3483 = vrot.lane.b32.xlu0 %v3482, 43
  %v3484 = vpop.permute.xlu0 %3483
  %vm3485 = vcmask 7168
  %s3486 = scalar_lea.vmem %s1, 85
  %3487 = vst.msk [vmem:[%s3486] sm:$0x1] %vm3485, %v3484
  %s3488 = scalar_lea.vmem %s1, 340
  %3489 = vst.msk [vmem:[%s3488] sm:$0x2] %vm3485, %v3484
  %s3490 = scalar_lea.vmem %s1, 595
  %3491 = vst.msk [vmem:[%s3490] sm:$0x4] %vm3485, %v3484
  %s3492 = scalar_lea.vmem %s1, 850
  %3493 = vst.msk [vmem:[%s3492] sm:$0x8] %vm3485, %v3484
  %s3494 = scalar_lea.vmem %s1, 1105
  %3495 = vst.msk [vmem:[%s3494] sm:$0x10] %vm3485, %v3484
  %s3496 = scalar_lea.vmem %s1, 1360
  %3497 = vst.msk [vmem:[%s3496] sm:$0x20] %vm3485, %v3484
  %s3498 = scalar_lea.vmem %s1, 1615
  %3499 = vst.msk [vmem:[%s3498] sm:$0x40] %vm3485, %v3484
  %s3500 = scalar_lea.vmem %s1, 1870
  %3501 = vst.msk [vmem:[%s3500] sm:$0x80] %vm3485, %v3484
  %s3502 = scalar_lea.vmem %s0, 8
  %v3503 = vld [vmem:[%s3502] sm:$0xff]
  %3504 = vrot.lane.b32.xlu0 %v3503, 43
  %v3505 = vpop.permute.xlu0 %3504
  %vm3506 = vcmask 7168
  %s3507 = scalar_lea.vmem %s1, 213
  %3508 = vst.msk [vmem:[%s3507] sm:$0x1] %vm3506, %v3505
  %s3509 = scalar_lea.vmem %s1, 468
  %3510 = vst.msk [vmem:[%s3509] sm:$0x2] %vm3506, %v3505
  %s3511 = scalar_lea.vmem %s1, 723
  %3512 = vst.msk [vmem:[%s3511] sm:$0x4] %vm3506, %v3505
  %s3513 = scalar_lea.vmem %s1, 978
  %3514 = vst.msk [vmem:[%s3513] sm:$0x8] %vm3506, %v3505
  %s3515 = scalar_lea.vmem %s1, 1233
  %3516 = vst.msk [vmem:[%s3515] sm:$0x10] %vm3506, %v3505
  %s3517 = scalar_lea.vmem %s1, 1488
  %3518 = vst.msk [vmem:[%s3517] sm:$0x20] %vm3506, %v3505
  %s3519 = scalar_lea.vmem %s1, 1743
  %3520 = vst.msk [vmem:[%s3519] sm:$0x40] %vm3506, %v3505
  %s3521 = scalar_lea.vmem %s1, 1998
  %3522 = vst.msk [vmem:[%s3521] sm:$0x80] %vm3506, %v3505
  %v3523 = vld [vmem:[%s0] sm:$0xff]
  %3524 = vrot.lane.b32.xlu0 %v3523, 42
  %v3525 = vpop.permute.xlu0 %3524
  %vm3526 = vcmask 7168
  %s3527 = scalar_lea.vmem %s1, 86
  %3528 = vst.msk [vmem:[%s3527] sm:$0x1] %vm3526, %v3525
  %s3529 = scalar_lea.vmem %s1, 341
  %3530 = vst.msk [vmem:[%s3529] sm:$0x2] %vm3526, %v3525
  %s3531 = scalar_lea.vmem %s1, 596
  %3532 = vst.msk [vmem:[%s3531] sm:$0x4] %vm3526, %v3525
  %s3533 = scalar_lea.vmem %s1, 851
  %3534 = vst.msk [vmem:[%s3533] sm:$0x8] %vm3526, %v3525
  %s3535 = scalar_lea.vmem %s1, 1106
  %3536 = vst.msk [vmem:[%s3535] sm:$0x10] %vm3526, %v3525
  %s3537 = scalar_lea.vmem %s1, 1361
  %3538 = vst.msk [vmem:[%s3537] sm:$0x20] %vm3526, %v3525
  %s3539 = scalar_lea.vmem %s1, 1616
  %3540 = vst.msk [vmem:[%s3539] sm:$0x40] %vm3526, %v3525
  %s3541 = scalar_lea.vmem %s1, 1871
  %3542 = vst.msk [vmem:[%s3541] sm:$0x80] %vm3526, %v3525
  %s3543 = scalar_lea.vmem %s0, 8
  %v3544 = vld [vmem:[%s3543] sm:$0xff]
  %3545 = vrot.lane.b32.xlu0 %v3544, 42
  %v3546 = vpop.permute.xlu0 %3545
  %vm3547 = vcmask 7168
  %s3548 = scalar_lea.vmem %s1, 214
  %3549 = vst.msk [vmem:[%s3548] sm:$0x1] %vm3547, %v3546
  %s3550 = scalar_lea.vmem %s1, 469
  %3551 = vst.msk [vmem:[%s3550] sm:$0x2] %vm3547, %v3546
  %s3552 = scalar_lea.vmem %s1, 724
  %3553 = vst.msk [vmem:[%s3552] sm:$0x4] %vm3547, %v3546
  %s3554 = scalar_lea.vmem %s1, 979
  %3555 = vst.msk [vmem:[%s3554] sm:$0x8] %vm3547, %v3546
  %s3556 = scalar_lea.vmem %s1, 1234
  %3557 = vst.msk [vmem:[%s3556] sm:$0x10] %vm3547, %v3546
  %s3558 = scalar_lea.vmem %s1, 1489
  %3559 = vst.msk [vmem:[%s3558] sm:$0x20] %vm3547, %v3546
  %s3560 = scalar_lea.vmem %s1, 1744
  %3561 = vst.msk [vmem:[%s3560] sm:$0x40] %vm3547, %v3546
  %s3562 = scalar_lea.vmem %s1, 1999
  %3563 = vst.msk [vmem:[%s3562] sm:$0x80] %vm3547, %v3546
  %v3564 = vld [vmem:[%s0] sm:$0xff]
  %3565 = vrot.lane.b32.xlu0 %v3564, 41
  %v3566 = vpop.permute.xlu0 %3565
  %vm3567 = vcmask 7168
  %s3568 = scalar_lea.vmem %s1, 87
  %3569 = vst.msk [vmem:[%s3568] sm:$0x1] %vm3567, %v3566
  %s3570 = scalar_lea.vmem %s1, 342
  %3571 = vst.msk [vmem:[%s3570] sm:$0x2] %vm3567, %v3566
  %s3572 = scalar_lea.vmem %s1, 597
  %3573 = vst.msk [vmem:[%s3572] sm:$0x4] %vm3567, %v3566
  %s3574 = scalar_lea.vmem %s1, 852
  %3575 = vst.msk [vmem:[%s3574] sm:$0x8] %vm3567, %v3566
  %s3576 = scalar_lea.vmem %s1, 1107
  %3577 = vst.msk [vmem:[%s3576] sm:$0x10] %vm3567, %v3566
  %s3578 = scalar_lea.vmem %s1, 1362
  %3579 = vst.msk [vmem:[%s3578] sm:$0x20] %vm3567, %v3566
  %s3580 = scalar_lea.vmem %s1, 1617
  %3581 = vst.msk [vmem:[%s3580] sm:$0x40] %vm3567, %v3566
  %s3582 = scalar_lea.vmem %s1, 1872
  %3583 = vst.msk [vmem:[%s3582] sm:$0x80] %vm3567, %v3566
  %s3584 = scalar_lea.vmem %s0, 8
  %v3585 = vld [vmem:[%s3584] sm:$0xff]
  %3586 = vrot.lane.b32.xlu0 %v3585, 41
  %v3587 = vpop.permute.xlu0 %3586
  %vm3588 = vcmask 7168
  %s3589 = scalar_lea.vmem %s1, 215
  %3590 = vst.msk [vmem:[%s3589] sm:$0x1] %vm3588, %v3587
  %s3591 = scalar_lea.vmem %s1, 470
  %3592 = vst.msk [vmem:[%s3591] sm:$0x2] %vm3588, %v3587
  %s3593 = scalar_lea.vmem %s1, 725
  %3594 = vst.msk [vmem:[%s3593] sm:$0x4] %vm3588, %v3587
  %s3595 = scalar_lea.vmem %s1, 980
  %3596 = vst.msk [vmem:[%s3595] sm:$0x8] %vm3588, %v3587
  %s3597 = scalar_lea.vmem %s1, 1235
  %3598 = vst.msk [vmem:[%s3597] sm:$0x10] %vm3588, %v3587
  %s3599 = scalar_lea.vmem %s1, 1490
  %3600 = vst.msk [vmem:[%s3599] sm:$0x20] %vm3588, %v3587
  %s3601 = scalar_lea.vmem %s1, 1745
  %3602 = vst.msk [vmem:[%s3601] sm:$0x40] %vm3588, %v3587
  %s3603 = scalar_lea.vmem %s1, 2000
  %3604 = vst.msk [vmem:[%s3603] sm:$0x80] %vm3588, %v3587
  %v3605 = vld [vmem:[%s0] sm:$0xff]
  %3606 = vrot.lane.b32.xlu0 %v3605, 40
  %v3607 = vpop.permute.xlu0 %3606
  %vm3608 = vcmask 7168
  %s3609 = scalar_lea.vmem %s1, 88
  %3610 = vst.msk [vmem:[%s3609] sm:$0x1] %vm3608, %v3607
  %s3611 = scalar_lea.vmem %s1, 343
  %3612 = vst.msk [vmem:[%s3611] sm:$0x2] %vm3608, %v3607
  %s3613 = scalar_lea.vmem %s1, 598
  %3614 = vst.msk [vmem:[%s3613] sm:$0x4] %vm3608, %v3607
  %s3615 = scalar_lea.vmem %s1, 853
  %3616 = vst.msk [vmem:[%s3615] sm:$0x8] %vm3608, %v3607
  %s3617 = scalar_lea.vmem %s1, 1108
  %3618 = vst.msk [vmem:[%s3617] sm:$0x10] %vm3608, %v3607
  %s3619 = scalar_lea.vmem %s1, 1363
  %3620 = vst.msk [vmem:[%s3619] sm:$0x20] %vm3608, %v3607
  %s3621 = scalar_lea.vmem %s1, 1618
  %3622 = vst.msk [vmem:[%s3621] sm:$0x40] %vm3608, %v3607
  %s3623 = scalar_lea.vmem %s1, 1873
  %3624 = vst.msk [vmem:[%s3623] sm:$0x80] %vm3608, %v3607
  %s3625 = scalar_lea.vmem %s0, 8
  %v3626 = vld [vmem:[%s3625] sm:$0xff]
  %3627 = vrot.lane.b32.xlu0 %v3626, 40
  %v3628 = vpop.permute.xlu0 %3627
  %vm3629 = vcmask 7168
  %s3630 = scalar_lea.vmem %s1, 216
  %3631 = vst.msk [vmem:[%s3630] sm:$0x1] %vm3629, %v3628
  %s3632 = scalar_lea.vmem %s1, 471
  %3633 = vst.msk [vmem:[%s3632] sm:$0x2] %vm3629, %v3628
  %s3634 = scalar_lea.vmem %s1, 726
  %3635 = vst.msk [vmem:[%s3634] sm:$0x4] %vm3629, %v3628
  %s3636 = scalar_lea.vmem %s1, 981
  %3637 = vst.msk [vmem:[%s3636] sm:$0x8] %vm3629, %v3628
  %s3638 = scalar_lea.vmem %s1, 1236
  %3639 = vst.msk [vmem:[%s3638] sm:$0x10] %vm3629, %v3628
  %s3640 = scalar_lea.vmem %s1, 1491
  %3641 = vst.msk [vmem:[%s3640] sm:$0x20] %vm3629, %v3628
  %s3642 = scalar_lea.vmem %s1, 1746
  %3643 = vst.msk [vmem:[%s3642] sm:$0x40] %vm3629, %v3628
  %s3644 = scalar_lea.vmem %s1, 2001
  %3645 = vst.msk [vmem:[%s3644] sm:$0x80] %vm3629, %v3628
  %v3646 = vld [vmem:[%s0] sm:$0xff]
  %3647 = vrot.lane.b32.xlu0 %v3646, 39
  %v3648 = vpop.permute.xlu0 %3647
  %vm3649 = vcmask 7168
  %s3650 = scalar_lea.vmem %s1, 89
  %3651 = vst.msk [vmem:[%s3650] sm:$0x1] %vm3649, %v3648
  %s3652 = scalar_lea.vmem %s1, 344
  %3653 = vst.msk [vmem:[%s3652] sm:$0x2] %vm3649, %v3648
  %s3654 = scalar_lea.vmem %s1, 599
  %3655 = vst.msk [vmem:[%s3654] sm:$0x4] %vm3649, %v3648
  %s3656 = scalar_lea.vmem %s1, 854
  %3657 = vst.msk [vmem:[%s3656] sm:$0x8] %vm3649, %v3648
  %s3658 = scalar_lea.vmem %s1, 1109
  %3659 = vst.msk [vmem:[%s3658] sm:$0x10] %vm3649, %v3648
  %s3660 = scalar_lea.vmem %s1, 1364
  %3661 = vst.msk [vmem:[%s3660] sm:$0x20] %vm3649, %v3648
  %s3662 = scalar_lea.vmem %s1, 1619
  %3663 = vst.msk [vmem:[%s3662] sm:$0x40] %vm3649, %v3648
  %s3664 = scalar_lea.vmem %s1, 1874
  %3665 = vst.msk [vmem:[%s3664] sm:$0x80] %vm3649, %v3648
  %s3666 = scalar_lea.vmem %s0, 8
  %v3667 = vld [vmem:[%s3666] sm:$0xff]
  %3668 = vrot.lane.b32.xlu0 %v3667, 39
  %v3669 = vpop.permute.xlu0 %3668
  %vm3670 = vcmask 7168
  %s3671 = scalar_lea.vmem %s1, 217
  %3672 = vst.msk [vmem:[%s3671] sm:$0x1] %vm3670, %v3669
  %s3673 = scalar_lea.vmem %s1, 472
  %3674 = vst.msk [vmem:[%s3673] sm:$0x2] %vm3670, %v3669
  %s3675 = scalar_lea.vmem %s1, 727
  %3676 = vst.msk [vmem:[%s3675] sm:$0x4] %vm3670, %v3669
  %s3677 = scalar_lea.vmem %s1, 982
  %3678 = vst.msk [vmem:[%s3677] sm:$0x8] %vm3670, %v3669
  %s3679 = scalar_lea.vmem %s1, 1237
  %3680 = vst.msk [vmem:[%s3679] sm:$0x10] %vm3670, %v3669
  %s3681 = scalar_lea.vmem %s1, 1492
  %3682 = vst.msk [vmem:[%s3681] sm:$0x20] %vm3670, %v3669
  %s3683 = scalar_lea.vmem %s1, 1747
  %3684 = vst.msk [vmem:[%s3683] sm:$0x40] %vm3670, %v3669
  %s3685 = scalar_lea.vmem %s1, 2002
  %3686 = vst.msk [vmem:[%s3685] sm:$0x80] %vm3670, %v3669
  %v3687 = vld [vmem:[%s0] sm:$0xff]
  %3688 = vrot.lane.b32.xlu0 %v3687, 38
  %v3689 = vpop.permute.xlu0 %3688
  %vm3690 = vcmask 7168
  %s3691 = scalar_lea.vmem %s1, 90
  %3692 = vst.msk [vmem:[%s3691] sm:$0x1] %vm3690, %v3689
  %s3693 = scalar_lea.vmem %s1, 345
  %3694 = vst.msk [vmem:[%s3693] sm:$0x2] %vm3690, %v3689
  %s3695 = scalar_lea.vmem %s1, 600
  %3696 = vst.msk [vmem:[%s3695] sm:$0x4] %vm3690, %v3689
  %s3697 = scalar_lea.vmem %s1, 855
  %3698 = vst.msk [vmem:[%s3697] sm:$0x8] %vm3690, %v3689
  %s3699 = scalar_lea.vmem %s1, 1110
  %3700 = vst.msk [vmem:[%s3699] sm:$0x10] %vm3690, %v3689
  %s3701 = scalar_lea.vmem %s1, 1365
  %3702 = vst.msk [vmem:[%s3701] sm:$0x20] %vm3690, %v3689
  %s3703 = scalar_lea.vmem %s1, 1620
  %3704 = vst.msk [vmem:[%s3703] sm:$0x40] %vm3690, %v3689
  %s3705 = scalar_lea.vmem %s1, 1875
  %3706 = vst.msk [vmem:[%s3705] sm:$0x80] %vm3690, %v3689
  %s3707 = scalar_lea.vmem %s0, 8
  %v3708 = vld [vmem:[%s3707] sm:$0xff]
  %3709 = vrot.lane.b32.xlu0 %v3708, 38
  %v3710 = vpop.permute.xlu0 %3709
  %vm3711 = vcmask 7168
  %s3712 = scalar_lea.vmem %s1, 218
  %3713 = vst.msk [vmem:[%s3712] sm:$0x1] %vm3711, %v3710
  %s3714 = scalar_lea.vmem %s1, 473
  %3715 = vst.msk [vmem:[%s3714] sm:$0x2] %vm3711, %v3710
  %s3716 = scalar_lea.vmem %s1, 728
  %3717 = vst.msk [vmem:[%s3716] sm:$0x4] %vm3711, %v3710
  %s3718 = scalar_lea.vmem %s1, 983
  %3719 = vst.msk [vmem:[%s3718] sm:$0x8] %vm3711, %v3710
  %s3720 = scalar_lea.vmem %s1, 1238
  %3721 = vst.msk [vmem:[%s3720] sm:$0x10] %vm3711, %v3710
  %s3722 = scalar_lea.vmem %s1, 1493
  %3723 = vst.msk [vmem:[%s3722] sm:$0x20] %vm3711, %v3710
  %s3724 = scalar_lea.vmem %s1, 1748
  %3725 = vst.msk [vmem:[%s3724] sm:$0x40] %vm3711, %v3710
  %s3726 = scalar_lea.vmem %s1, 2003
  %3727 = vst.msk [vmem:[%s3726] sm:$0x80] %vm3711, %v3710
  %v3728 = vld [vmem:[%s0] sm:$0xff]
  %3729 = vrot.lane.b32.xlu0 %v3728, 37
  %v3730 = vpop.permute.xlu0 %3729
  %vm3731 = vcmask 7168
  %s3732 = scalar_lea.vmem %s1, 91
  %3733 = vst.msk [vmem:[%s3732] sm:$0x1] %vm3731, %v3730
  %s3734 = scalar_lea.vmem %s1, 346
  %3735 = vst.msk [vmem:[%s3734] sm:$0x2] %vm3731, %v3730
  %s3736 = scalar_lea.vmem %s1, 601
  %3737 = vst.msk [vmem:[%s3736] sm:$0x4] %vm3731, %v3730
  %s3738 = scalar_lea.vmem %s1, 856
  %3739 = vst.msk [vmem:[%s3738] sm:$0x8] %vm3731, %v3730
  %s3740 = scalar_lea.vmem %s1, 1111
  %3741 = vst.msk [vmem:[%s3740] sm:$0x10] %vm3731, %v3730
  %s3742 = scalar_lea.vmem %s1, 1366
  %3743 = vst.msk [vmem:[%s3742] sm:$0x20] %vm3731, %v3730
  %s3744 = scalar_lea.vmem %s1, 1621
  %3745 = vst.msk [vmem:[%s3744] sm:$0x40] %vm3731, %v3730
  %s3746 = scalar_lea.vmem %s1, 1876
  %3747 = vst.msk [vmem:[%s3746] sm:$0x80] %vm3731, %v3730
  %s3748 = scalar_lea.vmem %s0, 8
  %v3749 = vld [vmem:[%s3748] sm:$0xff]
  %3750 = vrot.lane.b32.xlu0 %v3749, 37
  %v3751 = vpop.permute.xlu0 %3750
  %vm3752 = vcmask 7168
  %s3753 = scalar_lea.vmem %s1, 219
  %3754 = vst.msk [vmem:[%s3753] sm:$0x1] %vm3752, %v3751
  %s3755 = scalar_lea.vmem %s1, 474
  %3756 = vst.msk [vmem:[%s3755] sm:$0x2] %vm3752, %v3751
  %s3757 = scalar_lea.vmem %s1, 729
  %3758 = vst.msk [vmem:[%s3757] sm:$0x4] %vm3752, %v3751
  %s3759 = scalar_lea.vmem %s1, 984
  %3760 = vst.msk [vmem:[%s3759] sm:$0x8] %vm3752, %v3751
  %s3761 = scalar_lea.vmem %s1, 1239
  %3762 = vst.msk [vmem:[%s3761] sm:$0x10] %vm3752, %v3751
  %s3763 = scalar_lea.vmem %s1, 1494
  %3764 = vst.msk [vmem:[%s3763] sm:$0x20] %vm3752, %v3751
  %s3765 = scalar_lea.vmem %s1, 1749
  %3766 = vst.msk [vmem:[%s3765] sm:$0x40] %vm3752, %v3751
  %s3767 = scalar_lea.vmem %s1, 2004
  %3768 = vst.msk [vmem:[%s3767] sm:$0x80] %vm3752, %v3751
  %v3769 = vld [vmem:[%s0] sm:$0xff]
  %3770 = vrot.lane.b32.xlu0 %v3769, 36
  %v3771 = vpop.permute.xlu0 %3770
  %vm3772 = vcmask 7168
  %s3773 = scalar_lea.vmem %s1, 92
  %3774 = vst.msk [vmem:[%s3773] sm:$0x1] %vm3772, %v3771
  %s3775 = scalar_lea.vmem %s1, 347
  %3776 = vst.msk [vmem:[%s3775] sm:$0x2] %vm3772, %v3771
  %s3777 = scalar_lea.vmem %s1, 602
  %3778 = vst.msk [vmem:[%s3777] sm:$0x4] %vm3772, %v3771
  %s3779 = scalar_lea.vmem %s1, 857
  %3780 = vst.msk [vmem:[%s3779] sm:$0x8] %vm3772, %v3771
  %s3781 = scalar_lea.vmem %s1, 1112
  %3782 = vst.msk [vmem:[%s3781] sm:$0x10] %vm3772, %v3771
  %s3783 = scalar_lea.vmem %s1, 1367
  %3784 = vst.msk [vmem:[%s3783] sm:$0x20] %vm3772, %v3771
  %s3785 = scalar_lea.vmem %s1, 1622
  %3786 = vst.msk [vmem:[%s3785] sm:$0x40] %vm3772, %v3771
  %s3787 = scalar_lea.vmem %s1, 1877
  %3788 = vst.msk [vmem:[%s3787] sm:$0x80] %vm3772, %v3771
  %s3789 = scalar_lea.vmem %s0, 8
  %v3790 = vld [vmem:[%s3789] sm:$0xff]
  %3791 = vrot.lane.b32.xlu0 %v3790, 36
  %v3792 = vpop.permute.xlu0 %3791
  %vm3793 = vcmask 7168
  %s3794 = scalar_lea.vmem %s1, 220
  %3795 = vst.msk [vmem:[%s3794] sm:$0x1] %vm3793, %v3792
  %s3796 = scalar_lea.vmem %s1, 475
  %3797 = vst.msk [vmem:[%s3796] sm:$0x2] %vm3793, %v3792
  %s3798 = scalar_lea.vmem %s1, 730
  %3799 = vst.msk [vmem:[%s3798] sm:$0x4] %vm3793, %v3792
  %s3800 = scalar_lea.vmem %s1, 985
  %3801 = vst.msk [vmem:[%s3800] sm:$0x8] %vm3793, %v3792
  %s3802 = scalar_lea.vmem %s1, 1240
  %3803 = vst.msk [vmem:[%s3802] sm:$0x10] %vm3793, %v3792
  %s3804 = scalar_lea.vmem %s1, 1495
  %3805 = vst.msk [vmem:[%s3804] sm:$0x20] %vm3793, %v3792
  %s3806 = scalar_lea.vmem %s1, 1750
  %3807 = vst.msk [vmem:[%s3806] sm:$0x40] %vm3793, %v3792
  %s3808 = scalar_lea.vmem %s1, 2005
  %3809 = vst.msk [vmem:[%s3808] sm:$0x80] %vm3793, %v3792
  %v3810 = vld [vmem:[%s0] sm:$0xff]
  %3811 = vrot.lane.b32.xlu0 %v3810, 35
  %v3812 = vpop.permute.xlu0 %3811
  %vm3813 = vcmask 7168
  %s3814 = scalar_lea.vmem %s1, 93
  %3815 = vst.msk [vmem:[%s3814] sm:$0x1] %vm3813, %v3812
  %s3816 = scalar_lea.vmem %s1, 348
  %3817 = vst.msk [vmem:[%s3816] sm:$0x2] %vm3813, %v3812
  %s3818 = scalar_lea.vmem %s1, 603
  %3819 = vst.msk [vmem:[%s3818] sm:$0x4] %vm3813, %v3812
  %s3820 = scalar_lea.vmem %s1, 858
  %3821 = vst.msk [vmem:[%s3820] sm:$0x8] %vm3813, %v3812
  %s3822 = scalar_lea.vmem %s1, 1113
  %3823 = vst.msk [vmem:[%s3822] sm:$0x10] %vm3813, %v3812
  %s3824 = scalar_lea.vmem %s1, 1368
  %3825 = vst.msk [vmem:[%s3824] sm:$0x20] %vm3813, %v3812
  %s3826 = scalar_lea.vmem %s1, 1623
  %3827 = vst.msk [vmem:[%s3826] sm:$0x40] %vm3813, %v3812
  %s3828 = scalar_lea.vmem %s1, 1878
  %3829 = vst.msk [vmem:[%s3828] sm:$0x80] %vm3813, %v3812
  %s3830 = scalar_lea.vmem %s0, 8
  %v3831 = vld [vmem:[%s3830] sm:$0xff]
  %3832 = vrot.lane.b32.xlu0 %v3831, 35
  %v3833 = vpop.permute.xlu0 %3832
  %vm3834 = vcmask 7168
  %s3835 = scalar_lea.vmem %s1, 221
  %3836 = vst.msk [vmem:[%s3835] sm:$0x1] %vm3834, %v3833
  %s3837 = scalar_lea.vmem %s1, 476
  %3838 = vst.msk [vmem:[%s3837] sm:$0x2] %vm3834, %v3833
  %s3839 = scalar_lea.vmem %s1, 731
  %3840 = vst.msk [vmem:[%s3839] sm:$0x4] %vm3834, %v3833
  %s3841 = scalar_lea.vmem %s1, 986
  %3842 = vst.msk [vmem:[%s3841] sm:$0x8] %vm3834, %v3833
  %s3843 = scalar_lea.vmem %s1, 1241
  %3844 = vst.msk [vmem:[%s3843] sm:$0x10] %vm3834, %v3833
  %s3845 = scalar_lea.vmem %s1, 1496
  %3846 = vst.msk [vmem:[%s3845] sm:$0x20] %vm3834, %v3833
  %s3847 = scalar_lea.vmem %s1, 1751
  %3848 = vst.msk [vmem:[%s3847] sm:$0x40] %vm3834, %v3833
  %s3849 = scalar_lea.vmem %s1, 2006
  %3850 = vst.msk [vmem:[%s3849] sm:$0x80] %vm3834, %v3833
  %v3851 = vld [vmem:[%s0] sm:$0xff]
  %3852 = vrot.lane.b32.xlu0 %v3851, 34
  %v3853 = vpop.permute.xlu0 %3852
  %vm3854 = vcmask 7168
  %s3855 = scalar_lea.vmem %s1, 94
  %3856 = vst.msk [vmem:[%s3855] sm:$0x1] %vm3854, %v3853
  %s3857 = scalar_lea.vmem %s1, 349
  %3858 = vst.msk [vmem:[%s3857] sm:$0x2] %vm3854, %v3853
  %s3859 = scalar_lea.vmem %s1, 604
  %3860 = vst.msk [vmem:[%s3859] sm:$0x4] %vm3854, %v3853
  %s3861 = scalar_lea.vmem %s1, 859
  %3862 = vst.msk [vmem:[%s3861] sm:$0x8] %vm3854, %v3853
  %s3863 = scalar_lea.vmem %s1, 1114
  %3864 = vst.msk [vmem:[%s3863] sm:$0x10] %vm3854, %v3853
  %s3865 = scalar_lea.vmem %s1, 1369
  %3866 = vst.msk [vmem:[%s3865] sm:$0x20] %vm3854, %v3853
  %s3867 = scalar_lea.vmem %s1, 1624
  %3868 = vst.msk [vmem:[%s3867] sm:$0x40] %vm3854, %v3853
  %s3869 = scalar_lea.vmem %s1, 1879
  %3870 = vst.msk [vmem:[%s3869] sm:$0x80] %vm3854, %v3853
  %s3871 = scalar_lea.vmem %s0, 8
  %v3872 = vld [vmem:[%s3871] sm:$0xff]
  %3873 = vrot.lane.b32.xlu0 %v3872, 34
  %v3874 = vpop.permute.xlu0 %3873
  %vm3875 = vcmask 7168
  %s3876 = scalar_lea.vmem %s1, 222
  %3877 = vst.msk [vmem:[%s3876] sm:$0x1] %vm3875, %v3874
  %s3878 = scalar_lea.vmem %s1, 477
  %3879 = vst.msk [vmem:[%s3878] sm:$0x2] %vm3875, %v3874
  %s3880 = scalar_lea.vmem %s1, 732
  %3881 = vst.msk [vmem:[%s3880] sm:$0x4] %vm3875, %v3874
  %s3882 = scalar_lea.vmem %s1, 987
  %3883 = vst.msk [vmem:[%s3882] sm:$0x8] %vm3875, %v3874
  %s3884 = scalar_lea.vmem %s1, 1242
  %3885 = vst.msk [vmem:[%s3884] sm:$0x10] %vm3875, %v3874
  %s3886 = scalar_lea.vmem %s1, 1497
  %3887 = vst.msk [vmem:[%s3886] sm:$0x20] %vm3875, %v3874
  %s3888 = scalar_lea.vmem %s1, 1752
  %3889 = vst.msk [vmem:[%s3888] sm:$0x40] %vm3875, %v3874
  %s3890 = scalar_lea.vmem %s1, 2007
  %3891 = vst.msk [vmem:[%s3890] sm:$0x80] %vm3875, %v3874
  %v3892 = vld [vmem:[%s0] sm:$0xff]
  %3893 = vrot.lane.b32.xlu0 %v3892, 33
  %v3894 = vpop.permute.xlu0 %3893
  %vm3895 = vcmask 7168
  %s3896 = scalar_lea.vmem %s1, 95
  %3897 = vst.msk [vmem:[%s3896] sm:$0x1] %vm3895, %v3894
  %s3898 = scalar_lea.vmem %s1, 350
  %3899 = vst.msk [vmem:[%s3898] sm:$0x2] %vm3895, %v3894
  %s3900 = scalar_lea.vmem %s1, 605
  %3901 = vst.msk [vmem:[%s3900] sm:$0x4] %vm3895, %v3894
  %s3902 = scalar_lea.vmem %s1, 860
  %3903 = vst.msk [vmem:[%s3902] sm:$0x8] %vm3895, %v3894
  %s3904 = scalar_lea.vmem %s1, 1115
  %3905 = vst.msk [vmem:[%s3904] sm:$0x10] %vm3895, %v3894
  %s3906 = scalar_lea.vmem %s1, 1370
  %3907 = vst.msk [vmem:[%s3906] sm:$0x20] %vm3895, %v3894
  %s3908 = scalar_lea.vmem %s1, 1625
  %3909 = vst.msk [vmem:[%s3908] sm:$0x40] %vm3895, %v3894
  %s3910 = scalar_lea.vmem %s1, 1880
  %3911 = vst.msk [vmem:[%s3910] sm:$0x80] %vm3895, %v3894
  %s3912 = scalar_lea.vmem %s0, 8
  %v3913 = vld [vmem:[%s3912] sm:$0xff]
  %3914 = vrot.lane.b32.xlu0 %v3913, 33
  %v3915 = vpop.permute.xlu0 %3914
  %vm3916 = vcmask 7168
  %s3917 = scalar_lea.vmem %s1, 223
  %3918 = vst.msk [vmem:[%s3917] sm:$0x1] %vm3916, %v3915
  %s3919 = scalar_lea.vmem %s1, 478
  %3920 = vst.msk [vmem:[%s3919] sm:$0x2] %vm3916, %v3915
  %s3921 = scalar_lea.vmem %s1, 733
  %3922 = vst.msk [vmem:[%s3921] sm:$0x4] %vm3916, %v3915
  %s3923 = scalar_lea.vmem %s1, 988
  %3924 = vst.msk [vmem:[%s3923] sm:$0x8] %vm3916, %v3915
  %s3925 = scalar_lea.vmem %s1, 1243
  %3926 = vst.msk [vmem:[%s3925] sm:$0x10] %vm3916, %v3915
  %s3927 = scalar_lea.vmem %s1, 1498
  %3928 = vst.msk [vmem:[%s3927] sm:$0x20] %vm3916, %v3915
  %s3929 = scalar_lea.vmem %s1, 1753
  %3930 = vst.msk [vmem:[%s3929] sm:$0x40] %vm3916, %v3915
  %s3931 = scalar_lea.vmem %s1, 2008
  %3932 = vst.msk [vmem:[%s3931] sm:$0x80] %vm3916, %v3915
  %v3933 = vld [vmem:[%s0] sm:$0xff]
  %3934 = vrot.lane.b32.xlu0 %v3933, 32
  %v3935 = vpop.permute.xlu0 %3934
  %vm3936 = vcmask 7168
  %s3937 = scalar_lea.vmem %s1, 96
  %3938 = vst.msk [vmem:[%s3937] sm:$0x1] %vm3936, %v3935
  %s3939 = scalar_lea.vmem %s1, 351
  %3940 = vst.msk [vmem:[%s3939] sm:$0x2] %vm3936, %v3935
  %s3941 = scalar_lea.vmem %s1, 606
  %3942 = vst.msk [vmem:[%s3941] sm:$0x4] %vm3936, %v3935
  %s3943 = scalar_lea.vmem %s1, 861
  %3944 = vst.msk [vmem:[%s3943] sm:$0x8] %vm3936, %v3935
  %s3945 = scalar_lea.vmem %s1, 1116
  %3946 = vst.msk [vmem:[%s3945] sm:$0x10] %vm3936, %v3935
  %s3947 = scalar_lea.vmem %s1, 1371
  %3948 = vst.msk [vmem:[%s3947] sm:$0x20] %vm3936, %v3935
  %s3949 = scalar_lea.vmem %s1, 1626
  %3950 = vst.msk [vmem:[%s3949] sm:$0x40] %vm3936, %v3935
  %s3951 = scalar_lea.vmem %s1, 1881
  %3952 = vst.msk [vmem:[%s3951] sm:$0x80] %vm3936, %v3935
  %s3953 = scalar_lea.vmem %s0, 8
  %v3954 = vld [vmem:[%s3953] sm:$0xff]
  %3955 = vrot.lane.b32.xlu0 %v3954, 32
  %v3956 = vpop.permute.xlu0 %3955
  %vm3957 = vcmask 7168
  %s3958 = scalar_lea.vmem %s1, 224
  %3959 = vst.msk [vmem:[%s3958] sm:$0x1] %vm3957, %v3956
  %s3960 = scalar_lea.vmem %s1, 479
  %3961 = vst.msk [vmem:[%s3960] sm:$0x2] %vm3957, %v3956
  %s3962 = scalar_lea.vmem %s1, 734
  %3963 = vst.msk [vmem:[%s3962] sm:$0x4] %vm3957, %v3956
  %s3964 = scalar_lea.vmem %s1, 989
  %3965 = vst.msk [vmem:[%s3964] sm:$0x8] %vm3957, %v3956
  %s3966 = scalar_lea.vmem %s1, 1244
  %3967 = vst.msk [vmem:[%s3966] sm:$0x10] %vm3957, %v3956
  %s3968 = scalar_lea.vmem %s1, 1499
  %3969 = vst.msk [vmem:[%s3968] sm:$0x20] %vm3957, %v3956
  %s3970 = scalar_lea.vmem %s1, 1754
  %3971 = vst.msk [vmem:[%s3970] sm:$0x40] %vm3957, %v3956
  %s3972 = scalar_lea.vmem %s1, 2009
  %3973 = vst.msk [vmem:[%s3972] sm:$0x80] %vm3957, %v3956
  %v3974 = vld [vmem:[%s0] sm:$0xff]
  %3975 = vrot.lane.b32.xlu0 %v3974, 31
  %v3976 = vpop.permute.xlu0 %3975
  %vm3977 = vcmask 7168
  %s3978 = scalar_lea.vmem %s1, 97
  %3979 = vst.msk [vmem:[%s3978] sm:$0x1] %vm3977, %v3976
  %s3980 = scalar_lea.vmem %s1, 352
  %3981 = vst.msk [vmem:[%s3980] sm:$0x2] %vm3977, %v3976
  %s3982 = scalar_lea.vmem %s1, 607
  %3983 = vst.msk [vmem:[%s3982] sm:$0x4] %vm3977, %v3976
  %s3984 = scalar_lea.vmem %s1, 862
  %3985 = vst.msk [vmem:[%s3984] sm:$0x8] %vm3977, %v3976
  %s3986 = scalar_lea.vmem %s1, 1117
  %3987 = vst.msk [vmem:[%s3986] sm:$0x10] %vm3977, %v3976
  %s3988 = scalar_lea.vmem %s1, 1372
  %3989 = vst.msk [vmem:[%s3988] sm:$0x20] %vm3977, %v3976
  %s3990 = scalar_lea.vmem %s1, 1627
  %3991 = vst.msk [vmem:[%s3990] sm:$0x40] %vm3977, %v3976
  %s3992 = scalar_lea.vmem %s1, 1882
  %3993 = vst.msk [vmem:[%s3992] sm:$0x80] %vm3977, %v3976
  %s3994 = scalar_lea.vmem %s0, 8
  %v3995 = vld [vmem:[%s3994] sm:$0xff]
  %3996 = vrot.lane.b32.xlu0 %v3995, 31
  %v3997 = vpop.permute.xlu0 %3996
  %vm3998 = vcmask 7168
  %s3999 = scalar_lea.vmem %s1, 225
  %4000 = vst.msk [vmem:[%s3999] sm:$0x1] %vm3998, %v3997
  %s4001 = scalar_lea.vmem %s1, 480
  %4002 = vst.msk [vmem:[%s4001] sm:$0x2] %vm3998, %v3997
  %s4003 = scalar_lea.vmem %s1, 735
  %4004 = vst.msk [vmem:[%s4003] sm:$0x4] %vm3998, %v3997
  %s4005 = scalar_lea.vmem %s1, 990
  %4006 = vst.msk [vmem:[%s4005] sm:$0x8] %vm3998, %v3997
  %s4007 = scalar_lea.vmem %s1, 1245
  %4008 = vst.msk [vmem:[%s4007] sm:$0x10] %vm3998, %v3997
  %s4009 = scalar_lea.vmem %s1, 1500
  %4010 = vst.msk [vmem:[%s4009] sm:$0x20] %vm3998, %v3997
  %s4011 = scalar_lea.vmem %s1, 1755
  %4012 = vst.msk [vmem:[%s4011] sm:$0x40] %vm3998, %v3997
  %s4013 = scalar_lea.vmem %s1, 2010
  %4014 = vst.msk [vmem:[%s4013] sm:$0x80] %vm3998, %v3997
  %v4015 = vld [vmem:[%s0] sm:$0xff]
  %4016 = vrot.lane.b32.xlu0 %v4015, 30
  %v4017 = vpop.permute.xlu0 %4016
  %vm4018 = vcmask 7168
  %s4019 = scalar_lea.vmem %s1, 98
  %4020 = vst.msk [vmem:[%s4019] sm:$0x1] %vm4018, %v4017
  %s4021 = scalar_lea.vmem %s1, 353
  %4022 = vst.msk [vmem:[%s4021] sm:$0x2] %vm4018, %v4017
  %s4023 = scalar_lea.vmem %s1, 608
  %4024 = vst.msk [vmem:[%s4023] sm:$0x4] %vm4018, %v4017
  %s4025 = scalar_lea.vmem %s1, 863
  %4026 = vst.msk [vmem:[%s4025] sm:$0x8] %vm4018, %v4017
  %s4027 = scalar_lea.vmem %s1, 1118
  %4028 = vst.msk [vmem:[%s4027] sm:$0x10] %vm4018, %v4017
  %s4029 = scalar_lea.vmem %s1, 1373
  %4030 = vst.msk [vmem:[%s4029] sm:$0x20] %vm4018, %v4017
  %s4031 = scalar_lea.vmem %s1, 1628
  %4032 = vst.msk [vmem:[%s4031] sm:$0x40] %vm4018, %v4017
  %s4033 = scalar_lea.vmem %s1, 1883
  %4034 = vst.msk [vmem:[%s4033] sm:$0x80] %vm4018, %v4017
  %s4035 = scalar_lea.vmem %s0, 8
  %v4036 = vld [vmem:[%s4035] sm:$0xff]
  %4037 = vrot.lane.b32.xlu0 %v4036, 30
  %v4038 = vpop.permute.xlu0 %4037
  %vm4039 = vcmask 7168
  %s4040 = scalar_lea.vmem %s1, 226
  %4041 = vst.msk [vmem:[%s4040] sm:$0x1] %vm4039, %v4038
  %s4042 = scalar_lea.vmem %s1, 481
  %4043 = vst.msk [vmem:[%s4042] sm:$0x2] %vm4039, %v4038
  %s4044 = scalar_lea.vmem %s1, 736
  %4045 = vst.msk [vmem:[%s4044] sm:$0x4] %vm4039, %v4038
  %s4046 = scalar_lea.vmem %s1, 991
  %4047 = vst.msk [vmem:[%s4046] sm:$0x8] %vm4039, %v4038
  %s4048 = scalar_lea.vmem %s1, 1246
  %4049 = vst.msk [vmem:[%s4048] sm:$0x10] %vm4039, %v4038
  %s4050 = scalar_lea.vmem %s1, 1501
  %4051 = vst.msk [vmem:[%s4050] sm:$0x20] %vm4039, %v4038
  %s4052 = scalar_lea.vmem %s1, 1756
  %4053 = vst.msk [vmem:[%s4052] sm:$0x40] %vm4039, %v4038
  %s4054 = scalar_lea.vmem %s1, 2011
  %4055 = vst.msk [vmem:[%s4054] sm:$0x80] %vm4039, %v4038
  %v4056 = vld [vmem:[%s0] sm:$0xff]
  %4057 = vrot.lane.b32.xlu0 %v4056, 29
  %v4058 = vpop.permute.xlu0 %4057
  %vm4059 = vcmask 7168
  %s4060 = scalar_lea.vmem %s1, 99
  %4061 = vst.msk [vmem:[%s4060] sm:$0x1] %vm4059, %v4058
  %s4062 = scalar_lea.vmem %s1, 354
  %4063 = vst.msk [vmem:[%s4062] sm:$0x2] %vm4059, %v4058
  %s4064 = scalar_lea.vmem %s1, 609
  %4065 = vst.msk [vmem:[%s4064] sm:$0x4] %vm4059, %v4058
  %s4066 = scalar_lea.vmem %s1, 864
  %4067 = vst.msk [vmem:[%s4066] sm:$0x8] %vm4059, %v4058
  %s4068 = scalar_lea.vmem %s1, 1119
  %4069 = vst.msk [vmem:[%s4068] sm:$0x10] %vm4059, %v4058
  %s4070 = scalar_lea.vmem %s1, 1374
  %4071 = vst.msk [vmem:[%s4070] sm:$0x20] %vm4059, %v4058
  %s4072 = scalar_lea.vmem %s1, 1629
  %4073 = vst.msk [vmem:[%s4072] sm:$0x40] %vm4059, %v4058
  %s4074 = scalar_lea.vmem %s1, 1884
  %4075 = vst.msk [vmem:[%s4074] sm:$0x80] %vm4059, %v4058
  %s4076 = scalar_lea.vmem %s0, 8
  %v4077 = vld [vmem:[%s4076] sm:$0xff]
  %4078 = vrot.lane.b32.xlu0 %v4077, 29
  %v4079 = vpop.permute.xlu0 %4078
  %vm4080 = vcmask 7168
  %s4081 = scalar_lea.vmem %s1, 227
  %4082 = vst.msk [vmem:[%s4081] sm:$0x1] %vm4080, %v4079
  %s4083 = scalar_lea.vmem %s1, 482
  %4084 = vst.msk [vmem:[%s4083] sm:$0x2] %vm4080, %v4079
  %s4085 = scalar_lea.vmem %s1, 737
  %4086 = vst.msk [vmem:[%s4085] sm:$0x4] %vm4080, %v4079
  %s4087 = scalar_lea.vmem %s1, 992
  %4088 = vst.msk [vmem:[%s4087] sm:$0x8] %vm4080, %v4079
  %s4089 = scalar_lea.vmem %s1, 1247
  %4090 = vst.msk [vmem:[%s4089] sm:$0x10] %vm4080, %v4079
  %s4091 = scalar_lea.vmem %s1, 1502
  %4092 = vst.msk [vmem:[%s4091] sm:$0x20] %vm4080, %v4079
  %s4093 = scalar_lea.vmem %s1, 1757
  %4094 = vst.msk [vmem:[%s4093] sm:$0x40] %vm4080, %v4079
  %s4095 = scalar_lea.vmem %s1, 2012
  %4096 = vst.msk [vmem:[%s4095] sm:$0x80] %vm4080, %v4079
  %v4097 = vld [vmem:[%s0] sm:$0xff]
  %4098 = vrot.lane.b32.xlu0 %v4097, 28
  %v4099 = vpop.permute.xlu0 %4098
  %vm4100 = vcmask 7168
  %s4101 = scalar_lea.vmem %s1, 100
  %4102 = vst.msk [vmem:[%s4101] sm:$0x1] %vm4100, %v4099
  %s4103 = scalar_lea.vmem %s1, 355
  %4104 = vst.msk [vmem:[%s4103] sm:$0x2] %vm4100, %v4099
  %s4105 = scalar_lea.vmem %s1, 610
  %4106 = vst.msk [vmem:[%s4105] sm:$0x4] %vm4100, %v4099
  %s4107 = scalar_lea.vmem %s1, 865
  %4108 = vst.msk [vmem:[%s4107] sm:$0x8] %vm4100, %v4099
  %s4109 = scalar_lea.vmem %s1, 1120
  %4110 = vst.msk [vmem:[%s4109] sm:$0x10] %vm4100, %v4099
  %s4111 = scalar_lea.vmem %s1, 1375
  %4112 = vst.msk [vmem:[%s4111] sm:$0x20] %vm4100, %v4099
  %s4113 = scalar_lea.vmem %s1, 1630
  %4114 = vst.msk [vmem:[%s4113] sm:$0x40] %vm4100, %v4099
  %s4115 = scalar_lea.vmem %s1, 1885
  %4116 = vst.msk [vmem:[%s4115] sm:$0x80] %vm4100, %v4099
  %s4117 = scalar_lea.vmem %s0, 8
  %v4118 = vld [vmem:[%s4117] sm:$0xff]
  %4119 = vrot.lane.b32.xlu0 %v4118, 28
  %v4120 = vpop.permute.xlu0 %4119
  %vm4121 = vcmask 7168
  %s4122 = scalar_lea.vmem %s1, 228
  %4123 = vst.msk [vmem:[%s4122] sm:$0x1] %vm4121, %v4120
  %s4124 = scalar_lea.vmem %s1, 483
  %4125 = vst.msk [vmem:[%s4124] sm:$0x2] %vm4121, %v4120
  %s4126 = scalar_lea.vmem %s1, 738
  %4127 = vst.msk [vmem:[%s4126] sm:$0x4] %vm4121, %v4120
  %s4128 = scalar_lea.vmem %s1, 993
  %4129 = vst.msk [vmem:[%s4128] sm:$0x8] %vm4121, %v4120
  %s4130 = scalar_lea.vmem %s1, 1248
  %4131 = vst.msk [vmem:[%s4130] sm:$0x10] %vm4121, %v4120
  %s4132 = scalar_lea.vmem %s1, 1503
  %4133 = vst.msk [vmem:[%s4132] sm:$0x20] %vm4121, %v4120
  %s4134 = scalar_lea.vmem %s1, 1758
  %4135 = vst.msk [vmem:[%s4134] sm:$0x40] %vm4121, %v4120
  %s4136 = scalar_lea.vmem %s1, 2013
  %4137 = vst.msk [vmem:[%s4136] sm:$0x80] %vm4121, %v4120
  %v4138 = vld [vmem:[%s0] sm:$0xff]
  %4139 = vrot.lane.b32.xlu0 %v4138, 27
  %v4140 = vpop.permute.xlu0 %4139
  %vm4141 = vcmask 7168
  %s4142 = scalar_lea.vmem %s1, 101
  %4143 = vst.msk [vmem:[%s4142] sm:$0x1] %vm4141, %v4140
  %s4144 = scalar_lea.vmem %s1, 356
  %4145 = vst.msk [vmem:[%s4144] sm:$0x2] %vm4141, %v4140
  %s4146 = scalar_lea.vmem %s1, 611
  %4147 = vst.msk [vmem:[%s4146] sm:$0x4] %vm4141, %v4140
  %s4148 = scalar_lea.vmem %s1, 866
  %4149 = vst.msk [vmem:[%s4148] sm:$0x8] %vm4141, %v4140
  %s4150 = scalar_lea.vmem %s1, 1121
  %4151 = vst.msk [vmem:[%s4150] sm:$0x10] %vm4141, %v4140
  %s4152 = scalar_lea.vmem %s1, 1376
  %4153 = vst.msk [vmem:[%s4152] sm:$0x20] %vm4141, %v4140
  %s4154 = scalar_lea.vmem %s1, 1631
  %4155 = vst.msk [vmem:[%s4154] sm:$0x40] %vm4141, %v4140
  %s4156 = scalar_lea.vmem %s1, 1886
  %4157 = vst.msk [vmem:[%s4156] sm:$0x80] %vm4141, %v4140
  %s4158 = scalar_lea.vmem %s0, 8
  %v4159 = vld [vmem:[%s4158] sm:$0xff]
  %4160 = vrot.lane.b32.xlu0 %v4159, 27
  %v4161 = vpop.permute.xlu0 %4160
  %vm4162 = vcmask 7168
  %s4163 = scalar_lea.vmem %s1, 229
  %4164 = vst.msk [vmem:[%s4163] sm:$0x1] %vm4162, %v4161
  %s4165 = scalar_lea.vmem %s1, 484
  %4166 = vst.msk [vmem:[%s4165] sm:$0x2] %vm4162, %v4161
  %s4167 = scalar_lea.vmem %s1, 739
  %4168 = vst.msk [vmem:[%s4167] sm:$0x4] %vm4162, %v4161
  %s4169 = scalar_lea.vmem %s1, 994
  %4170 = vst.msk [vmem:[%s4169] sm:$0x8] %vm4162, %v4161
  %s4171 = scalar_lea.vmem %s1, 1249
  %4172 = vst.msk [vmem:[%s4171] sm:$0x10] %vm4162, %v4161
  %s4173 = scalar_lea.vmem %s1, 1504
  %4174 = vst.msk [vmem:[%s4173] sm:$0x20] %vm4162, %v4161
  %s4175 = scalar_lea.vmem %s1, 1759
  %4176 = vst.msk [vmem:[%s4175] sm:$0x40] %vm4162, %v4161
  %s4177 = scalar_lea.vmem %s1, 2014
  %4178 = vst.msk [vmem:[%s4177] sm:$0x80] %vm4162, %v4161
  %v4179 = vld [vmem:[%s0] sm:$0xff]
  %4180 = vrot.lane.b32.xlu0 %v4179, 26
  %v4181 = vpop.permute.xlu0 %4180
  %vm4182 = vcmask 7168
  %s4183 = scalar_lea.vmem %s1, 102
  %4184 = vst.msk [vmem:[%s4183] sm:$0x1] %vm4182, %v4181
  %s4185 = scalar_lea.vmem %s1, 357
  %4186 = vst.msk [vmem:[%s4185] sm:$0x2] %vm4182, %v4181
  %s4187 = scalar_lea.vmem %s1, 612
  %4188 = vst.msk [vmem:[%s4187] sm:$0x4] %vm4182, %v4181
  %s4189 = scalar_lea.vmem %s1, 867
  %4190 = vst.msk [vmem:[%s4189] sm:$0x8] %vm4182, %v4181
  %s4191 = scalar_lea.vmem %s1, 1122
  %4192 = vst.msk [vmem:[%s4191] sm:$0x10] %vm4182, %v4181
  %s4193 = scalar_lea.vmem %s1, 1377
  %4194 = vst.msk [vmem:[%s4193] sm:$0x20] %vm4182, %v4181
  %s4195 = scalar_lea.vmem %s1, 1632
  %4196 = vst.msk [vmem:[%s4195] sm:$0x40] %vm4182, %v4181
  %s4197 = scalar_lea.vmem %s1, 1887
  %4198 = vst.msk [vmem:[%s4197] sm:$0x80] %vm4182, %v4181
  %s4199 = scalar_lea.vmem %s0, 8
  %v4200 = vld [vmem:[%s4199] sm:$0xff]
  %4201 = vrot.lane.b32.xlu0 %v4200, 26
  %v4202 = vpop.permute.xlu0 %4201
  %vm4203 = vcmask 7168
  %s4204 = scalar_lea.vmem %s1, 230
  %4205 = vst.msk [vmem:[%s4204] sm:$0x1] %vm4203, %v4202
  %s4206 = scalar_lea.vmem %s1, 485
  %4207 = vst.msk [vmem:[%s4206] sm:$0x2] %vm4203, %v4202
  %s4208 = scalar_lea.vmem %s1, 740
  %4209 = vst.msk [vmem:[%s4208] sm:$0x4] %vm4203, %v4202
  %s4210 = scalar_lea.vmem %s1, 995
  %4211 = vst.msk [vmem:[%s4210] sm:$0x8] %vm4203, %v4202
  %s4212 = scalar_lea.vmem %s1, 1250
  %4213 = vst.msk [vmem:[%s4212] sm:$0x10] %vm4203, %v4202
  %s4214 = scalar_lea.vmem %s1, 1505
  %4215 = vst.msk [vmem:[%s4214] sm:$0x20] %vm4203, %v4202
  %s4216 = scalar_lea.vmem %s1, 1760
  %4217 = vst.msk [vmem:[%s4216] sm:$0x40] %vm4203, %v4202
  %s4218 = scalar_lea.vmem %s1, 2015
  %4219 = vst.msk [vmem:[%s4218] sm:$0x80] %vm4203, %v4202
  %v4220 = vld [vmem:[%s0] sm:$0xff]
  %4221 = vrot.lane.b32.xlu0 %v4220, 25
  %v4222 = vpop.permute.xlu0 %4221
  %vm4223 = vcmask 7168
  %s4224 = scalar_lea.vmem %s1, 103
  %4225 = vst.msk [vmem:[%s4224] sm:$0x1] %vm4223, %v4222
  %s4226 = scalar_lea.vmem %s1, 358
  %4227 = vst.msk [vmem:[%s4226] sm:$0x2] %vm4223, %v4222
  %s4228 = scalar_lea.vmem %s1, 613
  %4229 = vst.msk [vmem:[%s4228] sm:$0x4] %vm4223, %v4222
  %s4230 = scalar_lea.vmem %s1, 868
  %4231 = vst.msk [vmem:[%s4230] sm:$0x8] %vm4223, %v4222
  %s4232 = scalar_lea.vmem %s1, 1123
  %4233 = vst.msk [vmem:[%s4232] sm:$0x10] %vm4223, %v4222
  %s4234 = scalar_lea.vmem %s1, 1378
  %4235 = vst.msk [vmem:[%s4234] sm:$0x20] %vm4223, %v4222
  %s4236 = scalar_lea.vmem %s1, 1633
  %4237 = vst.msk [vmem:[%s4236] sm:$0x40] %vm4223, %v4222
  %s4238 = scalar_lea.vmem %s1, 1888
  %4239 = vst.msk [vmem:[%s4238] sm:$0x80] %vm4223, %v4222
  %s4240 = scalar_lea.vmem %s0, 8
  %v4241 = vld [vmem:[%s4240] sm:$0xff]
  %4242 = vrot.lane.b32.xlu0 %v4241, 25
  %v4243 = vpop.permute.xlu0 %4242
  %vm4244 = vcmask 7168
  %s4245 = scalar_lea.vmem %s1, 231
  %4246 = vst.msk [vmem:[%s4245] sm:$0x1] %vm4244, %v4243
  %s4247 = scalar_lea.vmem %s1, 486
  %4248 = vst.msk [vmem:[%s4247] sm:$0x2] %vm4244, %v4243
  %s4249 = scalar_lea.vmem %s1, 741
  %4250 = vst.msk [vmem:[%s4249] sm:$0x4] %vm4244, %v4243
  %s4251 = scalar_lea.vmem %s1, 996
  %4252 = vst.msk [vmem:[%s4251] sm:$0x8] %vm4244, %v4243
  %s4253 = scalar_lea.vmem %s1, 1251
  %4254 = vst.msk [vmem:[%s4253] sm:$0x10] %vm4244, %v4243
  %s4255 = scalar_lea.vmem %s1, 1506
  %4256 = vst.msk [vmem:[%s4255] sm:$0x20] %vm4244, %v4243
  %s4257 = scalar_lea.vmem %s1, 1761
  %4258 = vst.msk [vmem:[%s4257] sm:$0x40] %vm4244, %v4243
  %s4259 = scalar_lea.vmem %s1, 2016
  %4260 = vst.msk [vmem:[%s4259] sm:$0x80] %vm4244, %v4243
  %v4261 = vld [vmem:[%s0] sm:$0xff]
  %4262 = vrot.lane.b32.xlu0 %v4261, 24
  %v4263 = vpop.permute.xlu0 %4262
  %vm4264 = vcmask 7168
  %s4265 = scalar_lea.vmem %s1, 104
  %4266 = vst.msk [vmem:[%s4265] sm:$0x1] %vm4264, %v4263
  %s4267 = scalar_lea.vmem %s1, 359
  %4268 = vst.msk [vmem:[%s4267] sm:$0x2] %vm4264, %v4263
  %s4269 = scalar_lea.vmem %s1, 614
  %4270 = vst.msk [vmem:[%s4269] sm:$0x4] %vm4264, %v4263
  %s4271 = scalar_lea.vmem %s1, 869
  %4272 = vst.msk [vmem:[%s4271] sm:$0x8] %vm4264, %v4263
  %s4273 = scalar_lea.vmem %s1, 1124
  %4274 = vst.msk [vmem:[%s4273] sm:$0x10] %vm4264, %v4263
  %s4275 = scalar_lea.vmem %s1, 1379
  %4276 = vst.msk [vmem:[%s4275] sm:$0x20] %vm4264, %v4263
  %s4277 = scalar_lea.vmem %s1, 1634
  %4278 = vst.msk [vmem:[%s4277] sm:$0x40] %vm4264, %v4263
  %s4279 = scalar_lea.vmem %s1, 1889
  %4280 = vst.msk [vmem:[%s4279] sm:$0x80] %vm4264, %v4263
  %s4281 = scalar_lea.vmem %s0, 8
  %v4282 = vld [vmem:[%s4281] sm:$0xff]
  %4283 = vrot.lane.b32.xlu0 %v4282, 24
  %v4284 = vpop.permute.xlu0 %4283
  %vm4285 = vcmask 7168
  %s4286 = scalar_lea.vmem %s1, 232
  %4287 = vst.msk [vmem:[%s4286] sm:$0x1] %vm4285, %v4284
  %s4288 = scalar_lea.vmem %s1, 487
  %4289 = vst.msk [vmem:[%s4288] sm:$0x2] %vm4285, %v4284
  %s4290 = scalar_lea.vmem %s1, 742
  %4291 = vst.msk [vmem:[%s4290] sm:$0x4] %vm4285, %v4284
  %s4292 = scalar_lea.vmem %s1, 997
  %4293 = vst.msk [vmem:[%s4292] sm:$0x8] %vm4285, %v4284
  %s4294 = scalar_lea.vmem %s1, 1252
  %4295 = vst.msk [vmem:[%s4294] sm:$0x10] %vm4285, %v4284
  %s4296 = scalar_lea.vmem %s1, 1507
  %4297 = vst.msk [vmem:[%s4296] sm:$0x20] %vm4285, %v4284
  %s4298 = scalar_lea.vmem %s1, 1762
  %4299 = vst.msk [vmem:[%s4298] sm:$0x40] %vm4285, %v4284
  %s4300 = scalar_lea.vmem %s1, 2017
  %4301 = vst.msk [vmem:[%s4300] sm:$0x80] %vm4285, %v4284
  %v4302 = vld [vmem:[%s0] sm:$0xff]
  %4303 = vrot.lane.b32.xlu0 %v4302, 23
  %v4304 = vpop.permute.xlu0 %4303
  %vm4305 = vcmask 7168
  %s4306 = scalar_lea.vmem %s1, 105
  %4307 = vst.msk [vmem:[%s4306] sm:$0x1] %vm4305, %v4304
  %s4308 = scalar_lea.vmem %s1, 360
  %4309 = vst.msk [vmem:[%s4308] sm:$0x2] %vm4305, %v4304
  %s4310 = scalar_lea.vmem %s1, 615
  %4311 = vst.msk [vmem:[%s4310] sm:$0x4] %vm4305, %v4304
  %s4312 = scalar_lea.vmem %s1, 870
  %4313 = vst.msk [vmem:[%s4312] sm:$0x8] %vm4305, %v4304
  %s4314 = scalar_lea.vmem %s1, 1125
  %4315 = vst.msk [vmem:[%s4314] sm:$0x10] %vm4305, %v4304
  %s4316 = scalar_lea.vmem %s1, 1380
  %4317 = vst.msk [vmem:[%s4316] sm:$0x20] %vm4305, %v4304
  %s4318 = scalar_lea.vmem %s1, 1635
  %4319 = vst.msk [vmem:[%s4318] sm:$0x40] %vm4305, %v4304
  %s4320 = scalar_lea.vmem %s1, 1890
  %4321 = vst.msk [vmem:[%s4320] sm:$0x80] %vm4305, %v4304
  %s4322 = scalar_lea.vmem %s0, 8
  %v4323 = vld [vmem:[%s4322] sm:$0xff]
  %4324 = vrot.lane.b32.xlu0 %v4323, 23
  %v4325 = vpop.permute.xlu0 %4324
  %vm4326 = vcmask 7168
  %s4327 = scalar_lea.vmem %s1, 233
  %4328 = vst.msk [vmem:[%s4327] sm:$0x1] %vm4326, %v4325
  %s4329 = scalar_lea.vmem %s1, 488
  %4330 = vst.msk [vmem:[%s4329] sm:$0x2] %vm4326, %v4325
  %s4331 = scalar_lea.vmem %s1, 743
  %4332 = vst.msk [vmem:[%s4331] sm:$0x4] %vm4326, %v4325
  %s4333 = scalar_lea.vmem %s1, 998
  %4334 = vst.msk [vmem:[%s4333] sm:$0x8] %vm4326, %v4325
  %s4335 = scalar_lea.vmem %s1, 1253
  %4336 = vst.msk [vmem:[%s4335] sm:$0x10] %vm4326, %v4325
  %s4337 = scalar_lea.vmem %s1, 1508
  %4338 = vst.msk [vmem:[%s4337] sm:$0x20] %vm4326, %v4325
  %s4339 = scalar_lea.vmem %s1, 1763
  %4340 = vst.msk [vmem:[%s4339] sm:$0x40] %vm4326, %v4325
  %s4341 = scalar_lea.vmem %s1, 2018
  %4342 = vst.msk [vmem:[%s4341] sm:$0x80] %vm4326, %v4325
  %v4343 = vld [vmem:[%s0] sm:$0xff]
  %4344 = vrot.lane.b32.xlu0 %v4343, 22
  %v4345 = vpop.permute.xlu0 %4344
  %vm4346 = vcmask 7168
  %s4347 = scalar_lea.vmem %s1, 106
  %4348 = vst.msk [vmem:[%s4347] sm:$0x1] %vm4346, %v4345
  %s4349 = scalar_lea.vmem %s1, 361
  %4350 = vst.msk [vmem:[%s4349] sm:$0x2] %vm4346, %v4345
  %s4351 = scalar_lea.vmem %s1, 616
  %4352 = vst.msk [vmem:[%s4351] sm:$0x4] %vm4346, %v4345
  %s4353 = scalar_lea.vmem %s1, 871
  %4354 = vst.msk [vmem:[%s4353] sm:$0x8] %vm4346, %v4345
  %s4355 = scalar_lea.vmem %s1, 1126
  %4356 = vst.msk [vmem:[%s4355] sm:$0x10] %vm4346, %v4345
  %s4357 = scalar_lea.vmem %s1, 1381
  %4358 = vst.msk [vmem:[%s4357] sm:$0x20] %vm4346, %v4345
  %s4359 = scalar_lea.vmem %s1, 1636
  %4360 = vst.msk [vmem:[%s4359] sm:$0x40] %vm4346, %v4345
  %s4361 = scalar_lea.vmem %s1, 1891
  %4362 = vst.msk [vmem:[%s4361] sm:$0x80] %vm4346, %v4345
  %s4363 = scalar_lea.vmem %s0, 8
  %v4364 = vld [vmem:[%s4363] sm:$0xff]
  %4365 = vrot.lane.b32.xlu0 %v4364, 22
  %v4366 = vpop.permute.xlu0 %4365
  %vm4367 = vcmask 7168
  %s4368 = scalar_lea.vmem %s1, 234
  %4369 = vst.msk [vmem:[%s4368] sm:$0x1] %vm4367, %v4366
  %s4370 = scalar_lea.vmem %s1, 489
  %4371 = vst.msk [vmem:[%s4370] sm:$0x2] %vm4367, %v4366
  %s4372 = scalar_lea.vmem %s1, 744
  %4373 = vst.msk [vmem:[%s4372] sm:$0x4] %vm4367, %v4366
  %s4374 = scalar_lea.vmem %s1, 999
  %4375 = vst.msk [vmem:[%s4374] sm:$0x8] %vm4367, %v4366
  %s4376 = scalar_lea.vmem %s1, 1254
  %4377 = vst.msk [vmem:[%s4376] sm:$0x10] %vm4367, %v4366
  %s4378 = scalar_lea.vmem %s1, 1509
  %4379 = vst.msk [vmem:[%s4378] sm:$0x20] %vm4367, %v4366
  %s4380 = scalar_lea.vmem %s1, 1764
  %4381 = vst.msk [vmem:[%s4380] sm:$0x40] %vm4367, %v4366
  %s4382 = scalar_lea.vmem %s1, 2019
  %4383 = vst.msk [vmem:[%s4382] sm:$0x80] %vm4367, %v4366
  %v4384 = vld [vmem:[%s0] sm:$0xff]
  %4385 = vrot.lane.b32.xlu0 %v4384, 21
  %v4386 = vpop.permute.xlu0 %4385
  %vm4387 = vcmask 7168
  %s4388 = scalar_lea.vmem %s1, 107
  %4389 = vst.msk [vmem:[%s4388] sm:$0x1] %vm4387, %v4386
  %s4390 = scalar_lea.vmem %s1, 362
  %4391 = vst.msk [vmem:[%s4390] sm:$0x2] %vm4387, %v4386
  %s4392 = scalar_lea.vmem %s1, 617
  %4393 = vst.msk [vmem:[%s4392] sm:$0x4] %vm4387, %v4386
  %s4394 = scalar_lea.vmem %s1, 872
  %4395 = vst.msk [vmem:[%s4394] sm:$0x8] %vm4387, %v4386
  %s4396 = scalar_lea.vmem %s1, 1127
  %4397 = vst.msk [vmem:[%s4396] sm:$0x10] %vm4387, %v4386
  %s4398 = scalar_lea.vmem %s1, 1382
  %4399 = vst.msk [vmem:[%s4398] sm:$0x20] %vm4387, %v4386
  %s4400 = scalar_lea.vmem %s1, 1637
  %4401 = vst.msk [vmem:[%s4400] sm:$0x40] %vm4387, %v4386
  %s4402 = scalar_lea.vmem %s1, 1892
  %4403 = vst.msk [vmem:[%s4402] sm:$0x80] %vm4387, %v4386
  %s4404 = scalar_lea.vmem %s0, 8
  %v4405 = vld [vmem:[%s4404] sm:$0xff]
  %4406 = vrot.lane.b32.xlu0 %v4405, 21
  %v4407 = vpop.permute.xlu0 %4406
  %vm4408 = vcmask 7168
  %s4409 = scalar_lea.vmem %s1, 235
  %4410 = vst.msk [vmem:[%s4409] sm:$0x1] %vm4408, %v4407
  %s4411 = scalar_lea.vmem %s1, 490
  %4412 = vst.msk [vmem:[%s4411] sm:$0x2] %vm4408, %v4407
  %s4413 = scalar_lea.vmem %s1, 745
  %4414 = vst.msk [vmem:[%s4413] sm:$0x4] %vm4408, %v4407
  %s4415 = scalar_lea.vmem %s1, 1000
  %4416 = vst.msk [vmem:[%s4415] sm:$0x8] %vm4408, %v4407
  %s4417 = scalar_lea.vmem %s1, 1255
  %4418 = vst.msk [vmem:[%s4417] sm:$0x10] %vm4408, %v4407
  %s4419 = scalar_lea.vmem %s1, 1510
  %4420 = vst.msk [vmem:[%s4419] sm:$0x20] %vm4408, %v4407
  %s4421 = scalar_lea.vmem %s1, 1765
  %4422 = vst.msk [vmem:[%s4421] sm:$0x40] %vm4408, %v4407
  %s4423 = scalar_lea.vmem %s1, 2020
  %4424 = vst.msk [vmem:[%s4423] sm:$0x80] %vm4408, %v4407
  %v4425 = vld [vmem:[%s0] sm:$0xff]
  %4426 = vrot.lane.b32.xlu0 %v4425, 20
  %v4427 = vpop.permute.xlu0 %4426
  %vm4428 = vcmask 7168
  %s4429 = scalar_lea.vmem %s1, 108
  %4430 = vst.msk [vmem:[%s4429] sm:$0x1] %vm4428, %v4427
  %s4431 = scalar_lea.vmem %s1, 363
  %4432 = vst.msk [vmem:[%s4431] sm:$0x2] %vm4428, %v4427
  %s4433 = scalar_lea.vmem %s1, 618
  %4434 = vst.msk [vmem:[%s4433] sm:$0x4] %vm4428, %v4427
  %s4435 = scalar_lea.vmem %s1, 873
  %4436 = vst.msk [vmem:[%s4435] sm:$0x8] %vm4428, %v4427
  %s4437 = scalar_lea.vmem %s1, 1128
  %4438 = vst.msk [vmem:[%s4437] sm:$0x10] %vm4428, %v4427
  %s4439 = scalar_lea.vmem %s1, 1383
  %4440 = vst.msk [vmem:[%s4439] sm:$0x20] %vm4428, %v4427
  %s4441 = scalar_lea.vmem %s1, 1638
  %4442 = vst.msk [vmem:[%s4441] sm:$0x40] %vm4428, %v4427
  %s4443 = scalar_lea.vmem %s1, 1893
  %4444 = vst.msk [vmem:[%s4443] sm:$0x80] %vm4428, %v4427
  %s4445 = scalar_lea.vmem %s0, 8
  %v4446 = vld [vmem:[%s4445] sm:$0xff]
  %4447 = vrot.lane.b32.xlu0 %v4446, 20
  %v4448 = vpop.permute.xlu0 %4447
  %vm4449 = vcmask 7168
  %s4450 = scalar_lea.vmem %s1, 236
  %4451 = vst.msk [vmem:[%s4450] sm:$0x1] %vm4449, %v4448
  %s4452 = scalar_lea.vmem %s1, 491
  %4453 = vst.msk [vmem:[%s4452] sm:$0x2] %vm4449, %v4448
  %s4454 = scalar_lea.vmem %s1, 746
  %4455 = vst.msk [vmem:[%s4454] sm:$0x4] %vm4449, %v4448
  %s4456 = scalar_lea.vmem %s1, 1001
  %4457 = vst.msk [vmem:[%s4456] sm:$0x8] %vm4449, %v4448
  %s4458 = scalar_lea.vmem %s1, 1256
  %4459 = vst.msk [vmem:[%s4458] sm:$0x10] %vm4449, %v4448
  %s4460 = scalar_lea.vmem %s1, 1511
  %4461 = vst.msk [vmem:[%s4460] sm:$0x20] %vm4449, %v4448
  %s4462 = scalar_lea.vmem %s1, 1766
  %4463 = vst.msk [vmem:[%s4462] sm:$0x40] %vm4449, %v4448
  %s4464 = scalar_lea.vmem %s1, 2021
  %4465 = vst.msk [vmem:[%s4464] sm:$0x80] %vm4449, %v4448
  %v4466 = vld [vmem:[%s0] sm:$0xff]
  %4467 = vrot.lane.b32.xlu0 %v4466, 19
  %v4468 = vpop.permute.xlu0 %4467
  %vm4469 = vcmask 7168
  %s4470 = scalar_lea.vmem %s1, 109
  %4471 = vst.msk [vmem:[%s4470] sm:$0x1] %vm4469, %v4468
  %s4472 = scalar_lea.vmem %s1, 364
  %4473 = vst.msk [vmem:[%s4472] sm:$0x2] %vm4469, %v4468
  %s4474 = scalar_lea.vmem %s1, 619
  %4475 = vst.msk [vmem:[%s4474] sm:$0x4] %vm4469, %v4468
  %s4476 = scalar_lea.vmem %s1, 874
  %4477 = vst.msk [vmem:[%s4476] sm:$0x8] %vm4469, %v4468
  %s4478 = scalar_lea.vmem %s1, 1129
  %4479 = vst.msk [vmem:[%s4478] sm:$0x10] %vm4469, %v4468
  %s4480 = scalar_lea.vmem %s1, 1384
  %4481 = vst.msk [vmem:[%s4480] sm:$0x20] %vm4469, %v4468
  %s4482 = scalar_lea.vmem %s1, 1639
  %4483 = vst.msk [vmem:[%s4482] sm:$0x40] %vm4469, %v4468
  %s4484 = scalar_lea.vmem %s1, 1894
  %4485 = vst.msk [vmem:[%s4484] sm:$0x80] %vm4469, %v4468
  %s4486 = scalar_lea.vmem %s0, 8
  %v4487 = vld [vmem:[%s4486] sm:$0xff]
  %4488 = vrot.lane.b32.xlu0 %v4487, 19
  %v4489 = vpop.permute.xlu0 %4488
  %vm4490 = vcmask 7168
  %s4491 = scalar_lea.vmem %s1, 237
  %4492 = vst.msk [vmem:[%s4491] sm:$0x1] %vm4490, %v4489
  %s4493 = scalar_lea.vmem %s1, 492
  %4494 = vst.msk [vmem:[%s4493] sm:$0x2] %vm4490, %v4489
  %s4495 = scalar_lea.vmem %s1, 747
  %4496 = vst.msk [vmem:[%s4495] sm:$0x4] %vm4490, %v4489
  %s4497 = scalar_lea.vmem %s1, 1002
  %4498 = vst.msk [vmem:[%s4497] sm:$0x8] %vm4490, %v4489
  %s4499 = scalar_lea.vmem %s1, 1257
  %4500 = vst.msk [vmem:[%s4499] sm:$0x10] %vm4490, %v4489
  %s4501 = scalar_lea.vmem %s1, 1512
  %4502 = vst.msk [vmem:[%s4501] sm:$0x20] %vm4490, %v4489
  %s4503 = scalar_lea.vmem %s1, 1767
  %4504 = vst.msk [vmem:[%s4503] sm:$0x40] %vm4490, %v4489
  %s4505 = scalar_lea.vmem %s1, 2022
  %4506 = vst.msk [vmem:[%s4505] sm:$0x80] %vm4490, %v4489
  %v4507 = vld [vmem:[%s0] sm:$0xff]
  %4508 = vrot.lane.b32.xlu0 %v4507, 18
  %v4509 = vpop.permute.xlu0 %4508
  %vm4510 = vcmask 7168
  %s4511 = scalar_lea.vmem %s1, 110
  %4512 = vst.msk [vmem:[%s4511] sm:$0x1] %vm4510, %v4509
  %s4513 = scalar_lea.vmem %s1, 365
  %4514 = vst.msk [vmem:[%s4513] sm:$0x2] %vm4510, %v4509
  %s4515 = scalar_lea.vmem %s1, 620
  %4516 = vst.msk [vmem:[%s4515] sm:$0x4] %vm4510, %v4509
  %s4517 = scalar_lea.vmem %s1, 875
  %4518 = vst.msk [vmem:[%s4517] sm:$0x8] %vm4510, %v4509
  %s4519 = scalar_lea.vmem %s1, 1130
  %4520 = vst.msk [vmem:[%s4519] sm:$0x10] %vm4510, %v4509
  %s4521 = scalar_lea.vmem %s1, 1385
  %4522 = vst.msk [vmem:[%s4521] sm:$0x20] %vm4510, %v4509
  %s4523 = scalar_lea.vmem %s1, 1640
  %4524 = vst.msk [vmem:[%s4523] sm:$0x40] %vm4510, %v4509
  %s4525 = scalar_lea.vmem %s1, 1895
  %4526 = vst.msk [vmem:[%s4525] sm:$0x80] %vm4510, %v4509
  %s4527 = scalar_lea.vmem %s0, 8
  %v4528 = vld [vmem:[%s4527] sm:$0xff]
  %4529 = vrot.lane.b32.xlu0 %v4528, 18
  %v4530 = vpop.permute.xlu0 %4529
  %vm4531 = vcmask 7168
  %s4532 = scalar_lea.vmem %s1, 238
  %4533 = vst.msk [vmem:[%s4532] sm:$0x1] %vm4531, %v4530
  %s4534 = scalar_lea.vmem %s1, 493
  %4535 = vst.msk [vmem:[%s4534] sm:$0x2] %vm4531, %v4530
  %s4536 = scalar_lea.vmem %s1, 748
  %4537 = vst.msk [vmem:[%s4536] sm:$0x4] %vm4531, %v4530
  %s4538 = scalar_lea.vmem %s1, 1003
  %4539 = vst.msk [vmem:[%s4538] sm:$0x8] %vm4531, %v4530
  %s4540 = scalar_lea.vmem %s1, 1258
  %4541 = vst.msk [vmem:[%s4540] sm:$0x10] %vm4531, %v4530
  %s4542 = scalar_lea.vmem %s1, 1513
  %4543 = vst.msk [vmem:[%s4542] sm:$0x20] %vm4531, %v4530
  %s4544 = scalar_lea.vmem %s1, 1768
  %4545 = vst.msk [vmem:[%s4544] sm:$0x40] %vm4531, %v4530
  %s4546 = scalar_lea.vmem %s1, 2023
  %4547 = vst.msk [vmem:[%s4546] sm:$0x80] %vm4531, %v4530
  %v4548 = vld [vmem:[%s0] sm:$0xff]
  %4549 = vrot.lane.b32.xlu0 %v4548, 17
  %v4550 = vpop.permute.xlu0 %4549
  %vm4551 = vcmask 7168
  %s4552 = scalar_lea.vmem %s1, 111
  %4553 = vst.msk [vmem:[%s4552] sm:$0x1] %vm4551, %v4550
  %s4554 = scalar_lea.vmem %s1, 366
  %4555 = vst.msk [vmem:[%s4554] sm:$0x2] %vm4551, %v4550
  %s4556 = scalar_lea.vmem %s1, 621
  %4557 = vst.msk [vmem:[%s4556] sm:$0x4] %vm4551, %v4550
  %s4558 = scalar_lea.vmem %s1, 876
  %4559 = vst.msk [vmem:[%s4558] sm:$0x8] %vm4551, %v4550
  %s4560 = scalar_lea.vmem %s1, 1131
  %4561 = vst.msk [vmem:[%s4560] sm:$0x10] %vm4551, %v4550
  %s4562 = scalar_lea.vmem %s1, 1386
  %4563 = vst.msk [vmem:[%s4562] sm:$0x20] %vm4551, %v4550
  %s4564 = scalar_lea.vmem %s1, 1641
  %4565 = vst.msk [vmem:[%s4564] sm:$0x40] %vm4551, %v4550
  %s4566 = scalar_lea.vmem %s1, 1896
  %4567 = vst.msk [vmem:[%s4566] sm:$0x80] %vm4551, %v4550
  %s4568 = scalar_lea.vmem %s0, 8
  %v4569 = vld [vmem:[%s4568] sm:$0xff]
  %4570 = vrot.lane.b32.xlu0 %v4569, 17
  %v4571 = vpop.permute.xlu0 %4570
  %vm4572 = vcmask 7168
  %s4573 = scalar_lea.vmem %s1, 239
  %4574 = vst.msk [vmem:[%s4573] sm:$0x1] %vm4572, %v4571
  %s4575 = scalar_lea.vmem %s1, 494
  %4576 = vst.msk [vmem:[%s4575] sm:$0x2] %vm4572, %v4571
  %s4577 = scalar_lea.vmem %s1, 749
  %4578 = vst.msk [vmem:[%s4577] sm:$0x4] %vm4572, %v4571
  %s4579 = scalar_lea.vmem %s1, 1004
  %4580 = vst.msk [vmem:[%s4579] sm:$0x8] %vm4572, %v4571
  %s4581 = scalar_lea.vmem %s1, 1259
  %4582 = vst.msk [vmem:[%s4581] sm:$0x10] %vm4572, %v4571
  %s4583 = scalar_lea.vmem %s1, 1514
  %4584 = vst.msk [vmem:[%s4583] sm:$0x20] %vm4572, %v4571
  %s4585 = scalar_lea.vmem %s1, 1769
  %4586 = vst.msk [vmem:[%s4585] sm:$0x40] %vm4572, %v4571
  %s4587 = scalar_lea.vmem %s1, 2024
  %4588 = vst.msk [vmem:[%s4587] sm:$0x80] %vm4572, %v4571
  %v4589 = vld [vmem:[%s0] sm:$0xff]
  %4590 = vrot.lane.b32.xlu0 %v4589, 16
  %v4591 = vpop.permute.xlu0 %4590
  %vm4592 = vcmask 7168
  %s4593 = scalar_lea.vmem %s1, 112
  %4594 = vst.msk [vmem:[%s4593] sm:$0x1] %vm4592, %v4591
  %s4595 = scalar_lea.vmem %s1, 367
  %4596 = vst.msk [vmem:[%s4595] sm:$0x2] %vm4592, %v4591
  %s4597 = scalar_lea.vmem %s1, 622
  %4598 = vst.msk [vmem:[%s4597] sm:$0x4] %vm4592, %v4591
  %s4599 = scalar_lea.vmem %s1, 877
  %4600 = vst.msk [vmem:[%s4599] sm:$0x8] %vm4592, %v4591
  %s4601 = scalar_lea.vmem %s1, 1132
  %4602 = vst.msk [vmem:[%s4601] sm:$0x10] %vm4592, %v4591
  %s4603 = scalar_lea.vmem %s1, 1387
  %4604 = vst.msk [vmem:[%s4603] sm:$0x20] %vm4592, %v4591
  %s4605 = scalar_lea.vmem %s1, 1642
  %4606 = vst.msk [vmem:[%s4605] sm:$0x40] %vm4592, %v4591
  %s4607 = scalar_lea.vmem %s1, 1897
  %4608 = vst.msk [vmem:[%s4607] sm:$0x80] %vm4592, %v4591
  %s4609 = scalar_lea.vmem %s0, 8
  %v4610 = vld [vmem:[%s4609] sm:$0xff]
  %4611 = vrot.lane.b32.xlu0 %v4610, 16
  %v4612 = vpop.permute.xlu0 %4611
  %vm4613 = vcmask 7168
  %s4614 = scalar_lea.vmem %s1, 240
  %4615 = vst.msk [vmem:[%s4614] sm:$0x1] %vm4613, %v4612
  %s4616 = scalar_lea.vmem %s1, 495
  %4617 = vst.msk [vmem:[%s4616] sm:$0x2] %vm4613, %v4612
  %s4618 = scalar_lea.vmem %s1, 750
  %4619 = vst.msk [vmem:[%s4618] sm:$0x4] %vm4613, %v4612
  %s4620 = scalar_lea.vmem %s1, 1005
  %4621 = vst.msk [vmem:[%s4620] sm:$0x8] %vm4613, %v4612
  %s4622 = scalar_lea.vmem %s1, 1260
  %4623 = vst.msk [vmem:[%s4622] sm:$0x10] %vm4613, %v4612
  %s4624 = scalar_lea.vmem %s1, 1515
  %4625 = vst.msk [vmem:[%s4624] sm:$0x20] %vm4613, %v4612
  %s4626 = scalar_lea.vmem %s1, 1770
  %4627 = vst.msk [vmem:[%s4626] sm:$0x40] %vm4613, %v4612
  %s4628 = scalar_lea.vmem %s1, 2025
  %4629 = vst.msk [vmem:[%s4628] sm:$0x80] %vm4613, %v4612
  %v4630 = vld [vmem:[%s0] sm:$0xff]
  %4631 = vrot.lane.b32.xlu0 %v4630, 15
  %v4632 = vpop.permute.xlu0 %4631
  %vm4633 = vcmask 7168
  %s4634 = scalar_lea.vmem %s1, 113
  %4635 = vst.msk [vmem:[%s4634] sm:$0x1] %vm4633, %v4632
  %s4636 = scalar_lea.vmem %s1, 368
  %4637 = vst.msk [vmem:[%s4636] sm:$0x2] %vm4633, %v4632
  %s4638 = scalar_lea.vmem %s1, 623
  %4639 = vst.msk [vmem:[%s4638] sm:$0x4] %vm4633, %v4632
  %s4640 = scalar_lea.vmem %s1, 878
  %4641 = vst.msk [vmem:[%s4640] sm:$0x8] %vm4633, %v4632
  %s4642 = scalar_lea.vmem %s1, 1133
  %4643 = vst.msk [vmem:[%s4642] sm:$0x10] %vm4633, %v4632
  %s4644 = scalar_lea.vmem %s1, 1388
  %4645 = vst.msk [vmem:[%s4644] sm:$0x20] %vm4633, %v4632
  %s4646 = scalar_lea.vmem %s1, 1643
  %4647 = vst.msk [vmem:[%s4646] sm:$0x40] %vm4633, %v4632
  %s4648 = scalar_lea.vmem %s1, 1898
  %4649 = vst.msk [vmem:[%s4648] sm:$0x80] %vm4633, %v4632
  %s4650 = scalar_lea.vmem %s0, 8
  %v4651 = vld [vmem:[%s4650] sm:$0xff]
  %4652 = vrot.lane.b32.xlu0 %v4651, 15
  %v4653 = vpop.permute.xlu0 %4652
  %vm4654 = vcmask 7168
  %s4655 = scalar_lea.vmem %s1, 241
  %4656 = vst.msk [vmem:[%s4655] sm:$0x1] %vm4654, %v4653
  %s4657 = scalar_lea.vmem %s1, 496
  %4658 = vst.msk [vmem:[%s4657] sm:$0x2] %vm4654, %v4653
  %s4659 = scalar_lea.vmem %s1, 751
  %4660 = vst.msk [vmem:[%s4659] sm:$0x4] %vm4654, %v4653
  %s4661 = scalar_lea.vmem %s1, 1006
  %4662 = vst.msk [vmem:[%s4661] sm:$0x8] %vm4654, %v4653
  %s4663 = scalar_lea.vmem %s1, 1261
  %4664 = vst.msk [vmem:[%s4663] sm:$0x10] %vm4654, %v4653
  %s4665 = scalar_lea.vmem %s1, 1516
  %4666 = vst.msk [vmem:[%s4665] sm:$0x20] %vm4654, %v4653
  %s4667 = scalar_lea.vmem %s1, 1771
  %4668 = vst.msk [vmem:[%s4667] sm:$0x40] %vm4654, %v4653
  %s4669 = scalar_lea.vmem %s1, 2026
  %4670 = vst.msk [vmem:[%s4669] sm:$0x80] %vm4654, %v4653
  %v4671 = vld [vmem:[%s0] sm:$0xff]
  %4672 = vrot.lane.b32.xlu0 %v4671, 14
  %v4673 = vpop.permute.xlu0 %4672
  %vm4674 = vcmask 7168
  %s4675 = scalar_lea.vmem %s1, 114
  %4676 = vst.msk [vmem:[%s4675] sm:$0x1] %vm4674, %v4673
  %s4677 = scalar_lea.vmem %s1, 369
  %4678 = vst.msk [vmem:[%s4677] sm:$0x2] %vm4674, %v4673
  %s4679 = scalar_lea.vmem %s1, 624
  %4680 = vst.msk [vmem:[%s4679] sm:$0x4] %vm4674, %v4673
  %s4681 = scalar_lea.vmem %s1, 879
  %4682 = vst.msk [vmem:[%s4681] sm:$0x8] %vm4674, %v4673
  %s4683 = scalar_lea.vmem %s1, 1134
  %4684 = vst.msk [vmem:[%s4683] sm:$0x10] %vm4674, %v4673
  %s4685 = scalar_lea.vmem %s1, 1389
  %4686 = vst.msk [vmem:[%s4685] sm:$0x20] %vm4674, %v4673
  %s4687 = scalar_lea.vmem %s1, 1644
  %4688 = vst.msk [vmem:[%s4687] sm:$0x40] %vm4674, %v4673
  %s4689 = scalar_lea.vmem %s1, 1899
  %4690 = vst.msk [vmem:[%s4689] sm:$0x80] %vm4674, %v4673
  %s4691 = scalar_lea.vmem %s0, 8
  %v4692 = vld [vmem:[%s4691] sm:$0xff]
  %4693 = vrot.lane.b32.xlu0 %v4692, 14
  %v4694 = vpop.permute.xlu0 %4693
  %vm4695 = vcmask 7168
  %s4696 = scalar_lea.vmem %s1, 242
  %4697 = vst.msk [vmem:[%s4696] sm:$0x1] %vm4695, %v4694
  %s4698 = scalar_lea.vmem %s1, 497
  %4699 = vst.msk [vmem:[%s4698] sm:$0x2] %vm4695, %v4694
  %s4700 = scalar_lea.vmem %s1, 752
  %4701 = vst.msk [vmem:[%s4700] sm:$0x4] %vm4695, %v4694
  %s4702 = scalar_lea.vmem %s1, 1007
  %4703 = vst.msk [vmem:[%s4702] sm:$0x8] %vm4695, %v4694
  %s4704 = scalar_lea.vmem %s1, 1262
  %4705 = vst.msk [vmem:[%s4704] sm:$0x10] %vm4695, %v4694
  %s4706 = scalar_lea.vmem %s1, 1517
  %4707 = vst.msk [vmem:[%s4706] sm:$0x20] %vm4695, %v4694
  %s4708 = scalar_lea.vmem %s1, 1772
  %4709 = vst.msk [vmem:[%s4708] sm:$0x40] %vm4695, %v4694
  %s4710 = scalar_lea.vmem %s1, 2027
  %4711 = vst.msk [vmem:[%s4710] sm:$0x80] %vm4695, %v4694
  %v4712 = vld [vmem:[%s0] sm:$0xff]
  %4713 = vrot.lane.b32.xlu0 %v4712, 13
  %v4714 = vpop.permute.xlu0 %4713
  %vm4715 = vcmask 7168
  %s4716 = scalar_lea.vmem %s1, 115
  %4717 = vst.msk [vmem:[%s4716] sm:$0x1] %vm4715, %v4714
  %s4718 = scalar_lea.vmem %s1, 370
  %4719 = vst.msk [vmem:[%s4718] sm:$0x2] %vm4715, %v4714
  %s4720 = scalar_lea.vmem %s1, 625
  %4721 = vst.msk [vmem:[%s4720] sm:$0x4] %vm4715, %v4714
  %s4722 = scalar_lea.vmem %s1, 880
  %4723 = vst.msk [vmem:[%s4722] sm:$0x8] %vm4715, %v4714
  %s4724 = scalar_lea.vmem %s1, 1135
  %4725 = vst.msk [vmem:[%s4724] sm:$0x10] %vm4715, %v4714
  %s4726 = scalar_lea.vmem %s1, 1390
  %4727 = vst.msk [vmem:[%s4726] sm:$0x20] %vm4715, %v4714
  %s4728 = scalar_lea.vmem %s1, 1645
  %4729 = vst.msk [vmem:[%s4728] sm:$0x40] %vm4715, %v4714
  %s4730 = scalar_lea.vmem %s1, 1900
  %4731 = vst.msk [vmem:[%s4730] sm:$0x80] %vm4715, %v4714
  %s4732 = scalar_lea.vmem %s0, 8
  %v4733 = vld [vmem:[%s4732] sm:$0xff]
  %4734 = vrot.lane.b32.xlu0 %v4733, 13
  %v4735 = vpop.permute.xlu0 %4734
  %vm4736 = vcmask 7168
  %s4737 = scalar_lea.vmem %s1, 243
  %4738 = vst.msk [vmem:[%s4737] sm:$0x1] %vm4736, %v4735
  %s4739 = scalar_lea.vmem %s1, 498
  %4740 = vst.msk [vmem:[%s4739] sm:$0x2] %vm4736, %v4735
  %s4741 = scalar_lea.vmem %s1, 753
  %4742 = vst.msk [vmem:[%s4741] sm:$0x4] %vm4736, %v4735
  %s4743 = scalar_lea.vmem %s1, 1008
  %4744 = vst.msk [vmem:[%s4743] sm:$0x8] %vm4736, %v4735
  %s4745 = scalar_lea.vmem %s1, 1263
  %4746 = vst.msk [vmem:[%s4745] sm:$0x10] %vm4736, %v4735
  %s4747 = scalar_lea.vmem %s1, 1518
  %4748 = vst.msk [vmem:[%s4747] sm:$0x20] %vm4736, %v4735
  %s4749 = scalar_lea.vmem %s1, 1773
  %4750 = vst.msk [vmem:[%s4749] sm:$0x40] %vm4736, %v4735
  %s4751 = scalar_lea.vmem %s1, 2028
  %4752 = vst.msk [vmem:[%s4751] sm:$0x80] %vm4736, %v4735
  %v4753 = vld [vmem:[%s0] sm:$0xff]
  %4754 = vrot.lane.b32.xlu0 %v4753, 12
  %v4755 = vpop.permute.xlu0 %4754
  %vm4756 = vcmask 7168
  %s4757 = scalar_lea.vmem %s1, 116
  %4758 = vst.msk [vmem:[%s4757] sm:$0x1] %vm4756, %v4755
  %s4759 = scalar_lea.vmem %s1, 371
  %4760 = vst.msk [vmem:[%s4759] sm:$0x2] %vm4756, %v4755
  %s4761 = scalar_lea.vmem %s1, 626
  %4762 = vst.msk [vmem:[%s4761] sm:$0x4] %vm4756, %v4755
  %s4763 = scalar_lea.vmem %s1, 881
  %4764 = vst.msk [vmem:[%s4763] sm:$0x8] %vm4756, %v4755
  %s4765 = scalar_lea.vmem %s1, 1136
  %4766 = vst.msk [vmem:[%s4765] sm:$0x10] %vm4756, %v4755
  %s4767 = scalar_lea.vmem %s1, 1391
  %4768 = vst.msk [vmem:[%s4767] sm:$0x20] %vm4756, %v4755
  %s4769 = scalar_lea.vmem %s1, 1646
  %4770 = vst.msk [vmem:[%s4769] sm:$0x40] %vm4756, %v4755
  %s4771 = scalar_lea.vmem %s1, 1901
  %4772 = vst.msk [vmem:[%s4771] sm:$0x80] %vm4756, %v4755
  %s4773 = scalar_lea.vmem %s0, 8
  %v4774 = vld [vmem:[%s4773] sm:$0xff]
  %4775 = vrot.lane.b32.xlu0 %v4774, 12
  %v4776 = vpop.permute.xlu0 %4775
  %vm4777 = vcmask 7168
  %s4778 = scalar_lea.vmem %s1, 244
  %4779 = vst.msk [vmem:[%s4778] sm:$0x1] %vm4777, %v4776
  %s4780 = scalar_lea.vmem %s1, 499
  %4781 = vst.msk [vmem:[%s4780] sm:$0x2] %vm4777, %v4776
  %s4782 = scalar_lea.vmem %s1, 754
  %4783 = vst.msk [vmem:[%s4782] sm:$0x4] %vm4777, %v4776
  %s4784 = scalar_lea.vmem %s1, 1009
  %4785 = vst.msk [vmem:[%s4784] sm:$0x8] %vm4777, %v4776
  %s4786 = scalar_lea.vmem %s1, 1264
  %4787 = vst.msk [vmem:[%s4786] sm:$0x10] %vm4777, %v4776
  %s4788 = scalar_lea.vmem %s1, 1519
  %4789 = vst.msk [vmem:[%s4788] sm:$0x20] %vm4777, %v4776
  %s4790 = scalar_lea.vmem %s1, 1774
  %4791 = vst.msk [vmem:[%s4790] sm:$0x40] %vm4777, %v4776
  %s4792 = scalar_lea.vmem %s1, 2029
  %4793 = vst.msk [vmem:[%s4792] sm:$0x80] %vm4777, %v4776
  %v4794 = vld [vmem:[%s0] sm:$0xff]
  %4795 = vrot.lane.b32.xlu0 %v4794, 11
  %v4796 = vpop.permute.xlu0 %4795
  %vm4797 = vcmask 7168
  %s4798 = scalar_lea.vmem %s1, 117
  %4799 = vst.msk [vmem:[%s4798] sm:$0x1] %vm4797, %v4796
  %s4800 = scalar_lea.vmem %s1, 372
  %4801 = vst.msk [vmem:[%s4800] sm:$0x2] %vm4797, %v4796
  %s4802 = scalar_lea.vmem %s1, 627
  %4803 = vst.msk [vmem:[%s4802] sm:$0x4] %vm4797, %v4796
  %s4804 = scalar_lea.vmem %s1, 882
  %4805 = vst.msk [vmem:[%s4804] sm:$0x8] %vm4797, %v4796
  %s4806 = scalar_lea.vmem %s1, 1137
  %4807 = vst.msk [vmem:[%s4806] sm:$0x10] %vm4797, %v4796
  %s4808 = scalar_lea.vmem %s1, 1392
  %4809 = vst.msk [vmem:[%s4808] sm:$0x20] %vm4797, %v4796
  %s4810 = scalar_lea.vmem %s1, 1647
  %4811 = vst.msk [vmem:[%s4810] sm:$0x40] %vm4797, %v4796
  %s4812 = scalar_lea.vmem %s1, 1902
  %4813 = vst.msk [vmem:[%s4812] sm:$0x80] %vm4797, %v4796
  %s4814 = scalar_lea.vmem %s0, 8
  %v4815 = vld [vmem:[%s4814] sm:$0xff]
  %4816 = vrot.lane.b32.xlu0 %v4815, 11
  %v4817 = vpop.permute.xlu0 %4816
  %vm4818 = vcmask 7168
  %s4819 = scalar_lea.vmem %s1, 245
  %4820 = vst.msk [vmem:[%s4819] sm:$0x1] %vm4818, %v4817
  %s4821 = scalar_lea.vmem %s1, 500
  %4822 = vst.msk [vmem:[%s4821] sm:$0x2] %vm4818, %v4817
  %s4823 = scalar_lea.vmem %s1, 755
  %4824 = vst.msk [vmem:[%s4823] sm:$0x4] %vm4818, %v4817
  %s4825 = scalar_lea.vmem %s1, 1010
  %4826 = vst.msk [vmem:[%s4825] sm:$0x8] %vm4818, %v4817
  %s4827 = scalar_lea.vmem %s1, 1265
  %4828 = vst.msk [vmem:[%s4827] sm:$0x10] %vm4818, %v4817
  %s4829 = scalar_lea.vmem %s1, 1520
  %4830 = vst.msk [vmem:[%s4829] sm:$0x20] %vm4818, %v4817
  %s4831 = scalar_lea.vmem %s1, 1775
  %4832 = vst.msk [vmem:[%s4831] sm:$0x40] %vm4818, %v4817
  %s4833 = scalar_lea.vmem %s1, 2030
  %4834 = vst.msk [vmem:[%s4833] sm:$0x80] %vm4818, %v4817
  %v4835 = vld [vmem:[%s0] sm:$0xff]
  %4836 = vrot.lane.b32.xlu0 %v4835, 10
  %v4837 = vpop.permute.xlu0 %4836
  %vm4838 = vcmask 7168
  %s4839 = scalar_lea.vmem %s1, 118
  %4840 = vst.msk [vmem:[%s4839] sm:$0x1] %vm4838, %v4837
  %s4841 = scalar_lea.vmem %s1, 373
  %4842 = vst.msk [vmem:[%s4841] sm:$0x2] %vm4838, %v4837
  %s4843 = scalar_lea.vmem %s1, 628
  %4844 = vst.msk [vmem:[%s4843] sm:$0x4] %vm4838, %v4837
  %s4845 = scalar_lea.vmem %s1, 883
  %4846 = vst.msk [vmem:[%s4845] sm:$0x8] %vm4838, %v4837
  %s4847 = scalar_lea.vmem %s1, 1138
  %4848 = vst.msk [vmem:[%s4847] sm:$0x10] %vm4838, %v4837
  %s4849 = scalar_lea.vmem %s1, 1393
  %4850 = vst.msk [vmem:[%s4849] sm:$0x20] %vm4838, %v4837
  %s4851 = scalar_lea.vmem %s1, 1648
  %4852 = vst.msk [vmem:[%s4851] sm:$0x40] %vm4838, %v4837
  %s4853 = scalar_lea.vmem %s1, 1903
  %4854 = vst.msk [vmem:[%s4853] sm:$0x80] %vm4838, %v4837
  %s4855 = scalar_lea.vmem %s0, 8
  %v4856 = vld [vmem:[%s4855] sm:$0xff]
  %4857 = vrot.lane.b32.xlu0 %v4856, 10
  %v4858 = vpop.permute.xlu0 %4857
  %vm4859 = vcmask 7168
  %s4860 = scalar_lea.vmem %s1, 246
  %4861 = vst.msk [vmem:[%s4860] sm:$0x1] %vm4859, %v4858
  %s4862 = scalar_lea.vmem %s1, 501
  %4863 = vst.msk [vmem:[%s4862] sm:$0x2] %vm4859, %v4858
  %s4864 = scalar_lea.vmem %s1, 756
  %4865 = vst.msk [vmem:[%s4864] sm:$0x4] %vm4859, %v4858
  %s4866 = scalar_lea.vmem %s1, 1011
  %4867 = vst.msk [vmem:[%s4866] sm:$0x8] %vm4859, %v4858
  %s4868 = scalar_lea.vmem %s1, 1266
  %4869 = vst.msk [vmem:[%s4868] sm:$0x10] %vm4859, %v4858
  %s4870 = scalar_lea.vmem %s1, 1521
  %4871 = vst.msk [vmem:[%s4870] sm:$0x20] %vm4859, %v4858
  %s4872 = scalar_lea.vmem %s1, 1776
  %4873 = vst.msk [vmem:[%s4872] sm:$0x40] %vm4859, %v4858
  %s4874 = scalar_lea.vmem %s1, 2031
  %4875 = vst.msk [vmem:[%s4874] sm:$0x80] %vm4859, %v4858
  %v4876 = vld [vmem:[%s0] sm:$0xff]
  %4877 = vrot.lane.b32.xlu0 %v4876, 9
  %v4878 = vpop.permute.xlu0 %4877
  %vm4879 = vcmask 7168
  %s4880 = scalar_lea.vmem %s1, 119
  %4881 = vst.msk [vmem:[%s4880] sm:$0x1] %vm4879, %v4878
  %s4882 = scalar_lea.vmem %s1, 374
  %4883 = vst.msk [vmem:[%s4882] sm:$0x2] %vm4879, %v4878
  %s4884 = scalar_lea.vmem %s1, 629
  %4885 = vst.msk [vmem:[%s4884] sm:$0x4] %vm4879, %v4878
  %s4886 = scalar_lea.vmem %s1, 884
  %4887 = vst.msk [vmem:[%s4886] sm:$0x8] %vm4879, %v4878
  %s4888 = scalar_lea.vmem %s1, 1139
  %4889 = vst.msk [vmem:[%s4888] sm:$0x10] %vm4879, %v4878
  %s4890 = scalar_lea.vmem %s1, 1394
  %4891 = vst.msk [vmem:[%s4890] sm:$0x20] %vm4879, %v4878
  %s4892 = scalar_lea.vmem %s1, 1649
  %4893 = vst.msk [vmem:[%s4892] sm:$0x40] %vm4879, %v4878
  %s4894 = scalar_lea.vmem %s1, 1904
  %4895 = vst.msk [vmem:[%s4894] sm:$0x80] %vm4879, %v4878
  %s4896 = scalar_lea.vmem %s0, 8
  %v4897 = vld [vmem:[%s4896] sm:$0xff]
  %4898 = vrot.lane.b32.xlu0 %v4897, 9
  %v4899 = vpop.permute.xlu0 %4898
  %vm4900 = vcmask 7168
  %s4901 = scalar_lea.vmem %s1, 247
  %4902 = vst.msk [vmem:[%s4901] sm:$0x1] %vm4900, %v4899
  %s4903 = scalar_lea.vmem %s1, 502
  %4904 = vst.msk [vmem:[%s4903] sm:$0x2] %vm4900, %v4899
  %s4905 = scalar_lea.vmem %s1, 757
  %4906 = vst.msk [vmem:[%s4905] sm:$0x4] %vm4900, %v4899
  %s4907 = scalar_lea.vmem %s1, 1012
  %4908 = vst.msk [vmem:[%s4907] sm:$0x8] %vm4900, %v4899
  %s4909 = scalar_lea.vmem %s1, 1267
  %4910 = vst.msk [vmem:[%s4909] sm:$0x10] %vm4900, %v4899
  %s4911 = scalar_lea.vmem %s1, 1522
  %4912 = vst.msk [vmem:[%s4911] sm:$0x20] %vm4900, %v4899
  %s4913 = scalar_lea.vmem %s1, 1777
  %4914 = vst.msk [vmem:[%s4913] sm:$0x40] %vm4900, %v4899
  %s4915 = scalar_lea.vmem %s1, 2032
  %4916 = vst.msk [vmem:[%s4915] sm:$0x80] %vm4900, %v4899
  %v4917 = vld [vmem:[%s0] sm:$0xff]
  %4918 = vrot.lane.b32.xlu0 %v4917, 8
  %v4919 = vpop.permute.xlu0 %4918
  %vm4920 = vcmask 7168
  %s4921 = scalar_lea.vmem %s1, 120
  %4922 = vst.msk [vmem:[%s4921] sm:$0x1] %vm4920, %v4919
  %s4923 = scalar_lea.vmem %s1, 375
  %4924 = vst.msk [vmem:[%s4923] sm:$0x2] %vm4920, %v4919
  %s4925 = scalar_lea.vmem %s1, 630
  %4926 = vst.msk [vmem:[%s4925] sm:$0x4] %vm4920, %v4919
  %s4927 = scalar_lea.vmem %s1, 885
  %4928 = vst.msk [vmem:[%s4927] sm:$0x8] %vm4920, %v4919
  %s4929 = scalar_lea.vmem %s1, 1140
  %4930 = vst.msk [vmem:[%s4929] sm:$0x10] %vm4920, %v4919
  %s4931 = scalar_lea.vmem %s1, 1395
  %4932 = vst.msk [vmem:[%s4931] sm:$0x20] %vm4920, %v4919
  %s4933 = scalar_lea.vmem %s1, 1650
  %4934 = vst.msk [vmem:[%s4933] sm:$0x40] %vm4920, %v4919
  %s4935 = scalar_lea.vmem %s1, 1905
  %4936 = vst.msk [vmem:[%s4935] sm:$0x80] %vm4920, %v4919
  %s4937 = scalar_lea.vmem %s0, 8
  %v4938 = vld [vmem:[%s4937] sm:$0xff]
  %4939 = vrot.lane.b32.xlu0 %v4938, 8
  %v4940 = vpop.permute.xlu0 %4939
  %vm4941 = vcmask 7168
  %s4942 = scalar_lea.vmem %s1, 248
  %4943 = vst.msk [vmem:[%s4942] sm:$0x1] %vm4941, %v4940
  %s4944 = scalar_lea.vmem %s1, 503
  %4945 = vst.msk [vmem:[%s4944] sm:$0x2] %vm4941, %v4940
  %s4946 = scalar_lea.vmem %s1, 758
  %4947 = vst.msk [vmem:[%s4946] sm:$0x4] %vm4941, %v4940
  %s4948 = scalar_lea.vmem %s1, 1013
  %4949 = vst.msk [vmem:[%s4948] sm:$0x8] %vm4941, %v4940
  %s4950 = scalar_lea.vmem %s1, 1268
  %4951 = vst.msk [vmem:[%s4950] sm:$0x10] %vm4941, %v4940
  %s4952 = scalar_lea.vmem %s1, 1523
  %4953 = vst.msk [vmem:[%s4952] sm:$0x20] %vm4941, %v4940
  %s4954 = scalar_lea.vmem %s1, 1778
  %4955 = vst.msk [vmem:[%s4954] sm:$0x40] %vm4941, %v4940
  %s4956 = scalar_lea.vmem %s1, 2033
  %4957 = vst.msk [vmem:[%s4956] sm:$0x80] %vm4941, %v4940
  %v4958 = vld [vmem:[%s0] sm:$0xff]
  %4959 = vrot.lane.b32.xlu0 %v4958, 7
  %v4960 = vpop.permute.xlu0 %4959
  %vm4961 = vcmask 7168
  %s4962 = scalar_lea.vmem %s1, 121
  %4963 = vst.msk [vmem:[%s4962] sm:$0x1] %vm4961, %v4960
  %s4964 = scalar_lea.vmem %s1, 376
  %4965 = vst.msk [vmem:[%s4964] sm:$0x2] %vm4961, %v4960
  %s4966 = scalar_lea.vmem %s1, 631
  %4967 = vst.msk [vmem:[%s4966] sm:$0x4] %vm4961, %v4960
  %s4968 = scalar_lea.vmem %s1, 886
  %4969 = vst.msk [vmem:[%s4968] sm:$0x8] %vm4961, %v4960
  %s4970 = scalar_lea.vmem %s1, 1141
  %4971 = vst.msk [vmem:[%s4970] sm:$0x10] %vm4961, %v4960
  %s4972 = scalar_lea.vmem %s1, 1396
  %4973 = vst.msk [vmem:[%s4972] sm:$0x20] %vm4961, %v4960
  %s4974 = scalar_lea.vmem %s1, 1651
  %4975 = vst.msk [vmem:[%s4974] sm:$0x40] %vm4961, %v4960
  %s4976 = scalar_lea.vmem %s1, 1906
  %4977 = vst.msk [vmem:[%s4976] sm:$0x80] %vm4961, %v4960
  %s4978 = scalar_lea.vmem %s0, 8
  %v4979 = vld [vmem:[%s4978] sm:$0xff]
  %4980 = vrot.lane.b32.xlu0 %v4979, 7
  %v4981 = vpop.permute.xlu0 %4980
  %vm4982 = vcmask 7168
  %s4983 = scalar_lea.vmem %s1, 249
  %4984 = vst.msk [vmem:[%s4983] sm:$0x1] %vm4982, %v4981
  %s4985 = scalar_lea.vmem %s1, 504
  %4986 = vst.msk [vmem:[%s4985] sm:$0x2] %vm4982, %v4981
  %s4987 = scalar_lea.vmem %s1, 759
  %4988 = vst.msk [vmem:[%s4987] sm:$0x4] %vm4982, %v4981
  %s4989 = scalar_lea.vmem %s1, 1014
  %4990 = vst.msk [vmem:[%s4989] sm:$0x8] %vm4982, %v4981
  %s4991 = scalar_lea.vmem %s1, 1269
  %4992 = vst.msk [vmem:[%s4991] sm:$0x10] %vm4982, %v4981
  %s4993 = scalar_lea.vmem %s1, 1524
  %4994 = vst.msk [vmem:[%s4993] sm:$0x20] %vm4982, %v4981
  %s4995 = scalar_lea.vmem %s1, 1779
  %4996 = vst.msk [vmem:[%s4995] sm:$0x40] %vm4982, %v4981
  %s4997 = scalar_lea.vmem %s1, 2034
  %4998 = vst.msk [vmem:[%s4997] sm:$0x80] %vm4982, %v4981
  %v4999 = vld [vmem:[%s0] sm:$0xff]
  %5000 = vrot.lane.b32.xlu0 %v4999, 6
  %v5001 = vpop.permute.xlu0 %5000
  %vm5002 = vcmask 7168
  %s5003 = scalar_lea.vmem %s1, 122
  %5004 = vst.msk [vmem:[%s5003] sm:$0x1] %vm5002, %v5001
  %s5005 = scalar_lea.vmem %s1, 377
  %5006 = vst.msk [vmem:[%s5005] sm:$0x2] %vm5002, %v5001
  %s5007 = scalar_lea.vmem %s1, 632
  %5008 = vst.msk [vmem:[%s5007] sm:$0x4] %vm5002, %v5001
  %s5009 = scalar_lea.vmem %s1, 887
  %5010 = vst.msk [vmem:[%s5009] sm:$0x8] %vm5002, %v5001
  %s5011 = scalar_lea.vmem %s1, 1142
  %5012 = vst.msk [vmem:[%s5011] sm:$0x10] %vm5002, %v5001
  %s5013 = scalar_lea.vmem %s1, 1397
  %5014 = vst.msk [vmem:[%s5013] sm:$0x20] %vm5002, %v5001
  %s5015 = scalar_lea.vmem %s1, 1652
  %5016 = vst.msk [vmem:[%s5015] sm:$0x40] %vm5002, %v5001
  %s5017 = scalar_lea.vmem %s1, 1907
  %5018 = vst.msk [vmem:[%s5017] sm:$0x80] %vm5002, %v5001
  %s5019 = scalar_lea.vmem %s0, 8
  %v5020 = vld [vmem:[%s5019] sm:$0xff]
  %5021 = vrot.lane.b32.xlu0 %v5020, 6
  %v5022 = vpop.permute.xlu0 %5021
  %vm5023 = vcmask 7168
  %s5024 = scalar_lea.vmem %s1, 250
  %5025 = vst.msk [vmem:[%s5024] sm:$0x1] %vm5023, %v5022
  %s5026 = scalar_lea.vmem %s1, 505
  %5027 = vst.msk [vmem:[%s5026] sm:$0x2] %vm5023, %v5022
  %s5028 = scalar_lea.vmem %s1, 760
  %5029 = vst.msk [vmem:[%s5028] sm:$0x4] %vm5023, %v5022
  %s5030 = scalar_lea.vmem %s1, 1015
  %5031 = vst.msk [vmem:[%s5030] sm:$0x8] %vm5023, %v5022
  %s5032 = scalar_lea.vmem %s1, 1270
  %5033 = vst.msk [vmem:[%s5032] sm:$0x10] %vm5023, %v5022
  %s5034 = scalar_lea.vmem %s1, 1525
  %5035 = vst.msk [vmem:[%s5034] sm:$0x20] %vm5023, %v5022
  %s5036 = scalar_lea.vmem %s1, 1780
  %5037 = vst.msk [vmem:[%s5036] sm:$0x40] %vm5023, %v5022
  %s5038 = scalar_lea.vmem %s1, 2035
  %5039 = vst.msk [vmem:[%s5038] sm:$0x80] %vm5023, %v5022
  %v5040 = vld [vmem:[%s0] sm:$0xff]
  %5041 = vrot.lane.b32.xlu0 %v5040, 5
  %v5042 = vpop.permute.xlu0 %5041
  %vm5043 = vcmask 7168
  %s5044 = scalar_lea.vmem %s1, 123
  %5045 = vst.msk [vmem:[%s5044] sm:$0x1] %vm5043, %v5042
  %s5046 = scalar_lea.vmem %s1, 378
  %5047 = vst.msk [vmem:[%s5046] sm:$0x2] %vm5043, %v5042
  %s5048 = scalar_lea.vmem %s1, 633
  %5049 = vst.msk [vmem:[%s5048] sm:$0x4] %vm5043, %v5042
  %s5050 = scalar_lea.vmem %s1, 888
  %5051 = vst.msk [vmem:[%s5050] sm:$0x8] %vm5043, %v5042
  %s5052 = scalar_lea.vmem %s1, 1143
  %5053 = vst.msk [vmem:[%s5052] sm:$0x10] %vm5043, %v5042
  %s5054 = scalar_lea.vmem %s1, 1398
  %5055 = vst.msk [vmem:[%s5054] sm:$0x20] %vm5043, %v5042
  %s5056 = scalar_lea.vmem %s1, 1653
  %5057 = vst.msk [vmem:[%s5056] sm:$0x40] %vm5043, %v5042
  %s5058 = scalar_lea.vmem %s1, 1908
  %5059 = vst.msk [vmem:[%s5058] sm:$0x80] %vm5043, %v5042
  %s5060 = scalar_lea.vmem %s0, 8
  %v5061 = vld [vmem:[%s5060] sm:$0xff]
  %5062 = vrot.lane.b32.xlu0 %v5061, 5
  %v5063 = vpop.permute.xlu0 %5062
  %vm5064 = vcmask 7168
  %s5065 = scalar_lea.vmem %s1, 251
  %5066 = vst.msk [vmem:[%s5065] sm:$0x1] %vm5064, %v5063
  %s5067 = scalar_lea.vmem %s1, 506
  %5068 = vst.msk [vmem:[%s5067] sm:$0x2] %vm5064, %v5063
  %s5069 = scalar_lea.vmem %s1, 761
  %5070 = vst.msk [vmem:[%s5069] sm:$0x4] %vm5064, %v5063
  %s5071 = scalar_lea.vmem %s1, 1016
  %5072 = vst.msk [vmem:[%s5071] sm:$0x8] %vm5064, %v5063
  %s5073 = scalar_lea.vmem %s1, 1271
  %5074 = vst.msk [vmem:[%s5073] sm:$0x10] %vm5064, %v5063
  %s5075 = scalar_lea.vmem %s1, 1526
  %5076 = vst.msk [vmem:[%s5075] sm:$0x20] %vm5064, %v5063
  %s5077 = scalar_lea.vmem %s1, 1781
  %5078 = vst.msk [vmem:[%s5077] sm:$0x40] %vm5064, %v5063
  %s5079 = scalar_lea.vmem %s1, 2036
  %5080 = vst.msk [vmem:[%s5079] sm:$0x80] %vm5064, %v5063
  %v5081 = vld [vmem:[%s0] sm:$0xff]
  %5082 = vrot.lane.b32.xlu0 %v5081, 4
  %v5083 = vpop.permute.xlu0 %5082
  %vm5084 = vcmask 7168
  %s5085 = scalar_lea.vmem %s1, 124
  %5086 = vst.msk [vmem:[%s5085] sm:$0x1] %vm5084, %v5083
  %s5087 = scalar_lea.vmem %s1, 379
  %5088 = vst.msk [vmem:[%s5087] sm:$0x2] %vm5084, %v5083
  %s5089 = scalar_lea.vmem %s1, 634
  %5090 = vst.msk [vmem:[%s5089] sm:$0x4] %vm5084, %v5083
  %s5091 = scalar_lea.vmem %s1, 889
  %5092 = vst.msk [vmem:[%s5091] sm:$0x8] %vm5084, %v5083
  %s5093 = scalar_lea.vmem %s1, 1144
  %5094 = vst.msk [vmem:[%s5093] sm:$0x10] %vm5084, %v5083
  %s5095 = scalar_lea.vmem %s1, 1399
  %5096 = vst.msk [vmem:[%s5095] sm:$0x20] %vm5084, %v5083
  %s5097 = scalar_lea.vmem %s1, 1654
  %5098 = vst.msk [vmem:[%s5097] sm:$0x40] %vm5084, %v5083
  %s5099 = scalar_lea.vmem %s1, 1909
  %5100 = vst.msk [vmem:[%s5099] sm:$0x80] %vm5084, %v5083
  %s5101 = scalar_lea.vmem %s0, 8
  %v5102 = vld [vmem:[%s5101] sm:$0xff]
  %5103 = vrot.lane.b32.xlu0 %v5102, 4
  %v5104 = vpop.permute.xlu0 %5103
  %vm5105 = vcmask 7168
  %s5106 = scalar_lea.vmem %s1, 252
  %5107 = vst.msk [vmem:[%s5106] sm:$0x1] %vm5105, %v5104
  %s5108 = scalar_lea.vmem %s1, 507
  %5109 = vst.msk [vmem:[%s5108] sm:$0x2] %vm5105, %v5104
  %s5110 = scalar_lea.vmem %s1, 762
  %5111 = vst.msk [vmem:[%s5110] sm:$0x4] %vm5105, %v5104
  %s5112 = scalar_lea.vmem %s1, 1017
  %5113 = vst.msk [vmem:[%s5112] sm:$0x8] %vm5105, %v5104
  %s5114 = scalar_lea.vmem %s1, 1272
  %5115 = vst.msk [vmem:[%s5114] sm:$0x10] %vm5105, %v5104
  %s5116 = scalar_lea.vmem %s1, 1527
  %5117 = vst.msk [vmem:[%s5116] sm:$0x20] %vm5105, %v5104
  %s5118 = scalar_lea.vmem %s1, 1782
  %5119 = vst.msk [vmem:[%s5118] sm:$0x40] %vm5105, %v5104
  %s5120 = scalar_lea.vmem %s1, 2037
  %5121 = vst.msk [vmem:[%s5120] sm:$0x80] %vm5105, %v5104
  %v5122 = vld [vmem:[%s0] sm:$0xff]
  %5123 = vrot.lane.b32.xlu0 %v5122, 3
  %v5124 = vpop.permute.xlu0 %5123
  %vm5125 = vcmask 7168
  %s5126 = scalar_lea.vmem %s1, 125
  %5127 = vst.msk [vmem:[%s5126] sm:$0x1] %vm5125, %v5124
  %s5128 = scalar_lea.vmem %s1, 380
  %5129 = vst.msk [vmem:[%s5128] sm:$0x2] %vm5125, %v5124
  %s5130 = scalar_lea.vmem %s1, 635
  %5131 = vst.msk [vmem:[%s5130] sm:$0x4] %vm5125, %v5124
  %s5132 = scalar_lea.vmem %s1, 890
  %5133 = vst.msk [vmem:[%s5132] sm:$0x8] %vm5125, %v5124
  %s5134 = scalar_lea.vmem %s1, 1145
  %5135 = vst.msk [vmem:[%s5134] sm:$0x10] %vm5125, %v5124
  %s5136 = scalar_lea.vmem %s1, 1400
  %5137 = vst.msk [vmem:[%s5136] sm:$0x20] %vm5125, %v5124
  %s5138 = scalar_lea.vmem %s1, 1655
  %5139 = vst.msk [vmem:[%s5138] sm:$0x40] %vm5125, %v5124
  %s5140 = scalar_lea.vmem %s1, 1910
  %5141 = vst.msk [vmem:[%s5140] sm:$0x80] %vm5125, %v5124
  %s5142 = scalar_lea.vmem %s0, 8
  %v5143 = vld [vmem:[%s5142] sm:$0xff]
  %5144 = vrot.lane.b32.xlu0 %v5143, 3
  %v5145 = vpop.permute.xlu0 %5144
  %vm5146 = vcmask 7168
  %s5147 = scalar_lea.vmem %s1, 253
  %5148 = vst.msk [vmem:[%s5147] sm:$0x1] %vm5146, %v5145
  %s5149 = scalar_lea.vmem %s1, 508
  %5150 = vst.msk [vmem:[%s5149] sm:$0x2] %vm5146, %v5145
  %s5151 = scalar_lea.vmem %s1, 763
  %5152 = vst.msk [vmem:[%s5151] sm:$0x4] %vm5146, %v5145
  %s5153 = scalar_lea.vmem %s1, 1018
  %5154 = vst.msk [vmem:[%s5153] sm:$0x8] %vm5146, %v5145
  %s5155 = scalar_lea.vmem %s1, 1273
  %5156 = vst.msk [vmem:[%s5155] sm:$0x10] %vm5146, %v5145
  %s5157 = scalar_lea.vmem %s1, 1528
  %5158 = vst.msk [vmem:[%s5157] sm:$0x20] %vm5146, %v5145
  %s5159 = scalar_lea.vmem %s1, 1783
  %5160 = vst.msk [vmem:[%s5159] sm:$0x40] %vm5146, %v5145
  %s5161 = scalar_lea.vmem %s1, 2038
  %5162 = vst.msk [vmem:[%s5161] sm:$0x80] %vm5146, %v5145
  %v5163 = vld [vmem:[%s0] sm:$0xff]
  %5164 = vrot.lane.b32.xlu0 %v5163, 2
  %v5165 = vpop.permute.xlu0 %5164
  %vm5166 = vcmask 7168
  %s5167 = scalar_lea.vmem %s1, 126
  %5168 = vst.msk [vmem:[%s5167] sm:$0x1] %vm5166, %v5165
  %s5169 = scalar_lea.vmem %s1, 381
  %5170 = vst.msk [vmem:[%s5169] sm:$0x2] %vm5166, %v5165
  %s5171 = scalar_lea.vmem %s1, 636
  %5172 = vst.msk [vmem:[%s5171] sm:$0x4] %vm5166, %v5165
  %s5173 = scalar_lea.vmem %s1, 891
  %5174 = vst.msk [vmem:[%s5173] sm:$0x8] %vm5166, %v5165
  %s5175 = scalar_lea.vmem %s1, 1146
  %5176 = vst.msk [vmem:[%s5175] sm:$0x10] %vm5166, %v5165
  %s5177 = scalar_lea.vmem %s1, 1401
  %5178 = vst.msk [vmem:[%s5177] sm:$0x20] %vm5166, %v5165
  %s5179 = scalar_lea.vmem %s1, 1656
  %5180 = vst.msk [vmem:[%s5179] sm:$0x40] %vm5166, %v5165
  %s5181 = scalar_lea.vmem %s1, 1911
  %5182 = vst.msk [vmem:[%s5181] sm:$0x80] %vm5166, %v5165
  %s5183 = scalar_lea.vmem %s0, 8
  %v5184 = vld [vmem:[%s5183] sm:$0xff]
  %5185 = vrot.lane.b32.xlu0 %v5184, 2
  %v5186 = vpop.permute.xlu0 %5185
  %vm5187 = vcmask 7168
  %s5188 = scalar_lea.vmem %s1, 254
  %5189 = vst.msk [vmem:[%s5188] sm:$0x1] %vm5187, %v5186
  %s5190 = scalar_lea.vmem %s1, 509
  %5191 = vst.msk [vmem:[%s5190] sm:$0x2] %vm5187, %v5186
  %s5192 = scalar_lea.vmem %s1, 764
  %5193 = vst.msk [vmem:[%s5192] sm:$0x4] %vm5187, %v5186
  %s5194 = scalar_lea.vmem %s1, 1019
  %5195 = vst.msk [vmem:[%s5194] sm:$0x8] %vm5187, %v5186
  %s5196 = scalar_lea.vmem %s1, 1274
  %5197 = vst.msk [vmem:[%s5196] sm:$0x10] %vm5187, %v5186
  %s5198 = scalar_lea.vmem %s1, 1529
  %5199 = vst.msk [vmem:[%s5198] sm:$0x20] %vm5187, %v5186
  %s5200 = scalar_lea.vmem %s1, 1784
  %5201 = vst.msk [vmem:[%s5200] sm:$0x40] %vm5187, %v5186
  %s5202 = scalar_lea.vmem %s1, 2039
  %5203 = vst.msk [vmem:[%s5202] sm:$0x80] %vm5187, %v5186
  %v5204 = vld [vmem:[%s0] sm:$0xff]
  %5205 = vrot.lane.b32.xlu0 %v5204, 1
  %v5206 = vpop.permute.xlu0 %5205
  %vm5207 = vcmask 7168
  %s5208 = scalar_lea.vmem %s1, 127
  %5209 = vst.msk [vmem:[%s5208] sm:$0x1] %vm5207, %v5206
  %s5210 = scalar_lea.vmem %s1, 382
  %5211 = vst.msk [vmem:[%s5210] sm:$0x2] %vm5207, %v5206
  %s5212 = scalar_lea.vmem %s1, 637
  %5213 = vst.msk [vmem:[%s5212] sm:$0x4] %vm5207, %v5206
  %s5214 = scalar_lea.vmem %s1, 892
  %5215 = vst.msk [vmem:[%s5214] sm:$0x8] %vm5207, %v5206
  %s5216 = scalar_lea.vmem %s1, 1147
  %5217 = vst.msk [vmem:[%s5216] sm:$0x10] %vm5207, %v5206
  %s5218 = scalar_lea.vmem %s1, 1402
  %5219 = vst.msk [vmem:[%s5218] sm:$0x20] %vm5207, %v5206
  %s5220 = scalar_lea.vmem %s1, 1657
  %5221 = vst.msk [vmem:[%s5220] sm:$0x40] %vm5207, %v5206
  %s5222 = scalar_lea.vmem %s1, 1912
  %5223 = vst.msk [vmem:[%s5222] sm:$0x80] %vm5207, %v5206
  %s5224 = scalar_lea.vmem %s0, 8
  %v5225 = vld [vmem:[%s5224] sm:$0xff]
  %5226 = vrot.lane.b32.xlu0 %v5225, 1
  %v5227 = vpop.permute.xlu0 %5226
  %vm5228 = vcmask 7168
  %s5229 = scalar_lea.vmem %s1, 255
  %5230 = vst.msk [vmem:[%s5229] sm:$0x1] %vm5228, %v5227
  %s5231 = scalar_lea.vmem %s1, 510
  %5232 = vst.msk [vmem:[%s5231] sm:$0x2] %vm5228, %v5227
  %s5233 = scalar_lea.vmem %s1, 765
  %5234 = vst.msk [vmem:[%s5233] sm:$0x4] %vm5228, %v5227
  %s5235 = scalar_lea.vmem %s1, 1020
  %5236 = vst.msk [vmem:[%s5235] sm:$0x8] %vm5228, %v5227
  %s5237 = scalar_lea.vmem %s1, 1275
  %5238 = vst.msk [vmem:[%s5237] sm:$0x10] %vm5228, %v5227
  %s5239 = scalar_lea.vmem %s1, 1530
  %5240 = vst.msk [vmem:[%s5239] sm:$0x20] %vm5228, %v5227
  %s5241 = scalar_lea.vmem %s1, 1785
  %5242 = vst.msk [vmem:[%s5241] sm:$0x40] %vm5228, %v5227
  %s5243 = scalar_lea.vmem %s1, 2040
  %5244 = vst.msk [vmem:[%s5243] sm:$0x80] %vm5228, %v5227

// kernel: wavelet_trans_layer.1
$region0: #{wavelet_trans_layer.1}
  #allocation0 [shape = 'u32[]', space=smem, size = 0x4, offset = 0x4, fixed_abs, tag = 'smem constant byte address 0x4 - core index']
  #allocation1 [shape = 'u32[72,128]{1,0:T(1,128)}', space=vmem, size = 0x9000, scoped, tag = 'internal scratch']
  #allocation2 [shape = 'f32[8,260]{1,0:T(8,128)}', space=vmem, size = 0x3000, scoped, tag = 'scratch operand']
  %s0 = inlined_call_operand.vmem [shape: f32[2,8,384], index: 0, kind: input, shape index: {}]
  %s1 = inlined_call_operand.vmem [shape: f32[2,8,256], index: 1, kind: output, shape index: {}]
  %s2 = sld [smem:[#allocation0]]
  $region14: #{wavelet_trans_layer.1} parent=0
    _
  %s4 = ssub.s32 1, %s2
  %s5 = scalar_select 0, %s4, %s2
  // Predicated region
  $region2: #{wavelet_trans_layer.1} parent=0 // pred_check
    _
  $region3: #{wavelet_trans_layer.1} parent=0 // pred_check_branch
    %7 = sbr.rel (0) target = $region5
  $region4: #{wavelet_trans_layer.1} parent=0 // pred_region
    _
  $region5: #{wavelet_trans_layer.1} parent=0 // pred_fallthru
    _
  %s8 = scalar_lea.vmem %s0, 24
  %v9 = vld [vmem:[%s8] sm:$0xff]
  %v10 = vld [vmem:[%s8 + $0x8] sm:$0xff]
  %v11 = vld [vmem:[%s8 + $0x10] sm:$0xff]
  %v12 = vmul.f32 %v9, 0.1601024
  %v13 = vmul.f32 %v10, 0.1601024
  %v14 = vmul.f32 %v11, 0.1601024
  %v15 = vmul.f32 %v9, 0.72430855
  %v16 = vmul.f32 %v10, 0.72430855
  %v17 = vmul.f32 %v11, 0.72430855
  %21 = vrot.lane.b32.xlu0 %v15, 127
  %v22 = vpop.permute.xlu0 %21
  %23 = vrot.lane.b32.xlu0 %v16, 127
  %v24 = vpop.permute.xlu0 %23
  %25 = vrot.lane.b32.xlu0 %v17, 127
  %v26 = vpop.permute.xlu0 %25
  %vm27 = vcmask 1039360
  %v28 = vsel %vm27, %v22, %v24
  %v29 = vsel %vm27, %v24, %v26
  %v33 = vadd.f32 %v12, %v28
  %v34 = vadd.f32 %v13, %v29
  %v35 = vadd.f32 %v14, %v26
  %v36 = vmul.f32 %v9, -0.2422949
  %v37 = vmul.f32 %v10, -0.2422949
  %v38 = vmul.f32 %v11, -0.2422949
  %42 = vrot.lane.b32.xlu0 %v36, 126
  %v43 = vpop.permute.xlu0 %42
  %44 = vrot.lane.b32.xlu0 %v37, 126
  %v45 = vpop.permute.xlu0 %44
  %46 = vrot.lane.b32.xlu0 %v38, 126
  %v47 = vpop.permute.xlu0 %46
  %vm48 = vcmask 1031168
  %v49 = vsel %vm48, %v43, %v45
  %v50 = vsel %vm48, %v45, %v47
  %v54 = vadd.f32 %v33, %v49
  %v55 = vadd.f32 %v34, %v50
  %v56 = vadd.f32 %v35, %v47
  %v57 = vmul.f32 %v9, 0.0775715
  %v58 = vmul.f32 %v10, 0.0775715
  %v59 = vmul.f32 %v11, 0.0775715
  %63 = vrot.lane.b32.xlu0 %v57, 125
  %v64 = vpop.permute.xlu0 %63
  %65 = vrot.lane.b32.xlu0 %v58, 125
  %v66 = vpop.permute.xlu0 %65
  %67 = vrot.lane.b32.xlu0 %v59, 125
  %v68 = vpop.permute.xlu0 %67
  %vm69 = vcmask 1022976
  %v70 = vsel %vm69, %v64, %v66
  %v71 = vsel %vm69, %v66, %v68
  %v75 = vadd.f32 %v54, %v70
  %v76 = vadd.f32 %v55, %v71
  %v77 = vadd.f32 %v56, %v68
  %v78 = vmul.f32 %v9, -0.012580752
  %v79 = vmul.f32 %v10, -0.012580752
  %v80 = vmul.f32 %v11, -0.012580752
  %84 = vrot.lane.b32.xlu0 %v78, 124
  %v85 = vpop.permute.xlu0 %84
  %86 = vrot.lane.b32.xlu0 %v79, 124
  %v87 = vpop.permute.xlu0 %86
  %88 = vrot.lane.b32.xlu0 %v80, 124
  %v89 = vpop.permute.xlu0 %88
  %vm90 = vcmask 1014784
  %v91 = vsel %vm90, %v85, %v87
  %v92 = vsel %vm90, %v87, %v89
  %v96 = vadd.f32 %v75, %v91
  %v97 = vadd.f32 %v76, %v92
  %v98 = vadd.f32 %v77, %v89
  %v99 = vld [vmem:[%s0] sm:$0xff]
  %v100 = vld [vmem:[%s0 + $0x8] sm:$0xff]
  %v101 = vld [vmem:[%s0 + $0x10] sm:$0xff]
  %v102 = vmul.f32 %v99, 0.60382926
  %v103 = vmul.f32 %v100, 0.60382926
  %v104 = vmul.f32 %v101, 0.60382926
  %108 = vrot.lane.b32.xlu0 %v102, 127
  %v109 = vpop.permute.xlu0 %108
  %110 = vrot.lane.b32.xlu0 %v103, 127
  %v111 = vpop.permute.xlu0 %110
  %112 = vrot.lane.b32.xlu0 %v104, 127
  %v113 = vpop.permute.xlu0 %112
  %v114 = vsel %vm27, %v109, %v111
  %v115 = vsel %vm27, %v111, %v113
  %v119 = vadd.f32 %v96, %v114
  %v120 = vadd.f32 %v97, %v115
  %v121 = vadd.f32 %v98, %v113
  %v122 = vmul.f32 %v99, 0.13842815
  %v123 = vmul.f32 %v100, 0.13842815
  %v124 = vmul.f32 %v101, 0.13842815
  %128 = vrot.lane.b32.xlu0 %v122, 126
  %v129 = vpop.permute.xlu0 %128
  %130 = vrot.lane.b32.xlu0 %v123, 126
  %v131 = vpop.permute.xlu0 %130
  %132 = vrot.lane.b32.xlu0 %v124, 126
  %v133 = vpop.permute.xlu0 %132
  %v134 = vsel %vm48, %v129, %v131
  %v135 = vsel %vm48, %v131, %v133
  %v139 = vadd.f32 %v119, %v134
  %v140 = vadd.f32 %v120, %v135
  %v141 = vadd.f32 %v121, %v133
  %v142 = vmul.f32 %v99, -0.03224487
  %v143 = vmul.f32 %v100, -0.03224487
  %v144 = vmul.f32 %v101, -0.03224487
  %148 = vrot.lane.b32.xlu0 %v142, 125
  %v149 = vpop.permute.xlu0 %148
  %150 = vrot.lane.b32.xlu0 %v143, 125
  %v151 = vpop.permute.xlu0 %150
  %152 = vrot.lane.b32.xlu0 %v144, 125
  %v153 = vpop.permute.xlu0 %152
  %v154 = vsel %vm69, %v149, %v151
  %v155 = vsel %vm69, %v151, %v153
  %v159 = vadd.f32 %v139, %v154
  %v160 = vadd.f32 %v140, %v155
  %v161 = vadd.f32 %v141, %v153
  %v162 = vmul.f32 %v99, -0.00624149
  %v163 = vmul.f32 %v100, -0.00624149
  %v164 = vmul.f32 %v101, -0.00624149
  %168 = vrot.lane.b32.xlu0 %v162, 124
  %v169 = vpop.permute.xlu0 %168
  %170 = vrot.lane.b32.xlu0 %v163, 124
  %v171 = vpop.permute.xlu0 %170
  %172 = vrot.lane.b32.xlu0 %v164, 124
  %v173 = vpop.permute.xlu0 %172
  %v174 = vsel %vm90, %v169, %v171
  %v175 = vsel %vm90, %v171, %v173
  %v179 = vadd.f32 %v159, %v174
  %v180 = vadd.f32 %v160, %v175
  %v181 = vadd.f32 %v161, %v173
  %v182 = vmul.f32 %v99, 0.0033357253
  %v183 = vmul.f32 %v100, 0.0033357253
  %v184 = vmul.f32 %v101, 0.0033357253
  %188 = vrot.lane.b32.xlu0 %v182, 123
  %v189 = vpop.permute.xlu0 %188
  %190 = vrot.lane.b32.xlu0 %v183, 123
  %v191 = vpop.permute.xlu0 %190
  %192 = vrot.lane.b32.xlu0 %v184, 123
  %v193 = vpop.permute.xlu0 %192
  %vm194 = vcmask 1006592
  %v195 = vsel %vm194, %v189, %v191
  %v196 = vsel %vm194, %v191, %v193
  %v200 = vadd.f32 %v179, %v195
  %v201 = vadd.f32 %v180, %v196
  %v202 = vadd.f32 %v181, %v193
  %203 = vst [vmem:[#allocation2] sm:$0xff] %v200
  %204 = vst [vmem:[#allocation2 + $0x8] sm:$0xff] %v201
  %vm205 = vcmask 31744
  %206 = vst.msk [vmem:[#allocation2 + $0x10] sm:$0xff] %vm205, %v202
  %v207 = vld [vmem:[#allocation2] sm:$0xff]
  %v208 = vld [vmem:[#allocation2 + $0x8] sm:$0xff]
  %v209 = vld [vmem:[#allocation2 + $0x10] sm:$0xff]
  %v210 = vmul.f32 %v207, 0.1601024
  %v211 = vmul.f32 %v208, 0.1601024
  %v212 = vmul.f32 %v209, 0.1601024
  %v213 = vmul.f32 %v207, 0.60382926
  %v214 = vmul.f32 %v208, 0.60382926
  %v215 = vmul.f32 %v209, 0.60382926
  %v216 = vmul.f32 %v207, 0.72430855
  %v217 = vmul.f32 %v208, 0.72430855
  %v218 = vmul.f32 %v209, 0.72430855
  %222 = vrot.lane.b32.xlu0 %v216, 1
  %v223 = vpop.permute.xlu0 %222
  %224 = vrot.lane.b32.xlu0 %v217, 1
  %v225 = vpop.permute.xlu0 %224
  %226 = vrot.lane.b32.xlu0 %v218, 1
  %v227 = vpop.permute.xlu0 %226
  %vm228 = vcmask 7168
  %v229 = vsel %vm228, %v223, %v225
  %v230 = vsel %vm228, %v225, %v227
  %v234 = vadd.f32 %v210, %v223
  %v235 = vadd.f32 %v211, %v229
  %v236 = vadd.f32 %v212, %v230
  %v237 = vmul.f32 %v207, 0.13842815
  %v238 = vmul.f32 %v208, 0.13842815
  %v239 = vmul.f32 %v209, 0.13842815
  %243 = vrot.lane.b32.xlu0 %v237, 1
  %v244 = vpop.permute.xlu0 %243
  %245 = vrot.lane.b32.xlu0 %v238, 1
  %v246 = vpop.permute.xlu0 %245
  %247 = vrot.lane.b32.xlu0 %v239, 1
  %v248 = vpop.permute.xlu0 %247
  %v249 = vsel %vm228, %v244, %v246
  %v250 = vsel %vm228, %v246, %v248
  %v254 = vadd.f32 %v213, %v244
  %v255 = vadd.f32 %v214, %v249
  %v256 = vadd.f32 %v215, %v250
  %v257 = vmul.f32 %v207, -0.2422949
  %v258 = vmul.f32 %v208, -0.2422949
  %v259 = vmul.f32 %v209, -0.2422949
  %263 = vrot.lane.b32.xlu0 %v257, 2
  %v264 = vpop.permute.xlu0 %263
  %265 = vrot.lane.b32.xlu0 %v258, 2
  %v266 = vpop.permute.xlu0 %265
  %267 = vrot.lane.b32.xlu0 %v259, 2
  %v268 = vpop.permute.xlu0 %267
  %vm269 = vcmask 15360
  %v270 = vsel %vm269, %v264, %v266
  %v271 = vsel %vm269, %v266, %v268
  %v275 = vadd.f32 %v234, %v264
  %v276 = vadd.f32 %v235, %v270
  %v277 = vadd.f32 %v236, %v271
  %v278 = vmul.f32 %v207, -0.03224487
  %v279 = vmul.f32 %v208, -0.03224487
  %v280 = vmul.f32 %v209, -0.03224487
  %284 = vrot.lane.b32.xlu0 %v278, 2
  %v285 = vpop.permute.xlu0 %284
  %286 = vrot.lane.b32.xlu0 %v279, 2
  %v287 = vpop.permute.xlu0 %286
  %288 = vrot.lane.b32.xlu0 %v280, 2
  %v289 = vpop.permute.xlu0 %288
  %v290 = vsel %vm269, %v285, %v287
  %v291 = vsel %vm269, %v287, %v289
  %v295 = vadd.f32 %v254, %v285
  %v296 = vadd.f32 %v255, %v290
  %v297 = vadd.f32 %v256, %v291
  %v298 = vmul.f32 %v207, 0.0775715
  %v299 = vmul.f32 %v208, 0.0775715
  %v300 = vmul.f32 %v209, 0.0775715
  %304 = vrot.lane.b32.xlu0 %v298, 3
  %v305 = vpop.permute.xlu0 %304
  %306 = vrot.lane.b32.xlu0 %v299, 3
  %v307 = vpop.permute.xlu0 %306
  %308 = vrot.lane.b32.xlu0 %v300, 3
  %v309 = vpop.permute.xlu0 %308
  %vm310 = vcmask 23552
  %v311 = vsel %vm310, %v305, %v307
  %v312 = vsel %vm310, %v307, %v309
  %v316 = vadd.f32 %v275, %v305
  %v317 = vadd.f32 %v276, %v311
  %v318 = vadd.f32 %v277, %v312
  %v319 = vmul.f32 %v207, -0.00624149
  %v320 = vmul.f32 %v208, -0.00624149
  %v321 = vmul.f32 %v209, -0.00624149
  %325 = vrot.lane.b32.xlu0 %v319, 3
  %v326 = vpop.permute.xlu0 %325
  %327 = vrot.lane.b32.xlu0 %v320, 3
  %v328 = vpop.permute.xlu0 %327
  %329 = vrot.lane.b32.xlu0 %v321, 3
  %v330 = vpop.permute.xlu0 %329
  %v331 = vsel %vm310, %v326, %v328
  %v332 = vsel %vm310, %v328, %v330
  %v336 = vadd.f32 %v295, %v326
  %v337 = vadd.f32 %v296, %v331
  %v338 = vadd.f32 %v297, %v332
  %v339 = vmul.f32 %v207, -0.012580752
  %v340 = vmul.f32 %v208, -0.012580752
  %343 = vrot.lane.b32.xlu0 %v339, 4
  %v344 = vpop.permute.xlu0 %343
  %345 = vrot.lane.b32.xlu0 %v340, 4
  %v346 = vpop.permute.xlu0 %345
  %v347 = vsel %vm205, %v344, %v346
  %v351 = vadd.f32 %v316, %v344
  %v352 = vadd.f32 %v317, %v347
  %v353 = vadd.f32 %v318, %v346
  %v354 = vmul.f32 %v207, 0.0033357253
  %v355 = vmul.f32 %v208, 0.0033357253
  %358 = vrot.lane.b32.xlu0 %v354, 4
  %v359 = vpop.permute.xlu0 %358
  %360 = vrot.lane.b32.xlu0 %v355, 4
  %v361 = vpop.permute.xlu0 %360
  %v362 = vsel %vm205, %v359, %v361
  %v366 = vadd.f32 %v336, %v359
  %v367 = vadd.f32 %v337, %v362
  %v368 = vadd.f32 %v338, %v361
  %372 = vrot.lane.b32.xlu0 %v351, 124
  %v373 = vpop.permute.xlu0 %372
  %374 = vrot.lane.b32.xlu0 %v352, 124
  %v375 = vpop.permute.xlu0 %374
  %376 = vrot.lane.b32.xlu0 %v353, 124
  %v377 = vpop.permute.xlu0 %376
  %v378 = vsel %vm90, %v373, %v375
  %v379 = vsel %vm90, %v375, %v377
  %382 = vst [vmem:[%s1] sm:$0xff] %v378
  %383 = vst [vmem:[%s1 + $0x8] sm:$0xff] %v379
  %387 = vrot.lane.b32.xlu0 %v366, 124
  %v388 = vpop.permute.xlu0 %387
  %389 = vrot.lane.b32.xlu0 %v367, 124
  %v390 = vpop.permute.xlu0 %389
  %391 = vrot.lane.b32.xlu0 %v368, 124
  %v392 = vpop.permute.xlu0 %391
  %v393 = vsel %vm90, %v388, %v390
  %v394 = vsel %vm90, %v390, %v392
  %s397 = scalar_lea.vmem %s1, 16
  %398 = vst [vmem:[%s397] sm:$0xff] %v393
  %399 = vst [vmem:[%s397 + $0x8] sm:$0xff] %v394
  // Predicated region
  $region6: #{wavelet_trans_layer.1} parent=0 // pred_check
    _
  $region7: #{wavelet_trans_layer.1} parent=0 // pred_check_branch
    %401 = sbr.rel (0) target = $region9
  $region8: #{wavelet_trans_layer.1} parent=0 // pred_region
    _
  $region9: #{wavelet_trans_layer.1} parent=0 // pred_fallthru
    _
  // Predicated region
  $region10: #{wavelet_trans_layer.1} parent=0 // pred_check
    _
  $region11: #{wavelet_trans_layer.1} parent=0 // pred_check_branch
    %403 = sbr.rel (0) target = $region13
  $region12: #{wavelet_trans_layer.1} parent=0 // pred_region
    _
  $region13: #{wavelet_trans_layer.1} parent=0 // pred_fallthru
    _

</llo_original>
